<compile_context>
chip_gen: v7x
topology: tpu7x:2x2x1
jax: 0.10.0
libtpu: 0.0.40
codegen_flags: <defaults>
</compile_context>

<pallas_src>
import jax
import jax.numpy as jnp
from jax import lax
from jax.experimental import pallas as pl
from jax.experimental.pallas import tpu as pltpu

EPS = 1e-5                      # nn.BatchNorm2d default eps
LANE = 128                      # TPU lane width
VMEM_LIMIT = 32 * 1024 * 1024   # explicit scoped-VMEM limit (safe on v5e/v6e/v7x)


# ------------------------------- helpers ------------------------------------

def _round_up(c):
    return ((c + LANE - 1) // LANE) * LANE


def _pick_tile(m, cap=1024):
    """Largest row-tile <= cap that is a multiple of 8 and divides m."""
    t = min(m, cap)
    t -= t % 8
    while t >= 8:
        if m % t == 0:
            return t
        t -= 8
    return m  # tiny / odd M: single block (still small by construction)


# ----------------------------- Pallas kernels -------------------------------

def bn_scale_shift(x2, gamma_p, beta_p):
    """Tiled BatchNorm statistics: returns (2, C) = [scale; shift] in f32.

    scale = gamma * rsqrt(var + eps), shift = beta - mean * scale, so the
    consumer only needs a fused multiply-add on its input tile."""
    M, C = x2.shape
    TM = _pick_tile(M)
    inv_m = 1.0 / M

    def kernel(x_ref, g_ref, b_ref, o_ref, sum_ref, sq_ref):
        @pl.when(pl.program_id(0) == 0)
        def _():
            sum_ref[...] = jnp.zeros_like(sum_ref)
            sq_ref[...] = jnp.zeros_like(sq_ref)

        x = x_ref[...]
        sum_ref[...] += jnp.sum(x, axis=0, keepdims=True)
        sq_ref[...] += jnp.sum(x * x, axis=0, keepdims=True)

        @pl.when(pl.program_id(0) == pl.num_programs(0) - 1)
        def _():
            mean = sum_ref[...] * inv_m
            var = sq_ref[...] * inv_m - mean * mean
            scale = g_ref[...] * lax.rsqrt(var + EPS)
            o_ref[0:1, :] = scale
            o_ref[1:2, :] = b_ref[...] - mean * scale

    return pl.pallas_call(
        kernel,
        out_shape=jax.ShapeDtypeStruct((2, C), jnp.float32),
        grid=(M // TM,),
        in_specs=[pl.BlockSpec((TM, C), lambda i: (i, 0)),
                  pl.BlockSpec((1, C), lambda i: (0, 0)),
                  pl.BlockSpec((1, C), lambda i: (0, 0))],
        out_specs=pl.BlockSpec((2, C), lambda i: (0, 0)),
        scratch_shapes=[pltpu.VMEM((1, C), jnp.float32),
                        pltpu.VMEM((1, C), jnp.float32)],
        compiler_params=pltpu.CompilerParams(
            dimension_semantics=("arbitrary",), vmem_limit_bytes=VMEM_LIMIT),
    )(x2, gamma_p, beta_p)


def bn_relu_apply(x4, scale, shift):
    """Standalone normalize+ReLU (only used ahead of the rare stride-2 conv)."""
    N, H, W, C = x4.shape
    M = N * H * W
    TM = _pick_tile(M)

    def kernel(x_ref, sc_ref, sh_ref, o_ref):
        o_ref[...] = jnp.maximum(x_ref[...] * sc_ref[...] + sh_ref[...], 0.0)

    out = pl.pallas_call(
        kernel,
        out_shape=jax.ShapeDtypeStruct((M, C), jnp.float32),
        grid=(M // TM,),
        in_specs=[pl.BlockSpec((TM, C), lambda i: (i, 0)),
                  pl.BlockSpec((1, C), lambda i: (0, 0)),
                  pl.BlockSpec((1, C), lambda i: (0, 0))],
        out_specs=pl.BlockSpec((TM, C), lambda i: (i, 0)),
        compiler_params=pltpu.CompilerParams(
            dimension_semantics=("parallel",), vmem_limit_bytes=VMEM_LIMIT),
    )(x4.reshape(M, C), scale, shift)
    return out.reshape(N, H, W, C)


def conv3x3_s1_fused(x4, scale, shift, w9, bias, residual=None):
    """Fused BN-apply + ReLU + 3x3 conv (stride 1, pad 1) + bias (+ residual).

    Grid over images; one image tile is DMA'd to VMEM once, the zero halo lives
    in a VMEM scratch, and the conv is 9 shifted-window bf16 matmuls with f32
    accumulation. No im2col, no BN intermediate in HBM."""
    N, H, W, Cin_p = x4.shape
    Cout_p = w9.shape[-1]
    Ho, Wo = H, W
    has_res = residual is not None
    # TODO(synk): for very large spatial sizes an H-tiling with halo overlap
    # would be needed; here one image per grid step easily fits VMEM.

    def kernel(*refs):
        if has_res:
            x_ref, sc_ref, sh_ref, w_ref, b_ref, res_ref, o_ref, pad_ref = refs
        else:
            x_ref, sc_ref, sh_ref, w_ref, b_ref, o_ref, pad_ref = refs
        # BN-apply + ReLU on the input tile (f32 math).
        y = jnp.maximum(
            x_ref[...] * sc_ref[...].reshape(1, 1, 1, Cin_p)
            + sh_ref[...].reshape(1, 1, 1, Cin_p), 0.0)
        # Zero halo in VMEM scratch (re-zeroed every step: safe under megacore).
        pad_ref[...] = jnp.zeros_like(pad_ref)
        pad_ref[:, 1:H + 1, 1:W + 1, :] = y
        # 9 shifted-window matmuls, bf16 MXU inputs, f32 accumulator.
        acc = jnp.zeros((Ho * Wo, Cout_p), jnp.float32)
        for kh in range(3):
            for kw in range(3):
                win = pad_ref[:, kh:kh + Ho, kw:kw + Wo, :]
                win = win.reshape(Ho * Wo, Cin_p).astype(jnp.bfloat16)
                acc = acc + jnp.dot(win, w_ref[kh * 3 + kw],
                                    preferred_element_type=jnp.float32)
        out = acc + b_ref[...]
        if has_res:
            out = out + res_ref[...].reshape(Ho * Wo, Cout_p)
        o_ref[...] = out.reshape(1, Ho, Wo, Cout_p)

    in_specs = [
        pl.BlockSpec((1, H, W, Cin_p), lambda n: (n, 0, 0, 0)),
        pl.BlockSpec((1, Cin_p), lambda n: (0, 0)),
        pl.BlockSpec((1, Cin_p), lambda n: (0, 0)),
        pl.BlockSpec((9, Cin_p, Cout_p), lambda n: (0, 0, 0)),
        pl.BlockSpec((1, Cout_p), lambda n: (0, 0)),
    ]
    args = [x4, scale, shift, w9, bias]
    if has_res:
        in_specs.append(pl.BlockSpec((1, Ho, Wo, Cout_p), lambda n: (n, 0, 0, 0)))
        args.append(residual)

    return pl.pallas_call(
        kernel,
        out_shape=jax.ShapeDtypeStruct((N, Ho, Wo, Cout_p), jnp.float32),
        grid=(N,),
        in_specs=in_specs,
        out_specs=pl.BlockSpec((1, Ho, Wo, Cout_p), lambda n: (n, 0, 0, 0)),
        scratch_shapes=[pltpu.VMEM((1, H + 2, W + 2, Cin_p), jnp.float32)],
        compiler_params=pltpu.CompilerParams(
            dimension_semantics=("parallel",), vmem_limit_bytes=VMEM_LIMIT),
    )(*args)


def conv3x3_s2(o1, w9, bias):
    """3x3 conv, stride 2, pad 1, on an already BN+ReLU'd input.

    The stride is handled via an even/odd phase decomposition built in the
    wrapper, so the kernel only uses unit-stride window slices."""
    N, H, W, Cin_p = o1.shape
    Ho, Wo = H // 2, W // 2
    Cout_p = w9.shape[-1]
    o1p = jnp.pad(o1, ((0, 0), (1, 1), (1, 1), (0, 0)))
    phases = [o1p[:, p::2, q::2, :] for p in range(2) for q in range(2)]

    def kernel(p00, p01, p10, p11, w_ref, b_ref, o_ref):
        ph = ((p00, p01), (p10, p11))
        acc = jnp.zeros((Ho * Wo, Cout_p), jnp.float32)
        for kh in range(3):
            for kw in range(3):
                src = ph[kh % 2][kw % 2]
                win = src[:, kh // 2:kh // 2 + Ho, kw // 2:kw // 2 + Wo, :]
                win = win.reshape(Ho * Wo, Cin_p).astype(jnp.bfloat16)
                acc = acc + jnp.dot(win, w_ref[kh * 3 + kw],
                                    preferred_element_type=jnp.float32)
        o_ref[...] = (acc + b_ref[...]).reshape(1, Ho, Wo, Cout_p)

    phase_spec = pl.BlockSpec((1, Ho + 1, Wo + 1, Cin_p), lambda n: (n, 0, 0, 0))
    return pl.pallas_call(
        kernel,
        out_shape=jax.ShapeDtypeStruct((N, Ho, Wo, Cout_p), jnp.float32),
        grid=(N,),
        in_specs=[phase_spec, phase_spec, phase_spec, phase_spec,
                  pl.BlockSpec((9, Cin_p, Cout_p), lambda n: (0, 0, 0)),
                  pl.BlockSpec((1, Cout_p), lambda n: (0, 0))],
        out_specs=pl.BlockSpec((1, Ho, Wo, Cout_p), lambda n: (n, 0, 0, 0)),
        compiler_params=pltpu.CompilerParams(
            dimension_semantics=("parallel",), vmem_limit_bytes=VMEM_LIMIT),
    )(*phases, w9, bias)


def bn_conv1x1(x2, scale, shift, w, bias):
    """Fused BN-apply + ReLU + 1x1 conv (matmul) + bias on a 2-D slab."""
    M, Cin_p = x2.shape
    Cout_p = w.shape[-1]
    TM = _pick_tile(M)

    def kernel(x_ref, sc_ref, sh_ref, w_ref, b_ref, o_ref):
        y = jnp.maximum(x_ref[...] * sc_ref[...] + sh_ref[...], 0.0)
        o_ref[...] = (jnp.dot(y.astype(jnp.bfloat16), w_ref[...],
                              preferred_element_type=jnp.float32) + b_ref[...])

    return pl.pallas_call(
        kernel,
        out_shape=jax.ShapeDtypeStruct((M, Cout_p), jnp.float32),
        grid=(M // TM,),
        in_specs=[pl.BlockSpec((TM, Cin_p), lambda i: (i, 0)),
                  pl.BlockSpec((1, Cin_p), lambda i: (0, 0)),
                  pl.BlockSpec((1, Cin_p), lambda i: (0, 0)),
                  pl.BlockSpec((Cin_p, Cout_p), lambda i: (0, 0)),
                  pl.BlockSpec((1, Cout_p), lambda i: (0, 0))],
        out_specs=pl.BlockSpec((TM, Cout_p), lambda i: (i, 0)),
        compiler_params=pltpu.CompilerParams(
            dimension_semantics=("parallel",), vmem_limit_bytes=VMEM_LIMIT),
    )(x2, scale, shift, w, bias)


# ------------------------------ module forward ------------------------------

def std_block_forward(x4, p):
    """One StdBlock on a lane-padded NHWC activation (padded channels stay 0)."""
    N, H, W, Cin_p = x4.shape
    s = p["stride"]
    Ho, Wo = H // s, W // s
    Cout_p = p["w1p"].shape[-1]

    # BN1 statistics -> per-channel scale/shift (2, Cin_p)
    ss1 = bn_scale_shift(x4.reshape(N * H * W, Cin_p), p["g1p"], p["bt1p"])
    sc1, sh1 = ss1[0:1, :], ss1[1:2, :]

    # conv1 (3x3, stride s), BN1+ReLU fused into the conv when stride == 1
    if s == 1:
        o1 = None
        z = conv3x3_s1_fused(x4, sc1, sh1, p["w1p"], p["b1p"])
    else:
        o1 = bn_relu_apply(x4, sc1, sh1)
        z = conv3x3_s2(o1, p["w1p"], p["b1p"])

    # BN2 statistics on z
    ss2 = bn_scale_shift(z.reshape(N * Ho * Wo, Cout_p), p["g2p"], p["bt2p"])

    # shortcut: projection(o1) or identity(inputs)
    if p["wpp"] is not None:
        if s == 1:
            shortcut = bn_conv1x1(x4.reshape(N * H * W, Cin_p), sc1, sh1,
                                  p["wpp"], p["bpp"])
        else:
            o1s = o1[:, ::s, ::s, :].reshape(N * Ho * Wo, Cin_p)
            ident_sc = jnp.ones((1, Cin_p), jnp.float32)
            ident_sh = jnp.zeros((1, Cin_p), jnp.float32)
            shortcut = bn_conv1x1(o1s, ident_sc, ident_sh, p["wpp"], p["bpp"])
        shortcut = shortcut.reshape(N, Ho, Wo, Cout_p)
    else:
        shortcut = x4  # identity (stride 1, Cin_p == Cout_p)

    # conv2 (3x3, stride 1) with BN2+ReLU and the residual add fused in-kernel
    return conv3x3_s1_fused(z, ss2[0:1, :], ss2[1:2, :], p["w2p"], p["b2p"],
                            residual=shortcut)


def group_layer_forward(x_nchw, params):
    N, Cin, H, W = x_nchw.shape
    cin_p = params[0]["g1p"].shape[-1]
    x = jnp.transpose(x_nchw, (0, 2, 3, 1))                      # NCHW -> NHWC
    x = jnp.pad(x, ((0, 0), (0, 0), (0, 0), (0, cin_p - Cin)))   # lane-pad once
    for p in params:
        x = std_block_forward(x, p)
    x = x[..., :params[-1]["cout"]]                               # drop lane pad
    return jnp.transpose(x, (0, 3, 1, 2))                         # NHWC -> NCHW


# ------------------------------ param packing -------------------------------

def _pack_conv3x3(w_oihw, cin_p, cout_p):
    cout, cin = w_oihw.shape[0], w_oihw.shape[1]
    w = jnp.transpose(w_oihw, (2, 3, 1, 0)).reshape(9, cin, cout)  # (kh*3+kw, ci, co)
    w = jnp.pad(w, ((0, 0), (0, cin_p - cin), (0, cout_p - cout)))
    return w.astype(jnp.bfloat16)


def _pack_conv1x1(w_oihw, cin_p, cout_p):
    cout, cin = w_oihw.shape[0], w_oihw.shape[1]
    w = jnp.transpose(w_oihw.reshape(cout, cin), (1, 0))
    w = jnp.pad(w, ((0, cin_p - cin), (0, cout_p - cout)))
    return w.astype(jnp.bfloat16)


def _pack_vec(v, c_p):
    return jnp.pad(v.reshape(1, -1), ((0, 0), (0, c_p - v.shape[0]))).astype(jnp.float32)


def _init_conv(key, cout, cin, k):
    kw, kb = jax.random.split(key)
    fan_in = cin * k * k
    w = jax.random.normal(kw, (cout, cin, k, k), jnp.float32) / jnp.sqrt(fan_in)
    b = 0.01 * jax.random.normal(kb, (cout,), jnp.float32)
    return w, b


def init_group_params(key, in_filters, out_filters, stride, resnet_size):
    params = []
    for i in range(resnet_size):
        cin = in_filters if i == 0 else out_filters
        s = stride if i == 0 else 1
        if cin == out_filters:
            assert s == 1, "identity shortcut requires stride 1 (as in the PyTorch module)"
        key, k1, k2, k3, kg1, kb1, kg2, kb2 = jax.random.split(key, 8)
        w1, b1 = _init_conv(k1, out_filters, cin, 3)
        w2, b2 = _init_conv(k2, out_filters, out_filters, 3)
        if cin != out_filters:
            wp, bp = _init_conv(k3, out_filters, cin, 1)
        else:
            wp, bp = None, None
        bn1_g = 1.0 + 0.1 * jax.random.normal(kg1, (cin,), jnp.float32)
        bn1_b = 0.1 * jax.random.normal(kb1, (cin,), jnp.float32)
        bn2_g = 1.0 + 0.1 * jax.random.normal(kg2, (out_filters,), jnp.float32)
        bn2_b = 0.1 * jax.random.normal(kb2, (out_filters,), jnp.float32)
        cin_p, cout_p = _round_up(cin), _round_up(out_filters)
        params.append({
            "stride": s, "cout": out_filters,
            # raw (PyTorch-layout) params used by the pure-JAX reference
            "w1": w1, "b1": b1, "w2": w2, "b2": b2, "wp": wp, "bp": bp,
            "bn1_g": bn1_g, "bn1_b": bn1_b, "bn2_g": bn2_g, "bn2_b": bn2_b,
            # pre-packed, lane-padded tensors consumed by the Pallas kernels
            "w1p": _pack_conv3x3(w1, cin_p, cout_p), "b1p": _pack_vec(b1, cout_p),
            "w2p": _pack_conv3x3(w2, cout_p, cout_p), "b2p": _pack_vec(b2, cout_p),
            "wpp": _pack_conv1x1(wp, cin_p, cout_p) if wp is not None else None,
            "bpp": _pack_vec(bp, cout_p) if bp is not None else None,
            "g1p": _pack_vec(bn1_g, cin_p), "bt1p": _pack_vec(bn1_b, cin_p),
            "g2p": _pack_vec(bn2_g, cout_p), "bt2p": _pack_vec(bn2_b, cout_p),
        })
    # TODO(synk): BatchNorm running-stat (momentum) updates are training-time
    # module-state side effects, not part of the forward output; not reproduced.
    return params


# ------------------------------ pure-JAX reference ---------------------------
# (matches the kernel numerics: BN/bias/residual in f32, conv inputs quantized
#  to bf16 with f32 accumulation)

def _ref_bn_relu(x, g, b):
    mean = x.mean(axis=(0, 1, 2), keepdims=True)
    var = ((x - mean) ** 2).mean(axis=(0, 1, 2), keepdims=True)
    y = (x - mean) * lax.rsqrt(var + EPS) * g.reshape(1, 1, 1, -1) + b.reshape(1, 1, 1, -1)
    return jnp.maximum(y, 0.0)


def _ref_conv(x, w_oihw, bias, stride, pad):
    out = lax.conv_general_dilated(
        x.astype(jnp.bfloat16),
        jnp.transpose(w_oihw, (2, 3, 1, 0)).astype(jnp.bfloat16),
        window_strides=(stride, stride), padding=[(pad, pad), (pad, pad)],
        dimension_numbers=("NHWC", "HWIO", "NHWC"),
        preferred_element_type=jnp.float32)
    return out + bias.reshape(1, 1, 1, -1)


def ref_group_forward(x_nchw, params):
    x = jnp.transpose(x_nchw, (0, 2, 3, 1))
    for p in params:
        o1 = _ref_bn_relu(x, p["bn1_g"], p["bn1_b"])
        z = _ref_conv(o1, p["w1"], p["b1"], p["stride"], 1)
        z = _ref_bn_relu(z, p["bn2_g"], p["bn2_b"])
        z = _ref_conv(z, p["w2"], p["b2"], 1, 1)
        if p["wp"] is not None:
            sc = _ref_conv(o1, p["wp"], p["bp"], p["stride"], 0)
        else:
            sc = x
        x = z + sc
    return jnp.transpose(x, (0, 3, 1, 2))


# ------------------------------------ main -----------------------------------

if __name__ == "__main__":
    key = jax.random.PRNGKey(0)
    kx, kp = jax.random.split(key)

    # group_layer(in_filters=4, out_filters=8, stride=2, resnet_size=2)
    N, Cin, H, W = 2, 4, 16, 16
    Cout, stride, resnet_size = 8, 2, 2

    x_nchw = jax.random.normal(kx, (N, Cin, H, W), jnp.float32)
    params = init_group_params(kp, Cin, Cout, stride, resnet_size)

    fwd = jax.jit(lambda xx: group_layer_forward(xx, params))
    out = jax.block_until_ready(fwd(x_nchw))

    ref = ref_group_forward(x_nchw, params)
    assert out.shape == ref.shape == (N, Cout, H // stride, W // stride), out.shape
    max_err = float(jnp.max(jnp.abs(out - ref)))
    # bf16 matmul inputs on both sides; tolerance covers occasional 1-ulp bf16
    # rounding differences from f32 op-ordering in the BN-applied inputs.
    assert jnp.allclose(out, ref, atol=2e-2, rtol=2e-2), max_err

    print("KERNEL_OK")
</pallas_src>

<mosaic_0001>
module attributes {stable_mosaic.version = 11 : i64} {
  func.func @kernel(%arg0: i32, %arg1: memref<512x128xf32, #tpu.memory_space<vmem>>, %arg2: memref<1x128xf32, #tpu.memory_space<vmem>>, %arg3: memref<1x128xf32, #tpu.memory_space<vmem>>, %arg4: memref<2x128xf32, #tpu.memory_space<vmem>>, %arg5: memref<1x128xf32, #tpu.memory_space<vmem>>, %arg6: memref<1x128xf32, #tpu.memory_space<vmem>>) attributes {dimension_semantics = [#tpu.dimension_semantics<arbitrary>], iteration_bounds = array<i64: 1>, scalar_prefetch = 0 : i64, scratch_operands = 2 : i64, tpu.core_type = #tpu.core_type<tc>, window_params = [{transform_indices = @transform_0, window_bounds = array<i64: 512, 128>}, {pipeline_mode = #tpu.pipeline_mode<synchronous>, transform_indices = @transform_1, window_bounds = array<i64: 1, 128>}, {pipeline_mode = #tpu.pipeline_mode<synchronous>, transform_indices = @transform_2, window_bounds = array<i64: 1, 128>}, {pipeline_mode = #tpu.pipeline_mode<synchronous>, transform_indices = @transform_3, window_bounds = array<i64: 2, 128>}]} {
    %c0_i32 = arith.constant 0 : i32
    %0 = arith.cmpi eq, %arg0, %c0_i32 : i32
    %1 = arith.extui %0 : i1 to i32
    %c0_i32_0 = arith.constant 0 : i32
    %2 = arith.cmpi ne, %1, %c0_i32_0 : i32
    scf.if %2 {
      %cst_13 = arith.constant 0.000000e+00 : f32
      %18 = vector.broadcast %cst_13 : f32 to vector<1x128xf32>
      %c0_14 = arith.constant 0 : index
      %c0_15 = arith.constant 0 : index
      %19 = vector.load %arg5[%c0_14, %c0_15] : memref<1x128xf32, #tpu.memory_space<vmem>>, vector<1x128xf32>
      tpu.vector_store %arg5[%c0_14, %c0_15], %18 {strides = array<i32>} : memref<1x128xf32, #tpu.memory_space<vmem>>, vector<1x128xf32>,
      %cst_16 = arith.constant 0.000000e+00 : f32
      %20 = vector.broadcast %cst_16 : f32 to vector<1x128xf32>
      %c0_17 = arith.constant 0 : index
      %c0_18 = arith.constant 0 : index
      %21 = vector.load %arg6[%c0_17, %c0_18] : memref<1x128xf32, #tpu.memory_space<vmem>>, vector<1x128xf32>
      tpu.vector_store %arg6[%c0_17, %c0_18], %20 {strides = array<i32>} : memref<1x128xf32, #tpu.memory_space<vmem>>, vector<1x128xf32>,
    } else {
    }
    %c0 = arith.constant 0 : index
    %c0_1 = arith.constant 0 : index
    %3 = vector.load %arg1[%c0, %c0_1] : memref<512x128xf32, #tpu.memory_space<vmem>>, vector<512x128xf32>
    %c0_2 = arith.constant 0 : index
    %c0_3 = arith.constant 0 : index
    %4 = vector.load %arg5[%c0_2, %c0_3] : memref<1x128xf32, #tpu.memory_space<vmem>>, vector<1x128xf32>
    %cst = arith.constant dense<0.000000e+00> : vector<128xf32>
    %5 = vector.multi_reduction <add>, %3, %cst [0] : vector<512x128xf32> to vector<128xf32>
    %6 = vector.shape_cast %5 : vector<128xf32> to vector<1x128xf32>
    %7 = arith.addf %4, %6 : vector<1x128xf32>
    %c0_4 = arith.constant 0 : index
    %c0_5 = arith.constant 0 : index
    %8 = vector.load %arg5[%c0_4, %c0_5] : memref<1x128xf32, #tpu.memory_space<vmem>>, vector<1x128xf32>
    tpu.vector_store %arg5[%c0_4, %c0_5], %7 {strides = array<i32>} : memref<1x128xf32, #tpu.memory_space<vmem>>, vector<1x128xf32>,
    %c0_6 = arith.constant 0 : index
    %c0_7 = arith.constant 0 : index
    %9 = vector.load %arg6[%c0_6, %c0_7] : memref<1x128xf32, #tpu.memory_space<vmem>>, vector<1x128xf32>
    %10 = arith.mulf %3, %3 : vector<512x128xf32>
    %cst_8 = arith.constant dense<0.000000e+00> : vector<128xf32>
    %11 = vector.multi_reduction <add>, %10, %cst_8 [0] : vector<512x128xf32> to vector<128xf32>
    %12 = vector.shape_cast %11 : vector<128xf32> to vector<1x128xf32>
    %13 = arith.addf %9, %12 : vector<1x128xf32>
    %c0_9 = arith.constant 0 : index
    %c0_10 = arith.constant 0 : index
    %14 = vector.load %arg6[%c0_9, %c0_10] : memref<1x128xf32, #tpu.memory_space<vmem>>, vector<1x128xf32>
    tpu.vector_store %arg6[%c0_9, %c0_10], %13 {strides = array<i32>} : memref<1x128xf32, #tpu.memory_space<vmem>>, vector<1x128xf32>,
    %c0_i32_11 = arith.constant 0 : i32
    %15 = arith.cmpi eq, %arg0, %c0_i32_11 : i32
    %16 = arith.extui %15 : i1 to i32
    %c0_i32_12 = arith.constant 0 : i32
    %17 = arith.cmpi ne, %16, %c0_i32_12 : i32
    scf.if %17 {
      %c0_13 = arith.constant 0 : index
      %c0_14 = arith.constant 0 : index
      %18 = vector.load %arg5[%c0_13, %c0_14] : memref<1x128xf32, #tpu.memory_space<vmem>>, vector<1x128xf32>
      %cst_15 = arith.constant 0.001953125 : f32
      %19 = vector.broadcast %cst_15 : f32 to vector<1x128xf32>
      %20 = arith.mulf %18, %19 : vector<1x128xf32>
      %c0_16 = arith.constant 0 : index
      %c0_17 = arith.constant 0 : index
      %21 = vector.load %arg6[%c0_16, %c0_17] : memref<1x128xf32, #tpu.memory_space<vmem>>, vector<1x128xf32>
      %cst_18 = arith.constant 0.001953125 : f32
      %22 = vector.broadcast %cst_18 : f32 to vector<1x128xf32>
      %23 = arith.mulf %21, %22 : vector<1x128xf32>
      %24 = arith.mulf %20, %20 : vector<1x128xf32>
      %25 = arith.subf %23, %24 : vector<1x128xf32>
      %c0_19 = arith.constant 0 : index
      %c0_20 = arith.constant 0 : index
      %26 = vector.load %arg2[%c0_19, %c0_20] : memref<1x128xf32, #tpu.memory_space<vmem>>, vector<1x128xf32>
      %cst_21 = arith.constant 9.99999974E-6 : f32
      %27 = vector.broadcast %cst_21 : f32 to vector<1x128xf32>
      %28 = arith.addf %25, %27 : vector<1x128xf32>
      %29 = math.rsqrt %28 : vector<1x128xf32>
      %30 = arith.mulf %26, %29 : vector<1x128xf32>
      %c0_22 = arith.constant 0 : index
      %c0_23 = arith.constant 0 : index
      %31 = vector.load %arg4[%c0_22, %c0_23] : memref<2x128xf32, #tpu.memory_space<vmem>>, vector<1x128xf32>
      tpu.vector_store %arg4[%c0_22, %c0_23], %30 {strides = array<i32>} : memref<2x128xf32, #tpu.memory_space<vmem>>, vector<1x128xf32>,
      %c0_24 = arith.constant 0 : index
      %c0_25 = arith.constant 0 : index
      %32 = vector.load %arg3[%c0_24, %c0_25] : memref<1x128xf32, #tpu.memory_space<vmem>>, vector<1x128xf32>
      %33 = arith.mulf %20, %30 : vector<1x128xf32>
      %34 = arith.subf %32, %33 : vector<1x128xf32>
      %c1 = arith.constant 1 : index
      %c0_26 = arith.constant 0 : index
      %35 = vector.load %arg4[%c1, %c0_26] : memref<2x128xf32, #tpu.memory_space<vmem>>, vector<1x128xf32>
      tpu.vector_store %arg4[%c1, %c0_26], %34 {strides = array<i32>} : memref<2x128xf32, #tpu.memory_space<vmem>>, vector<1x128xf32>,
    } else {
    }
    return
  }
  func.func @transform_0(%arg0: i32) -> (i32, i32) {
    %c0_i32 = arith.constant 0 : i32
    %c0_i32_0 = arith.constant 0 : i32
    return %arg0, %c0_i32 : i32, i32
  }
  func.func @transform_1(%arg0: i32) -> (i32, i32) {
    %c0_i32 = arith.constant 0 : i32
    %c0_i32_0 = arith.constant 0 : i32
    %c0_i32_1 = arith.constant 0 : i32
    return %c0_i32, %c0_i32_0 : i32, i32
  }
  func.func @transform_2(%arg0: i32) -> (i32, i32) {
    %c0_i32 = arith.constant 0 : i32
    %c0_i32_0 = arith.constant 0 : i32
    %c0_i32_1 = arith.constant 0 : i32
    return %c0_i32, %c0_i32_0 : i32, i32
  }
  func.func @transform_3(%arg0: i32) -> (i32, i32) {
    %c0_i32 = arith.constant 0 : i32
    %c0_i32_0 = arith.constant 0 : i32
    %c0_i32_1 = arith.constant 0 : i32
    return %c0_i32, %c0_i32_0 : i32, i32
  }
}

module attributes {stable_mosaic.version = 11 : i64} {
  func.func @kernel(%arg0: i32, %arg1: memref<512x128xf32, #tpu.memory_space<vmem>>, %arg2: memref<1x128xf32, #tpu.memory_space<vmem>>, %arg3: memref<1x128xf32, #tpu.memory_space<vmem>>, %arg4: memref<512x128xf32, #tpu.memory_space<vmem>>) attributes {dimension_semantics = [#tpu.dimension_semantics<parallel>], iteration_bounds = array<i64: 1>, scalar_prefetch = 0 : i64, scratch_operands = 0 : i64, tpu.core_type = #tpu.core_type<tc>, window_params = [{transform_indices = @transform_0, window_bounds = array<i64: 512, 128>}, {pipeline_mode = #tpu.pipeline_mode<synchronous>, transform_indices = @transform_1, window_bounds = array<i64: 1, 128>}, {pipeline_mode = #tpu.pipeline_mode<synchronous>, transform_indices = @transform_2, window_bounds = array<i64: 1, 128>}, {transform_indices = @transform_3, window_bounds = array<i64: 512, 128>}]} {
    %c0 = arith.constant 0 : index
    %c0_0 = arith.constant 0 : index
    %0 = vector.load %arg1[%c0, %c0_0] : memref<512x128xf32, #tpu.memory_space<vmem>>, vector<512x128xf32>
    %c0_1 = arith.constant 0 : index
    %c0_2 = arith.constant 0 : index
    %1 = vector.load %arg2[%c0_1, %c0_2] : memref<1x128xf32, #tpu.memory_space<vmem>>, vector<1x128xf32>
    %2 = vector.broadcast %1 : vector<1x128xf32> to vector<512x128xf32>
    %3 = arith.mulf %0, %2 : vector<512x128xf32>
    %c0_3 = arith.constant 0 : index
    %c0_4 = arith.constant 0 : index
    %4 = vector.load %arg3[%c0_3, %c0_4] : memref<1x128xf32, #tpu.memory_space<vmem>>, vector<1x128xf32>
    %5 = vector.broadcast %4 : vector<1x128xf32> to vector<512x128xf32>
    %6 = arith.addf %3, %5 : vector<512x128xf32>
    %cst = arith.constant 0.000000e+00 : f32
    %7 = vector.broadcast %cst : f32 to vector<512x128xf32>
    %8 = arith.maximumf %6, %7 : vector<512x128xf32>
    %c0_5 = arith.constant 0 : index
    %c0_6 = arith.constant 0 : index
    %9 = vector.load %arg4[%c0_5, %c0_6] : memref<512x128xf32, #tpu.memory_space<vmem>>, vector<512x128xf32>
    tpu.vector_store %arg4[%c0_5, %c0_6], %8 {strides = array<i32>} : memref<512x128xf32, #tpu.memory_space<vmem>>, vector<512x128xf32>,
    return
  }
  func.func @transform_0(%arg0: i32) -> (i32, i32) {
    %c0_i32 = arith.constant 0 : i32
    %c0_i32_0 = arith.constant 0 : i32
    return %arg0, %c0_i32 : i32, i32
  }
  func.func @transform_1(%arg0: i32) -> (i32, i32) {
    %c0_i32 = arith.constant 0 : i32
    %c0_i32_0 = arith.constant 0 : i32
    %c0_i32_1 = arith.constant 0 : i32
    return %c0_i32, %c0_i32_0 : i32, i32
  }
  func.func @transform_2(%arg0: i32) -> (i32, i32) {
    %c0_i32 = arith.constant 0 : i32
    %c0_i32_0 = arith.constant 0 : i32
    %c0_i32_1 = arith.constant 0 : i32
    return %c0_i32, %c0_i32_0 : i32, i32
  }
  func.func @transform_3(%arg0: i32) -> (i32, i32) {
    %c0_i32 = arith.constant 0 : i32
    %c0_i32_0 = arith.constant 0 : i32
    return %arg0, %c0_i32 : i32, i32
  }
}

module attributes {stable_mosaic.version = 11 : i64} {
  func.func @kernel(%arg0: i32, %arg1: memref<128x128xf32, #tpu.memory_space<vmem>>, %arg2: memref<1x128xf32, #tpu.memory_space<vmem>>, %arg3: memref<1x128xf32, #tpu.memory_space<vmem>>, %arg4: memref<128x128xbf16, #tpu.memory_space<vmem>>, %arg5: memref<1x128xf32, #tpu.memory_space<vmem>>, %arg6: memref<128x128xf32, #tpu.memory_space<vmem>>) attributes {dimension_semantics = [#tpu.dimension_semantics<parallel>], iteration_bounds = array<i64: 1>, scalar_prefetch = 0 : i64, scratch_operands = 0 : i64, tpu.core_type = #tpu.core_type<tc>, window_params = [{transform_indices = @transform_0, window_bounds = array<i64: 128, 128>}, {pipeline_mode = #tpu.pipeline_mode<synchronous>, transform_indices = @transform_1, window_bounds = array<i64: 1, 128>}, {pipeline_mode = #tpu.pipeline_mode<synchronous>, transform_indices = @transform_2, window_bounds = array<i64: 1, 128>}, {pipeline_mode = #tpu.pipeline_mode<synchronous>, transform_indices = @transform_3, window_bounds = array<i64: 128, 128>}, {pipeline_mode = #tpu.pipeline_mode<synchronous>, transform_indices = @transform_4, window_bounds = array<i64: 1, 128>}, {transform_indices = @transform_5, window_bounds = array<i64: 128, 128>}]} {
    %c0 = arith.constant 0 : index
    %c0_0 = arith.constant 0 : index
    %0 = vector.load %arg1[%c0, %c0_0] : memref<128x128xf32, #tpu.memory_space<vmem>>, vector<128x128xf32>
    %c0_1 = arith.constant 0 : index
    %c0_2 = arith.constant 0 : index
    %1 = vector.load %arg2[%c0_1, %c0_2] : memref<1x128xf32, #tpu.memory_space<vmem>>, vector<1x128xf32>
    %2 = vector.broadcast %1 : vector<1x128xf32> to vector<128x128xf32>
    %3 = arith.mulf %0, %2 : vector<128x128xf32>
    %c0_3 = arith.constant 0 : index
    %c0_4 = arith.constant 0 : index
    %4 = vector.load %arg3[%c0_3, %c0_4] : memref<1x128xf32, #tpu.memory_space<vmem>>, vector<1x128xf32>
    %5 = vector.broadcast %4 : vector<1x128xf32> to vector<128x128xf32>
    %6 = arith.addf %3, %5 : vector<128x128xf32>
    %cst = arith.constant 0.000000e+00 : f32
    %7 = vector.broadcast %cst : f32 to vector<128x128xf32>
    %8 = arith.maximumf %6, %7 : vector<128x128xf32>
    %9 = arith.truncf %8 : vector<128x128xf32> to vector<128x128xbf16>
    %c0_5 = arith.constant 0 : index
    %c0_6 = arith.constant 0 : index
    %10 = vector.load %arg4[%c0_5, %c0_6] : memref<128x128xbf16, #tpu.memory_space<vmem>>, vector<128x128xbf16>
    %cst_7 = arith.constant dense<0.000000e+00> : vector<128x128xf32>
    %11 = tpu.matmul %9, %10, %cst_7 {dimension_numbers = #tpu.dot_dimension_numbers<[1], [0], [0], [1], [0, 0, 1, 1], [], []>} : vector<128x128xbf16>, vector<128x128xbf16>, vector<128x128xf32> -> vector<128x128xf32>
    %c0_8 = arith.constant 0 : index
    %c0_9 = arith.constant 0 : index
    %12 = vector.load %arg5[%c0_8, %c0_9] : memref<1x128xf32, #tpu.memory_space<vmem>>, vector<1x128xf32>
    %13 = vector.broadcast %12 : vector<1x128xf32> to vector<128x128xf32>
    %14 = arith.addf %11, %13 : vector<128x128xf32>
    %c0_10 = arith.constant 0 : index
    %c0_11 = arith.constant 0 : index
    %15 = vector.load %arg6[%c0_10, %c0_11] : memref<128x128xf32, #tpu.memory_space<vmem>>, vector<128x128xf32>
    tpu.vector_store %arg6[%c0_10, %c0_11], %14 {strides = array<i32>} : memref<128x128xf32, #tpu.memory_space<vmem>>, vector<128x128xf32>,
    return
  }
  func.func @transform_0(%arg0: i32) -> (i32, i32) {
    %c0_i32 = arith.constant 0 : i32
    %c0_i32_0 = arith.constant 0 : i32
    return %arg0, %c0_i32 : i32, i32
  }
  func.func @transform_1(%arg0: i32) -> (i32, i32) {
    %c0_i32 = arith.constant 0 : i32
    %c0_i32_0 = arith.constant 0 : i32
    %c0_i32_1 = arith.constant 0 : i32
    return %c0_i32, %c0_i32_0 : i32, i32
  }
  func.func @transform_2(%arg0: i32) -> (i32, i32) {
    %c0_i32 = arith.constant 0 : i32
    %c0_i32_0 = arith.constant 0 : i32
    %c0_i32_1 = arith.constant 0 : i32
    return %c0_i32, %c0_i32_0 : i32, i32
  }
  func.func @transform_3(%arg0: i32) -> (i32, i32) {
    %c0_i32 = arith.constant 0 : i32
    %c0_i32_0 = arith.constant 0 : i32
    %c0_i32_1 = arith.constant 0 : i32
    return %c0_i32, %c0_i32_0 : i32, i32
  }
  func.func @transform_4(%arg0: i32) -> (i32, i32) {
    %c0_i32 = arith.constant 0 : i32
    %c0_i32_0 = arith.constant 0 : i32
    %c0_i32_1 = arith.constant 0 : i32
    return %c0_i32, %c0_i32_0 : i32, i32
  }
  func.func @transform_5(%arg0: i32) -> (i32, i32) {
    %c0_i32 = arith.constant 0 : i32
    %c0_i32_0 = arith.constant 0 : i32
    return %arg0, %c0_i32 : i32, i32
  }
}

module attributes {stable_mosaic.version = 11 : i64} {
  func.func @kernel(%arg0: i32, %arg1: memref<1x9x9x128xf32, #tpu.memory_space<vmem>>, %arg2: memref<1x9x9x128xf32, #tpu.memory_space<vmem>>, %arg3: memref<1x9x9x128xf32, #tpu.memory_space<vmem>>, %arg4: memref<1x9x9x128xf32, #tpu.memory_space<vmem>>, %arg5: memref<9x128x128xbf16, #tpu.memory_space<vmem>>, %arg6: memref<1x128xf32, #tpu.memory_space<vmem>>, %arg7: memref<1x8x8x128xf32, #tpu.memory_space<vmem>>) attributes {dimension_semantics = [#tpu.dimension_semantics<parallel>], iteration_bounds = array<i64: 2>, scalar_prefetch = 0 : i64, scratch_operands = 0 : i64, tpu.core_type = #tpu.core_type<tc>, window_params = [{transform_indices = @transform_0, window_bounds = array<i64: 1, 9, 9, 128>}, {transform_indices = @transform_1, window_bounds = array<i64: 1, 9, 9, 128>}, {transform_indices = @transform_2, window_bounds = array<i64: 1, 9, 9, 128>}, {transform_indices = @transform_3, window_bounds = array<i64: 1, 9, 9, 128>}, {pipeline_mode = #tpu.pipeline_mode<synchronous>, transform_indices = @transform_4, window_bounds = array<i64: 9, 128, 128>}, {pipeline_mode = #tpu.pipeline_mode<synchronous>, transform_indices = @transform_5, window_bounds = array<i64: 1, 128>}, {transform_indices = @transform_6, window_bounds = array<i64: 1, 8, 8, 128>}]} {
    %cst = arith.constant 0.000000e+00 : f32
    %0 = vector.broadcast %cst : f32 to vector<64x128xf32>
    %c0 = arith.constant 0 : index
    %c0_0 = arith.constant 0 : index
    %c0_1 = arith.constant 0 : index
    %c0_2 = arith.constant 0 : index
    %1 = vector.load %arg1[%c0, %c0_0, %c0_1, %c0_2] : memref<1x9x9x128xf32, #tpu.memory_space<vmem>>, vector<1x8x8x128xf32>
    %2 = vector.shape_cast %1 : vector<1x8x8x128xf32> to vector<64x128xf32>
    %3 = arith.truncf %2 : vector<64x128xf32> to vector<64x128xbf16>
    %c0_3 = arith.constant 0 : index
    %c0_4 = arith.constant 0 : index
    %c0_5 = arith.constant 0 : index
    %4 = vector.load %arg5[%c0_3, %c0_4, %c0_5] : memref<9x128x128xbf16, #tpu.memory_space<vmem>>, vector<1x128x128xbf16>
    %5 = vector.shape_cast %4 : vector<1x128x128xbf16> to vector<128x128xbf16>
    %cst_6 = arith.constant dense<0.000000e+00> : vector<64x128xf32>
    %6 = tpu.matmul %3, %5, %cst_6 {dimension_numbers = #tpu.dot_dimension_numbers<[1], [0], [0], [1], [0, 0, 1, 1], [], []>} : vector<64x128xbf16>, vector<128x128xbf16>, vector<64x128xf32> -> vector<64x128xf32>
    %7 = arith.addf %0, %6 : vector<64x128xf32>
    %c0_7 = arith.constant 0 : index
    %c0_8 = arith.constant 0 : index
    %c0_9 = arith.constant 0 : index
    %c0_10 = arith.constant 0 : index
    %8 = vector.load %arg2[%c0_7, %c0_8, %c0_9, %c0_10] : memref<1x9x9x128xf32, #tpu.memory_space<vmem>>, vector<1x8x8x128xf32>
    %9 = vector.shape_cast %8 : vector<1x8x8x128xf32> to vector<64x128xf32>
    %10 = arith.truncf %9 : vector<64x128xf32> to vector<64x128xbf16>
    %c1 = arith.constant 1 : index
    %c0_11 = arith.constant 0 : index
    %c0_12 = arith.constant 0 : index
    %11 = vector.load %arg5[%c1, %c0_11, %c0_12] : memref<9x128x128xbf16, #tpu.memory_space<vmem>>, vector<1x128x128xbf16>
    %12 = vector.shape_cast %11 : vector<1x128x128xbf16> to vector<128x128xbf16>
    %cst_13 = arith.constant dense<0.000000e+00> : vector<64x128xf32>
    %13 = tpu.matmul %10, %12, %cst_13 {dimension_numbers = #tpu.dot_dimension_numbers<[1], [0], [0], [1], [0, 0, 1, 1], [], []>} : vector<64x128xbf16>, vector<128x128xbf16>, vector<64x128xf32> -> vector<64x128xf32>
    %14 = arith.addf %7, %13 : vector<64x128xf32>
    %c0_14 = arith.constant 0 : index
    %c0_15 = arith.constant 0 : index
    %c1_16 = arith.constant 1 : index
    %c0_17 = arith.constant 0 : index
    %15 = vector.load %arg1[%c0_14, %c0_15, %c1_16, %c0_17] : memref<1x9x9x128xf32, #tpu.memory_space<vmem>>, vector<1x8x8x128xf32>
    %16 = vector.shape_cast %15 : vector<1x8x8x128xf32> to vector<64x128xf32>
    %17 = arith.truncf %16 : vector<64x128xf32> to vector<64x128xbf16>
    %c2 = arith.constant 2 : index
    %c0_18 = arith.constant 0 : index
    %c0_19 = arith.constant 0 : index
    %18 = vector.load %arg5[%c2, %c0_18, %c0_19] : memref<9x128x128xbf16, #tpu.memory_space<vmem>>, vector<1x128x128xbf16>
    %19 = vector.shape_cast %18 : vector<1x128x128xbf16> to vector<128x128xbf16>
    %cst_20 = arith.constant dense<0.000000e+00> : vector<64x128xf32>
    %20 = tpu.matmul %17, %19, %cst_20 {dimension_numbers = #tpu.dot_dimension_numbers<[1], [0], [0], [1], [0, 0, 1, 1], [], []>} : vector<64x128xbf16>, vector<128x128xbf16>, vector<64x128xf32> -> vector<64x128xf32>
    %21 = arith.addf %14, %20 : vector<64x128xf32>
    %c0_21 = arith.constant 0 : index
    %c0_22 = arith.constant 0 : index
    %c0_23 = arith.constant 0 : index
    %c0_24 = arith.constant 0 : index
    %22 = vector.load %arg3[%c0_21, %c0_22, %c0_23, %c0_24] : memref<1x9x9x128xf32, #tpu.memory_space<vmem>>, vector<1x8x8x128xf32>
    %23 = vector.shape_cast %22 : vector<1x8x8x128xf32> to vector<64x128xf32>
    %24 = arith.truncf %23 : vector<64x128xf32> to vector<64x128xbf16>
    %c3 = arith.constant 3 : index
    %c0_25 = arith.constant 0 : index
    %c0_26 = arith.constant 0 : index
    %25 = vector.load %arg5[%c3, %c0_25, %c0_26] : memref<9x128x128xbf16, #tpu.memory_space<vmem>>, vector<1x128x128xbf16>
    %26 = vector.shape_cast %25 : vector<1x128x128xbf16> to vector<128x128xbf16>
    %cst_27 = arith.constant dense<0.000000e+00> : vector<64x128xf32>
    %27 = tpu.matmul %24, %26, %cst_27 {dimension_numbers = #tpu.dot_dimension_numbers<[1], [0], [0], [1], [0, 0, 1, 1], [], []>} : vector<64x128xbf16>, vector<128x128xbf16>, vector<64x128xf32> -> vector<64x128xf32>
    %28 = arith.addf %21, %27 : vector<64x128xf32>
    %c0_28 = arith.constant 0 : index
    %c0_29 = arith.constant 0 : index
    %c0_30 = arith.constant 0 : index
    %c0_31 = arith.constant 0 : index
    %29 = vector.load %arg4[%c0_28, %c0_29, %c0_30, %c0_31] : memref<1x9x9x128xf32, #tpu.memory_space<vmem>>, vector<1x8x8x128xf32>
    %30 = vector.shape_cast %29 : vector<1x8x8x128xf32> to vector<64x128xf32>
    %31 = arith.truncf %30 : vector<64x128xf32> to vector<64x128xbf16>
    %c4 = arith.constant 4 : index
    %c0_32 = arith.constant 0 : index
    %c0_33 = arith.constant 0 : index
    %32 = vector.load %arg5[%c4, %c0_32, %c0_33] : memref<9x128x128xbf16, #tpu.memory_space<vmem>>, vector<1x128x128xbf16>
    %33 = vector.shape_cast %32 : vector<1x128x128xbf16> to vector<128x128xbf16>
    %cst_34 = arith.constant dense<0.000000e+00> : vector<64x128xf32>
    %34 = tpu.matmul %31, %33, %cst_34 {dimension_numbers = #tpu.dot_dimension_numbers<[1], [0], [0], [1], [0, 0, 1, 1], [], []>} : vector<64x128xbf16>, vector<128x128xbf16>, vector<64x128xf32> -> vector<64x128xf32>
    %35 = arith.addf %28, %34 : vector<64x128xf32>
    %c0_35 = arith.constant 0 : index
    %c0_36 = arith.constant 0 : index
    %c1_37 = arith.constant 1 : index
    %c0_38 = arith.constant 0 : index
    %36 = vector.load %arg3[%c0_35, %c0_36, %c1_37, %c0_38] : memref<1x9x9x128xf32, #tpu.memory_space<vmem>>, vector<1x8x8x128xf32>
    %37 = vector.shape_cast %36 : vector<1x8x8x128xf32> to vector<64x128xf32>
    %38 = arith.truncf %37 : vector<64x128xf32> to vector<64x128xbf16>
    %c5 = arith.constant 5 : index
    %c0_39 = arith.constant 0 : index
    %c0_40 = arith.constant 0 : index
    %39 = vector.load %arg5[%c5, %c0_39, %c0_40] : memref<9x128x128xbf16, #tpu.memory_space<vmem>>, vector<1x128x128xbf16>
    %40 = vector.shape_cast %39 : vector<1x128x128xbf16> to vector<128x128xbf16>
    %cst_41 = arith.constant dense<0.000000e+00> : vector<64x128xf32>
    %41 = tpu.matmul %38, %40, %cst_41 {dimension_numbers = #tpu.dot_dimension_numbers<[1], [0], [0], [1], [0, 0, 1, 1], [], []>} : vector<64x128xbf16>, vector<128x128xbf16>, vector<64x128xf32> -> vector<64x128xf32>
    %42 = arith.addf %35, %41 : vector<64x128xf32>
    %c0_42 = arith.constant 0 : index
    %c1_43 = arith.constant 1 : index
    %c0_44 = arith.constant 0 : index
    %c0_45 = arith.constant 0 : index
    %43 = vector.load %arg1[%c0_42, %c1_43, %c0_44, %c0_45] : memref<1x9x9x128xf32, #tpu.memory_space<vmem>>, vector<1x8x8x128xf32>
    %44 = vector.shape_cast %43 : vector<1x8x8x128xf32> to vector<64x128xf32>
    %45 = arith.truncf %44 : vector<64x128xf32> to vector<64x128xbf16>
    %c6 = arith.constant 6 : index
    %c0_46 = arith.constant 0 : index
    %c0_47 = arith.constant 0 : index
    %46 = vector.load %arg5[%c6, %c0_46, %c0_47] : memref<9x128x128xbf16, #tpu.memory_space<vmem>>, vector<1x128x128xbf16>
    %47 = vector.shape_cast %46 : vector<1x128x128xbf16> to vector<128x128xbf16>
    %cst_48 = arith.constant dense<0.000000e+00> : vector<64x128xf32>
    %48 = tpu.matmul %45, %47, %cst_48 {dimension_numbers = #tpu.dot_dimension_numbers<[1], [0], [0], [1], [0, 0, 1, 1], [], []>} : vector<64x128xbf16>, vector<128x128xbf16>, vector<64x128xf32> -> vector<64x128xf32>
    %49 = arith.addf %42, %48 : vector<64x128xf32>
    %c0_49 = arith.constant 0 : index
    %c1_50 = arith.constant 1 : index
    %c0_51 = arith.constant 0 : index
    %c0_52 = arith.constant 0 : index
    %50 = vector.load %arg2[%c0_49, %c1_50, %c0_51, %c0_52] : memref<1x9x9x128xf32, #tpu.memory_space<vmem>>, vector<1x8x8x128xf32>
    %51 = vector.shape_cast %50 : vector<1x8x8x128xf32> to vector<64x128xf32>
    %52 = arith.truncf %51 : vector<64x128xf32> to vector<64x128xbf16>
    %c7 = arith.constant 7 : index
    %c0_53 = arith.constant 0 : index
    %c0_54 = arith.constant 0 : index
    %53 = vector.load %arg5[%c7, %c0_53, %c0_54] : memref<9x128x128xbf16, #tpu.memory_space<vmem>>, vector<1x128x128xbf16>
    %54 = vector.shape_cast %53 : vector<1x128x128xbf16> to vector<128x128xbf16>
    %cst_55 = arith.constant dense<0.000000e+00> : vector<64x128xf32>
    %55 = tpu.matmul %52, %54, %cst_55 {dimension_numbers = #tpu.dot_dimension_numbers<[1], [0], [0], [1], [0, 0, 1, 1], [], []>} : vector<64x128xbf16>, vector<128x128xbf16>, vector<64x128xf32> -> vector<64x128xf32>
    %56 = arith.addf %49, %55 : vector<64x128xf32>
    %c0_56 = arith.constant 0 : index
    %c1_57 = arith.constant 1 : index
    %c1_58 = arith.constant 1 : index
    %c0_59 = arith.constant 0 : index
    %57 = vector.load %arg1[%c0_56, %c1_57, %c1_58, %c0_59] : memref<1x9x9x128xf32, #tpu.memory_space<vmem>>, vector<1x8x8x128xf32>
    %58 = vector.shape_cast %57 : vector<1x8x8x128xf32> to vector<64x128xf32>
    %59 = arith.truncf %58 : vector<64x128xf32> to vector<64x128xbf16>
    %c8 = arith.constant 8 : index
    %c0_60 = arith.constant 0 : index
    %c0_61 = arith.constant 0 : index
    %60 = vector.load %arg5[%c8, %c0_60, %c0_61] : memref<9x128x128xbf16, #tpu.memory_space<vmem>>, vector<1x128x128xbf16>
    %61 = vector.shape_cast %60 : vector<1x128x128xbf16> to vector<128x128xbf16>
    %cst_62 = arith.constant dense<0.000000e+00> : vector<64x128xf32>
    %62 = tpu.matmul %59, %61, %cst_62 {dimension_numbers = #tpu.dot_dimension_numbers<[1], [0], [0], [1], [0, 0, 1, 1], [], []>} : vector<64x128xbf16>, vector<128x128xbf16>, vector<64x128xf32> -> vector<64x128xf32>
    %63 = arith.addf %56, %62 : vector<64x128xf32>
    %c0_63 = arith.constant 0 : index
    %c0_64 = arith.constant 0 : index
    %64 = vector.load %arg6[%c0_63, %c0_64] : memref<1x128xf32, #tpu.memory_space<vmem>>, vector<1x128xf32>
    %65 = vector.broadcast %64 : vector<1x128xf32> to vector<64x128xf32>
    %66 = arith.addf %63, %65 : vector<64x128xf32>
    %67 = vector.shape_cast %66 : vector<64x128xf32> to vector<1x8x8x128xf32>
    %c0_65 = arith.constant 0 : index
    %c0_66 = arith.constant 0 : index
    %c0_67 = arith.constant 0 : index
    %c0_68 = arith.constant 0 : index
    %68 = vector.load %arg7[%c0_65, %c0_66, %c0_67, %c0_68] : memref<1x8x8x128xf32, #tpu.memory_space<vmem>>, vector<1x8x8x128xf32>
    tpu.vector_store %arg7[%c0_65, %c0_66, %c0_67, %c0_68], %67 {strides = array<i32>} : memref<1x8x8x128xf32, #tpu.memory_space<vmem>>, vector<1x8x8x128xf32>,
    return
  }
  func.func @transform_0(%arg0: i32) -> (i32, i32, i32, i32) {
    %c0_i32 = arith.constant 0 : i32
    %c0_i32_0 = arith.constant 0 : i32
    %c0_i32_1 = arith.constant 0 : i32
    %c0_i32_2 = arith.constant 0 : i32
    return %arg0, %c0_i32, %c0_i32_0, %c0_i32_1 : i32, i32, i32, i32
  }
  func.func @transform_1(%arg0: i32) -> (i32, i32, i32, i32) {
    %c0_i32 = arith.constant 0 : i32
    %c0_i32_0 = arith.constant 0 : i32
    %c0_i32_1 = arith.constant 0 : i32
    %c0_i32_2 = arith.constant 0 : i32
    return %arg0, %c0_i32, %c0_i32_0, %c0_i32_1 : i32, i32, i32, i32
  }
  func.func @transform_2(%arg0: i32) -> (i32, i32, i32, i32) {
    %c0_i32 = arith.constant 0 : i32
    %c0_i32_0 = arith.constant 0 : i32
    %c0_i32_1 = arith.constant 0 : i32
    %c0_i32_2 = arith.constant 0 : i32
    return %arg0, %c0_i32, %c0_i32_0, %c0_i32_1 : i32, i32, i32, i32
  }
  func.func @transform_3(%arg0: i32) -> (i32, i32, i32, i32) {
    %c0_i32 = arith.constant 0 : i32
    %c0_i32_0 = arith.constant 0 : i32
    %c0_i32_1 = arith.constant 0 : i32
    %c0_i32_2 = arith.constant 0 : i32
    return %arg0, %c0_i32, %c0_i32_0, %c0_i32_1 : i32, i32, i32, i32
  }
  func.func @transform_4(%arg0: i32) -> (i32, i32, i32) {
    %c0_i32 = arith.constant 0 : i32
    %c0_i32_0 = arith.constant 0 : i32
    %c0_i32_1 = arith.constant 0 : i32
    %c0_i32_2 = arith.constant 0 : i32
    return %c0_i32, %c0_i32_0, %c0_i32_1 : i32, i32, i32
  }
  func.func @transform_5(%arg0: i32) -> (i32, i32) {
    %c0_i32 = arith.constant 0 : i32
    %c0_i32_0 = arith.constant 0 : i32
    %c0_i32_1 = arith.constant 0 : i32
    return %c0_i32, %c0_i32_0 : i32, i32
  }
  func.func @transform_6(%arg0: i32) -> (i32, i32, i32, i32) {
    %c0_i32 = arith.constant 0 : i32
    %c0_i32_0 = arith.constant 0 : i32
    %c0_i32_1 = arith.constant 0 : i32
    %c0_i32_2 = arith.constant 0 : i32
    return %arg0, %c0_i32, %c0_i32_0, %c0_i32_1 : i32, i32, i32, i32
  }
}

module attributes {stable_mosaic.version = 11 : i64} {
  func.func @kernel(%arg0: i32, %arg1: memref<1x8x8x128xf32, #tpu.memory_space<vmem>>, %arg2: memref<1x128xf32, #tpu.memory_space<vmem>>, %arg3: memref<1x128xf32, #tpu.memory_space<vmem>>, %arg4: memref<9x128x128xbf16, #tpu.memory_space<vmem>>, %arg5: memref<1x128xf32, #tpu.memory_space<vmem>>, %arg6: memref<1x8x8x128xf32, #tpu.memory_space<vmem>>, %arg7: memref<1x8x8x128xf32, #tpu.memory_space<vmem>>, %arg8: memref<1x10x10x128xf32, #tpu.memory_space<vmem>>) attributes {dimension_semantics = [#tpu.dimension_semantics<parallel>], iteration_bounds = array<i64: 2>, scalar_prefetch = 0 : i64, scratch_operands = 1 : i64, tpu.core_type = #tpu.core_type<tc>, window_params = [{transform_indices = @transform_0, window_bounds = array<i64: 1, 8, 8, 128>}, {pipeline_mode = #tpu.pipeline_mode<synchronous>, transform_indices = @transform_1, window_bounds = array<i64: 1, 128>}, {pipeline_mode = #tpu.pipeline_mode<synchronous>, transform_indices = @transform_2, window_bounds = array<i64: 1, 128>}, {pipeline_mode = #tpu.pipeline_mode<synchronous>, transform_indices = @transform_3, window_bounds = array<i64: 9, 128, 128>}, {pipeline_mode = #tpu.pipeline_mode<synchronous>, transform_indices = @transform_4, window_bounds = array<i64: 1, 128>}, {transform_indices = @transform_5, window_bounds = array<i64: 1, 8, 8, 128>}, {transform_indices = @transform_6, window_bounds = array<i64: 1, 8, 8, 128>}]} {
    %c0 = arith.constant 0 : index
    %c0_0 = arith.constant 0 : index
    %c0_1 = arith.constant 0 : index
    %c0_2 = arith.constant 0 : index
    %0 = vector.load %arg1[%c0, %c0_0, %c0_1, %c0_2] : memref<1x8x8x128xf32, #tpu.memory_space<vmem>>, vector<1x8x8x128xf32>
    %c0_3 = arith.constant 0 : index
    %c0_4 = arith.constant 0 : index
    %1 = vector.load %arg2[%c0_3, %c0_4] : memref<1x128xf32, #tpu.memory_space<vmem>>, vector<1x128xf32>
    %2 = vector.shape_cast %1 : vector<1x128xf32> to vector<1x1x1x128xf32>
    %3 = vector.broadcast %2 : vector<1x1x1x128xf32> to vector<1x8x8x128xf32>
    %4 = arith.mulf %0, %3 : vector<1x8x8x128xf32>
    %c0_5 = arith.constant 0 : index
    %c0_6 = arith.constant 0 : index
    %5 = vector.load %arg3[%c0_5, %c0_6] : memref<1x128xf32, #tpu.memory_space<vmem>>, vector<1x128xf32>
    %6 = vector.shape_cast %5 : vector<1x128xf32> to vector<1x1x1x128xf32>
    %7 = vector.broadcast %6 : vector<1x1x1x128xf32> to vector<1x8x8x128xf32>
    %8 = arith.addf %4, %7 : vector<1x8x8x128xf32>
    %cst = arith.constant 0.000000e+00 : f32
    %9 = vector.broadcast %cst : f32 to vector<1x8x8x128xf32>
    %10 = arith.maximumf %8, %9 : vector<1x8x8x128xf32>
    %cst_7 = arith.constant 0.000000e+00 : f32
    %11 = vector.broadcast %cst_7 : f32 to vector<1x10x10x128xf32>
    %c0_8 = arith.constant 0 : index
    %c0_9 = arith.constant 0 : index
    %c0_10 = arith.constant 0 : index
    %c0_11 = arith.constant 0 : index
    %12 = vector.load %arg8[%c0_8, %c0_9, %c0_10, %c0_11] : memref<1x10x10x128xf32, #tpu.memory_space<vmem>>, vector<1x10x10x128xf32>
    tpu.vector_store %arg8[%c0_8, %c0_9, %c0_10, %c0_11], %11 {strides = array<i32>} : memref<1x10x10x128xf32, #tpu.memory_space<vmem>>, vector<1x10x10x128xf32>,
    %c0_12 = arith.constant 0 : index
    %c1 = arith.constant 1 : index
    %c1_13 = arith.constant 1 : index
    %c0_14 = arith.constant 0 : index
    %13 = vector.load %arg8[%c0_12, %c1, %c1_13, %c0_14] : memref<1x10x10x128xf32, #tpu.memory_space<vmem>>, vector<1x8x8x128xf32>
    tpu.vector_store %arg8[%c0_12, %c1, %c1_13, %c0_14], %10 {strides = array<i32>} : memref<1x10x10x128xf32, #tpu.memory_space<vmem>>, vector<1x8x8x128xf32>,
    %cst_15 = arith.constant 0.000000e+00 : f32
    %14 = vector.broadcast %cst_15 : f32 to vector<64x128xf32>
    %c0_16 = arith.constant 0 : index
    %c0_17 = arith.constant 0 : index
    %c0_18 = arith.constant 0 : index
    %c0_19 = arith.constant 0 : index
    %15 = vector.load %arg8[%c0_16, %c0_17, %c0_18, %c0_19] : memref<1x10x10x128xf32, #tpu.memory_space<vmem>>, vector<1x8x8x128xf32>
    %16 = vector.shape_cast %15 : vector<1x8x8x128xf32> to vector<64x128xf32>
    %17 = arith.truncf %16 : vector<64x128xf32> to vector<64x128xbf16>
    %c0_20 = arith.constant 0 : index
    %c0_21 = arith.constant 0 : index
    %c0_22 = arith.constant 0 : index
    %18 = vector.load %arg4[%c0_20, %c0_21, %c0_22] : memref<9x128x128xbf16, #tpu.memory_space<vmem>>, vector<1x128x128xbf16>
    %19 = vector.shape_cast %18 : vector<1x128x128xbf16> to vector<128x128xbf16>
    %cst_23 = arith.constant dense<0.000000e+00> : vector<64x128xf32>
    %20 = tpu.matmul %17, %19, %cst_23 {dimension_numbers = #tpu.dot_dimension_numbers<[1], [0], [0], [1], [0, 0, 1, 1], [], []>} : vector<64x128xbf16>, vector<128x128xbf16>, vector<64x128xf32> -> vector<64x128xf32>
    %21 = arith.addf %14, %20 : vector<64x128xf32>
    %c0_24 = arith.constant 0 : index
    %c0_25 = arith.constant 0 : index
    %c1_26 = arith.constant 1 : index
    %c0_27 = arith.constant 0 : index
    %22 = vector.load %arg8[%c0_24, %c0_25, %c1_26, %c0_27] : memref<1x10x10x128xf32, #tpu.memory_space<vmem>>, vector<1x8x8x128xf32>
    %23 = vector.shape_cast %22 : vector<1x8x8x128xf32> to vector<64x128xf32>
    %24 = arith.truncf %23 : vector<64x128xf32> to vector<64x128xbf16>
    %c1_28 = arith.constant 1 : index
    %c0_29 = arith.constant 0 : index
    %c0_30 = arith.constant 0 : index
    %25 = vector.load %arg4[%c1_28, %c0_29, %c0_30] : memref<9x128x128xbf16, #tpu.memory_space<vmem>>, vector<1x128x128xbf16>
    %26 = vector.shape_cast %25 : vector<1x128x128xbf16> to vector<128x128xbf16>
    %cst_31 = arith.constant dense<0.000000e+00> : vector<64x128xf32>
    %27 = tpu.matmul %24, %26, %cst_31 {dimension_numbers = #tpu.dot_dimension_numbers<[1], [0], [0], [1], [0, 0, 1, 1], [], []>} : vector<64x128xbf16>, vector<128x128xbf16>, vector<64x128xf32> -> vector<64x128xf32>
    %28 = arith.addf %21, %27 : vector<64x128xf32>
    %c0_32 = arith.constant 0 : index
    %c0_33 = arith.constant 0 : index
    %c2 = arith.constant 2 : index
    %c0_34 = arith.constant 0 : index
    %29 = vector.load %arg8[%c0_32, %c0_33, %c2, %c0_34] : memref<1x10x10x128xf32, #tpu.memory_space<vmem>>, vector<1x8x8x128xf32>
    %30 = vector.shape_cast %29 : vector<1x8x8x128xf32> to vector<64x128xf32>
    %31 = arith.truncf %30 : vector<64x128xf32> to vector<64x128xbf16>
    %c2_35 = arith.constant 2 : index
    %c0_36 = arith.constant 0 : index
    %c0_37 = arith.constant 0 : index
    %32 = vector.load %arg4[%c2_35, %c0_36, %c0_37] : memref<9x128x128xbf16, #tpu.memory_space<vmem>>, vector<1x128x128xbf16>
    %33 = vector.shape_cast %32 : vector<1x128x128xbf16> to vector<128x128xbf16>
    %cst_38 = arith.constant dense<0.000000e+00> : vector<64x128xf32>
    %34 = tpu.matmul %31, %33, %cst_38 {dimension_numbers = #tpu.dot_dimension_numbers<[1], [0], [0], [1], [0, 0, 1, 1], [], []>} : vector<64x128xbf16>, vector<128x128xbf16>, vector<64x128xf32> -> vector<64x128xf32>
    %35 = arith.addf %28, %34 : vector<64x128xf32>
    %c0_39 = arith.constant 0 : index
    %c1_40 = arith.constant 1 : index
    %c0_41 = arith.constant 0 : index
    %c0_42 = arith.constant 0 : index
    %36 = vector.load %arg8[%c0_39, %c1_40, %c0_41, %c0_42] : memref<1x10x10x128xf32, #tpu.memory_space<vmem>>, vector<1x8x8x128xf32>
    %37 = vector.shape_cast %36 : vector<1x8x8x128xf32> to vector<64x128xf32>
    %38 = arith.truncf %37 : vector<64x128xf32> to vector<64x128xbf16>
    %c3 = arith.constant 3 : index
    %c0_43 = arith.constant 0 : index
    %c0_44 = arith.constant 0 : index
    %39 = vector.load %arg4[%c3, %c0_43, %c0_44] : memref<9x128x128xbf16, #tpu.memory_space<vmem>>, vector<1x128x128xbf16>
    %40 = vector.shape_cast %39 : vector<1x128x128xbf16> to vector<128x128xbf16>
    %cst_45 = arith.constant dense<0.000000e+00> : vector<64x128xf32>
    %41 = tpu.matmul %38, %40, %cst_45 {dimension_numbers = #tpu.dot_dimension_numbers<[1], [0], [0], [1], [0, 0, 1, 1], [], []>} : vector<64x128xbf16>, vector<128x128xbf16>, vector<64x128xf32> -> vector<64x128xf32>
    %42 = arith.addf %35, %41 : vector<64x128xf32>
    %c0_46 = arith.constant 0 : index
    %c1_47 = arith.constant 1 : index
    %c1_48 = arith.constant 1 : index
    %c0_49 = arith.constant 0 : index
    %43 = vector.load %arg8[%c0_46, %c1_47, %c1_48, %c0_49] : memref<1x10x10x128xf32, #tpu.memory_space<vmem>>, vector<1x8x8x128xf32>
    %44 = vector.shape_cast %43 : vector<1x8x8x128xf32> to vector<64x128xf32>
    %45 = arith.truncf %44 : vector<64x128xf32> to vector<64x128xbf16>
    %c4 = arith.constant 4 : index
    %c0_50 = arith.constant 0 : index
    %c0_51 = arith.constant 0 : index
    %46 = vector.load %arg4[%c4, %c0_50, %c0_51] : memref<9x128x128xbf16, #tpu.memory_space<vmem>>, vector<1x128x128xbf16>
    %47 = vector.shape_cast %46 : vector<1x128x128xbf16> to vector<128x128xbf16>
    %cst_52 = arith.constant dense<0.000000e+00> : vector<64x128xf32>
    %48 = tpu.matmul %45, %47, %cst_52 {dimension_numbers = #tpu.dot_dimension_numbers<[1], [0], [0], [1], [0, 0, 1, 1], [], []>} : vector<64x128xbf16>, vector<128x128xbf16>, vector<64x128xf32> -> vector<64x128xf32>
    %49 = arith.addf %42, %48 : vector<64x128xf32>
    %c0_53 = arith.constant 0 : index
    %c1_54 = arith.constant 1 : index
    %c2_55 = arith.constant 2 : index
    %c0_56 = arith.constant 0 : index
    %50 = vector.load %arg8[%c0_53, %c1_54, %c2_55, %c0_56] : memref<1x10x10x128xf32, #tpu.memory_space<vmem>>, vector<1x8x8x128xf32>
    %51 = vector.shape_cast %50 : vector<1x8x8x128xf32> to vector<64x128xf32>
    %52 = arith.truncf %51 : vector<64x128xf32> to vector<64x128xbf16>
    %c5 = arith.constant 5 : index
    %c0_57 = arith.constant 0 : index
    %c0_58 = arith.constant 0 : index
    %53 = vector.load %arg4[%c5, %c0_57, %c0_58] : memref<9x128x128xbf16, #tpu.memory_space<vmem>>, vector<1x128x128xbf16>
    %54 = vector.shape_cast %53 : vector<1x128x128xbf16> to vector<128x128xbf16>
    %cst_59 = arith.constant dense<0.000000e+00> : vector<64x128xf32>
    %55 = tpu.matmul %52, %54, %cst_59 {dimension_numbers = #tpu.dot_dimension_numbers<[1], [0], [0], [1], [0, 0, 1, 1], [], []>} : vector<64x128xbf16>, vector<128x128xbf16>, vector<64x128xf32> -> vector<64x128xf32>
    %56 = arith.addf %49, %55 : vector<64x128xf32>
    %c0_60 = arith.constant 0 : index
    %c2_61 = arith.constant 2 : index
    %c0_62 = arith.constant 0 : index
    %c0_63 = arith.constant 0 : index
    %57 = vector.load %arg8[%c0_60, %c2_61, %c0_62, %c0_63] : memref<1x10x10x128xf32, #tpu.memory_space<vmem>>, vector<1x8x8x128xf32>
    %58 = vector.shape_cast %57 : vector<1x8x8x128xf32> to vector<64x128xf32>
    %59 = arith.truncf %58 : vector<64x128xf32> to vector<64x128xbf16>
    %c6 = arith.constant 6 : index
    %c0_64 = arith.constant 0 : index
    %c0_65 = arith.constant 0 : index
    %60 = vector.load %arg4[%c6, %c0_64, %c0_65] : memref<9x128x128xbf16, #tpu.memory_space<vmem>>, vector<1x128x128xbf16>
    %61 = vector.shape_cast %60 : vector<1x128x128xbf16> to vector<128x128xbf16>
    %cst_66 = arith.constant dense<0.000000e+00> : vector<64x128xf32>
    %62 = tpu.matmul %59, %61, %cst_66 {dimension_numbers = #tpu.dot_dimension_numbers<[1], [0], [0], [1], [0, 0, 1, 1], [], []>} : vector<64x128xbf16>, vector<128x128xbf16>, vector<64x128xf32> -> vector<64x128xf32>
    %63 = arith.addf %56, %62 : vector<64x128xf32>
    %c0_67 = arith.constant 0 : index
    %c2_68 = arith.constant 2 : index
    %c1_69 = arith.constant 1 : index
    %c0_70 = arith.constant 0 : index
    %64 = vector.load %arg8[%c0_67, %c2_68, %c1_69, %c0_70] : memref<1x10x10x128xf32, #tpu.memory_space<vmem>>, vector<1x8x8x128xf32>
    %65 = vector.shape_cast %64 : vector<1x8x8x128xf32> to vector<64x128xf32>
    %66 = arith.truncf %65 : vector<64x128xf32> to vector<64x128xbf16>
    %c7 = arith.constant 7 : index
    %c0_71 = arith.constant 0 : index
    %c0_72 = arith.constant 0 : index
    %67 = vector.load %arg4[%c7, %c0_71, %c0_72] : memref<9x128x128xbf16, #tpu.memory_space<vmem>>, vector<1x128x128xbf16>
    %68 = vector.shape_cast %67 : vector<1x128x128xbf16> to vector<128x128xbf16>
    %cst_73 = arith.constant dense<0.000000e+00> : vector<64x128xf32>
    %69 = tpu.matmul %66, %68, %cst_73 {dimension_numbers = #tpu.dot_dimension_numbers<[1], [0], [0], [1], [0, 0, 1, 1], [], []>} : vector<64x128xbf16>, vector<128x128xbf16>, vector<64x128xf32> -> vector<64x128xf32>
    %70 = arith.addf %63, %69 : vector<64x128xf32>
    %c0_74 = arith.constant 0 : index
    %c2_75 = arith.constant 2 : index
    %c2_76 = arith.constant 2 : index
    %c0_77 = arith.constant 0 : index
    %71 = vector.load %arg8[%c0_74, %c2_75, %c2_76, %c0_77] : memref<1x10x10x128xf32, #tpu.memory_space<vmem>>, vector<1x8x8x128xf32>
    %72 = vector.shape_cast %71 : vector<1x8x8x128xf32> to vector<64x128xf32>
    %73 = arith.truncf %72 : vector<64x128xf32> to vector<64x128xbf16>
    %c8 = arith.constant 8 : index
    %c0_78 = arith.constant 0 : index
    %c0_79 = arith.constant 0 : index
    %74 = vector.load %arg4[%c8, %c0_78, %c0_79] : memref<9x128x128xbf16, #tpu.memory_space<vmem>>, vector<1x128x128xbf16>
    %75 = vector.shape_cast %74 : vector<1x128x128xbf16> to vector<128x128xbf16>
    %cst_80 = arith.constant dense<0.000000e+00> : vector<64x128xf32>
    %76 = tpu.matmul %73, %75, %cst_80 {dimension_numbers = #tpu.dot_dimension_numbers<[1], [0], [0], [1], [0, 0, 1, 1], [], []>} : vector<64x128xbf16>, vector<128x128xbf16>, vector<64x128xf32> -> vector<64x128xf32>
    %77 = arith.addf %70, %76 : vector<64x128xf32>
    %c0_81 = arith.constant 0 : index
    %c0_82 = arith.constant 0 : index
    %78 = vector.load %arg5[%c0_81, %c0_82] : memref<1x128xf32, #tpu.memory_space<vmem>>, vector<1x128xf32>
    %79 = vector.broadcast %78 : vector<1x128xf32> to vector<64x128xf32>
    %80 = arith.addf %77, %79 : vector<64x128xf32>
    %c0_83 = arith.constant 0 : index
    %c0_84 = arith.constant 0 : index
    %c0_85 = arith.constant 0 : index
    %c0_86 = arith.constant 0 : index
    %81 = vector.load %arg6[%c0_83, %c0_84, %c0_85, %c0_86] : memref<1x8x8x128xf32, #tpu.memory_space<vmem>>, vector<1x8x8x128xf32>
    %82 = vector.shape_cast %81 : vector<1x8x8x128xf32> to vector<64x128xf32>
    %83 = arith.addf %80, %82 : vector<64x128xf32>
    %84 = vector.shape_cast %83 : vector<64x128xf32> to vector<1x8x8x128xf32>
    %c0_87 = arith.constant 0 : index
    %c0_88 = arith.constant 0 : index
    %c0_89 = arith.constant 0 : index
    %c0_90 = arith.constant 0 : index
    %85 = vector.load %arg7[%c0_87, %c0_88, %c0_89, %c0_90] : memref<1x8x8x128xf32, #tpu.memory_space<vmem>>, vector<1x8x8x128xf32>
    tpu.vector_store %arg7[%c0_87, %c0_88, %c0_89, %c0_90], %84 {strides = array<i32>} : memref<1x8x8x128xf32, #tpu.memory_space<vmem>>, vector<1x8x8x128xf32>,
    return
  }
  func.func @transform_0(%arg0: i32) -> (i32, i32, i32, i32) {
    %c0_i32 = arith.constant 0 : i32
    %c0_i32_0 = arith.constant 0 : i32
    %c0_i32_1 = arith.constant 0 : i32
    %c0_i32_2 = arith.constant 0 : i32
    return %arg0, %c0_i32, %c0_i32_0, %c0_i32_1 : i32, i32, i32, i32
  }
  func.func @transform_1(%arg0: i32) -> (i32, i32) {
    %c0_i32 = arith.constant 0 : i32
    %c0_i32_0 = arith.constant 0 : i32
    %c0_i32_1 = arith.constant 0 : i32
    return %c0_i32, %c0_i32_0 : i32, i32
  }
  func.func @transform_2(%arg0: i32) -> (i32, i32) {
    %c0_i32 = arith.constant 0 : i32
    %c0_i32_0 = arith.constant 0 : i32
    %c0_i32_1 = arith.constant 0 : i32
    return %c0_i32, %c0_i32_0 : i32, i32
  }
  func.func @transform_3(%arg0: i32) -> (i32, i32, i32) {
    %c0_i32 = arith.constant 0 : i32
    %c0_i32_0 = arith.constant 0 : i32
    %c0_i32_1 = arith.constant 0 : i32
    %c0_i32_2 = arith.constant 0 : i32
    return %c0_i32, %c0_i32_0, %c0_i32_1 : i32, i32, i32
  }
  func.func @transform_4(%arg0: i32) -> (i32, i32) {
    %c0_i32 = arith.constant 0 : i32
    %c0_i32_0 = arith.constant 0 : i32
    %c0_i32_1 = arith.constant 0 : i32
    return %c0_i32, %c0_i32_0 : i32, i32
  }
  func.func @transform_5(%arg0: i32) -> (i32, i32, i32, i32) {
    %c0_i32 = arith.constant 0 : i32
    %c0_i32_0 = arith.constant 0 : i32
    %c0_i32_1 = arith.constant 0 : i32
    %c0_i32_2 = arith.constant 0 : i32
    return %arg0, %c0_i32, %c0_i32_0, %c0_i32_1 : i32, i32, i32, i32
  }
  func.func @transform_6(%arg0: i32) -> (i32, i32, i32, i32) {
    %c0_i32 = arith.constant 0 : i32
    %c0_i32_0 = arith.constant 0 : i32
    %c0_i32_1 = arith.constant 0 : i32
    %c0_i32_2 = arith.constant 0 : i32
    return %arg0, %c0_i32, %c0_i32_0, %c0_i32_1 : i32, i32, i32, i32
  }
}

module attributes {stable_mosaic.version = 11 : i64} {
  func.func @kernel(%arg0: i32, %arg1: memref<128x128xf32, #tpu.memory_space<vmem>>, %arg2: memref<1x128xf32, #tpu.memory_space<vmem>>, %arg3: memref<1x128xf32, #tpu.memory_space<vmem>>, %arg4: memref<2x128xf32, #tpu.memory_space<vmem>>, %arg5: memref<1x128xf32, #tpu.memory_space<vmem>>, %arg6: memref<1x128xf32, #tpu.memory_space<vmem>>) attributes {dimension_semantics = [#tpu.dimension_semantics<arbitrary>], iteration_bounds = array<i64: 1>, scalar_prefetch = 0 : i64, scratch_operands = 2 : i64, tpu.core_type = #tpu.core_type<tc>, window_params = [{transform_indices = @transform_0, window_bounds = array<i64: 128, 128>}, {pipeline_mode = #tpu.pipeline_mode<synchronous>, transform_indices = @transform_1, window_bounds = array<i64: 1, 128>}, {pipeline_mode = #tpu.pipeline_mode<synchronous>, transform_indices = @transform_2, window_bounds = array<i64: 1, 128>}, {pipeline_mode = #tpu.pipeline_mode<synchronous>, transform_indices = @transform_3, window_bounds = array<i64: 2, 128>}]} {
    %c0_i32 = arith.constant 0 : i32
    %0 = arith.cmpi eq, %arg0, %c0_i32 : i32
    %1 = arith.extui %0 : i1 to i32
    %c0_i32_0 = arith.constant 0 : i32
    %2 = arith.cmpi ne, %1, %c0_i32_0 : i32
    scf.if %2 {
      %cst_13 = arith.constant 0.000000e+00 : f32
      %18 = vector.broadcast %cst_13 : f32 to vector<1x128xf32>
      %c0_14 = arith.constant 0 : index
      %c0_15 = arith.constant 0 : index
      %19 = vector.load %arg5[%c0_14, %c0_15] : memref<1x128xf32, #tpu.memory_space<vmem>>, vector<1x128xf32>
      tpu.vector_store %arg5[%c0_14, %c0_15], %18 {strides = array<i32>} : memref<1x128xf32, #tpu.memory_space<vmem>>, vector<1x128xf32>,
      %cst_16 = arith.constant 0.000000e+00 : f32
      %20 = vector.broadcast %cst_16 : f32 to vector<1x128xf32>
      %c0_17 = arith.constant 0 : index
      %c0_18 = arith.constant 0 : index
      %21 = vector.load %arg6[%c0_17, %c0_18] : memref<1x128xf32, #tpu.memory_space<vmem>>, vector<1x128xf32>
      tpu.vector_store %arg6[%c0_17, %c0_18], %20 {strides = array<i32>} : memref<1x128xf32, #tpu.memory_space<vmem>>, vector<1x128xf32>,
    } else {
    }
    %c0 = arith.constant 0 : index
    %c0_1 = arith.constant 0 : index
    %3 = vector.load %arg1[%c0, %c0_1] : memref<128x128xf32, #tpu.memory_space<vmem>>, vector<128x128xf32>
    %c0_2 = arith.constant 0 : index
    %c0_3 = arith.constant 0 : index
    %4 = vector.load %arg5[%c0_2, %c0_3] : memref<1x128xf32, #tpu.memory_space<vmem>>, vector<1x128xf32>
    %cst = arith.constant dense<0.000000e+00> : vector<128xf32>
    %5 = vector.multi_reduction <add>, %3, %cst [0] : vector<128x128xf32> to vector<128xf32>
    %6 = vector.shape_cast %5 : vector<128xf32> to vector<1x128xf32>
    %7 = arith.addf %4, %6 : vector<1x128xf32>
    %c0_4 = arith.constant 0 : index
    %c0_5 = arith.constant 0 : index
    %8 = vector.load %arg5[%c0_4, %c0_5] : memref<1x128xf32, #tpu.memory_space<vmem>>, vector<1x128xf32>
    tpu.vector_store %arg5[%c0_4, %c0_5], %7 {strides = array<i32>} : memref<1x128xf32, #tpu.memory_space<vmem>>, vector<1x128xf32>,
    %c0_6 = arith.constant 0 : index
    %c0_7 = arith.constant 0 : index
    %9 = vector.load %arg6[%c0_6, %c0_7] : memref<1x128xf32, #tpu.memory_space<vmem>>, vector<1x128xf32>
    %10 = arith.mulf %3, %3 : vector<128x128xf32>
    %cst_8 = arith.constant dense<0.000000e+00> : vector<128xf32>
    %11 = vector.multi_reduction <add>, %10, %cst_8 [0] : vector<128x128xf32> to vector<128xf32>
    %12 = vector.shape_cast %11 : vector<128xf32> to vector<1x128xf32>
    %13 = arith.addf %9, %12 : vector<1x128xf32>
    %c0_9 = arith.constant 0 : index
    %c0_10 = arith.constant 0 : index
    %14 = vector.load %arg6[%c0_9, %c0_10] : memref<1x128xf32, #tpu.memory_space<vmem>>, vector<1x128xf32>
    tpu.vector_store %arg6[%c0_9, %c0_10], %13 {strides = array<i32>} : memref<1x128xf32, #tpu.memory_space<vmem>>, vector<1x128xf32>,
    %c0_i32_11 = arith.constant 0 : i32
    %15 = arith.cmpi eq, %arg0, %c0_i32_11 : i32
    %16 = arith.extui %15 : i1 to i32
    %c0_i32_12 = arith.constant 0 : i32
    %17 = arith.cmpi ne, %16, %c0_i32_12 : i32
    scf.if %17 {
      %c0_13 = arith.constant 0 : index
      %c0_14 = arith.constant 0 : index
      %18 = vector.load %arg5[%c0_13, %c0_14] : memref<1x128xf32, #tpu.memory_space<vmem>>, vector<1x128xf32>
      %cst_15 = arith.constant 7.812500e-03 : f32
      %19 = vector.broadcast %cst_15 : f32 to vector<1x128xf32>
      %20 = arith.mulf %18, %19 : vector<1x128xf32>
      %c0_16 = arith.constant 0 : index
      %c0_17 = arith.constant 0 : index
      %21 = vector.load %arg6[%c0_16, %c0_17] : memref<1x128xf32, #tpu.memory_space<vmem>>, vector<1x128xf32>
      %cst_18 = arith.constant 7.812500e-03 : f32
      %22 = vector.broadcast %cst_18 : f32 to vector<1x128xf32>
      %23 = arith.mulf %21, %22 : vector<1x128xf32>
      %24 = arith.mulf %20, %20 : vector<1x128xf32>
      %25 = arith.subf %23, %24 : vector<1x128xf32>
      %c0_19 = arith.constant 0 : index
      %c0_20 = arith.constant 0 : index
      %26 = vector.load %arg2[%c0_19, %c0_20] : memref<1x128xf32, #tpu.memory_space<vmem>>, vector<1x128xf32>
      %cst_21 = arith.constant 9.99999974E-6 : f32
      %27 = vector.broadcast %cst_21 : f32 to vector<1x128xf32>
      %28 = arith.addf %25, %27 : vector<1x128xf32>
      %29 = math.rsqrt %28 : vector<1x128xf32>
      %30 = arith.mulf %26, %29 : vector<1x128xf32>
      %c0_22 = arith.constant 0 : index
      %c0_23 = arith.constant 0 : index
      %31 = vector.load %arg4[%c0_22, %c0_23] : memref<2x128xf32, #tpu.memory_space<vmem>>, vector<1x128xf32>
      tpu.vector_store %arg4[%c0_22, %c0_23], %30 {strides = array<i32>} : memref<2x128xf32, #tpu.memory_space<vmem>>, vector<1x128xf32>,
      %c0_24 = arith.constant 0 : index
      %c0_25 = arith.constant 0 : index
      %32 = vector.load %arg3[%c0_24, %c0_25] : memref<1x128xf32, #tpu.memory_space<vmem>>, vector<1x128xf32>
      %33 = arith.mulf %20, %30 : vector<1x128xf32>
      %34 = arith.subf %32, %33 : vector<1x128xf32>
      %c1 = arith.constant 1 : index
      %c0_26 = arith.constant 0 : index
      %35 = vector.load %arg4[%c1, %c0_26] : memref<2x128xf32, #tpu.memory_space<vmem>>, vector<1x128xf32>
      tpu.vector_store %arg4[%c1, %c0_26], %34 {strides = array<i32>} : memref<2x128xf32, #tpu.memory_space<vmem>>, vector<1x128xf32>,
    } else {
    }
    return
  }
  func.func @transform_0(%arg0: i32) -> (i32, i32) {
    %c0_i32 = arith.constant 0 : i32
    %c0_i32_0 = arith.constant 0 : i32
    return %arg0, %c0_i32 : i32, i32
  }
  func.func @transform_1(%arg0: i32) -> (i32, i32) {
    %c0_i32 = arith.constant 0 : i32
    %c0_i32_0 = arith.constant 0 : i32
    %c0_i32_1 = arith.constant 0 : i32
    return %c0_i32, %c0_i32_0 : i32, i32
  }
  func.func @transform_2(%arg0: i32) -> (i32, i32) {
    %c0_i32 = arith.constant 0 : i32
    %c0_i32_0 = arith.constant 0 : i32
    %c0_i32_1 = arith.constant 0 : i32
    return %c0_i32, %c0_i32_0 : i32, i32
  }
  func.func @transform_3(%arg0: i32) -> (i32, i32) {
    %c0_i32 = arith.constant 0 : i32
    %c0_i32_0 = arith.constant 0 : i32
    %c0_i32_1 = arith.constant 0 : i32
    return %c0_i32, %c0_i32_0 : i32, i32
  }
}

module attributes {stable_mosaic.version = 11 : i64} {
  func.func @kernel(%arg0: i32, %arg1: memref<1x8x8x128xf32, #tpu.memory_space<vmem>>, %arg2: memref<1x128xf32, #tpu.memory_space<vmem>>, %arg3: memref<1x128xf32, #tpu.memory_space<vmem>>, %arg4: memref<9x128x128xbf16, #tpu.memory_space<vmem>>, %arg5: memref<1x128xf32, #tpu.memory_space<vmem>>, %arg6: memref<1x8x8x128xf32, #tpu.memory_space<vmem>>, %arg7: memref<1x10x10x128xf32, #tpu.memory_space<vmem>>) attributes {dimension_semantics = [#tpu.dimension_semantics<parallel>], iteration_bounds = array<i64: 2>, scalar_prefetch = 0 : i64, scratch_operands = 1 : i64, tpu.core_type = #tpu.core_type<tc>, window_params = [{transform_indices = @transform_0, window_bounds = array<i64: 1, 8, 8, 128>}, {pipeline_mode = #tpu.pipeline_mode<synchronous>, transform_indices = @transform_1, window_bounds = array<i64: 1, 128>}, {pipeline_mode = #tpu.pipeline_mode<synchronous>, transform_indices = @transform_2, window_bounds = array<i64: 1, 128>}, {pipeline_mode = #tpu.pipeline_mode<synchronous>, transform_indices = @transform_3, window_bounds = array<i64: 9, 128, 128>}, {pipeline_mode = #tpu.pipeline_mode<synchronous>, transform_indices = @transform_4, window_bounds = array<i64: 1, 128>}, {transform_indices = @transform_5, window_bounds = array<i64: 1, 8, 8, 128>}]} {
    %c0 = arith.constant 0 : index
    %c0_0 = arith.constant 0 : index
    %c0_1 = arith.constant 0 : index
    %c0_2 = arith.constant 0 : index
    %0 = vector.load %arg1[%c0, %c0_0, %c0_1, %c0_2] : memref<1x8x8x128xf32, #tpu.memory_space<vmem>>, vector<1x8x8x128xf32>
    %c0_3 = arith.constant 0 : index
    %c0_4 = arith.constant 0 : index
    %1 = vector.load %arg2[%c0_3, %c0_4] : memref<1x128xf32, #tpu.memory_space<vmem>>, vector<1x128xf32>
    %2 = vector.shape_cast %1 : vector<1x128xf32> to vector<1x1x1x128xf32>
    %3 = vector.broadcast %2 : vector<1x1x1x128xf32> to vector<1x8x8x128xf32>
    %4 = arith.mulf %0, %3 : vector<1x8x8x128xf32>
    %c0_5 = arith.constant 0 : index
    %c0_6 = arith.constant 0 : index
    %5 = vector.load %arg3[%c0_5, %c0_6] : memref<1x128xf32, #tpu.memory_space<vmem>>, vector<1x128xf32>
    %6 = vector.shape_cast %5 : vector<1x128xf32> to vector<1x1x1x128xf32>
    %7 = vector.broadcast %6 : vector<1x1x1x128xf32> to vector<1x8x8x128xf32>
    %8 = arith.addf %4, %7 : vector<1x8x8x128xf32>
    %cst = arith.constant 0.000000e+00 : f32
    %9 = vector.broadcast %cst : f32 to vector<1x8x8x128xf32>
    %10 = arith.maximumf %8, %9 : vector<1x8x8x128xf32>
    %cst_7 = arith.constant 0.000000e+00 : f32
    %11 = vector.broadcast %cst_7 : f32 to vector<1x10x10x128xf32>
    %c0_8 = arith.constant 0 : index
    %c0_9 = arith.constant 0 : index
    %c0_10 = arith.constant 0 : index
    %c0_11 = arith.constant 0 : index
    %12 = vector.load %arg7[%c0_8, %c0_9, %c0_10, %c0_11] : memref<1x10x10x128xf32, #tpu.memory_space<vmem>>, vector<1x10x10x128xf32>
    tpu.vector_store %arg7[%c0_8, %c0_9, %c0_10, %c0_11], %11 {strides = array<i32>} : memref<1x10x10x128xf32, #tpu.memory_space<vmem>>, vector<1x10x10x128xf32>,
    %c0_12 = arith.constant 0 : index
    %c1 = arith.constant 1 : index
    %c1_13 = arith.constant 1 : index
    %c0_14 = arith.constant 0 : index
    %13 = vector.load %arg7[%c0_12, %c1, %c1_13, %c0_14] : memref<1x10x10x128xf32, #tpu.memory_space<vmem>>, vector<1x8x8x128xf32>
    tpu.vector_store %arg7[%c0_12, %c1, %c1_13, %c0_14], %10 {strides = array<i32>} : memref<1x10x10x128xf32, #tpu.memory_space<vmem>>, vector<1x8x8x128xf32>,
    %cst_15 = arith.constant 0.000000e+00 : f32
    %14 = vector.broadcast %cst_15 : f32 to vector<64x128xf32>
    %c0_16 = arith.constant 0 : index
    %c0_17 = arith.constant 0 : index
    %c0_18 = arith.constant 0 : index
    %c0_19 = arith.constant 0 : index
    %15 = vector.load %arg7[%c0_16, %c0_17, %c0_18, %c0_19] : memref<1x10x10x128xf32, #tpu.memory_space<vmem>>, vector<1x8x8x128xf32>
    %16 = vector.shape_cast %15 : vector<1x8x8x128xf32> to vector<64x128xf32>
    %17 = arith.truncf %16 : vector<64x128xf32> to vector<64x128xbf16>
    %c0_20 = arith.constant 0 : index
    %c0_21 = arith.constant 0 : index
    %c0_22 = arith.constant 0 : index
    %18 = vector.load %arg4[%c0_20, %c0_21, %c0_22] : memref<9x128x128xbf16, #tpu.memory_space<vmem>>, vector<1x128x128xbf16>
    %19 = vector.shape_cast %18 : vector<1x128x128xbf16> to vector<128x128xbf16>
    %cst_23 = arith.constant dense<0.000000e+00> : vector<64x128xf32>
    %20 = tpu.matmul %17, %19, %cst_23 {dimension_numbers = #tpu.dot_dimension_numbers<[1], [0], [0], [1], [0, 0, 1, 1], [], []>} : vector<64x128xbf16>, vector<128x128xbf16>, vector<64x128xf32> -> vector<64x128xf32>
    %21 = arith.addf %14, %20 : vector<64x128xf32>
    %c0_24 = arith.constant 0 : index
    %c0_25 = arith.constant 0 : index
    %c1_26 = arith.constant 1 : index
    %c0_27 = arith.constant 0 : index
    %22 = vector.load %arg7[%c0_24, %c0_25, %c1_26, %c0_27] : memref<1x10x10x128xf32, #tpu.memory_space<vmem>>, vector<1x8x8x128xf32>
    %23 = vector.shape_cast %22 : vector<1x8x8x128xf32> to vector<64x128xf32>
    %24 = arith.truncf %23 : vector<64x128xf32> to vector<64x128xbf16>
    %c1_28 = arith.constant 1 : index
    %c0_29 = arith.constant 0 : index
    %c0_30 = arith.constant 0 : index
    %25 = vector.load %arg4[%c1_28, %c0_29, %c0_30] : memref<9x128x128xbf16, #tpu.memory_space<vmem>>, vector<1x128x128xbf16>
    %26 = vector.shape_cast %25 : vector<1x128x128xbf16> to vector<128x128xbf16>
    %cst_31 = arith.constant dense<0.000000e+00> : vector<64x128xf32>
    %27 = tpu.matmul %24, %26, %cst_31 {dimension_numbers = #tpu.dot_dimension_numbers<[1], [0], [0], [1], [0, 0, 1, 1], [], []>} : vector<64x128xbf16>, vector<128x128xbf16>, vector<64x128xf32> -> vector<64x128xf32>
    %28 = arith.addf %21, %27 : vector<64x128xf32>
    %c0_32 = arith.constant 0 : index
    %c0_33 = arith.constant 0 : index
    %c2 = arith.constant 2 : index
    %c0_34 = arith.constant 0 : index
    %29 = vector.load %arg7[%c0_32, %c0_33, %c2, %c0_34] : memref<1x10x10x128xf32, #tpu.memory_space<vmem>>, vector<1x8x8x128xf32>
    %30 = vector.shape_cast %29 : vector<1x8x8x128xf32> to vector<64x128xf32>
    %31 = arith.truncf %30 : vector<64x128xf32> to vector<64x128xbf16>
    %c2_35 = arith.constant 2 : index
    %c0_36 = arith.constant 0 : index
    %c0_37 = arith.constant 0 : index
    %32 = vector.load %arg4[%c2_35, %c0_36, %c0_37] : memref<9x128x128xbf16, #tpu.memory_space<vmem>>, vector<1x128x128xbf16>
    %33 = vector.shape_cast %32 : vector<1x128x128xbf16> to vector<128x128xbf16>
    %cst_38 = arith.constant dense<0.000000e+00> : vector<64x128xf32>
    %34 = tpu.matmul %31, %33, %cst_38 {dimension_numbers = #tpu.dot_dimension_numbers<[1], [0], [0], [1], [0, 0, 1, 1], [], []>} : vector<64x128xbf16>, vector<128x128xbf16>, vector<64x128xf32> -> vector<64x128xf32>
    %35 = arith.addf %28, %34 : vector<64x128xf32>
    %c0_39 = arith.constant 0 : index
    %c1_40 = arith.constant 1 : index
    %c0_41 = arith.constant 0 : index
    %c0_42 = arith.constant 0 : index
    %36 = vector.load %arg7[%c0_39, %c1_40, %c0_41, %c0_42] : memref<1x10x10x128xf32, #tpu.memory_space<vmem>>, vector<1x8x8x128xf32>
    %37 = vector.shape_cast %36 : vector<1x8x8x128xf32> to vector<64x128xf32>
    %38 = arith.truncf %37 : vector<64x128xf32> to vector<64x128xbf16>
    %c3 = arith.constant 3 : index
    %c0_43 = arith.constant 0 : index
    %c0_44 = arith.constant 0 : index
    %39 = vector.load %arg4[%c3, %c0_43, %c0_44] : memref<9x128x128xbf16, #tpu.memory_space<vmem>>, vector<1x128x128xbf16>
    %40 = vector.shape_cast %39 : vector<1x128x128xbf16> to vector<128x128xbf16>
    %cst_45 = arith.constant dense<0.000000e+00> : vector<64x128xf32>
    %41 = tpu.matmul %38, %40, %cst_45 {dimension_numbers = #tpu.dot_dimension_numbers<[1], [0], [0], [1], [0, 0, 1, 1], [], []>} : vector<64x128xbf16>, vector<128x128xbf16>, vector<64x128xf32> -> vector<64x128xf32>
    %42 = arith.addf %35, %41 : vector<64x128xf32>
    %c0_46 = arith.constant 0 : index
    %c1_47 = arith.constant 1 : index
    %c1_48 = arith.constant 1 : index
    %c0_49 = arith.constant 0 : index
    %43 = vector.load %arg7[%c0_46, %c1_47, %c1_48, %c0_49] : memref<1x10x10x128xf32, #tpu.memory_space<vmem>>, vector<1x8x8x128xf32>
    %44 = vector.shape_cast %43 : vector<1x8x8x128xf32> to vector<64x128xf32>
    %45 = arith.truncf %44 : vector<64x128xf32> to vector<64x128xbf16>
    %c4 = arith.constant 4 : index
    %c0_50 = arith.constant 0 : index
    %c0_51 = arith.constant 0 : index
    %46 = vector.load %arg4[%c4, %c0_50, %c0_51] : memref<9x128x128xbf16, #tpu.memory_space<vmem>>, vector<1x128x128xbf16>
    %47 = vector.shape_cast %46 : vector<1x128x128xbf16> to vector<128x128xbf16>
    %cst_52 = arith.constant dense<0.000000e+00> : vector<64x128xf32>
    %48 = tpu.matmul %45, %47, %cst_52 {dimension_numbers = #tpu.dot_dimension_numbers<[1], [0], [0], [1], [0, 0, 1, 1], [], []>} : vector<64x128xbf16>, vector<128x128xbf16>, vector<64x128xf32> -> vector<64x128xf32>
    %49 = arith.addf %42, %48 : vector<64x128xf32>
    %c0_53 = arith.constant 0 : index
    %c1_54 = arith.constant 1 : index
    %c2_55 = arith.constant 2 : index
    %c0_56 = arith.constant 0 : index
    %50 = vector.load %arg7[%c0_53, %c1_54, %c2_55, %c0_56] : memref<1x10x10x128xf32, #tpu.memory_space<vmem>>, vector<1x8x8x128xf32>
    %51 = vector.shape_cast %50 : vector<1x8x8x128xf32> to vector<64x128xf32>
    %52 = arith.truncf %51 : vector<64x128xf32> to vector<64x128xbf16>
    %c5 = arith.constant 5 : index
    %c0_57 = arith.constant 0 : index
    %c0_58 = arith.constant 0 : index
    %53 = vector.load %arg4[%c5, %c0_57, %c0_58] : memref<9x128x128xbf16, #tpu.memory_space<vmem>>, vector<1x128x128xbf16>
    %54 = vector.shape_cast %53 : vector<1x128x128xbf16> to vector<128x128xbf16>
    %cst_59 = arith.constant dense<0.000000e+00> : vector<64x128xf32>
    %55 = tpu.matmul %52, %54, %cst_59 {dimension_numbers = #tpu.dot_dimension_numbers<[1], [0], [0], [1], [0, 0, 1, 1], [], []>} : vector<64x128xbf16>, vector<128x128xbf16>, vector<64x128xf32> -> vector<64x128xf32>
    %56 = arith.addf %49, %55 : vector<64x128xf32>
    %c0_60 = arith.constant 0 : index
    %c2_61 = arith.constant 2 : index
    %c0_62 = arith.constant 0 : index
    %c0_63 = arith.constant 0 : index
    %57 = vector.load %arg7[%c0_60, %c2_61, %c0_62, %c0_63] : memref<1x10x10x128xf32, #tpu.memory_space<vmem>>, vector<1x8x8x128xf32>
    %58 = vector.shape_cast %57 : vector<1x8x8x128xf32> to vector<64x128xf32>
    %59 = arith.truncf %58 : vector<64x128xf32> to vector<64x128xbf16>
    %c6 = arith.constant 6 : index
    %c0_64 = arith.constant 0 : index
    %c0_65 = arith.constant 0 : index
    %60 = vector.load %arg4[%c6, %c0_64, %c0_65] : memref<9x128x128xbf16, #tpu.memory_space<vmem>>, vector<1x128x128xbf16>
    %61 = vector.shape_cast %60 : vector<1x128x128xbf16> to vector<128x128xbf16>
    %cst_66 = arith.constant dense<0.000000e+00> : vector<64x128xf32>
    %62 = tpu.matmul %59, %61, %cst_66 {dimension_numbers = #tpu.dot_dimension_numbers<[1], [0], [0], [1], [0, 0, 1, 1], [], []>} : vector<64x128xbf16>, vector<128x128xbf16>, vector<64x128xf32> -> vector<64x128xf32>
    %63 = arith.addf %56, %62 : vector<64x128xf32>
    %c0_67 = arith.constant 0 : index
    %c2_68 = arith.constant 2 : index
    %c1_69 = arith.constant 1 : index
    %c0_70 = arith.constant 0 : index
    %64 = vector.load %arg7[%c0_67, %c2_68, %c1_69, %c0_70] : memref<1x10x10x128xf32, #tpu.memory_space<vmem>>, vector<1x8x8x128xf32>
    %65 = vector.shape_cast %64 : vector<1x8x8x128xf32> to vector<64x128xf32>
    %66 = arith.truncf %65 : vector<64x128xf32> to vector<64x128xbf16>
    %c7 = arith.constant 7 : index
    %c0_71 = arith.constant 0 : index
    %c0_72 = arith.constant 0 : index
    %67 = vector.load %arg4[%c7, %c0_71, %c0_72] : memref<9x128x128xbf16, #tpu.memory_space<vmem>>, vector<1x128x128xbf16>
    %68 = vector.shape_cast %67 : vector<1x128x128xbf16> to vector<128x128xbf16>
    %cst_73 = arith.constant dense<0.000000e+00> : vector<64x128xf32>
    %69 = tpu.matmul %66, %68, %cst_73 {dimension_numbers = #tpu.dot_dimension_numbers<[1], [0], [0], [1], [0, 0, 1, 1], [], []>} : vector<64x128xbf16>, vector<128x128xbf16>, vector<64x128xf32> -> vector<64x128xf32>
    %70 = arith.addf %63, %69 : vector<64x128xf32>
    %c0_74 = arith.constant 0 : index
    %c2_75 = arith.constant 2 : index
    %c2_76 = arith.constant 2 : index
    %c0_77 = arith.constant 0 : index
    %71 = vector.load %arg7[%c0_74, %c2_75, %c2_76, %c0_77] : memref<1x10x10x128xf32, #tpu.memory_space<vmem>>, vector<1x8x8x128xf32>
    %72 = vector.shape_cast %71 : vector<1x8x8x128xf32> to vector<64x128xf32>
    %73 = arith.truncf %72 : vector<64x128xf32> to vector<64x128xbf16>
    %c8 = arith.constant 8 : index
    %c0_78 = arith.constant 0 : index
    %c0_79 = arith.constant 0 : index
    %74 = vector.load %arg4[%c8, %c0_78, %c0_79] : memref<9x128x128xbf16, #tpu.memory_space<vmem>>, vector<1x128x128xbf16>
    %75 = vector.shape_cast %74 : vector<1x128x128xbf16> to vector<128x128xbf16>
    %cst_80 = arith.constant dense<0.000000e+00> : vector<64x128xf32>
    %76 = tpu.matmul %73, %75, %cst_80 {dimension_numbers = #tpu.dot_dimension_numbers<[1], [0], [0], [1], [0, 0, 1, 1], [], []>} : vector<64x128xbf16>, vector<128x128xbf16>, vector<64x128xf32> -> vector<64x128xf32>
    %77 = arith.addf %70, %76 : vector<64x128xf32>
    %c0_81 = arith.constant 0 : index
    %c0_82 = arith.constant 0 : index
    %78 = vector.load %arg5[%c0_81, %c0_82] : memref<1x128xf32, #tpu.memory_space<vmem>>, vector<1x128xf32>
    %79 = vector.broadcast %78 : vector<1x128xf32> to vector<64x128xf32>
    %80 = arith.addf %77, %79 : vector<64x128xf32>
    %81 = vector.shape_cast %80 : vector<64x128xf32> to vector<1x8x8x128xf32>
    %c0_83 = arith.constant 0 : index
    %c0_84 = arith.constant 0 : index
    %c0_85 = arith.constant 0 : index
    %c0_86 = arith.constant 0 : index
    %82 = vector.load %arg6[%c0_83, %c0_84, %c0_85, %c0_86] : memref<1x8x8x128xf32, #tpu.memory_space<vmem>>, vector<1x8x8x128xf32>
    tpu.vector_store %arg6[%c0_83, %c0_84, %c0_85, %c0_86], %81 {strides = array<i32>} : memref<1x8x8x128xf32, #tpu.memory_space<vmem>>, vector<1x8x8x128xf32>,
    return
  }
  func.func @transform_0(%arg0: i32) -> (i32, i32, i32, i32) {
    %c0_i32 = arith.constant 0 : i32
    %c0_i32_0 = arith.constant 0 : i32
    %c0_i32_1 = arith.constant 0 : i32
    %c0_i32_2 = arith.constant 0 : i32
    return %arg0, %c0_i32, %c0_i32_0, %c0_i32_1 : i32, i32, i32, i32
  }
  func.func @transform_1(%arg0: i32) -> (i32, i32) {
    %c0_i32 = arith.constant 0 : i32
    %c0_i32_0 = arith.constant 0 : i32
    %c0_i32_1 = arith.constant 0 : i32
    return %c0_i32, %c0_i32_0 : i32, i32
  }
  func.func @transform_2(%arg0: i32) -> (i32, i32) {
    %c0_i32 = arith.constant 0 : i32
    %c0_i32_0 = arith.constant 0 : i32
    %c0_i32_1 = arith.constant 0 : i32
    return %c0_i32, %c0_i32_0 : i32, i32
  }
  func.func @transform_3(%arg0: i32) -> (i32, i32, i32) {
    %c0_i32 = arith.constant 0 : i32
    %c0_i32_0 = arith.constant 0 : i32
    %c0_i32_1 = arith.constant 0 : i32
    %c0_i32_2 = arith.constant 0 : i32
    return %c0_i32, %c0_i32_0, %c0_i32_1 : i32, i32, i32
  }
  func.func @transform_4(%arg0: i32) -> (i32, i32) {
    %c0_i32 = arith.constant 0 : i32
    %c0_i32_0 = arith.constant 0 : i32
    %c0_i32_1 = arith.constant 0 : i32
    return %c0_i32, %c0_i32_0 : i32, i32
  }
  func.func @transform_5(%arg0: i32) -> (i32, i32, i32, i32) {
    %c0_i32 = arith.constant 0 : i32
    %c0_i32_0 = arith.constant 0 : i32
    %c0_i32_1 = arith.constant 0 : i32
    %c0_i32_2 = arith.constant 0 : i32
    return %arg0, %c0_i32, %c0_i32_0, %c0_i32_1 : i32, i32, i32, i32
  }
}

</mosaic_0001>

<llo_original>
// kernel: _lambda_.10
$region0: #{_lambda_.10}
  #allocation0 [shape = 'u32[]', space=smem, size = 0x4, offset = 0x4, fixed_abs, tag = 'smem constant byte address 0x4 - core index']
  #allocation1 [shape = 'u32[144,128]{1,0:T(1,128)}', space=vmem, size = 0x12000, scoped, tag = 'internal scratch']
  #allocation2 [shape = 'f32[1,128]{1,0:T(1,128)}', space=vmem, size = 0x200, scoped, tag = 'scratch operand']
  #allocation3 [shape = 'f32[1,128]{1,0:T(1,128)}', space=vmem, size = 0x200, scoped, tag = 'scratch operand']
  %s0 = inlined_call_operand.vmem [shape: f32[512,128], index: 0, kind: input, shape index: {}]
  %s1 = inlined_call_operand.vmem [shape: f32[1,128], index: 1, kind: input, shape index: {}]
  %s2 = inlined_call_operand.vmem [shape: f32[1,128], index: 2, kind: input, shape index: {}]
  %s3 = inlined_call_operand.vmem [shape: f32[2,128], index: 3, kind: output, shape index: {}]
  %s4 = sld [smem:[#allocation0]]
  $region30: #{_lambda_.10} parent=0
    _
  %s6 = ssub.s32 1, %s4
  %s7 = scalar_select 0, %s6, %s4
  // Predicated region
  $region2: #{_lambda_.10} parent=0 // pred_check
    _
  $region3: #{_lambda_.10} parent=0 // pred_check_branch
    %9 = sbr.rel (0) target = $region5
  $region4: #{_lambda_.10} parent=0 // pred_region
    _
  $region5: #{_lambda_.10} parent=0 // pred_fallthru
    _
  // Predicated region
  $region6: #{_lambda_.10} parent=0 // pred_check
    _
  $region7: #{_lambda_.10} parent=0 // pred_check_branch
    %11 = sbr.rel (0) target = $region9
  $region8: #{_lambda_.10} parent=0 // pred_region
    _
  $region9: #{_lambda_.10} parent=0 // pred_fallthru
    _
  // Predicated region
  $region10: #{_lambda_.10} parent=0 // pred_check
    _
  $region11: #{_lambda_.10} parent=0 // pred_check_branch
    %13 = sbr.rel (0) target = $region13
  $region12: #{_lambda_.10} parent=0 // pred_region
    _
  $region13: #{_lambda_.10} parent=0 // pred_fallthru
    _
  %p14 = scmp.eq.s32.totalorder 0, 0
  // Predicated region
  $region14: #{_lambda_.10} parent=0 // pred_check
    %p15 = pneg %p14
  $region15: #{_lambda_.10} parent=0 // pred_check_branch
    %17 = sbr.rel (%p15) target = $region17
  $region16: #{_lambda_.10} parent=0 // pred_region
    %18 = vst [vmem:[#allocation2] sm:$0x1] 0.0
    %19 = vst [vmem:[#allocation3] sm:$0x1] 0.0
  $region17: #{_lambda_.10} parent=0 // pred_fallthru
    _
  %v20 = vld [vmem:[%s0] sm:$0xff]
  %v21 = vld [vmem:[%s0 + $0x8] sm:$0xff]
  %v22 = vld [vmem:[%s0 + $0x10] sm:$0xff]
  %v23 = vld [vmem:[%s0 + $0x18] sm:$0xff]
  %v24 = vld [vmem:[%s0 + $0x20] sm:$0xff]
  %v25 = vld [vmem:[%s0 + $0x28] sm:$0xff]
  %v26 = vld [vmem:[%s0 + $0x30] sm:$0xff]
  %v27 = vld [vmem:[%s0 + $0x38] sm:$0xff]
  %v28 = vld [vmem:[%s0 + $0x40] sm:$0xff]
  %v29 = vld [vmem:[%s0 + $0x48] sm:$0xff]
  %v30 = vld [vmem:[%s0 + $0x50] sm:$0xff]
  %v31 = vld [vmem:[%s0 + $0x58] sm:$0xff]
  %v32 = vld [vmem:[%s0 + $0x60] sm:$0xff]
  %v33 = vld [vmem:[%s0 + $0x68] sm:$0xff]
  %v34 = vld [vmem:[%s0 + $0x70] sm:$0xff]
  %v35 = vld [vmem:[%s0 + $0x78] sm:$0xff]
  %v36 = vld [vmem:[%s0 + $0x80] sm:$0xff]
  %v37 = vld [vmem:[%s0 + $0x88] sm:$0xff]
  %v38 = vld [vmem:[%s0 + $0x90] sm:$0xff]
  %v39 = vld [vmem:[%s0 + $0x98] sm:$0xff]
  %v40 = vld [vmem:[%s0 + $0xa0] sm:$0xff]
  %v41 = vld [vmem:[%s0 + $0xa8] sm:$0xff]
  %v42 = vld [vmem:[%s0 + $0xb0] sm:$0xff]
  %v43 = vld [vmem:[%s0 + $0xb8] sm:$0xff]
  %v44 = vld [vmem:[%s0 + $0xc0] sm:$0xff]
  %v45 = vld [vmem:[%s0 + $0xc8] sm:$0xff]
  %v46 = vld [vmem:[%s0 + $0xd0] sm:$0xff]
  %v47 = vld [vmem:[%s0 + $0xd8] sm:$0xff]
  %v48 = vld [vmem:[%s0 + $0xe0] sm:$0xff]
  %v49 = vld [vmem:[%s0 + $0xe8] sm:$0xff]
  %v50 = vld [vmem:[%s0 + $0xf0] sm:$0xff]
  %v51 = vld [vmem:[%s0 + $0xf8] sm:$0xff]
  %v52 = vld [vmem:[%s0 + $0x100] sm:$0xff]
  %v53 = vld [vmem:[%s0 + $0x108] sm:$0xff]
  %v54 = vld [vmem:[%s0 + $0x110] sm:$0xff]
  %v55 = vld [vmem:[%s0 + $0x118] sm:$0xff]
  %v56 = vld [vmem:[%s0 + $0x120] sm:$0xff]
  %v57 = vld [vmem:[%s0 + $0x128] sm:$0xff]
  %v58 = vld [vmem:[%s0 + $0x130] sm:$0xff]
  %v59 = vld [vmem:[%s0 + $0x138] sm:$0xff]
  %v60 = vld [vmem:[%s0 + $0x140] sm:$0xff]
  %v61 = vld [vmem:[%s0 + $0x148] sm:$0xff]
  %v62 = vld [vmem:[%s0 + $0x150] sm:$0xff]
  %v63 = vld [vmem:[%s0 + $0x158] sm:$0xff]
  %v64 = vld [vmem:[%s0 + $0x160] sm:$0xff]
  %v65 = vld [vmem:[%s0 + $0x168] sm:$0xff]
  %v66 = vld [vmem:[%s0 + $0x170] sm:$0xff]
  %v67 = vld [vmem:[%s0 + $0x178] sm:$0xff]
  %v68 = vld [vmem:[%s0 + $0x180] sm:$0xff]
  %v69 = vld [vmem:[%s0 + $0x188] sm:$0xff]
  %v70 = vld [vmem:[%s0 + $0x190] sm:$0xff]
  %v71 = vld [vmem:[%s0 + $0x198] sm:$0xff]
  %v72 = vld [vmem:[%s0 + $0x1a0] sm:$0xff]
  %v73 = vld [vmem:[%s0 + $0x1a8] sm:$0xff]
  %v74 = vld [vmem:[%s0 + $0x1b0] sm:$0xff]
  %v75 = vld [vmem:[%s0 + $0x1b8] sm:$0xff]
  %v76 = vld [vmem:[%s0 + $0x1c0] sm:$0xff]
  %v77 = vld [vmem:[%s0 + $0x1c8] sm:$0xff]
  %v78 = vld [vmem:[%s0 + $0x1d0] sm:$0xff]
  %v79 = vld [vmem:[%s0 + $0x1d8] sm:$0xff]
  %v80 = vld [vmem:[%s0 + $0x1e0] sm:$0xff]
  %v81 = vld [vmem:[%s0 + $0x1e8] sm:$0xff]
  %v82 = vld [vmem:[%s0 + $0x1f0] sm:$0xff]
  %v83 = vld [vmem:[%s0 + $0x1f8] sm:$0xff]
  %v84 = vld [vmem:[#allocation2] sm:$0x1]
  %v85 = vadd.f32 %v20, %v21
  %v86 = vadd.f32 %v85, %v22
  %v87 = vadd.f32 %v86, %v23
  %v88 = vadd.f32 %v87, %v24
  %v89 = vadd.f32 %v88, %v25
  %v90 = vadd.f32 %v89, %v26
  %v91 = vadd.f32 %v90, %v27
  %v92 = vadd.f32 %v91, %v28
  %v93 = vadd.f32 %v92, %v29
  %v94 = vadd.f32 %v93, %v30
  %v95 = vadd.f32 %v94, %v31
  %v96 = vadd.f32 %v95, %v32
  %v97 = vadd.f32 %v96, %v33
  %v98 = vadd.f32 %v97, %v34
  %v99 = vadd.f32 %v98, %v35
  %v100 = vadd.f32 %v99, %v36
  %v101 = vadd.f32 %v100, %v37
  %v102 = vadd.f32 %v101, %v38
  %v103 = vadd.f32 %v102, %v39
  %v104 = vadd.f32 %v103, %v40
  %v105 = vadd.f32 %v104, %v41
  %v106 = vadd.f32 %v105, %v42
  %v107 = vadd.f32 %v106, %v43
  %v108 = vadd.f32 %v107, %v44
  %v109 = vadd.f32 %v108, %v45
  %v110 = vadd.f32 %v109, %v46
  %v111 = vadd.f32 %v110, %v47
  %v112 = vadd.f32 %v111, %v48
  %v113 = vadd.f32 %v112, %v49
  %v114 = vadd.f32 %v113, %v50
  %v115 = vadd.f32 %v114, %v51
  %v116 = vadd.f32 %v115, %v52
  %v117 = vadd.f32 %v116, %v53
  %v118 = vadd.f32 %v117, %v54
  %v119 = vadd.f32 %v118, %v55
  %v120 = vadd.f32 %v119, %v56
  %v121 = vadd.f32 %v120, %v57
  %v122 = vadd.f32 %v121, %v58
  %v123 = vadd.f32 %v122, %v59
  %v124 = vadd.f32 %v123, %v60
  %v125 = vadd.f32 %v124, %v61
  %v126 = vadd.f32 %v125, %v62
  %v127 = vadd.f32 %v126, %v63
  %v128 = vadd.f32 %v127, %v64
  %v129 = vadd.f32 %v128, %v65
  %v130 = vadd.f32 %v129, %v66
  %v131 = vadd.f32 %v130, %v67
  %v132 = vadd.f32 %v131, %v68
  %v133 = vadd.f32 %v132, %v69
  %v134 = vadd.f32 %v133, %v70
  %v135 = vadd.f32 %v134, %v71
  %v136 = vadd.f32 %v135, %v72
  %v137 = vadd.f32 %v136, %v73
  %v138 = vadd.f32 %v137, %v74
  %v139 = vadd.f32 %v138, %v75
  %v140 = vadd.f32 %v139, %v76
  %v141 = vadd.f32 %v140, %v77
  %v142 = vadd.f32 %v141, %v78
  %v143 = vadd.f32 %v142, %v79
  %v144 = vadd.f32 %v143, %v80
  %v145 = vadd.f32 %v144, %v81
  %v146 = vadd.f32 %v145, %v82
  %v147 = vadd.f32 %v146, %v83
  %v148 = vrot.slane %v147, 4
  %v149 = vadd.f32 %v147, %v148
  %v150 = vrot.slane %v149, 2
  %v151 = vadd.f32 %v149, %v150
  %v152 = vrot.slane %v151, 1
  %v153 = vadd.f32 %v151, %v152
  %v154 = vadd.f32 %v84, %v153
  %155 = vst [vmem:[#allocation2] sm:$0x1] %v154
  %v156 = vld [vmem:[#allocation3] sm:$0x1]
  %v157 = vmul.f32 %v20, %v20
  %v158 = vmul.f32 %v21, %v21
  %v159 = vmul.f32 %v22, %v22
  %v160 = vmul.f32 %v23, %v23
  %v161 = vmul.f32 %v24, %v24
  %v162 = vmul.f32 %v25, %v25
  %v163 = vmul.f32 %v26, %v26
  %v164 = vmul.f32 %v27, %v27
  %v165 = vmul.f32 %v28, %v28
  %v166 = vmul.f32 %v29, %v29
  %v167 = vmul.f32 %v30, %v30
  %v168 = vmul.f32 %v31, %v31
  %v169 = vmul.f32 %v32, %v32
  %v170 = vmul.f32 %v33, %v33
  %v171 = vmul.f32 %v34, %v34
  %v172 = vmul.f32 %v35, %v35
  %v173 = vmul.f32 %v36, %v36
  %v174 = vmul.f32 %v37, %v37
  %v175 = vmul.f32 %v38, %v38
  %v176 = vmul.f32 %v39, %v39
  %v177 = vmul.f32 %v40, %v40
  %v178 = vmul.f32 %v41, %v41
  %v179 = vmul.f32 %v42, %v42
  %v180 = vmul.f32 %v43, %v43
  %v181 = vmul.f32 %v44, %v44
  %v182 = vmul.f32 %v45, %v45
  %v183 = vmul.f32 %v46, %v46
  %v184 = vmul.f32 %v47, %v47
  %v185 = vmul.f32 %v48, %v48
  %v186 = vmul.f32 %v49, %v49
  %v187 = vmul.f32 %v50, %v50
  %v188 = vmul.f32 %v51, %v51
  %v189 = vmul.f32 %v52, %v52
  %v190 = vmul.f32 %v53, %v53
  %v191 = vmul.f32 %v54, %v54
  %v192 = vmul.f32 %v55, %v55
  %v193 = vmul.f32 %v56, %v56
  %v194 = vmul.f32 %v57, %v57
  %v195 = vmul.f32 %v58, %v58
  %v196 = vmul.f32 %v59, %v59
  %v197 = vmul.f32 %v60, %v60
  %v198 = vmul.f32 %v61, %v61
  %v199 = vmul.f32 %v62, %v62
  %v200 = vmul.f32 %v63, %v63
  %v201 = vmul.f32 %v64, %v64
  %v202 = vmul.f32 %v65, %v65
  %v203 = vmul.f32 %v66, %v66
  %v204 = vmul.f32 %v67, %v67
  %v205 = vmul.f32 %v68, %v68
  %v206 = vmul.f32 %v69, %v69
  %v207 = vmul.f32 %v70, %v70
  %v208 = vmul.f32 %v71, %v71
  %v209 = vmul.f32 %v72, %v72
  %v210 = vmul.f32 %v73, %v73
  %v211 = vmul.f32 %v74, %v74
  %v212 = vmul.f32 %v75, %v75
  %v213 = vmul.f32 %v76, %v76
  %v214 = vmul.f32 %v77, %v77
  %v215 = vmul.f32 %v78, %v78
  %v216 = vmul.f32 %v79, %v79
  %v217 = vmul.f32 %v80, %v80
  %v218 = vmul.f32 %v81, %v81
  %v219 = vmul.f32 %v82, %v82
  %v220 = vmul.f32 %v83, %v83
  %v221 = vadd.f32 %v157, %v158
  %v222 = vadd.f32 %v221, %v159
  %v223 = vadd.f32 %v222, %v160
  %v224 = vadd.f32 %v223, %v161
  %v225 = vadd.f32 %v224, %v162
  %v226 = vadd.f32 %v225, %v163
  %v227 = vadd.f32 %v226, %v164
  %v228 = vadd.f32 %v227, %v165
  %v229 = vadd.f32 %v228, %v166
  %v230 = vadd.f32 %v229, %v167
  %v231 = vadd.f32 %v230, %v168
  %v232 = vadd.f32 %v231, %v169
  %v233 = vadd.f32 %v232, %v170
  %v234 = vadd.f32 %v233, %v171
  %v235 = vadd.f32 %v234, %v172
  %v236 = vadd.f32 %v235, %v173
  %v237 = vadd.f32 %v236, %v174
  %v238 = vadd.f32 %v237, %v175
  %v239 = vadd.f32 %v238, %v176
  %v240 = vadd.f32 %v239, %v177
  %v241 = vadd.f32 %v240, %v178
  %v242 = vadd.f32 %v241, %v179
  %v243 = vadd.f32 %v242, %v180
  %v244 = vadd.f32 %v243, %v181
  %v245 = vadd.f32 %v244, %v182
  %v246 = vadd.f32 %v245, %v183
  %v247 = vadd.f32 %v246, %v184
  %v248 = vadd.f32 %v247, %v185
  %v249 = vadd.f32 %v248, %v186
  %v250 = vadd.f32 %v249, %v187
  %v251 = vadd.f32 %v250, %v188
  %v252 = vadd.f32 %v251, %v189
  %v253 = vadd.f32 %v252, %v190
  %v254 = vadd.f32 %v253, %v191
  %v255 = vadd.f32 %v254, %v192
  %v256 = vadd.f32 %v255, %v193
  %v257 = vadd.f32 %v256, %v194
  %v258 = vadd.f32 %v257, %v195
  %v259 = vadd.f32 %v258, %v196
  %v260 = vadd.f32 %v259, %v197
  %v261 = vadd.f32 %v260, %v198
  %v262 = vadd.f32 %v261, %v199
  %v263 = vadd.f32 %v262, %v200
  %v264 = vadd.f32 %v263, %v201
  %v265 = vadd.f32 %v264, %v202
  %v266 = vadd.f32 %v265, %v203
  %v267 = vadd.f32 %v266, %v204
  %v268 = vadd.f32 %v267, %v205
  %v269 = vadd.f32 %v268, %v206
  %v270 = vadd.f32 %v269, %v207
  %v271 = vadd.f32 %v270, %v208
  %v272 = vadd.f32 %v271, %v209
  %v273 = vadd.f32 %v272, %v210
  %v274 = vadd.f32 %v273, %v211
  %v275 = vadd.f32 %v274, %v212
  %v276 = vadd.f32 %v275, %v213
  %v277 = vadd.f32 %v276, %v214
  %v278 = vadd.f32 %v277, %v215
  %v279 = vadd.f32 %v278, %v216
  %v280 = vadd.f32 %v279, %v217
  %v281 = vadd.f32 %v280, %v218
  %v282 = vadd.f32 %v281, %v219
  %v283 = vadd.f32 %v282, %v220
  %v284 = vrot.slane %v283, 4
  %v285 = vadd.f32 %v283, %v284
  %v286 = vrot.slane %v285, 2
  %v287 = vadd.f32 %v285, %v286
  %v288 = vrot.slane %v287, 1
  %v289 = vadd.f32 %v287, %v288
  %v290 = vadd.f32 %v156, %v289
  %291 = vst [vmem:[#allocation3] sm:$0x1] %v290
  // Predicated region
  $region18: #{_lambda_.10} parent=0 // pred_check
    %p292 = pneg %p14
  $region19: #{_lambda_.10} parent=0 // pred_check_branch
    %294 = sbr.rel (%p292) target = $region21
  $region20: #{_lambda_.10} parent=0 // pred_region
    %v295 = vld [vmem:[#allocation2] sm:$0x1]
    %v296 = vmul.f32 %v295, 0.001953125
    %v297 = vld [vmem:[#allocation3] sm:$0x1]
    %v298 = vmul.f32 %v297, 0.001953125
    %v299 = vmul.f32 %v296, %v296
    %v300 = vsub.f32 %v298, %v299
    %v301 = vld [vmem:[%s1] sm:$0x1]
    %v302 = vadd.f32 %v300, 1e-05
    %v303 = vrsqrt.pop %v302
    %v304 = vmul.f32 %v301, %v303
    %305 = vst [vmem:[%s3] sm:$0x1] %v304
    %v306 = vld [vmem:[%s2] sm:$0x1]
    %v307 = vmul.f32 %v296, %v304
    %v308 = vsub.f32 %v306, %v307
    %309 = vst [vmem:[%s3 + $0x1] sm:$0x1] %v308
  $region21: #{_lambda_.10} parent=0 // pred_fallthru
    _
  // Predicated region
  $region22: #{_lambda_.10} parent=0 // pred_check
    _
  $region23: #{_lambda_.10} parent=0 // pred_check_branch
    %311 = sbr.rel (0) target = $region25
  $region24: #{_lambda_.10} parent=0 // pred_region
    _
  $region25: #{_lambda_.10} parent=0 // pred_fallthru
    _
  // Predicated region
  $region26: #{_lambda_.10} parent=0 // pred_check
    _
  $region27: #{_lambda_.10} parent=0 // pred_check_branch
    %313 = sbr.rel (0) target = $region29
  $region28: #{_lambda_.10} parent=0 // pred_region
    _
  $region29: #{_lambda_.10} parent=0 // pred_fallthru
    _

// kernel: _lambda_.11
$region0: #{_lambda_.11}
  #allocation0 [shape = 'u32[]', space=smem, size = 0x4, offset = 0x4, fixed_abs, tag = 'smem constant byte address 0x4 - core index']
  #allocation1 [shape = 'u32[144,128]{1,0:T(1,128)}', space=vmem, size = 0x12000, scoped, tag = 'internal scratch']
  %s0 = inlined_call_operand.vmem [shape: f32[512,128], index: 0, kind: input, shape index: {}]
  %s1 = inlined_call_operand.vmem [shape: f32[1,128], index: 1, kind: input, shape index: {}]
  %s2 = inlined_call_operand.vmem [shape: f32[1,128], index: 2, kind: input, shape index: {}]
  %s3 = inlined_call_operand.vmem [shape: f32[512,128], index: 3, kind: output, shape index: {}]
  %s4 = sld [smem:[#allocation0]]
  $region22: #{_lambda_.11} parent=0
    _
  %s6 = ssub.s32 1, %s4
  %s7 = scalar_select 0, %s6, %s4
  // Predicated region
  $region2: #{_lambda_.11} parent=0 // pred_check
    _
  $region3: #{_lambda_.11} parent=0 // pred_check_branch
    %9 = sbr.rel (0) target = $region5
  $region4: #{_lambda_.11} parent=0 // pred_region
    _
  $region5: #{_lambda_.11} parent=0 // pred_fallthru
    _
  // Predicated region
  $region6: #{_lambda_.11} parent=0 // pred_check
    _
  $region7: #{_lambda_.11} parent=0 // pred_check_branch
    %11 = sbr.rel (0) target = $region9
  $region8: #{_lambda_.11} parent=0 // pred_region
    _
  $region9: #{_lambda_.11} parent=0 // pred_fallthru
    _
  // Predicated region
  $region10: #{_lambda_.11} parent=0 // pred_check
    _
  $region11: #{_lambda_.11} parent=0 // pred_check_branch
    %13 = sbr.rel (0) target = $region13
  $region12: #{_lambda_.11} parent=0 // pred_region
    _
  $region13: #{_lambda_.11} parent=0 // pred_fallthru
    _
  %v14 = vld [vmem:[%s0] sm:$0xff]
  %v15 = vld [vmem:[%s0 + $0x8] sm:$0xff]
  %v16 = vld [vmem:[%s0 + $0x10] sm:$0xff]
  %v17 = vld [vmem:[%s0 + $0x18] sm:$0xff]
  %v18 = vld [vmem:[%s0 + $0x20] sm:$0xff]
  %v19 = vld [vmem:[%s0 + $0x28] sm:$0xff]
  %v20 = vld [vmem:[%s0 + $0x30] sm:$0xff]
  %v21 = vld [vmem:[%s0 + $0x38] sm:$0xff]
  %v22 = vld [vmem:[%s0 + $0x40] sm:$0xff]
  %v23 = vld [vmem:[%s0 + $0x48] sm:$0xff]
  %v24 = vld [vmem:[%s0 + $0x50] sm:$0xff]
  %v25 = vld [vmem:[%s0 + $0x58] sm:$0xff]
  %v26 = vld [vmem:[%s0 + $0x60] sm:$0xff]
  %v27 = vld [vmem:[%s0 + $0x68] sm:$0xff]
  %v28 = vld [vmem:[%s0 + $0x70] sm:$0xff]
  %v29 = vld [vmem:[%s0 + $0x78] sm:$0xff]
  %v30 = vld [vmem:[%s0 + $0x80] sm:$0xff]
  %v31 = vld [vmem:[%s0 + $0x88] sm:$0xff]
  %v32 = vld [vmem:[%s0 + $0x90] sm:$0xff]
  %v33 = vld [vmem:[%s0 + $0x98] sm:$0xff]
  %v34 = vld [vmem:[%s0 + $0xa0] sm:$0xff]
  %v35 = vld [vmem:[%s0 + $0xa8] sm:$0xff]
  %v36 = vld [vmem:[%s0 + $0xb0] sm:$0xff]
  %v37 = vld [vmem:[%s0 + $0xb8] sm:$0xff]
  %v38 = vld [vmem:[%s0 + $0xc0] sm:$0xff]
  %v39 = vld [vmem:[%s0 + $0xc8] sm:$0xff]
  %v40 = vld [vmem:[%s0 + $0xd0] sm:$0xff]
  %v41 = vld [vmem:[%s0 + $0xd8] sm:$0xff]
  %v42 = vld [vmem:[%s0 + $0xe0] sm:$0xff]
  %v43 = vld [vmem:[%s0 + $0xe8] sm:$0xff]
  %v44 = vld [vmem:[%s0 + $0xf0] sm:$0xff]
  %v45 = vld [vmem:[%s0 + $0xf8] sm:$0xff]
  %v46 = vld [vmem:[%s0 + $0x100] sm:$0xff]
  %v47 = vld [vmem:[%s0 + $0x108] sm:$0xff]
  %v48 = vld [vmem:[%s0 + $0x110] sm:$0xff]
  %v49 = vld [vmem:[%s0 + $0x118] sm:$0xff]
  %v50 = vld [vmem:[%s0 + $0x120] sm:$0xff]
  %v51 = vld [vmem:[%s0 + $0x128] sm:$0xff]
  %v52 = vld [vmem:[%s0 + $0x130] sm:$0xff]
  %v53 = vld [vmem:[%s0 + $0x138] sm:$0xff]
  %v54 = vld [vmem:[%s0 + $0x140] sm:$0xff]
  %v55 = vld [vmem:[%s0 + $0x148] sm:$0xff]
  %v56 = vld [vmem:[%s0 + $0x150] sm:$0xff]
  %v57 = vld [vmem:[%s0 + $0x158] sm:$0xff]
  %v58 = vld [vmem:[%s0 + $0x160] sm:$0xff]
  %v59 = vld [vmem:[%s0 + $0x168] sm:$0xff]
  %v60 = vld [vmem:[%s0 + $0x170] sm:$0xff]
  %v61 = vld [vmem:[%s0 + $0x178] sm:$0xff]
  %v62 = vld [vmem:[%s0 + $0x180] sm:$0xff]
  %v63 = vld [vmem:[%s0 + $0x188] sm:$0xff]
  %v64 = vld [vmem:[%s0 + $0x190] sm:$0xff]
  %v65 = vld [vmem:[%s0 + $0x198] sm:$0xff]
  %v66 = vld [vmem:[%s0 + $0x1a0] sm:$0xff]
  %v67 = vld [vmem:[%s0 + $0x1a8] sm:$0xff]
  %v68 = vld [vmem:[%s0 + $0x1b0] sm:$0xff]
  %v69 = vld [vmem:[%s0 + $0x1b8] sm:$0xff]
  %v70 = vld [vmem:[%s0 + $0x1c0] sm:$0xff]
  %v71 = vld [vmem:[%s0 + $0x1c8] sm:$0xff]
  %v72 = vld [vmem:[%s0 + $0x1d0] sm:$0xff]
  %v73 = vld [vmem:[%s0 + $0x1d8] sm:$0xff]
  %v74 = vld [vmem:[%s0 + $0x1e0] sm:$0xff]
  %v75 = vld [vmem:[%s0 + $0x1e8] sm:$0xff]
  %v76 = vld [vmem:[%s0 + $0x1f0] sm:$0xff]
  %v77 = vld [vmem:[%s0 + $0x1f8] sm:$0xff]
  %v78 = vld [vmem:[%s1] sm:$0x1]
  %v80 = vlaneseq
  %v81 = vshrl.u32 %v80, 7
  %v82 = vsub.s32 0, %v81
  %v83 = vrot.slane %v78, %v82
  %v85 = vmul.f32 %v14, %v83
  %v86 = vmul.f32 %v15, %v83
  %v87 = vmul.f32 %v16, %v83
  %v88 = vmul.f32 %v17, %v83
  %v89 = vmul.f32 %v18, %v83
  %v90 = vmul.f32 %v19, %v83
  %v91 = vmul.f32 %v20, %v83
  %v92 = vmul.f32 %v21, %v83
  %v93 = vmul.f32 %v22, %v83
  %v94 = vmul.f32 %v23, %v83
  %v95 = vmul.f32 %v24, %v83
  %v96 = vmul.f32 %v25, %v83
  %v97 = vmul.f32 %v26, %v83
  %v98 = vmul.f32 %v27, %v83
  %v99 = vmul.f32 %v28, %v83
  %v100 = vmul.f32 %v29, %v83
  %v101 = vmul.f32 %v30, %v83
  %v102 = vmul.f32 %v31, %v83
  %v103 = vmul.f32 %v32, %v83
  %v104 = vmul.f32 %v33, %v83
  %v105 = vmul.f32 %v34, %v83
  %v106 = vmul.f32 %v35, %v83
  %v107 = vmul.f32 %v36, %v83
  %v108 = vmul.f32 %v37, %v83
  %v109 = vmul.f32 %v38, %v83
  %v110 = vmul.f32 %v39, %v83
  %v111 = vmul.f32 %v40, %v83
  %v112 = vmul.f32 %v41, %v83
  %v113 = vmul.f32 %v42, %v83
  %v114 = vmul.f32 %v43, %v83
  %v115 = vmul.f32 %v44, %v83
  %v116 = vmul.f32 %v45, %v83
  %v117 = vmul.f32 %v46, %v83
  %v118 = vmul.f32 %v47, %v83
  %v119 = vmul.f32 %v48, %v83
  %v120 = vmul.f32 %v49, %v83
  %v121 = vmul.f32 %v50, %v83
  %v122 = vmul.f32 %v51, %v83
  %v123 = vmul.f32 %v52, %v83
  %v124 = vmul.f32 %v53, %v83
  %v125 = vmul.f32 %v54, %v83
  %v126 = vmul.f32 %v55, %v83
  %v127 = vmul.f32 %v56, %v83
  %v128 = vmul.f32 %v57, %v83
  %v129 = vmul.f32 %v58, %v83
  %v130 = vmul.f32 %v59, %v83
  %v131 = vmul.f32 %v60, %v83
  %v132 = vmul.f32 %v61, %v83
  %v133 = vmul.f32 %v62, %v83
  %v134 = vmul.f32 %v63, %v83
  %v135 = vmul.f32 %v64, %v83
  %v136 = vmul.f32 %v65, %v83
  %v137 = vmul.f32 %v66, %v83
  %v138 = vmul.f32 %v67, %v83
  %v139 = vmul.f32 %v68, %v83
  %v140 = vmul.f32 %v69, %v83
  %v141 = vmul.f32 %v70, %v83
  %v142 = vmul.f32 %v71, %v83
  %v143 = vmul.f32 %v72, %v83
  %v144 = vmul.f32 %v73, %v83
  %v145 = vmul.f32 %v74, %v83
  %v146 = vmul.f32 %v75, %v83
  %v147 = vmul.f32 %v76, %v83
  %v148 = vmul.f32 %v77, %v83
  %v149 = vld [vmem:[%s2] sm:$0x1]
  %v151 = vlaneseq
  %v152 = vshrl.u32 %v151, 7
  %v153 = vsub.s32 0, %v152
  %v154 = vrot.slane %v149, %v153
  %v156 = vadd.f32 %v85, %v154
  %v157 = vadd.f32 %v86, %v154
  %v158 = vadd.f32 %v87, %v154
  %v159 = vadd.f32 %v88, %v154
  %v160 = vadd.f32 %v89, %v154
  %v161 = vadd.f32 %v90, %v154
  %v162 = vadd.f32 %v91, %v154
  %v163 = vadd.f32 %v92, %v154
  %v164 = vadd.f32 %v93, %v154
  %v165 = vadd.f32 %v94, %v154
  %v166 = vadd.f32 %v95, %v154
  %v167 = vadd.f32 %v96, %v154
  %v168 = vadd.f32 %v97, %v154
  %v169 = vadd.f32 %v98, %v154
  %v170 = vadd.f32 %v99, %v154
  %v171 = vadd.f32 %v100, %v154
  %v172 = vadd.f32 %v101, %v154
  %v173 = vadd.f32 %v102, %v154
  %v174 = vadd.f32 %v103, %v154
  %v175 = vadd.f32 %v104, %v154
  %v176 = vadd.f32 %v105, %v154
  %v177 = vadd.f32 %v106, %v154
  %v178 = vadd.f32 %v107, %v154
  %v179 = vadd.f32 %v108, %v154
  %v180 = vadd.f32 %v109, %v154
  %v181 = vadd.f32 %v110, %v154
  %v182 = vadd.f32 %v111, %v154
  %v183 = vadd.f32 %v112, %v154
  %v184 = vadd.f32 %v113, %v154
  %v185 = vadd.f32 %v114, %v154
  %v186 = vadd.f32 %v115, %v154
  %v187 = vadd.f32 %v116, %v154
  %v188 = vadd.f32 %v117, %v154
  %v189 = vadd.f32 %v118, %v154
  %v190 = vadd.f32 %v119, %v154
  %v191 = vadd.f32 %v120, %v154
  %v192 = vadd.f32 %v121, %v154
  %v193 = vadd.f32 %v122, %v154
  %v194 = vadd.f32 %v123, %v154
  %v195 = vadd.f32 %v124, %v154
  %v196 = vadd.f32 %v125, %v154
  %v197 = vadd.f32 %v126, %v154
  %v198 = vadd.f32 %v127, %v154
  %v199 = vadd.f32 %v128, %v154
  %v200 = vadd.f32 %v129, %v154
  %v201 = vadd.f32 %v130, %v154
  %v202 = vadd.f32 %v131, %v154
  %v203 = vadd.f32 %v132, %v154
  %v204 = vadd.f32 %v133, %v154
  %v205 = vadd.f32 %v134, %v154
  %v206 = vadd.f32 %v135, %v154
  %v207 = vadd.f32 %v136, %v154
  %v208 = vadd.f32 %v137, %v154
  %v209 = vadd.f32 %v138, %v154
  %v210 = vadd.f32 %v139, %v154
  %v211 = vadd.f32 %v140, %v154
  %v212 = vadd.f32 %v141, %v154
  %v213 = vadd.f32 %v142, %v154
  %v214 = vadd.f32 %v143, %v154
  %v215 = vadd.f32 %v144, %v154
  %v216 = vadd.f32 %v145, %v154
  %v217 = vadd.f32 %v146, %v154
  %v218 = vadd.f32 %v147, %v154
  %v219 = vadd.f32 %v148, %v154
  %v220 = vmax.f32 %v156, 0.0
  %v221 = vmax.f32 %v157, 0.0
  %v222 = vmax.f32 %v158, 0.0
  %v223 = vmax.f32 %v159, 0.0
  %v224 = vmax.f32 %v160, 0.0
  %v225 = vmax.f32 %v161, 0.0
  %v226 = vmax.f32 %v162, 0.0
  %v227 = vmax.f32 %v163, 0.0
  %v228 = vmax.f32 %v164, 0.0
  %v229 = vmax.f32 %v165, 0.0
  %v230 = vmax.f32 %v166, 0.0
  %v231 = vmax.f32 %v167, 0.0
  %v232 = vmax.f32 %v168, 0.0
  %v233 = vmax.f32 %v169, 0.0
  %v234 = vmax.f32 %v170, 0.0
  %v235 = vmax.f32 %v171, 0.0
  %v236 = vmax.f32 %v172, 0.0
  %v237 = vmax.f32 %v173, 0.0
  %v238 = vmax.f32 %v174, 0.0
  %v239 = vmax.f32 %v175, 0.0
  %v240 = vmax.f32 %v176, 0.0
  %v241 = vmax.f32 %v177, 0.0
  %v242 = vmax.f32 %v178, 0.0
  %v243 = vmax.f32 %v179, 0.0
  %v244 = vmax.f32 %v180, 0.0
  %v245 = vmax.f32 %v181, 0.0
  %v246 = vmax.f32 %v182, 0.0
  %v247 = vmax.f32 %v183, 0.0
  %v248 = vmax.f32 %v184, 0.0
  %v249 = vmax.f32 %v185, 0.0
  %v250 = vmax.f32 %v186, 0.0
  %v251 = vmax.f32 %v187, 0.0
  %v252 = vmax.f32 %v188, 0.0
  %v253 = vmax.f32 %v189, 0.0
  %v254 = vmax.f32 %v190, 0.0
  %v255 = vmax.f32 %v191, 0.0
  %v256 = vmax.f32 %v192, 0.0
  %v257 = vmax.f32 %v193, 0.0
  %v258 = vmax.f32 %v194, 0.0
  %v259 = vmax.f32 %v195, 0.0
  %v260 = vmax.f32 %v196, 0.0
  %v261 = vmax.f32 %v197, 0.0
  %v262 = vmax.f32 %v198, 0.0
  %v263 = vmax.f32 %v199, 0.0
  %v264 = vmax.f32 %v200, 0.0
  %v265 = vmax.f32 %v201, 0.0
  %v266 = vmax.f32 %v202, 0.0
  %v267 = vmax.f32 %v203, 0.0
  %v268 = vmax.f32 %v204, 0.0
  %v269 = vmax.f32 %v205, 0.0
  %v270 = vmax.f32 %v206, 0.0
  %v271 = vmax.f32 %v207, 0.0
  %v272 = vmax.f32 %v208, 0.0
  %v273 = vmax.f32 %v209, 0.0
  %v274 = vmax.f32 %v210, 0.0
  %v275 = vmax.f32 %v211, 0.0
  %v276 = vmax.f32 %v212, 0.0
  %v277 = vmax.f32 %v213, 0.0
  %v278 = vmax.f32 %v214, 0.0
  %v279 = vmax.f32 %v215, 0.0
  %v280 = vmax.f32 %v216, 0.0
  %v281 = vmax.f32 %v217, 0.0
  %v282 = vmax.f32 %v218, 0.0
  %v283 = vmax.f32 %v219, 0.0
  %284 = vst [vmem:[%s3] sm:$0xff] %v220
  %285 = vst [vmem:[%s3 + $0x8] sm:$0xff] %v221
  %286 = vst [vmem:[%s3 + $0x10] sm:$0xff] %v222
  %287 = vst [vmem:[%s3 + $0x18] sm:$0xff] %v223
  %288 = vst [vmem:[%s3 + $0x20] sm:$0xff] %v224
  %289 = vst [vmem:[%s3 + $0x28] sm:$0xff] %v225
  %290 = vst [vmem:[%s3 + $0x30] sm:$0xff] %v226
  %291 = vst [vmem:[%s3 + $0x38] sm:$0xff] %v227
  %292 = vst [vmem:[%s3 + $0x40] sm:$0xff] %v228
  %293 = vst [vmem:[%s3 + $0x48] sm:$0xff] %v229
  %294 = vst [vmem:[%s3 + $0x50] sm:$0xff] %v230
  %295 = vst [vmem:[%s3 + $0x58] sm:$0xff] %v231
  %296 = vst [vmem:[%s3 + $0x60] sm:$0xff] %v232
  %297 = vst [vmem:[%s3 + $0x68] sm:$0xff] %v233
  %298 = vst [vmem:[%s3 + $0x70] sm:$0xff] %v234
  %299 = vst [vmem:[%s3 + $0x78] sm:$0xff] %v235
  %300 = vst [vmem:[%s3 + $0x80] sm:$0xff] %v236
  %301 = vst [vmem:[%s3 + $0x88] sm:$0xff] %v237
  %302 = vst [vmem:[%s3 + $0x90] sm:$0xff] %v238
  %303 = vst [vmem:[%s3 + $0x98] sm:$0xff] %v239
  %304 = vst [vmem:[%s3 + $0xa0] sm:$0xff] %v240
  %305 = vst [vmem:[%s3 + $0xa8] sm:$0xff] %v241
  %306 = vst [vmem:[%s3 + $0xb0] sm:$0xff] %v242
  %307 = vst [vmem:[%s3 + $0xb8] sm:$0xff] %v243
  %308 = vst [vmem:[%s3 + $0xc0] sm:$0xff] %v244
  %309 = vst [vmem:[%s3 + $0xc8] sm:$0xff] %v245
  %310 = vst [vmem:[%s3 + $0xd0] sm:$0xff] %v246
  %311 = vst [vmem:[%s3 + $0xd8] sm:$0xff] %v247
  %312 = vst [vmem:[%s3 + $0xe0] sm:$0xff] %v248
  %313 = vst [vmem:[%s3 + $0xe8] sm:$0xff] %v249
  %314 = vst [vmem:[%s3 + $0xf0] sm:$0xff] %v250
  %315 = vst [vmem:[%s3 + $0xf8] sm:$0xff] %v251
  %316 = vst [vmem:[%s3 + $0x100] sm:$0xff] %v252
  %317 = vst [vmem:[%s3 + $0x108] sm:$0xff] %v253
  %318 = vst [vmem:[%s3 + $0x110] sm:$0xff] %v254
  %319 = vst [vmem:[%s3 + $0x118] sm:$0xff] %v255
  %320 = vst [vmem:[%s3 + $0x120] sm:$0xff] %v256
  %321 = vst [vmem:[%s3 + $0x128] sm:$0xff] %v257
  %322 = vst [vmem:[%s3 + $0x130] sm:$0xff] %v258
  %323 = vst [vmem:[%s3 + $0x138] sm:$0xff] %v259
  %324 = vst [vmem:[%s3 + $0x140] sm:$0xff] %v260
  %325 = vst [vmem:[%s3 + $0x148] sm:$0xff] %v261
  %326 = vst [vmem:[%s3 + $0x150] sm:$0xff] %v262
  %327 = vst [vmem:[%s3 + $0x158] sm:$0xff] %v263
  %328 = vst [vmem:[%s3 + $0x160] sm:$0xff] %v264
  %329 = vst [vmem:[%s3 + $0x168] sm:$0xff] %v265
  %330 = vst [vmem:[%s3 + $0x170] sm:$0xff] %v266
  %331 = vst [vmem:[%s3 + $0x178] sm:$0xff] %v267
  %332 = vst [vmem:[%s3 + $0x180] sm:$0xff] %v268
  %333 = vst [vmem:[%s3 + $0x188] sm:$0xff] %v269
  %334 = vst [vmem:[%s3 + $0x190] sm:$0xff] %v270
  %335 = vst [vmem:[%s3 + $0x198] sm:$0xff] %v271
  %336 = vst [vmem:[%s3 + $0x1a0] sm:$0xff] %v272
  %337 = vst [vmem:[%s3 + $0x1a8] sm:$0xff] %v273
  %338 = vst [vmem:[%s3 + $0x1b0] sm:$0xff] %v274
  %339 = vst [vmem:[%s3 + $0x1b8] sm:$0xff] %v275
  %340 = vst [vmem:[%s3 + $0x1c0] sm:$0xff] %v276
  %341 = vst [vmem:[%s3 + $0x1c8] sm:$0xff] %v277
  %342 = vst [vmem:[%s3 + $0x1d0] sm:$0xff] %v278
  %343 = vst [vmem:[%s3 + $0x1d8] sm:$0xff] %v279
  %344 = vst [vmem:[%s3 + $0x1e0] sm:$0xff] %v280
  %345 = vst [vmem:[%s3 + $0x1e8] sm:$0xff] %v281
  %346 = vst [vmem:[%s3 + $0x1f0] sm:$0xff] %v282
  %347 = vst [vmem:[%s3 + $0x1f8] sm:$0xff] %v283
  // Predicated region
  $region14: #{_lambda_.11} parent=0 // pred_check
    _
  $region15: #{_lambda_.11} parent=0 // pred_check_branch
    %349 = sbr.rel (0) target = $region17
  $region16: #{_lambda_.11} parent=0 // pred_region
    _
  $region17: #{_lambda_.11} parent=0 // pred_fallthru
    _
  // Predicated region
  $region18: #{_lambda_.11} parent=0 // pred_check
    _
  $region19: #{_lambda_.11} parent=0 // pred_check_branch
    %351 = sbr.rel (0) target = $region21
  $region20: #{_lambda_.11} parent=0 // pred_region
    _
  $region21: #{_lambda_.11} parent=0 // pred_fallthru
    _

// kernel: _lambda_.14
$region0: #{_lambda_.14}
  #allocation0 [shape = 'u32[]', space=smem, size = 0x4, offset = 0x4, fixed_abs, tag = 'smem constant byte address 0x4 - core index']
  #allocation1 [shape = 'u32[144,128]{1,0:T(1,128)}', space=vmem, size = 0x12000, scoped, tag = 'internal scratch']
  %s0 = inlined_call_operand.vmem [shape: f32[128,128], index: 0, kind: input, shape index: {}]
  %s1 = inlined_call_operand.vmem [shape: f32[1,128], index: 1, kind: input, shape index: {}]
  %s2 = inlined_call_operand.vmem [shape: f32[1,128], index: 2, kind: input, shape index: {}]
  %s3 = inlined_call_operand.vmem [shape: bf16[128,128], index: 3, kind: input, shape index: {}]
  %s4 = inlined_call_operand.vmem [shape: f32[1,128], index: 4, kind: input, shape index: {}]
  %s5 = inlined_call_operand.vmem [shape: f32[128,128], index: 5, kind: output, shape index: {}]
  %s6 = sld [smem:[#allocation0]]
  $region30: #{_lambda_.14} parent=0
    _
  %s8 = ssub.s32 1, %s6
  %s9 = scalar_select 0, %s8, %s6
  // Predicated region
  $region2: #{_lambda_.14} parent=0 // pred_check
    _
  $region3: #{_lambda_.14} parent=0 // pred_check_branch
    %11 = sbr.rel (0) target = $region5
  $region4: #{_lambda_.14} parent=0 // pred_region
    _
  $region5: #{_lambda_.14} parent=0 // pred_fallthru
    _
  // Predicated region
  $region6: #{_lambda_.14} parent=0 // pred_check
    _
  $region7: #{_lambda_.14} parent=0 // pred_check_branch
    %13 = sbr.rel (0) target = $region9
  $region8: #{_lambda_.14} parent=0 // pred_region
    _
  $region9: #{_lambda_.14} parent=0 // pred_fallthru
    _
  // Predicated region
  $region10: #{_lambda_.14} parent=0 // pred_check
    _
  $region11: #{_lambda_.14} parent=0 // pred_check_branch
    %15 = sbr.rel (0) target = $region13
  $region12: #{_lambda_.14} parent=0 // pred_region
    _
  $region13: #{_lambda_.14} parent=0 // pred_fallthru
    _
  // Predicated region
  $region14: #{_lambda_.14} parent=0 // pred_check
    _
  $region15: #{_lambda_.14} parent=0 // pred_check_branch
    %17 = sbr.rel (0) target = $region17
  $region16: #{_lambda_.14} parent=0 // pred_region
    _
  $region17: #{_lambda_.14} parent=0 // pred_fallthru
    _
  // Predicated region
  $region18: #{_lambda_.14} parent=0 // pred_check
    _
  $region19: #{_lambda_.14} parent=0 // pred_check_branch
    %19 = sbr.rel (0) target = $region21
  $region20: #{_lambda_.14} parent=0 // pred_region
    _
  $region21: #{_lambda_.14} parent=0 // pred_fallthru
    _
  %v21 = vld [vmem:[%s0] sm:$0xff]
  %v22 = vld [vmem:[%s0 + $0x8] sm:$0xff]
  %v23 = vld [vmem:[%s0 + $0x10] sm:$0xff]
  %v24 = vld [vmem:[%s0 + $0x18] sm:$0xff]
  %v25 = vld [vmem:[%s0 + $0x20] sm:$0xff]
  %v26 = vld [vmem:[%s0 + $0x28] sm:$0xff]
  %v27 = vld [vmem:[%s0 + $0x30] sm:$0xff]
  %v28 = vld [vmem:[%s0 + $0x38] sm:$0xff]
  %v29 = vld [vmem:[%s0 + $0x40] sm:$0xff]
  %v30 = vld [vmem:[%s0 + $0x48] sm:$0xff]
  %v31 = vld [vmem:[%s0 + $0x50] sm:$0xff]
  %v32 = vld [vmem:[%s0 + $0x58] sm:$0xff]
  %v33 = vld [vmem:[%s0 + $0x60] sm:$0xff]
  %v34 = vld [vmem:[%s0 + $0x68] sm:$0xff]
  %v35 = vld [vmem:[%s0 + $0x70] sm:$0xff]
  %v36 = vld [vmem:[%s0 + $0x78] sm:$0xff]
  %v37 = vld [vmem:[%s1] sm:$0x1]
  %v39 = vlaneseq
  %v40 = vshrl.u32 %v39, 7
  %v41 = vsub.s32 0, %v40
  %v42 = vrot.slane %v37, %v41
  %v44 = vmul.f32 %v21, %v42
  %v45 = vmul.f32 %v22, %v42
  %v46 = vmul.f32 %v23, %v42
  %v47 = vmul.f32 %v24, %v42
  %v48 = vmul.f32 %v25, %v42
  %v49 = vmul.f32 %v26, %v42
  %v50 = vmul.f32 %v27, %v42
  %v51 = vmul.f32 %v28, %v42
  %v52 = vmul.f32 %v29, %v42
  %v53 = vmul.f32 %v30, %v42
  %v54 = vmul.f32 %v31, %v42
  %v55 = vmul.f32 %v32, %v42
  %v56 = vmul.f32 %v33, %v42
  %v57 = vmul.f32 %v34, %v42
  %v58 = vmul.f32 %v35, %v42
  %v59 = vmul.f32 %v36, %v42
  %v60 = vld [vmem:[%s2] sm:$0x1]
  %v62 = vlaneseq
  %v63 = vshrl.u32 %v62, 7
  %v64 = vsub.s32 0, %v63
  %v65 = vrot.slane %v60, %v64
  %v67 = vadd.f32 %v44, %v65
  %v68 = vadd.f32 %v45, %v65
  %v69 = vadd.f32 %v46, %v65
  %v70 = vadd.f32 %v47, %v65
  %v71 = vadd.f32 %v48, %v65
  %v72 = vadd.f32 %v49, %v65
  %v73 = vadd.f32 %v50, %v65
  %v74 = vadd.f32 %v51, %v65
  %v75 = vadd.f32 %v52, %v65
  %v76 = vadd.f32 %v53, %v65
  %v77 = vadd.f32 %v54, %v65
  %v78 = vadd.f32 %v55, %v65
  %v79 = vadd.f32 %v56, %v65
  %v80 = vadd.f32 %v57, %v65
  %v81 = vadd.f32 %v58, %v65
  %v82 = vadd.f32 %v59, %v65
  %v83 = vmax.f32 %v67, 0.0
  %v84 = vmax.f32 %v68, 0.0
  %v85 = vmax.f32 %v69, 0.0
  %v86 = vmax.f32 %v70, 0.0
  %v87 = vmax.f32 %v71, 0.0
  %v88 = vmax.f32 %v72, 0.0
  %v89 = vmax.f32 %v73, 0.0
  %v90 = vmax.f32 %v74, 0.0
  %v91 = vmax.f32 %v75, 0.0
  %v92 = vmax.f32 %v76, 0.0
  %v93 = vmax.f32 %v77, 0.0
  %v94 = vmax.f32 %v78, 0.0
  %v95 = vmax.f32 %v79, 0.0
  %v96 = vmax.f32 %v80, 0.0
  %v97 = vmax.f32 %v81, 0.0
  %v98 = vmax.f32 %v82, 0.0
  %v99 = vpack.c.bf16 %v84, %v83
  %v100 = vpack.c.bf16 %v86, %v85
  %v101 = vpack.c.bf16 %v88, %v87
  %v102 = vpack.c.bf16 %v90, %v89
  %v103 = vpack.c.bf16 %v92, %v91
  %v104 = vpack.c.bf16 %v94, %v93
  %v105 = vpack.c.bf16 %v96, %v95
  %v106 = vpack.c.bf16 %v98, %v97
  %v107 = vld [vmem:[%s3] sm:$0xf]
  %v108 = vld [vmem:[%s3 + $0x4] sm:$0xf]
  %v109 = vld [vmem:[%s3 + $0x8] sm:$0xf]
  %v110 = vld [vmem:[%s3 + $0xc] sm:$0xf]
  %v111 = vld [vmem:[%s3 + $0x10] sm:$0xf]
  %v112 = vld [vmem:[%s3 + $0x14] sm:$0xf]
  %v113 = vld [vmem:[%s3 + $0x18] sm:$0xf]
  %v114 = vld [vmem:[%s3 + $0x1c] sm:$0xf]
  %v115 = vld [vmem:[%s3 + $0x20] sm:$0xf]
  %v116 = vld [vmem:[%s3 + $0x24] sm:$0xf]
  %v117 = vld [vmem:[%s3 + $0x28] sm:$0xf]
  %v118 = vld [vmem:[%s3 + $0x2c] sm:$0xf]
  %v119 = vld [vmem:[%s3 + $0x30] sm:$0xf]
  %v120 = vld [vmem:[%s3 + $0x34] sm:$0xf]
  %v121 = vld [vmem:[%s3 + $0x38] sm:$0xf]
  %v122 = vld [vmem:[%s3 + $0x3c] sm:$0xf]
  %v123 = vld [vmem:[%s4] sm:$0x1]
  %v125 = vlaneseq
  %v126 = vshrl.u32 %v125, 7
  %v127 = vsub.s32 0, %v126
  %v128 = vrot.slane %v123, %v127
  %v146 = vunpack.c.l.b16 %v107
  %v147 = vunpack.c.l.b16 %v108
  %v148 = vunpack.c.l.b16 %v109
  %v149 = vunpack.c.l.b16 %v110
  %v150 = vunpack.c.l.b16 %v111
  %v151 = vunpack.c.l.b16 %v112
  %v152 = vunpack.c.l.b16 %v113
  %v153 = vunpack.c.l.b16 %v114
  %v154 = vunpack.c.l.b16 %v115
  %v155 = vunpack.c.l.b16 %v116
  %v156 = vunpack.c.l.b16 %v117
  %v157 = vunpack.c.l.b16 %v118
  %v158 = vunpack.c.l.b16 %v119
  %v159 = vunpack.c.l.b16 %v120
  %v160 = vunpack.c.l.b16 %v121
  %v161 = vunpack.c.l.b16 %v122
  %v162 = vpack.c.b16 %v147, %v146
  %v163 = vpack.c.b16 %v149, %v148
  %v164 = vpack.c.b16 %v151, %v150
  %v165 = vpack.c.b16 %v153, %v152
  %v166 = vpack.c.b16 %v155, %v154
  %v167 = vpack.c.b16 %v157, %v156
  %v168 = vpack.c.b16 %v159, %v158
  %v169 = vpack.c.b16 %v161, %v160
  %178 = vmatprep.subr.bf16.mxu0 0
  %179 = vmatpush1.bf16.msra.mxu0 %v162
  %180 = vmatprep.subr.bf16.mxu0 0
  %181 = vmatpush1.bf16.msra.mxu0 %v163
  %182 = vmatprep.subr.bf16.mxu0 0
  %183 = vmatpush1.bf16.msra.mxu0 %v164
  %184 = vmatprep.subr.bf16.mxu0 0
  %185 = vmatpush1.bf16.msra.mxu0 %v165
  %186 = vmatprep.subr.bf16.mxu0 0
  %187 = vmatpush1.bf16.msra.mxu0 %v166
  %188 = vmatprep.subr.bf16.mxu0 0
  %189 = vmatpush1.bf16.msra.mxu0 %v167
  %190 = vmatprep.subr.bf16.mxu0 0
  %191 = vmatpush1.bf16.msra.mxu0 %v168
  %192 = vmatprep.subr.bf16.mxu0 0
  %193 = vmatpush1.bf16.msra.mxu0 %v169
  %194 = vmatprep.subr.bf16.mxu0 0
  %195 = vmatpush1.bf16.msra.mxu0 0
  %196 = vmatprep.subr.bf16.mxu0 0
  %197 = vmatpush1.bf16.msra.mxu0 0
  %198 = vmatprep.subr.bf16.mxu0 0
  %199 = vmatpush1.bf16.msra.mxu0 0
  %200 = vmatprep.subr.bf16.mxu0 0
  %201 = vmatpush1.bf16.msra.mxu0 0
  %202 = vmatprep.subr.bf16.mxu0 0
  %203 = vmatpush1.bf16.msra.mxu0 0
  %204 = vmatprep.subr.bf16.mxu0 0
  %205 = vmatpush1.bf16.msra.mxu0 0
  %206 = vmatprep.subr.bf16.mxu0 0
  %207 = vmatpush1.bf16.msra.mxu0 0
  %208 = vmatprep.subr.bf16.mxu0 0
  %209 = vmatpush1.bf16.msra.mxu0 0
  %210 = vmatprep.mubr.bf16.mxu0 0
  %211 = vmatmul.mubr.bf16.gmra.mrb[0].mxu0 %v99
  %v212 = vpop.f32.mrb[0].mxu0
  %v213 = vadd.f32 %v128, %v212
  %v214 = vpop.f32.mrb[0].mxu0
  %v215 = vpop.f32.mrb[0].mxu0
  %v216 = vadd.f32 %v128, %v215
  %v217 = vpop.f32.mrb[0].mxu0
  %218 = vmatprep.mubr.bf16.mxu0 0
  %219 = vmatmul.mubr.bf16.gmra.mrb[0].mxu0 %v100
  %v220 = vpop.f32.mrb[0].mxu0
  %v221 = vadd.f32 %v128, %v220
  %v222 = vpop.f32.mrb[0].mxu0
  %v223 = vpop.f32.mrb[0].mxu0
  %v224 = vadd.f32 %v128, %v223
  %v225 = vpop.f32.mrb[0].mxu0
  %226 = vmatprep.mubr.bf16.mxu0 0
  %227 = vmatmul.mubr.bf16.gmra.mrb[0].mxu0 %v101
  %v228 = vpop.f32.mrb[0].mxu0
  %v229 = vadd.f32 %v128, %v228
  %v230 = vpop.f32.mrb[0].mxu0
  %v231 = vpop.f32.mrb[0].mxu0
  %v232 = vadd.f32 %v128, %v231
  %v233 = vpop.f32.mrb[0].mxu0
  %234 = vmatprep.mubr.bf16.mxu0 0
  %235 = vmatmul.mubr.bf16.gmra.mrb[0].mxu0 %v102
  %v236 = vpop.f32.mrb[0].mxu0
  %v237 = vadd.f32 %v128, %v236
  %v238 = vpop.f32.mrb[0].mxu0
  %v239 = vpop.f32.mrb[0].mxu0
  %v240 = vadd.f32 %v128, %v239
  %v241 = vpop.f32.mrb[0].mxu0
  %242 = vmatprep.mubr.bf16.mxu0 0
  %243 = vmatmul.mubr.bf16.gmra.mrb[0].mxu0 %v103
  %v244 = vpop.f32.mrb[0].mxu0
  %v245 = vadd.f32 %v128, %v244
  %v246 = vpop.f32.mrb[0].mxu0
  %v247 = vpop.f32.mrb[0].mxu0
  %v248 = vadd.f32 %v128, %v247
  %v249 = vpop.f32.mrb[0].mxu0
  %250 = vmatprep.mubr.bf16.mxu0 0
  %251 = vmatmul.mubr.bf16.gmra.mrb[0].mxu0 %v104
  %v252 = vpop.f32.mrb[0].mxu0
  %v253 = vadd.f32 %v128, %v252
  %v254 = vpop.f32.mrb[0].mxu0
  %v255 = vpop.f32.mrb[0].mxu0
  %v256 = vadd.f32 %v128, %v255
  %v257 = vpop.f32.mrb[0].mxu0
  %258 = vmatprep.mubr.bf16.mxu0 0
  %259 = vmatmul.mubr.bf16.gmra.mrb[0].mxu0 %v105
  %v260 = vpop.f32.mrb[0].mxu0
  %v261 = vadd.f32 %v128, %v260
  %v262 = vpop.f32.mrb[0].mxu0
  %v263 = vpop.f32.mrb[0].mxu0
  %v264 = vadd.f32 %v128, %v263
  %v265 = vpop.f32.mrb[0].mxu0
  %266 = vmatprep.mubr.bf16.mxu0 0
  %267 = vmatmul.mubr.bf16.gmra.mrb[0].mxu0 %v106
  %v268 = vpop.f32.mrb[0].mxu0
  %v269 = vadd.f32 %v128, %v268
  %v270 = vpop.f32.mrb[0].mxu0
  %v271 = vpop.f32.mrb[0].mxu0
  %v272 = vadd.f32 %v128, %v271
  %v273 = vpop.f32.mrb[0].mxu0
  %274 = vdwg.mxu0
  %275 = vst [vmem:[%s5] sm:$0xff] %v213
  %276 = vst [vmem:[%s5 + $0x8] sm:$0xff] %v216
  %277 = vst [vmem:[%s5 + $0x10] sm:$0xff] %v221
  %278 = vst [vmem:[%s5 + $0x18] sm:$0xff] %v224
  %279 = vst [vmem:[%s5 + $0x20] sm:$0xff] %v229
  %280 = vst [vmem:[%s5 + $0x28] sm:$0xff] %v232
  %281 = vst [vmem:[%s5 + $0x30] sm:$0xff] %v237
  %282 = vst [vmem:[%s5 + $0x38] sm:$0xff] %v240
  %283 = vst [vmem:[%s5 + $0x40] sm:$0xff] %v245
  %284 = vst [vmem:[%s5 + $0x48] sm:$0xff] %v248
  %285 = vst [vmem:[%s5 + $0x50] sm:$0xff] %v253
  %286 = vst [vmem:[%s5 + $0x58] sm:$0xff] %v256
  %287 = vst [vmem:[%s5 + $0x60] sm:$0xff] %v261
  %288 = vst [vmem:[%s5 + $0x68] sm:$0xff] %v264
  %289 = vst [vmem:[%s5 + $0x70] sm:$0xff] %v269
  %290 = vst [vmem:[%s5 + $0x78] sm:$0xff] %v272
  // Predicated region
  $region22: #{_lambda_.14} parent=0 // pred_check
    _
  $region23: #{_lambda_.14} parent=0 // pred_check_branch
    %292 = sbr.rel (0) target = $region25
  $region24: #{_lambda_.14} parent=0 // pred_region
    _
  $region25: #{_lambda_.14} parent=0 // pred_fallthru
    _
  // Predicated region
  $region26: #{_lambda_.14} parent=0 // pred_check
    _
  $region27: #{_lambda_.14} parent=0 // pred_check_branch
    %294 = sbr.rel (0) target = $region29
  $region28: #{_lambda_.14} parent=0 // pred_region
    _
  $region29: #{_lambda_.14} parent=0 // pred_fallthru
    _

// kernel: _lambda_.13
$region0: #{_lambda_.13}
  #allocation0 [shape = 'u32[]', space=smem, size = 0x4, offset = 0x4, fixed_abs, tag = 'smem constant byte address 0x4 - core index']
  #allocation1 [shape = 'u32[144,128]{1,0:T(1,128)}', space=vmem, size = 0x12000, scoped, tag = 'internal scratch']
  #allocation2 [shape = 'f32[1,128]{1,0:T(1,128)}', space=vmem, size = 0x200, scoped, tag = 'scratch operand']
  #allocation3 [shape = 'f32[1,128]{1,0:T(1,128)}', space=vmem, size = 0x200, scoped, tag = 'scratch operand']
  %s0 = inlined_call_operand.vmem [shape: f32[128,128], index: 0, kind: input, shape index: {}]
  %s1 = inlined_call_operand.vmem [shape: f32[1,128], index: 1, kind: input, shape index: {}]
  %s2 = inlined_call_operand.vmem [shape: f32[1,128], index: 2, kind: input, shape index: {}]
  %s3 = inlined_call_operand.vmem [shape: f32[2,128], index: 3, kind: output, shape index: {}]
  %s4 = sld [smem:[#allocation0]]
  $region30: #{_lambda_.13} parent=0
    _
  %s6 = ssub.s32 1, %s4
  %s7 = scalar_select 0, %s6, %s4
  // Predicated region
  $region2: #{_lambda_.13} parent=0 // pred_check
    _
  $region3: #{_lambda_.13} parent=0 // pred_check_branch
    %9 = sbr.rel (0) target = $region5
  $region4: #{_lambda_.13} parent=0 // pred_region
    _
  $region5: #{_lambda_.13} parent=0 // pred_fallthru
    _
  // Predicated region
  $region6: #{_lambda_.13} parent=0 // pred_check
    _
  $region7: #{_lambda_.13} parent=0 // pred_check_branch
    %11 = sbr.rel (0) target = $region9
  $region8: #{_lambda_.13} parent=0 // pred_region
    _
  $region9: #{_lambda_.13} parent=0 // pred_fallthru
    _
  // Predicated region
  $region10: #{_lambda_.13} parent=0 // pred_check
    _
  $region11: #{_lambda_.13} parent=0 // pred_check_branch
    %13 = sbr.rel (0) target = $region13
  $region12: #{_lambda_.13} parent=0 // pred_region
    _
  $region13: #{_lambda_.13} parent=0 // pred_fallthru
    _
  %p14 = scmp.eq.s32.totalorder 0, 0
  // Predicated region
  $region14: #{_lambda_.13} parent=0 // pred_check
    %p15 = pneg %p14
  $region15: #{_lambda_.13} parent=0 // pred_check_branch
    %17 = sbr.rel (%p15) target = $region17
  $region16: #{_lambda_.13} parent=0 // pred_region
    %18 = vst [vmem:[#allocation2] sm:$0x1] 0.0
    %19 = vst [vmem:[#allocation3] sm:$0x1] 0.0
  $region17: #{_lambda_.13} parent=0 // pred_fallthru
    _
  %v20 = vld [vmem:[%s0] sm:$0xff]
  %v21 = vld [vmem:[%s0 + $0x8] sm:$0xff]
  %v22 = vld [vmem:[%s0 + $0x10] sm:$0xff]
  %v23 = vld [vmem:[%s0 + $0x18] sm:$0xff]
  %v24 = vld [vmem:[%s0 + $0x20] sm:$0xff]
  %v25 = vld [vmem:[%s0 + $0x28] sm:$0xff]
  %v26 = vld [vmem:[%s0 + $0x30] sm:$0xff]
  %v27 = vld [vmem:[%s0 + $0x38] sm:$0xff]
  %v28 = vld [vmem:[%s0 + $0x40] sm:$0xff]
  %v29 = vld [vmem:[%s0 + $0x48] sm:$0xff]
  %v30 = vld [vmem:[%s0 + $0x50] sm:$0xff]
  %v31 = vld [vmem:[%s0 + $0x58] sm:$0xff]
  %v32 = vld [vmem:[%s0 + $0x60] sm:$0xff]
  %v33 = vld [vmem:[%s0 + $0x68] sm:$0xff]
  %v34 = vld [vmem:[%s0 + $0x70] sm:$0xff]
  %v35 = vld [vmem:[%s0 + $0x78] sm:$0xff]
  %v36 = vld [vmem:[#allocation2] sm:$0x1]
  %v37 = vadd.f32 %v20, %v21
  %v38 = vadd.f32 %v37, %v22
  %v39 = vadd.f32 %v38, %v23
  %v40 = vadd.f32 %v39, %v24
  %v41 = vadd.f32 %v40, %v25
  %v42 = vadd.f32 %v41, %v26
  %v43 = vadd.f32 %v42, %v27
  %v44 = vadd.f32 %v43, %v28
  %v45 = vadd.f32 %v44, %v29
  %v46 = vadd.f32 %v45, %v30
  %v47 = vadd.f32 %v46, %v31
  %v48 = vadd.f32 %v47, %v32
  %v49 = vadd.f32 %v48, %v33
  %v50 = vadd.f32 %v49, %v34
  %v51 = vadd.f32 %v50, %v35
  %v52 = vrot.slane %v51, 4
  %v53 = vadd.f32 %v51, %v52
  %v54 = vrot.slane %v53, 2
  %v55 = vadd.f32 %v53, %v54
  %v56 = vrot.slane %v55, 1
  %v57 = vadd.f32 %v55, %v56
  %v58 = vadd.f32 %v36, %v57
  %59 = vst [vmem:[#allocation2] sm:$0x1] %v58
  %v60 = vld [vmem:[#allocation3] sm:$0x1]
  %v61 = vmul.f32 %v20, %v20
  %v62 = vmul.f32 %v21, %v21
  %v63 = vmul.f32 %v22, %v22
  %v64 = vmul.f32 %v23, %v23
  %v65 = vmul.f32 %v24, %v24
  %v66 = vmul.f32 %v25, %v25
  %v67 = vmul.f32 %v26, %v26
  %v68 = vmul.f32 %v27, %v27
  %v69 = vmul.f32 %v28, %v28
  %v70 = vmul.f32 %v29, %v29
  %v71 = vmul.f32 %v30, %v30
  %v72 = vmul.f32 %v31, %v31
  %v73 = vmul.f32 %v32, %v32
  %v74 = vmul.f32 %v33, %v33
  %v75 = vmul.f32 %v34, %v34
  %v76 = vmul.f32 %v35, %v35
  %v77 = vadd.f32 %v61, %v62
  %v78 = vadd.f32 %v77, %v63
  %v79 = vadd.f32 %v78, %v64
  %v80 = vadd.f32 %v79, %v65
  %v81 = vadd.f32 %v80, %v66
  %v82 = vadd.f32 %v81, %v67
  %v83 = vadd.f32 %v82, %v68
  %v84 = vadd.f32 %v83, %v69
  %v85 = vadd.f32 %v84, %v70
  %v86 = vadd.f32 %v85, %v71
  %v87 = vadd.f32 %v86, %v72
  %v88 = vadd.f32 %v87, %v73
  %v89 = vadd.f32 %v88, %v74
  %v90 = vadd.f32 %v89, %v75
  %v91 = vadd.f32 %v90, %v76
  %v92 = vrot.slane %v91, 4
  %v93 = vadd.f32 %v91, %v92
  %v94 = vrot.slane %v93, 2
  %v95 = vadd.f32 %v93, %v94
  %v96 = vrot.slane %v95, 1
  %v97 = vadd.f32 %v95, %v96
  %v98 = vadd.f32 %v60, %v97
  %99 = vst [vmem:[#allocation3] sm:$0x1] %v98
  // Predicated region
  $region18: #{_lambda_.13} parent=0 // pred_check
    %p100 = pneg %p14
  $region19: #{_lambda_.13} parent=0 // pred_check_branch
    %102 = sbr.rel (%p100) target = $region21
  $region20: #{_lambda_.13} parent=0 // pred_region
    %v103 = vld [vmem:[#allocation2] sm:$0x1]
    %v104 = vmul.f32 %v103, 0.0078125
    %v105 = vld [vmem:[#allocation3] sm:$0x1]
    %v106 = vmul.f32 %v105, 0.0078125
    %v107 = vmul.f32 %v104, %v104
    %v108 = vsub.f32 %v106, %v107
    %v109 = vld [vmem:[%s1] sm:$0x1]
    %v110 = vadd.f32 %v108, 1e-05
    %v111 = vrsqrt.pop %v110
    %v112 = vmul.f32 %v109, %v111
    %113 = vst [vmem:[%s3] sm:$0x1] %v112
    %v114 = vld [vmem:[%s2] sm:$0x1]
    %v115 = vmul.f32 %v104, %v112
    %v116 = vsub.f32 %v114, %v115
    %117 = vst [vmem:[%s3 + $0x1] sm:$0x1] %v116
  $region21: #{_lambda_.13} parent=0 // pred_fallthru
    _
  // Predicated region
  $region22: #{_lambda_.13} parent=0 // pred_check
    _
  $region23: #{_lambda_.13} parent=0 // pred_check_branch
    %119 = sbr.rel (0) target = $region25
  $region24: #{_lambda_.13} parent=0 // pred_region
    _
  $region25: #{_lambda_.13} parent=0 // pred_fallthru
    _
  // Predicated region
  $region26: #{_lambda_.13} parent=0 // pred_check
    _
  $region27: #{_lambda_.13} parent=0 // pred_check_branch
    %121 = sbr.rel (0) target = $region29
  $region28: #{_lambda_.13} parent=0 // pred_region
    _
  $region29: #{_lambda_.13} parent=0 // pred_fallthru
    _

// kernel: _lambda_.12
$region0: #{_lambda_.12}
  #allocation0 [shape = 'u32[]', space=smem, size = 0x4, offset = 0x4, fixed_abs, tag = 'smem constant byte address 0x4 - core index']
  #allocation1 [shape = 'u32[144,128]{1,0:T(1,128)}', space=vmem, size = 0x12000, scoped, tag = 'internal scratch']
  %s0 = inlined_call_operand.vmem [shape: f32[2,9,9,128], index: 0, kind: input, shape index: {}]
  %s1 = inlined_call_operand.vmem [shape: f32[2,9,9,128], index: 1, kind: input, shape index: {}]
  %s2 = inlined_call_operand.vmem [shape: f32[2,9,9,128], index: 2, kind: input, shape index: {}]
  %s3 = inlined_call_operand.vmem [shape: f32[2,9,9,128], index: 3, kind: input, shape index: {}]
  %s4 = inlined_call_operand.vmem [shape: bf16[9,128,128], index: 4, kind: input, shape index: {}]
  %s5 = inlined_call_operand.vmem [shape: f32[1,128], index: 5, kind: input, shape index: {}]
  %s6 = inlined_call_operand.vmem [shape: f32[2,8,8,128], index: 6, kind: output, shape index: {}]
  %s7 = sld [smem:[#allocation0]]
  $region57: #{_lambda_.12} parent=0
    _
  %s9 = ssub.s32 1, %s7
  %s10 = scalar_select 0, %s9, %s7
  loop: start=0, step=1, limit=4
  $region2: #{_lambda_.12} parent=0 // loop_pre_header
    _
  $region3: #{_lambda_.12} parent=0 // loop_header
    %s12 = sphi 0, %s16
    %p13 = scmp.ge.s32.totalorder %s12, 4
    %s22 = sphi 0, %s24
    %s25 = sphi 0, %s22
    %s26 = sphi 0, %s25
    %s42 = sphi 0, %s26
    %s48 = sphi 0, %s50
    %s51 = sphi 0, %s48
    %s52 = sphi 0, %s51
    %s68 = sphi 0, %s52
    %s74 = sphi 0, %s76
    %s77 = sphi 0, %s74
    %s78 = sphi 0, %s77
    %s94 = sphi 0, %s78
    %s100 = sphi 0, %s102
    %s103 = sphi 0, %s100
    %s104 = sphi 0, %s103
    %s120 = sphi 0, %s104
    %s124 = sphi 0, %s124
    %s126 = sphi 0, %s124
    %s127 = sphi 0, %s126
    %s141 = sphi 0, %s127
    %s145 = sphi 0, %s145
    %s147 = sphi 0, %s145
    %s148 = sphi 0, %s147
    %s162 = sphi 0, %s148
    %s168 = sphi 0, %s170
    %s171 = sphi 0, %s168
    %s172 = sphi 0, %s171
    %s188 = sphi 0, %s172
  $region4: #{_lambda_.12} parent=0 // loop_header_branch
    %15 = sbr.rel (%p13) target = $region8
  $region5: #{_lambda_.12} parent=0 // loop_body
    %s17 = ssub.s32 %s12, 1
    %s18 = ssub.s32 %s12, 2
    %s19 = sadd.s32 %s12, 1
    %s20 = ssub.s32 %s12, %s19
    %p21 = scmp.eq.s32.totalorder %s20, 0
    %s23 = sadd.s32 %s22, 1
    %s24 = scalar_select %p21, %s22, %s23
    %p27 = pneg %p21
    %p28 = scmp.eq.s32.totalorder %s12, 1
    %p29 = por %p27, %p28
    %p30 = scmp.ne.s32.totalorder %s22, %s25
    %p31 = scmp.eq.s32.totalorder %s12, 0
    %p32 = por %p30, %p31
    %p33 = scmp.ne.s32.totalorder %s22, %s25
    %p34 = scmp.eq.s32.totalorder %s17, 1
    %p35 = por %p33, %p34
    %p36 = scmp.ne.s32.totalorder %s25, %s26
    %p37 = scmp.eq.s32.totalorder %s17, 0
    %p38 = por %p36, %p37
    %p39 = scmp.ne.s32.totalorder %s25, %s26
    %p40 = scmp.eq.s32.totalorder %s18, 1
    %p41 = por %p39, %p40
    %p43 = scmp.ne.s32.totalorder %s26, %s42
    %p44 = scmp.eq.s32.totalorder %s18, 0
    %p45 = por %p43, %p44
    %s46 = ssub.s32 %s12, %s19
    %p47 = scmp.eq.s32.totalorder %s46, 0
    %s49 = sadd.s32 %s48, 1
    %s50 = scalar_select %p47, %s48, %s49
    %p53 = pneg %p47
    %p54 = scmp.eq.s32.totalorder %s12, 1
    %p55 = por %p53, %p54
    %p56 = scmp.ne.s32.totalorder %s48, %s51
    %p57 = scmp.eq.s32.totalorder %s12, 0
    %p58 = por %p56, %p57
    %p59 = scmp.ne.s32.totalorder %s48, %s51
    %p60 = scmp.eq.s32.totalorder %s17, 1
    %p61 = por %p59, %p60
    %p62 = scmp.ne.s32.totalorder %s51, %s52
    %p63 = scmp.eq.s32.totalorder %s17, 0
    %p64 = por %p62, %p63
    %p65 = scmp.ne.s32.totalorder %s51, %s52
    %p66 = scmp.eq.s32.totalorder %s18, 1
    %p67 = por %p65, %p66
    %p69 = scmp.ne.s32.totalorder %s52, %s68
    %p70 = scmp.eq.s32.totalorder %s18, 0
    %p71 = por %p69, %p70
    %s72 = ssub.s32 %s12, %s19
    %p73 = scmp.eq.s32.totalorder %s72, 0
    %s75 = sadd.s32 %s74, 1
    %s76 = scalar_select %p73, %s74, %s75
    %p79 = pneg %p73
    %p80 = scmp.eq.s32.totalorder %s12, 1
    %p81 = por %p79, %p80
    %p82 = scmp.ne.s32.totalorder %s74, %s77
    %p83 = scmp.eq.s32.totalorder %s12, 0
    %p84 = por %p82, %p83
    %p85 = scmp.ne.s32.totalorder %s74, %s77
    %p86 = scmp.eq.s32.totalorder %s17, 1
    %p87 = por %p85, %p86
    %p88 = scmp.ne.s32.totalorder %s77, %s78
    %p89 = scmp.eq.s32.totalorder %s17, 0
    %p90 = por %p88, %p89
    %p91 = scmp.ne.s32.totalorder %s77, %s78
    %p92 = scmp.eq.s32.totalorder %s18, 1
    %p93 = por %p91, %p92
    %p95 = scmp.ne.s32.totalorder %s78, %s94
    %p96 = scmp.eq.s32.totalorder %s18, 0
    %p97 = por %p95, %p96
    %s98 = ssub.s32 %s12, %s19
    %p99 = scmp.eq.s32.totalorder %s98, 0
    %s101 = sadd.s32 %s100, 1
    %s102 = scalar_select %p99, %s100, %s101
    %p105 = pneg %p99
    %p106 = scmp.eq.s32.totalorder %s12, 1
    %p107 = por %p105, %p106
    %p108 = scmp.ne.s32.totalorder %s100, %s103
    %p109 = scmp.eq.s32.totalorder %s12, 0
    %p110 = por %p108, %p109
    %p111 = scmp.ne.s32.totalorder %s100, %s103
    %p112 = scmp.eq.s32.totalorder %s17, 1
    %p113 = por %p111, %p112
    %p114 = scmp.ne.s32.totalorder %s103, %s104
    %p115 = scmp.eq.s32.totalorder %s17, 0
    %p116 = por %p114, %p115
    %p117 = scmp.ne.s32.totalorder %s103, %s104
    %p118 = scmp.eq.s32.totalorder %s18, 1
    %p119 = por %p117, %p118
    %p121 = scmp.ne.s32.totalorder %s104, %s120
    %p122 = scmp.eq.s32.totalorder %s18, 0
    %p123 = por %p121, %p122
    %s125 = sadd.s32 %s124, 1
    %p128 = scmp.eq.s32.totalorder %s12, 1
    %p129 = scmp.ne.s32.totalorder %s124, %s126
    %p130 = scmp.eq.s32.totalorder %s12, 0
    %p131 = por %p129, %p130
    %p132 = scmp.ne.s32.totalorder %s124, %s126
    %p133 = scmp.eq.s32.totalorder %s17, 1
    %p134 = por %p132, %p133
    %p135 = scmp.ne.s32.totalorder %s126, %s127
    %p136 = scmp.eq.s32.totalorder %s17, 0
    %p137 = por %p135, %p136
    %p138 = scmp.ne.s32.totalorder %s126, %s127
    %p139 = scmp.eq.s32.totalorder %s18, 1
    %p140 = por %p138, %p139
    %p142 = scmp.ne.s32.totalorder %s127, %s141
    %p143 = scmp.eq.s32.totalorder %s18, 0
    %p144 = por %p142, %p143
    %s146 = sadd.s32 %s145, 1
    %p149 = scmp.eq.s32.totalorder %s12, 1
    %p150 = scmp.ne.s32.totalorder %s145, %s147
    %p151 = scmp.eq.s32.totalorder %s12, 0
    %p152 = por %p150, %p151
    %p153 = scmp.ne.s32.totalorder %s145, %s147
    %p154 = scmp.eq.s32.totalorder %s17, 1
    %p155 = por %p153, %p154
    %p156 = scmp.ne.s32.totalorder %s147, %s148
    %p157 = scmp.eq.s32.totalorder %s17, 0
    %p158 = por %p156, %p157
    %p159 = scmp.ne.s32.totalorder %s147, %s148
    %p160 = scmp.eq.s32.totalorder %s18, 1
    %p161 = por %p159, %p160
    %p163 = scmp.ne.s32.totalorder %s148, %s162
    %p164 = scmp.eq.s32.totalorder %s18, 0
    %p165 = por %p163, %p164
    %s166 = ssub.s32 %s12, %s19
    %p167 = scmp.eq.s32.totalorder %s166, 0
    %s169 = sadd.s32 %s168, 1
    %s170 = scalar_select %p167, %s168, %s169
    %p173 = pneg %p167
    %p174 = scmp.eq.s32.totalorder %s12, 1
    %p175 = por %p173, %p174
    %p176 = scmp.ne.s32.totalorder %s168, %s171
    %p177 = scmp.eq.s32.totalorder %s12, 0
    %p178 = por %p176, %p177
    %p179 = scmp.ne.s32.totalorder %s168, %s171
    %p180 = scmp.eq.s32.totalorder %s17, 1
    %p181 = por %p179, %p180
    %p182 = scmp.ne.s32.totalorder %s171, %s172
    %p183 = scmp.eq.s32.totalorder %s17, 0
    %p184 = por %p182, %p183
    %p185 = scmp.ne.s32.totalorder %s171, %s172
    %p186 = scmp.eq.s32.totalorder %s18, 1
    %p187 = por %p185, %p186
    %p189 = scmp.ne.s32.totalorder %s172, %s188
    %p190 = scmp.eq.s32.totalorder %s18, 0
    %p191 = por %p189, %p190
    %p192 = scmp.le.s32.totalorder 1, %s12
    %p193 = scmp.lt.s32.totalorder %s12, 3
    %p194 = pnand %p192, %p193
    %p195 = pneg %p194
    // Predicated region
    $region9: #{_lambda_.12} parent=5 // pred_check
      _
    $region10: #{_lambda_.12} parent=5 // pred_check_branch
      %197 = sbr.rel (%p194) target = $region12
    $region11: #{_lambda_.12} parent=5 // pred_region
      %s198 = ssub.s32 %s12, 1
      // Predicated region
      $region13: #{_lambda_.12} parent=11 // pred_check
        %p199 = pneg %p137
      $region14: #{_lambda_.12} parent=11 // pred_check_branch
        %201 = sbr.rel (%p199) target = $region16
      $region15: #{_lambda_.12} parent=11 // pred_region
        _
      $region16: #{_lambda_.12} parent=11 // pred_fallthru
        _
      // Predicated region
      $region17: #{_lambda_.12} parent=11 // pred_check
        %p202 = pneg %p158
      $region18: #{_lambda_.12} parent=11 // pred_check_branch
        %204 = sbr.rel (%p202) target = $region20
      $region19: #{_lambda_.12} parent=11 // pred_region
        _
      $region20: #{_lambda_.12} parent=11 // pred_fallthru
        _
    $region12: #{_lambda_.12} parent=5 // pred_fallthru
      _
    %p205 = scmp.lt.s32.totalorder %s12, 2
    // Predicated region
    $region21: #{_lambda_.12} parent=5 // pred_check
      %p206 = pneg %p205
    $region22: #{_lambda_.12} parent=5 // pred_check_branch
      %208 = sbr.rel (%p206) target = $region24
    $region23: #{_lambda_.12} parent=5 // pred_region
      // Predicated region
      $region25: #{_lambda_.12} parent=23 // pred_check
        %p209 = pneg %p32
      $region26: #{_lambda_.12} parent=23 // pred_check_branch
        %211 = sbr.rel (%p209) target = $region28
      $region27: #{_lambda_.12} parent=23 // pred_region
        %p212 = scmp.lt.s32.totalorder %s12, 1
        %s213 = scalar_select %p212, %s12, 1
        %s214 = smul.addr %s213, 18
        %s215 = smul.addr %s214, 8
        %s216 = scalar_lea.vmem %s0, %s215
      $region28: #{_lambda_.12} parent=23 // pred_fallthru
        _
      // Predicated region
      $region29: #{_lambda_.12} parent=23 // pred_check
        %p217 = pneg %p58
      $region30: #{_lambda_.12} parent=23 // pred_check_branch
        %219 = sbr.rel (%p217) target = $region32
      $region31: #{_lambda_.12} parent=23 // pred_region
        %p220 = scmp.lt.s32.totalorder %s12, 1
        %s221 = scalar_select %p220, %s12, 1
        %s222 = smul.addr %s221, 18
        %s223 = smul.addr %s222, 8
        %s224 = scalar_lea.vmem %s1, %s223
      $region32: #{_lambda_.12} parent=23 // pred_fallthru
        _
      // Predicated region
      $region33: #{_lambda_.12} parent=23 // pred_check
        %p225 = pneg %p84
      $region34: #{_lambda_.12} parent=23 // pred_check_branch
        %227 = sbr.rel (%p225) target = $region36
      $region35: #{_lambda_.12} parent=23 // pred_region
        %p228 = scmp.lt.s32.totalorder %s12, 1
        %s229 = scalar_select %p228, %s12, 1
        %s230 = smul.addr %s229, 18
        %s231 = smul.addr %s230, 8
        %s232 = scalar_lea.vmem %s2, %s231
      $region36: #{_lambda_.12} parent=23 // pred_fallthru
        _
      // Predicated region
      $region37: #{_lambda_.12} parent=23 // pred_check
        %p233 = pneg %p110
      $region38: #{_lambda_.12} parent=23 // pred_check_branch
        %235 = sbr.rel (%p233) target = $region40
      $region39: #{_lambda_.12} parent=23 // pred_region
        %p236 = scmp.lt.s32.totalorder %s12, 1
        %s237 = scalar_select %p236, %s12, 1
        %s238 = smul.addr %s237, 18
        %s239 = smul.addr %s238, 8
        %s240 = scalar_lea.vmem %s3, %s239
      $region40: #{_lambda_.12} parent=23 // pred_fallthru
        _
    $region24: #{_lambda_.12} parent=5 // pred_fallthru
      _
    %p241 = scmp.le.s32.totalorder 1, %s12
    %p242 = scmp.lt.s32.totalorder %s12, 3
    %p243 = pnand %p241, %p242
    %p244 = pneg %p243
    // Predicated region
    $region41: #{_lambda_.12} parent=5 // pred_check
      _
    $region42: #{_lambda_.12} parent=5 // pred_check_branch
      %246 = sbr.rel (%p243) target = $region44
    $region43: #{_lambda_.12} parent=5 // pred_region
      %s247 = ssub.s32 %s12, 1
      %p248 = scmp.lt.s32.totalorder %s17, 1
      %s249 = scalar_select %p248, %s17, 1
      %s250 = smul.addr %s249, 18
      %s251 = smul.addr %s250, 8
      %s252 = scalar_lea.vmem %s0, %s251
      %p253 = pneg %p38
      %p254 = pneg %p35
      %p255 = scmp.lt.s32.totalorder %s17, 1
      %s256 = scalar_select %p255, %s17, 1
      %s257 = smul.addr %s256, 18
      %s258 = smul.addr %s257, 8
      %s259 = scalar_lea.vmem %s1, %s258
      %p260 = pneg %p64
      %p261 = pneg %p61
      %p262 = scmp.lt.s32.totalorder %s17, 1
      %s263 = scalar_select %p262, %s17, 1
      %s264 = smul.addr %s263, 18
      %s265 = smul.addr %s264, 8
      %s266 = scalar_lea.vmem %s2, %s265
      %p267 = pneg %p90
      %p268 = pneg %p87
      %p269 = scmp.lt.s32.totalorder %s17, 1
      %s270 = scalar_select %p269, %s17, 1
      %s271 = smul.addr %s270, 18
      %s272 = smul.addr %s271, 8
      %s273 = scalar_lea.vmem %s3, %s272
      %p274 = pneg %p116
      %p275 = pneg %p113
      %p276 = pneg %p137
      %p277 = pneg %p134
      %p278 = pneg %p158
      %p279 = pneg %p155
      %p280 = pneg %p184
      %p281 = pneg %p181
      %p282 = scmp.lt.s32.totalorder %s17, 1
      %s283 = scalar_select %p282, %s17, 1
      %s284 = smul.addr %s283, 8
      %s285 = smul.addr %s284, 8
      %s286 = scalar_lea.vmem %s6, %s285
      %p287 = scmp.lt.s32.totalorder %s17, 1
      %s288 = scalar_select %p287, %s17, 1
      %s289 = smul.addr %s288, 18
      %s290 = smul.addr %s289, 8
      %s291 = scalar_lea.vmem %s0, %s290
      %p292 = scmp.lt.s32.totalorder %s17, 1
      %s293 = scalar_select %p292, %s17, 1
      %s294 = smul.addr %s293, 18
      %s295 = smul.addr %s294, 8
      %s296 = scalar_lea.vmem %s1, %s295
      %p297 = scmp.lt.s32.totalorder %s17, 1
      %s298 = scalar_select %p297, %s17, 1
      %s299 = smul.addr %s298, 18
      %s300 = smul.addr %s299, 8
      %s301 = scalar_lea.vmem %s2, %s300
      %p302 = scmp.lt.s32.totalorder %s17, 1
      %s303 = scalar_select %p302, %s17, 1
      %s304 = smul.addr %s303, 18
      %s305 = smul.addr %s304, 8
      %s306 = scalar_lea.vmem %s3, %s305
      %p307 = scmp.lt.s32.totalorder %s17, 1
      %s308 = scalar_select %p307, %s17, 1
      %s309 = smul.addr %s308, 8
      %s310 = smul.addr %s309, 8
      %s311 = scalar_lea.vmem %s6, %s310
      %v313 = vld [vmem:[%s291] sm:$0xff]
      %v314 = vld [vmem:[%s291 + $0x10] sm:$0xff]
      %v315 = vld [vmem:[%s291 + $0x20] sm:$0xff]
      %v316 = vld [vmem:[%s291 + $0x30] sm:$0xff]
      %v317 = vld [vmem:[%s291 + $0x40] sm:$0xff]
      %v318 = vld [vmem:[%s291 + $0x50] sm:$0xff]
      %v319 = vld [vmem:[%s291 + $0x60] sm:$0xff]
      %v320 = vld [vmem:[%s291 + $0x70] sm:$0xff]
      %v321 = vpack.c.bf16 %v314, %v313
      %v322 = vpack.c.bf16 %v316, %v315
      %v323 = vpack.c.bf16 %v318, %v317
      %v324 = vpack.c.bf16 %v320, %v319
      %v325 = vld [vmem:[%s4] sm:$0xf]
      %v326 = vld [vmem:[%s4 + $0x4] sm:$0xf]
      %v327 = vld [vmem:[%s4 + $0x8] sm:$0xf]
      %v328 = vld [vmem:[%s4 + $0xc] sm:$0xf]
      %v329 = vld [vmem:[%s4 + $0x10] sm:$0xf]
      %v330 = vld [vmem:[%s4 + $0x14] sm:$0xf]
      %v331 = vld [vmem:[%s4 + $0x18] sm:$0xf]
      %v332 = vld [vmem:[%s4 + $0x1c] sm:$0xf]
      %v333 = vld [vmem:[%s4 + $0x20] sm:$0xf]
      %v334 = vld [vmem:[%s4 + $0x24] sm:$0xf]
      %v335 = vld [vmem:[%s4 + $0x28] sm:$0xf]
      %v336 = vld [vmem:[%s4 + $0x2c] sm:$0xf]
      %v337 = vld [vmem:[%s4 + $0x30] sm:$0xf]
      %v338 = vld [vmem:[%s4 + $0x34] sm:$0xf]
      %v339 = vld [vmem:[%s4 + $0x38] sm:$0xf]
      %v340 = vld [vmem:[%s4 + $0x3c] sm:$0xf]
      %v341 = vld [vmem:[%s296] sm:$0xff]
      %v342 = vld [vmem:[%s296 + $0x10] sm:$0xff]
      %v343 = vld [vmem:[%s296 + $0x20] sm:$0xff]
      %v344 = vld [vmem:[%s296 + $0x30] sm:$0xff]
      %v345 = vld [vmem:[%s296 + $0x40] sm:$0xff]
      %v346 = vld [vmem:[%s296 + $0x50] sm:$0xff]
      %v347 = vld [vmem:[%s296 + $0x60] sm:$0xff]
      %v348 = vld [vmem:[%s296 + $0x70] sm:$0xff]
      %v349 = vpack.c.bf16 %v342, %v341
      %v350 = vpack.c.bf16 %v344, %v343
      %v351 = vpack.c.bf16 %v346, %v345
      %v352 = vpack.c.bf16 %v348, %v347
      %s353 = scalar_lea.vmem %s4, 64
      %v354 = vld [vmem:[%s353] sm:$0xf]
      %v355 = vld [vmem:[%s353 + $0x4] sm:$0xf]
      %v356 = vld [vmem:[%s353 + $0x8] sm:$0xf]
      %v357 = vld [vmem:[%s353 + $0xc] sm:$0xf]
      %v358 = vld [vmem:[%s353 + $0x10] sm:$0xf]
      %v359 = vld [vmem:[%s353 + $0x14] sm:$0xf]
      %v360 = vld [vmem:[%s353 + $0x18] sm:$0xf]
      %v361 = vld [vmem:[%s353 + $0x1c] sm:$0xf]
      %v362 = vld [vmem:[%s353 + $0x20] sm:$0xf]
      %v363 = vld [vmem:[%s353 + $0x24] sm:$0xf]
      %v364 = vld [vmem:[%s353 + $0x28] sm:$0xf]
      %v365 = vld [vmem:[%s353 + $0x2c] sm:$0xf]
      %v366 = vld [vmem:[%s353 + $0x30] sm:$0xf]
      %v367 = vld [vmem:[%s353 + $0x34] sm:$0xf]
      %v368 = vld [vmem:[%s353 + $0x38] sm:$0xf]
      %v369 = vld [vmem:[%s353 + $0x3c] sm:$0xf]
      %v386 = vunpack.c.l.b16 %v354
      %v387 = vunpack.c.l.b16 %v355
      %v388 = vunpack.c.l.b16 %v356
      %v389 = vunpack.c.l.b16 %v357
      %v390 = vunpack.c.l.b16 %v358
      %v391 = vunpack.c.l.b16 %v359
      %v392 = vunpack.c.l.b16 %v360
      %v393 = vunpack.c.l.b16 %v361
      %v394 = vunpack.c.l.b16 %v362
      %v395 = vunpack.c.l.b16 %v363
      %v396 = vunpack.c.l.b16 %v364
      %v397 = vunpack.c.l.b16 %v365
      %v398 = vunpack.c.l.b16 %v366
      %v399 = vunpack.c.l.b16 %v367
      %v400 = vunpack.c.l.b16 %v368
      %v401 = vunpack.c.l.b16 %v369
      %v402 = vpack.c.b16 %v387, %v386
      %v403 = vpack.c.b16 %v389, %v388
      %v404 = vpack.c.b16 %v391, %v390
      %v405 = vpack.c.b16 %v393, %v392
      %v406 = vpack.c.b16 %v395, %v394
      %v407 = vpack.c.b16 %v397, %v396
      %v408 = vpack.c.b16 %v399, %v398
      %v409 = vpack.c.b16 %v401, %v400
      %418 = vmatprep.subr.bf16.mxu0 0
      %419 = vmatpush1.bf16.msra.mxu0 %v402
      %420 = vmatprep.subr.bf16.mxu0 0
      %421 = vmatpush1.bf16.msra.mxu0 %v403
      %422 = vmatprep.subr.bf16.mxu0 0
      %423 = vmatpush1.bf16.msra.mxu0 %v404
      %424 = vmatprep.subr.bf16.mxu0 0
      %425 = vmatpush1.bf16.msra.mxu0 %v405
      %426 = vmatprep.subr.bf16.mxu0 0
      %427 = vmatpush1.bf16.msra.mxu0 %v406
      %428 = vmatprep.subr.bf16.mxu0 0
      %429 = vmatpush1.bf16.msra.mxu0 %v407
      %430 = vmatprep.subr.bf16.mxu0 0
      %431 = vmatpush1.bf16.msra.mxu0 %v408
      %432 = vmatprep.subr.bf16.mxu0 0
      %433 = vmatpush1.bf16.msra.mxu0 %v409
      %434 = vmatprep.subr.bf16.mxu0 0
      %435 = vmatpush1.bf16.msra.mxu0 0
      %436 = vmatprep.subr.bf16.mxu0 0
      %437 = vmatpush1.bf16.msra.mxu0 0
      %438 = vmatprep.subr.bf16.mxu0 0
      %439 = vmatpush1.bf16.msra.mxu0 0
      %440 = vmatprep.subr.bf16.mxu0 0
      %441 = vmatpush1.bf16.msra.mxu0 0
      %442 = vmatprep.subr.bf16.mxu0 0
      %443 = vmatpush1.bf16.msra.mxu0 0
      %444 = vmatprep.subr.bf16.mxu0 0
      %445 = vmatpush1.bf16.msra.mxu0 0
      %446 = vmatprep.subr.bf16.mxu0 0
      %447 = vmatpush1.bf16.msra.mxu0 0
      %448 = vmatprep.subr.bf16.mxu0 0
      %449 = vmatpush1.bf16.msra.mxu0 0
      %450 = vmatprep.mubr.bf16.mxu0 0
      %451 = vmatmul.mubr.bf16.gmra.mrb[0].mxu0 %v349
      %v452 = vpop.f32.mrb[0].mxu0
      %v453 = vadd.f32 0.0, %v452
      %v454 = vpop.f32.mrb[0].mxu0
      %v455 = vpop.f32.mrb[0].mxu0
      %v456 = vadd.f32 0.0, %v455
      %v457 = vpop.f32.mrb[0].mxu0
      %458 = vmatprep.mubr.bf16.mxu0 0
      %459 = vmatmul.mubr.bf16.gmra.mrb[0].mxu0 %v350
      %v460 = vpop.f32.mrb[0].mxu0
      %v461 = vadd.f32 0.0, %v460
      %v462 = vpop.f32.mrb[0].mxu0
      %v463 = vpop.f32.mrb[0].mxu0
      %v464 = vadd.f32 0.0, %v463
      %v465 = vpop.f32.mrb[0].mxu0
      %466 = vmatprep.mubr.bf16.mxu0 0
      %467 = vmatmul.mubr.bf16.gmra.mrb[0].mxu0 %v351
      %v468 = vpop.f32.mrb[0].mxu0
      %v469 = vadd.f32 0.0, %v468
      %v470 = vpop.f32.mrb[0].mxu0
      %v471 = vpop.f32.mrb[0].mxu0
      %v472 = vadd.f32 0.0, %v471
      %v473 = vpop.f32.mrb[0].mxu0
      %474 = vmatprep.mubr.bf16.mxu0 0
      %475 = vmatmul.mubr.bf16.gmra.mrb[0].mxu0 %v352
      %v476 = vpop.f32.mrb[0].mxu0
      %v477 = vadd.f32 0.0, %v476
      %v478 = vpop.f32.mrb[0].mxu0
      %v479 = vpop.f32.mrb[0].mxu0
      %v480 = vadd.f32 0.0, %v479
      %v481 = vpop.f32.mrb[0].mxu0
      %482 = vdwg.mxu0
      %v499 = vunpack.c.l.b16 %v325
      %v500 = vunpack.c.l.b16 %v326
      %v501 = vunpack.c.l.b16 %v327
      %v502 = vunpack.c.l.b16 %v328
      %v503 = vunpack.c.l.b16 %v329
      %v504 = vunpack.c.l.b16 %v330
      %v505 = vunpack.c.l.b16 %v331
      %v506 = vunpack.c.l.b16 %v332
      %v507 = vunpack.c.l.b16 %v333
      %v508 = vunpack.c.l.b16 %v334
      %v509 = vunpack.c.l.b16 %v335
      %v510 = vunpack.c.l.b16 %v336
      %v511 = vunpack.c.l.b16 %v337
      %v512 = vunpack.c.l.b16 %v338
      %v513 = vunpack.c.l.b16 %v339
      %v514 = vunpack.c.l.b16 %v340
      %v515 = vpack.c.b16 %v500, %v499
      %v516 = vpack.c.b16 %v502, %v501
      %v517 = vpack.c.b16 %v504, %v503
      %v518 = vpack.c.b16 %v506, %v505
      %v519 = vpack.c.b16 %v508, %v507
      %v520 = vpack.c.b16 %v510, %v509
      %v521 = vpack.c.b16 %v512, %v511
      %v522 = vpack.c.b16 %v514, %v513
      %531 = vmatprep.subr.bf16.mxu0 0
      %532 = vmatpush1.bf16.msra.mxu0 %v515
      %533 = vmatprep.subr.bf16.mxu0 0
      %534 = vmatpush1.bf16.msra.mxu0 %v516
      %535 = vmatprep.subr.bf16.mxu0 0
      %536 = vmatpush1.bf16.msra.mxu0 %v517
      %537 = vmatprep.subr.bf16.mxu0 0
      %538 = vmatpush1.bf16.msra.mxu0 %v518
      %539 = vmatprep.subr.bf16.mxu0 0
      %540 = vmatpush1.bf16.msra.mxu0 %v519
      %541 = vmatprep.subr.bf16.mxu0 0
      %542 = vmatpush1.bf16.msra.mxu0 %v520
      %543 = vmatprep.subr.bf16.mxu0 0
      %544 = vmatpush1.bf16.msra.mxu0 %v521
      %545 = vmatprep.subr.bf16.mxu0 0
      %546 = vmatpush1.bf16.msra.mxu0 %v522
      %547 = vmatprep.subr.bf16.mxu0 0
      %548 = vmatpush1.bf16.msra.mxu0 0
      %549 = vmatprep.subr.bf16.mxu0 0
      %550 = vmatpush1.bf16.msra.mxu0 0
      %551 = vmatprep.subr.bf16.mxu0 0
      %552 = vmatpush1.bf16.msra.mxu0 0
      %553 = vmatprep.subr.bf16.mxu0 0
      %554 = vmatpush1.bf16.msra.mxu0 0
      %555 = vmatprep.subr.bf16.mxu0 0
      %556 = vmatpush1.bf16.msra.mxu0 0
      %557 = vmatprep.subr.bf16.mxu0 0
      %558 = vmatpush1.bf16.msra.mxu0 0
      %559 = vmatprep.subr.bf16.mxu0 0
      %560 = vmatpush1.bf16.msra.mxu0 0
      %561 = vmatprep.subr.bf16.mxu0 0
      %562 = vmatpush1.bf16.msra.mxu0 0
      %563 = vmatprep.mubr.bf16.mxu0 0
      %564 = vmatmul.mubr.bf16.gmra.mrb[0].mxu0 %v321
      %v565 = vpop.f32.mrb[0].mxu0
      %v566 = vadd.f32 %v453, %v565
      %v567 = vpop.f32.mrb[0].mxu0
      %v568 = vpop.f32.mrb[0].mxu0
      %v569 = vadd.f32 %v456, %v568
      %v570 = vpop.f32.mrb[0].mxu0
      %571 = vmatprep.mubr.bf16.mxu0 0
      %572 = vmatmul.mubr.bf16.gmra.mrb[0].mxu0 %v322
      %v573 = vpop.f32.mrb[0].mxu0
      %v574 = vadd.f32 %v461, %v573
      %v575 = vpop.f32.mrb[0].mxu0
      %v576 = vpop.f32.mrb[0].mxu0
      %v577 = vadd.f32 %v464, %v576
      %v578 = vpop.f32.mrb[0].mxu0
      %579 = vmatprep.mubr.bf16.mxu0 0
      %580 = vmatmul.mubr.bf16.gmra.mrb[0].mxu0 %v323
      %v581 = vpop.f32.mrb[0].mxu0
      %v582 = vadd.f32 %v469, %v581
      %v583 = vpop.f32.mrb[0].mxu0
      %v584 = vpop.f32.mrb[0].mxu0
      %v585 = vadd.f32 %v472, %v584
      %v586 = vpop.f32.mrb[0].mxu0
      %587 = vmatprep.mubr.bf16.mxu0 0
      %588 = vmatmul.mubr.bf16.gmra.mrb[0].mxu0 %v324
      %v589 = vpop.f32.mrb[0].mxu0
      %v590 = vadd.f32 %v477, %v589
      %v591 = vpop.f32.mrb[0].mxu0
      %v592 = vpop.f32.mrb[0].mxu0
      %v593 = vadd.f32 %v480, %v592
      %v594 = vpop.f32.mrb[0].mxu0
      %595 = vdwg.mxu0
      %v596 = vld [vmem:[%s291 + $0x1] sm:$0xff]
      %v597 = vld [vmem:[%s291 + $0x11] sm:$0xff]
      %v598 = vld [vmem:[%s291 + $0x21] sm:$0xff]
      %v599 = vld [vmem:[%s291 + $0x31] sm:$0xff]
      %v600 = vld [vmem:[%s291 + $0x41] sm:$0xff]
      %v601 = vld [vmem:[%s291 + $0x51] sm:$0xff]
      %v602 = vld [vmem:[%s291 + $0x61] sm:$0xff]
      %v603 = vld [vmem:[%s291 + $0x71] sm:$0xff]
      %v604 = vpack.c.bf16 %v597, %v596
      %v605 = vpack.c.bf16 %v599, %v598
      %v606 = vpack.c.bf16 %v601, %v600
      %v607 = vpack.c.bf16 %v603, %v602
      %s608 = scalar_lea.vmem %s4, 128
      %v609 = vld [vmem:[%s608] sm:$0xf]
      %v610 = vld [vmem:[%s608 + $0x4] sm:$0xf]
      %v611 = vld [vmem:[%s608 + $0x8] sm:$0xf]
      %v612 = vld [vmem:[%s608 + $0xc] sm:$0xf]
      %v613 = vld [vmem:[%s608 + $0x10] sm:$0xf]
      %v614 = vld [vmem:[%s608 + $0x14] sm:$0xf]
      %v615 = vld [vmem:[%s608 + $0x18] sm:$0xf]
      %v616 = vld [vmem:[%s608 + $0x1c] sm:$0xf]
      %v617 = vld [vmem:[%s608 + $0x20] sm:$0xf]
      %v618 = vld [vmem:[%s608 + $0x24] sm:$0xf]
      %v619 = vld [vmem:[%s608 + $0x28] sm:$0xf]
      %v620 = vld [vmem:[%s608 + $0x2c] sm:$0xf]
      %v621 = vld [vmem:[%s608 + $0x30] sm:$0xf]
      %v622 = vld [vmem:[%s608 + $0x34] sm:$0xf]
      %v623 = vld [vmem:[%s608 + $0x38] sm:$0xf]
      %v624 = vld [vmem:[%s608 + $0x3c] sm:$0xf]
      %v641 = vunpack.c.l.b16 %v609
      %v642 = vunpack.c.l.b16 %v610
      %v643 = vunpack.c.l.b16 %v611
      %v644 = vunpack.c.l.b16 %v612
      %v645 = vunpack.c.l.b16 %v613
      %v646 = vunpack.c.l.b16 %v614
      %v647 = vunpack.c.l.b16 %v615
      %v648 = vunpack.c.l.b16 %v616
      %v649 = vunpack.c.l.b16 %v617
      %v650 = vunpack.c.l.b16 %v618
      %v651 = vunpack.c.l.b16 %v619
      %v652 = vunpack.c.l.b16 %v620
      %v653 = vunpack.c.l.b16 %v621
      %v654 = vunpack.c.l.b16 %v622
      %v655 = vunpack.c.l.b16 %v623
      %v656 = vunpack.c.l.b16 %v624
      %v657 = vpack.c.b16 %v642, %v641
      %v658 = vpack.c.b16 %v644, %v643
      %v659 = vpack.c.b16 %v646, %v645
      %v660 = vpack.c.b16 %v648, %v647
      %v661 = vpack.c.b16 %v650, %v649
      %v662 = vpack.c.b16 %v652, %v651
      %v663 = vpack.c.b16 %v654, %v653
      %v664 = vpack.c.b16 %v656, %v655
      %673 = vmatprep.subr.bf16.mxu0 0
      %674 = vmatpush1.bf16.msra.mxu0 %v657
      %675 = vmatprep.subr.bf16.mxu0 0
      %676 = vmatpush1.bf16.msra.mxu0 %v658
      %677 = vmatprep.subr.bf16.mxu0 0
      %678 = vmatpush1.bf16.msra.mxu0 %v659
      %679 = vmatprep.subr.bf16.mxu0 0
      %680 = vmatpush1.bf16.msra.mxu0 %v660
      %681 = vmatprep.subr.bf16.mxu0 0
      %682 = vmatpush1.bf16.msra.mxu0 %v661
      %683 = vmatprep.subr.bf16.mxu0 0
      %684 = vmatpush1.bf16.msra.mxu0 %v662
      %685 = vmatprep.subr.bf16.mxu0 0
      %686 = vmatpush1.bf16.msra.mxu0 %v663
      %687 = vmatprep.subr.bf16.mxu0 0
      %688 = vmatpush1.bf16.msra.mxu0 %v664
      %689 = vmatprep.subr.bf16.mxu0 0
      %690 = vmatpush1.bf16.msra.mxu0 0
      %691 = vmatprep.subr.bf16.mxu0 0
      %692 = vmatpush1.bf16.msra.mxu0 0
      %693 = vmatprep.subr.bf16.mxu0 0
      %694 = vmatpush1.bf16.msra.mxu0 0
      %695 = vmatprep.subr.bf16.mxu0 0
      %696 = vmatpush1.bf16.msra.mxu0 0
      %697 = vmatprep.subr.bf16.mxu0 0
      %698 = vmatpush1.bf16.msra.mxu0 0
      %699 = vmatprep.subr.bf16.mxu0 0
      %700 = vmatpush1.bf16.msra.mxu0 0
      %701 = vmatprep.subr.bf16.mxu0 0
      %702 = vmatpush1.bf16.msra.mxu0 0
      %703 = vmatprep.subr.bf16.mxu0 0
      %704 = vmatpush1.bf16.msra.mxu0 0
      %705 = vmatprep.mubr.bf16.mxu0 0
      %706 = vmatmul.mubr.bf16.gmra.mrb[0].mxu0 %v604
      %v707 = vpop.f32.mrb[0].mxu0
      %v708 = vadd.f32 0.0, %v707
      %v709 = vpop.f32.mrb[0].mxu0
      %v710 = vpop.f32.mrb[0].mxu0
      %v711 = vadd.f32 0.0, %v710
      %v712 = vpop.f32.mrb[0].mxu0
      %713 = vmatprep.mubr.bf16.mxu0 0
      %714 = vmatmul.mubr.bf16.gmra.mrb[0].mxu0 %v605
      %v715 = vpop.f32.mrb[0].mxu0
      %v716 = vadd.f32 0.0, %v715
      %v717 = vpop.f32.mrb[0].mxu0
      %v718 = vpop.f32.mrb[0].mxu0
      %v719 = vadd.f32 0.0, %v718
      %v720 = vpop.f32.mrb[0].mxu0
      %721 = vmatprep.mubr.bf16.mxu0 0
      %722 = vmatmul.mubr.bf16.gmra.mrb[0].mxu0 %v606
      %v723 = vpop.f32.mrb[0].mxu0
      %v724 = vadd.f32 0.0, %v723
      %v725 = vpop.f32.mrb[0].mxu0
      %v726 = vpop.f32.mrb[0].mxu0
      %v727 = vadd.f32 0.0, %v726
      %v728 = vpop.f32.mrb[0].mxu0
      %729 = vmatprep.mubr.bf16.mxu0 0
      %730 = vmatmul.mubr.bf16.gmra.mrb[0].mxu0 %v607
      %v731 = vpop.f32.mrb[0].mxu0
      %v732 = vadd.f32 0.0, %v731
      %v733 = vpop.f32.mrb[0].mxu0
      %v734 = vpop.f32.mrb[0].mxu0
      %v735 = vadd.f32 0.0, %v734
      %v736 = vpop.f32.mrb[0].mxu0
      %737 = vdwg.mxu0
      %v738 = vadd.f32 %v566, %v708
      %v739 = vadd.f32 %v569, %v711
      %v740 = vadd.f32 %v574, %v716
      %v741 = vadd.f32 %v577, %v719
      %v742 = vadd.f32 %v582, %v724
      %v743 = vadd.f32 %v585, %v727
      %v744 = vadd.f32 %v590, %v732
      %v745 = vadd.f32 %v593, %v735
      %v746 = vld [vmem:[%s301] sm:$0xff]
      %v747 = vld [vmem:[%s301 + $0x10] sm:$0xff]
      %v748 = vld [vmem:[%s301 + $0x20] sm:$0xff]
      %v749 = vld [vmem:[%s301 + $0x30] sm:$0xff]
      %v750 = vld [vmem:[%s301 + $0x40] sm:$0xff]
      %v751 = vld [vmem:[%s301 + $0x50] sm:$0xff]
      %v752 = vld [vmem:[%s301 + $0x60] sm:$0xff]
      %v753 = vld [vmem:[%s301 + $0x70] sm:$0xff]
      %v754 = vpack.c.bf16 %v747, %v746
      %v755 = vpack.c.bf16 %v749, %v748
      %v756 = vpack.c.bf16 %v751, %v750
      %v757 = vpack.c.bf16 %v753, %v752
      %s758 = scalar_lea.vmem %s4, 192
      %v759 = vld [vmem:[%s758] sm:$0xf]
      %v760 = vld [vmem:[%s758 + $0x4] sm:$0xf]
      %v761 = vld [vmem:[%s758 + $0x8] sm:$0xf]
      %v762 = vld [vmem:[%s758 + $0xc] sm:$0xf]
      %v763 = vld [vmem:[%s758 + $0x10] sm:$0xf]
      %v764 = vld [vmem:[%s758 + $0x14] sm:$0xf]
      %v765 = vld [vmem:[%s758 + $0x18] sm:$0xf]
      %v766 = vld [vmem:[%s758 + $0x1c] sm:$0xf]
      %v767 = vld [vmem:[%s758 + $0x20] sm:$0xf]
      %v768 = vld [vmem:[%s758 + $0x24] sm:$0xf]
      %v769 = vld [vmem:[%s758 + $0x28] sm:$0xf]
      %v770 = vld [vmem:[%s758 + $0x2c] sm:$0xf]
      %v771 = vld [vmem:[%s758 + $0x30] sm:$0xf]
      %v772 = vld [vmem:[%s758 + $0x34] sm:$0xf]
      %v773 = vld [vmem:[%s758 + $0x38] sm:$0xf]
      %v774 = vld [vmem:[%s758 + $0x3c] sm:$0xf]
      %v791 = vunpack.c.l.b16 %v759
      %v792 = vunpack.c.l.b16 %v760
      %v793 = vunpack.c.l.b16 %v761
      %v794 = vunpack.c.l.b16 %v762
      %v795 = vunpack.c.l.b16 %v763
      %v796 = vunpack.c.l.b16 %v764
      %v797 = vunpack.c.l.b16 %v765
      %v798 = vunpack.c.l.b16 %v766
      %v799 = vunpack.c.l.b16 %v767
      %v800 = vunpack.c.l.b16 %v768
      %v801 = vunpack.c.l.b16 %v769
      %v802 = vunpack.c.l.b16 %v770
      %v803 = vunpack.c.l.b16 %v771
      %v804 = vunpack.c.l.b16 %v772
      %v805 = vunpack.c.l.b16 %v773
      %v806 = vunpack.c.l.b16 %v774
      %v807 = vpack.c.b16 %v792, %v791
      %v808 = vpack.c.b16 %v794, %v793
      %v809 = vpack.c.b16 %v796, %v795
      %v810 = vpack.c.b16 %v798, %v797
      %v811 = vpack.c.b16 %v800, %v799
      %v812 = vpack.c.b16 %v802, %v801
      %v813 = vpack.c.b16 %v804, %v803
      %v814 = vpack.c.b16 %v806, %v805
      %823 = vmatprep.subr.bf16.mxu0 0
      %824 = vmatpush1.bf16.msra.mxu0 %v807
      %825 = vmatprep.subr.bf16.mxu0 0
      %826 = vmatpush1.bf16.msra.mxu0 %v808
      %827 = vmatprep.subr.bf16.mxu0 0
      %828 = vmatpush1.bf16.msra.mxu0 %v809
      %829 = vmatprep.subr.bf16.mxu0 0
      %830 = vmatpush1.bf16.msra.mxu0 %v810
      %831 = vmatprep.subr.bf16.mxu0 0
      %832 = vmatpush1.bf16.msra.mxu0 %v811
      %833 = vmatprep.subr.bf16.mxu0 0
      %834 = vmatpush1.bf16.msra.mxu0 %v812
      %835 = vmatprep.subr.bf16.mxu0 0
      %836 = vmatpush1.bf16.msra.mxu0 %v813
      %837 = vmatprep.subr.bf16.mxu0 0
      %838 = vmatpush1.bf16.msra.mxu0 %v814
      %839 = vmatprep.subr.bf16.mxu0 0
      %840 = vmatpush1.bf16.msra.mxu0 0
      %841 = vmatprep.subr.bf16.mxu0 0
      %842 = vmatpush1.bf16.msra.mxu0 0
      %843 = vmatprep.subr.bf16.mxu0 0
      %844 = vmatpush1.bf16.msra.mxu0 0
      %845 = vmatprep.subr.bf16.mxu0 0
      %846 = vmatpush1.bf16.msra.mxu0 0
      %847 = vmatprep.subr.bf16.mxu0 0
      %848 = vmatpush1.bf16.msra.mxu0 0
      %849 = vmatprep.subr.bf16.mxu0 0
      %850 = vmatpush1.bf16.msra.mxu0 0
      %851 = vmatprep.subr.bf16.mxu0 0
      %852 = vmatpush1.bf16.msra.mxu0 0
      %853 = vmatprep.subr.bf16.mxu0 0
      %854 = vmatpush1.bf16.msra.mxu0 0
      %855 = vmatprep.mubr.bf16.mxu0 0
      %856 = vmatmul.mubr.bf16.gmra.mrb[0].mxu0 %v754
      %v857 = vpop.f32.mrb[0].mxu0
      %v858 = vadd.f32 0.0, %v857
      %v859 = vpop.f32.mrb[0].mxu0
      %v860 = vpop.f32.mrb[0].mxu0
      %v861 = vadd.f32 0.0, %v860
      %v862 = vpop.f32.mrb[0].mxu0
      %863 = vmatprep.mubr.bf16.mxu0 0
      %864 = vmatmul.mubr.bf16.gmra.mrb[0].mxu0 %v755
      %v865 = vpop.f32.mrb[0].mxu0
      %v866 = vadd.f32 0.0, %v865
      %v867 = vpop.f32.mrb[0].mxu0
      %v868 = vpop.f32.mrb[0].mxu0
      %v869 = vadd.f32 0.0, %v868
      %v870 = vpop.f32.mrb[0].mxu0
      %871 = vmatprep.mubr.bf16.mxu0 0
      %872 = vmatmul.mubr.bf16.gmra.mrb[0].mxu0 %v756
      %v873 = vpop.f32.mrb[0].mxu0
      %v874 = vadd.f32 0.0, %v873
      %v875 = vpop.f32.mrb[0].mxu0
      %v876 = vpop.f32.mrb[0].mxu0
      %v877 = vadd.f32 0.0, %v876
      %v878 = vpop.f32.mrb[0].mxu0
      %879 = vmatprep.mubr.bf16.mxu0 0
      %880 = vmatmul.mubr.bf16.gmra.mrb[0].mxu0 %v757
      %v881 = vpop.f32.mrb[0].mxu0
      %v882 = vadd.f32 0.0, %v881
      %v883 = vpop.f32.mrb[0].mxu0
      %v884 = vpop.f32.mrb[0].mxu0
      %v885 = vadd.f32 0.0, %v884
      %v886 = vpop.f32.mrb[0].mxu0
      %887 = vdwg.mxu0
      %v888 = vadd.f32 %v738, %v858
      %v889 = vadd.f32 %v739, %v861
      %v890 = vadd.f32 %v740, %v866
      %v891 = vadd.f32 %v741, %v869
      %v892 = vadd.f32 %v742, %v874
      %v893 = vadd.f32 %v743, %v877
      %v894 = vadd.f32 %v744, %v882
      %v895 = vadd.f32 %v745, %v885
      %v896 = vld [vmem:[%s306] sm:$0xff]
      %v897 = vld [vmem:[%s306 + $0x10] sm:$0xff]
      %v898 = vld [vmem:[%s306 + $0x20] sm:$0xff]
      %v899 = vld [vmem:[%s306 + $0x30] sm:$0xff]
      %v900 = vld [vmem:[%s306 + $0x40] sm:$0xff]
      %v901 = vld [vmem:[%s306 + $0x50] sm:$0xff]
      %v902 = vld [vmem:[%s306 + $0x60] sm:$0xff]
      %v903 = vld [vmem:[%s306 + $0x70] sm:$0xff]
      %v904 = vpack.c.bf16 %v897, %v896
      %v905 = vpack.c.bf16 %v899, %v898
      %v906 = vpack.c.bf16 %v901, %v900
      %v907 = vpack.c.bf16 %v903, %v902
      %s908 = scalar_lea.vmem %s4, 256
      %v909 = vld [vmem:[%s908] sm:$0xf]
      %v910 = vld [vmem:[%s908 + $0x4] sm:$0xf]
      %v911 = vld [vmem:[%s908 + $0x8] sm:$0xf]
      %v912 = vld [vmem:[%s908 + $0xc] sm:$0xf]
      %v913 = vld [vmem:[%s908 + $0x10] sm:$0xf]
      %v914 = vld [vmem:[%s908 + $0x14] sm:$0xf]
      %v915 = vld [vmem:[%s908 + $0x18] sm:$0xf]
      %v916 = vld [vmem:[%s908 + $0x1c] sm:$0xf]
      %v917 = vld [vmem:[%s908 + $0x20] sm:$0xf]
      %v918 = vld [vmem:[%s908 + $0x24] sm:$0xf]
      %v919 = vld [vmem:[%s908 + $0x28] sm:$0xf]
      %v920 = vld [vmem:[%s908 + $0x2c] sm:$0xf]
      %v921 = vld [vmem:[%s908 + $0x30] sm:$0xf]
      %v922 = vld [vmem:[%s908 + $0x34] sm:$0xf]
      %v923 = vld [vmem:[%s908 + $0x38] sm:$0xf]
      %v924 = vld [vmem:[%s908 + $0x3c] sm:$0xf]
      %v941 = vunpack.c.l.b16 %v909
      %v942 = vunpack.c.l.b16 %v910
      %v943 = vunpack.c.l.b16 %v911
      %v944 = vunpack.c.l.b16 %v912
      %v945 = vunpack.c.l.b16 %v913
      %v946 = vunpack.c.l.b16 %v914
      %v947 = vunpack.c.l.b16 %v915
      %v948 = vunpack.c.l.b16 %v916
      %v949 = vunpack.c.l.b16 %v917
      %v950 = vunpack.c.l.b16 %v918
      %v951 = vunpack.c.l.b16 %v919
      %v952 = vunpack.c.l.b16 %v920
      %v953 = vunpack.c.l.b16 %v921
      %v954 = vunpack.c.l.b16 %v922
      %v955 = vunpack.c.l.b16 %v923
      %v956 = vunpack.c.l.b16 %v924
      %v957 = vpack.c.b16 %v942, %v941
      %v958 = vpack.c.b16 %v944, %v943
      %v959 = vpack.c.b16 %v946, %v945
      %v960 = vpack.c.b16 %v948, %v947
      %v961 = vpack.c.b16 %v950, %v949
      %v962 = vpack.c.b16 %v952, %v951
      %v963 = vpack.c.b16 %v954, %v953
      %v964 = vpack.c.b16 %v956, %v955
      %973 = vmatprep.subr.bf16.mxu0 0
      %974 = vmatpush1.bf16.msra.mxu0 %v957
      %975 = vmatprep.subr.bf16.mxu0 0
      %976 = vmatpush1.bf16.msra.mxu0 %v958
      %977 = vmatprep.subr.bf16.mxu0 0
      %978 = vmatpush1.bf16.msra.mxu0 %v959
      %979 = vmatprep.subr.bf16.mxu0 0
      %980 = vmatpush1.bf16.msra.mxu0 %v960
      %981 = vmatprep.subr.bf16.mxu0 0
      %982 = vmatpush1.bf16.msra.mxu0 %v961
      %983 = vmatprep.subr.bf16.mxu0 0
      %984 = vmatpush1.bf16.msra.mxu0 %v962
      %985 = vmatprep.subr.bf16.mxu0 0
      %986 = vmatpush1.bf16.msra.mxu0 %v963
      %987 = vmatprep.subr.bf16.mxu0 0
      %988 = vmatpush1.bf16.msra.mxu0 %v964
      %989 = vmatprep.subr.bf16.mxu0 0
      %990 = vmatpush1.bf16.msra.mxu0 0
      %991 = vmatprep.subr.bf16.mxu0 0
      %992 = vmatpush1.bf16.msra.mxu0 0
      %993 = vmatprep.subr.bf16.mxu0 0
      %994 = vmatpush1.bf16.msra.mxu0 0
      %995 = vmatprep.subr.bf16.mxu0 0
      %996 = vmatpush1.bf16.msra.mxu0 0
      %997 = vmatprep.subr.bf16.mxu0 0
      %998 = vmatpush1.bf16.msra.mxu0 0
      %999 = vmatprep.subr.bf16.mxu0 0
      %1000 = vmatpush1.bf16.msra.mxu0 0
      %1001 = vmatprep.subr.bf16.mxu0 0
      %1002 = vmatpush1.bf16.msra.mxu0 0
      %1003 = vmatprep.subr.bf16.mxu0 0
      %1004 = vmatpush1.bf16.msra.mxu0 0
      %1005 = vmatprep.mubr.bf16.mxu0 0
      %1006 = vmatmul.mubr.bf16.gmra.mrb[0].mxu0 %v904
      %v1007 = vpop.f32.mrb[0].mxu0
      %v1008 = vadd.f32 0.0, %v1007
      %v1009 = vpop.f32.mrb[0].mxu0
      %v1010 = vpop.f32.mrb[0].mxu0
      %v1011 = vadd.f32 0.0, %v1010
      %v1012 = vpop.f32.mrb[0].mxu0
      %1013 = vmatprep.mubr.bf16.mxu0 0
      %1014 = vmatmul.mubr.bf16.gmra.mrb[0].mxu0 %v905
      %v1015 = vpop.f32.mrb[0].mxu0
      %v1016 = vadd.f32 0.0, %v1015
      %v1017 = vpop.f32.mrb[0].mxu0
      %v1018 = vpop.f32.mrb[0].mxu0
      %v1019 = vadd.f32 0.0, %v1018
      %v1020 = vpop.f32.mrb[0].mxu0
      %1021 = vmatprep.mubr.bf16.mxu0 0
      %1022 = vmatmul.mubr.bf16.gmra.mrb[0].mxu0 %v906
      %v1023 = vpop.f32.mrb[0].mxu0
      %v1024 = vadd.f32 0.0, %v1023
      %v1025 = vpop.f32.mrb[0].mxu0
      %v1026 = vpop.f32.mrb[0].mxu0
      %v1027 = vadd.f32 0.0, %v1026
      %v1028 = vpop.f32.mrb[0].mxu0
      %1029 = vmatprep.mubr.bf16.mxu0 0
      %1030 = vmatmul.mubr.bf16.gmra.mrb[0].mxu0 %v907
      %v1031 = vpop.f32.mrb[0].mxu0
      %v1032 = vadd.f32 0.0, %v1031
      %v1033 = vpop.f32.mrb[0].mxu0
      %v1034 = vpop.f32.mrb[0].mxu0
      %v1035 = vadd.f32 0.0, %v1034
      %v1036 = vpop.f32.mrb[0].mxu0
      %1037 = vdwg.mxu0
      %v1038 = vadd.f32 %v888, %v1008
      %v1039 = vadd.f32 %v889, %v1011
      %v1040 = vadd.f32 %v890, %v1016
      %v1041 = vadd.f32 %v891, %v1019
      %v1042 = vadd.f32 %v892, %v1024
      %v1043 = vadd.f32 %v893, %v1027
      %v1044 = vadd.f32 %v894, %v1032
      %v1045 = vadd.f32 %v895, %v1035
      %v1046 = vld [vmem:[%s301 + $0x1] sm:$0xff]
      %v1047 = vld [vmem:[%s301 + $0x11] sm:$0xff]
      %v1048 = vld [vmem:[%s301 + $0x21] sm:$0xff]
      %v1049 = vld [vmem:[%s301 + $0x31] sm:$0xff]
      %v1050 = vld [vmem:[%s301 + $0x41] sm:$0xff]
      %v1051 = vld [vmem:[%s301 + $0x51] sm:$0xff]
      %v1052 = vld [vmem:[%s301 + $0x61] sm:$0xff]
      %v1053 = vld [vmem:[%s301 + $0x71] sm:$0xff]
      %v1054 = vpack.c.bf16 %v1047, %v1046
      %v1055 = vpack.c.bf16 %v1049, %v1048
      %v1056 = vpack.c.bf16 %v1051, %v1050
      %v1057 = vpack.c.bf16 %v1053, %v1052
      %s1058 = scalar_lea.vmem %s4, 320
      %v1059 = vld [vmem:[%s1058] sm:$0xf]
      %v1060 = vld [vmem:[%s1058 + $0x4] sm:$0xf]
      %v1061 = vld [vmem:[%s1058 + $0x8] sm:$0xf]
      %v1062 = vld [vmem:[%s1058 + $0xc] sm:$0xf]
      %v1063 = vld [vmem:[%s1058 + $0x10] sm:$0xf]
      %v1064 = vld [vmem:[%s1058 + $0x14] sm:$0xf]
      %v1065 = vld [vmem:[%s1058 + $0x18] sm:$0xf]
      %v1066 = vld [vmem:[%s1058 + $0x1c] sm:$0xf]
      %v1067 = vld [vmem:[%s1058 + $0x20] sm:$0xf]
      %v1068 = vld [vmem:[%s1058 + $0x24] sm:$0xf]
      %v1069 = vld [vmem:[%s1058 + $0x28] sm:$0xf]
      %v1070 = vld [vmem:[%s1058 + $0x2c] sm:$0xf]
      %v1071 = vld [vmem:[%s1058 + $0x30] sm:$0xf]
      %v1072 = vld [vmem:[%s1058 + $0x34] sm:$0xf]
      %v1073 = vld [vmem:[%s1058 + $0x38] sm:$0xf]
      %v1074 = vld [vmem:[%s1058 + $0x3c] sm:$0xf]
      %v1091 = vunpack.c.l.b16 %v1059
      %v1092 = vunpack.c.l.b16 %v1060
      %v1093 = vunpack.c.l.b16 %v1061
      %v1094 = vunpack.c.l.b16 %v1062
      %v1095 = vunpack.c.l.b16 %v1063
      %v1096 = vunpack.c.l.b16 %v1064
      %v1097 = vunpack.c.l.b16 %v1065
      %v1098 = vunpack.c.l.b16 %v1066
      %v1099 = vunpack.c.l.b16 %v1067
      %v1100 = vunpack.c.l.b16 %v1068
      %v1101 = vunpack.c.l.b16 %v1069
      %v1102 = vunpack.c.l.b16 %v1070
      %v1103 = vunpack.c.l.b16 %v1071
      %v1104 = vunpack.c.l.b16 %v1072
      %v1105 = vunpack.c.l.b16 %v1073
      %v1106 = vunpack.c.l.b16 %v1074
      %v1107 = vpack.c.b16 %v1092, %v1091
      %v1108 = vpack.c.b16 %v1094, %v1093
      %v1109 = vpack.c.b16 %v1096, %v1095
      %v1110 = vpack.c.b16 %v1098, %v1097
      %v1111 = vpack.c.b16 %v1100, %v1099
      %v1112 = vpack.c.b16 %v1102, %v1101
      %v1113 = vpack.c.b16 %v1104, %v1103
      %v1114 = vpack.c.b16 %v1106, %v1105
      %1123 = vmatprep.subr.bf16.mxu0 0
      %1124 = vmatpush1.bf16.msra.mxu0 %v1107
      %1125 = vmatprep.subr.bf16.mxu0 0
      %1126 = vmatpush1.bf16.msra.mxu0 %v1108
      %1127 = vmatprep.subr.bf16.mxu0 0
      %1128 = vmatpush1.bf16.msra.mxu0 %v1109
      %1129 = vmatprep.subr.bf16.mxu0 0
      %1130 = vmatpush1.bf16.msra.mxu0 %v1110
      %1131 = vmatprep.subr.bf16.mxu0 0
      %1132 = vmatpush1.bf16.msra.mxu0 %v1111
      %1133 = vmatprep.subr.bf16.mxu0 0
      %1134 = vmatpush1.bf16.msra.mxu0 %v1112
      %1135 = vmatprep.subr.bf16.mxu0 0
      %1136 = vmatpush1.bf16.msra.mxu0 %v1113
      %1137 = vmatprep.subr.bf16.mxu0 0
      %1138 = vmatpush1.bf16.msra.mxu0 %v1114
      %1139 = vmatprep.subr.bf16.mxu0 0
      %1140 = vmatpush1.bf16.msra.mxu0 0
      %1141 = vmatprep.subr.bf16.mxu0 0
      %1142 = vmatpush1.bf16.msra.mxu0 0
      %1143 = vmatprep.subr.bf16.mxu0 0
      %1144 = vmatpush1.bf16.msra.mxu0 0
      %1145 = vmatprep.subr.bf16.mxu0 0
      %1146 = vmatpush1.bf16.msra.mxu0 0
      %1147 = vmatprep.subr.bf16.mxu0 0
      %1148 = vmatpush1.bf16.msra.mxu0 0
      %1149 = vmatprep.subr.bf16.mxu0 0
      %1150 = vmatpush1.bf16.msra.mxu0 0
      %1151 = vmatprep.subr.bf16.mxu0 0
      %1152 = vmatpush1.bf16.msra.mxu0 0
      %1153 = vmatprep.subr.bf16.mxu0 0
      %1154 = vmatpush1.bf16.msra.mxu0 0
      %1155 = vmatprep.mubr.bf16.mxu0 0
      %1156 = vmatmul.mubr.bf16.gmra.mrb[0].mxu0 %v1054
      %v1157 = vpop.f32.mrb[0].mxu0
      %v1158 = vadd.f32 0.0, %v1157
      %v1159 = vpop.f32.mrb[0].mxu0
      %v1160 = vpop.f32.mrb[0].mxu0
      %v1161 = vadd.f32 0.0, %v1160
      %v1162 = vpop.f32.mrb[0].mxu0
      %1163 = vmatprep.mubr.bf16.mxu0 0
      %1164 = vmatmul.mubr.bf16.gmra.mrb[0].mxu0 %v1055
      %v1165 = vpop.f32.mrb[0].mxu0
      %v1166 = vadd.f32 0.0, %v1165
      %v1167 = vpop.f32.mrb[0].mxu0
      %v1168 = vpop.f32.mrb[0].mxu0
      %v1169 = vadd.f32 0.0, %v1168
      %v1170 = vpop.f32.mrb[0].mxu0
      %1171 = vmatprep.mubr.bf16.mxu0 0
      %1172 = vmatmul.mubr.bf16.gmra.mrb[0].mxu0 %v1056
      %v1173 = vpop.f32.mrb[0].mxu0
      %v1174 = vadd.f32 0.0, %v1173
      %v1175 = vpop.f32.mrb[0].mxu0
      %v1176 = vpop.f32.mrb[0].mxu0
      %v1177 = vadd.f32 0.0, %v1176
      %v1178 = vpop.f32.mrb[0].mxu0
      %1179 = vmatprep.mubr.bf16.mxu0 0
      %1180 = vmatmul.mubr.bf16.gmra.mrb[0].mxu0 %v1057
      %v1181 = vpop.f32.mrb[0].mxu0
      %v1182 = vadd.f32 0.0, %v1181
      %v1183 = vpop.f32.mrb[0].mxu0
      %v1184 = vpop.f32.mrb[0].mxu0
      %v1185 = vadd.f32 0.0, %v1184
      %v1186 = vpop.f32.mrb[0].mxu0
      %1187 = vdwg.mxu0
      %v1188 = vadd.f32 %v1038, %v1158
      %v1189 = vadd.f32 %v1039, %v1161
      %v1190 = vadd.f32 %v1040, %v1166
      %v1191 = vadd.f32 %v1041, %v1169
      %v1192 = vadd.f32 %v1042, %v1174
      %v1193 = vadd.f32 %v1043, %v1177
      %v1194 = vadd.f32 %v1044, %v1182
      %v1195 = vadd.f32 %v1045, %v1185
      %s1196 = scalar_lea.vmem %s291, 16
      %v1197 = vld [vmem:[%s1196] sm:$0xff]
      %v1198 = vld [vmem:[%s1196 + $0x10] sm:$0xff]
      %v1199 = vld [vmem:[%s1196 + $0x20] sm:$0xff]
      %v1200 = vld [vmem:[%s1196 + $0x30] sm:$0xff]
      %v1201 = vld [vmem:[%s1196 + $0x40] sm:$0xff]
      %v1202 = vld [vmem:[%s1196 + $0x50] sm:$0xff]
      %v1203 = vld [vmem:[%s1196 + $0x60] sm:$0xff]
      %v1204 = vld [vmem:[%s1196 + $0x70] sm:$0xff]
      %v1205 = vpack.c.bf16 %v1198, %v1197
      %v1206 = vpack.c.bf16 %v1200, %v1199
      %v1207 = vpack.c.bf16 %v1202, %v1201
      %v1208 = vpack.c.bf16 %v1204, %v1203
      %s1209 = scalar_lea.vmem %s4, 384
      %v1210 = vld [vmem:[%s1209] sm:$0xf]
      %v1211 = vld [vmem:[%s1209 + $0x4] sm:$0xf]
      %v1212 = vld [vmem:[%s1209 + $0x8] sm:$0xf]
      %v1213 = vld [vmem:[%s1209 + $0xc] sm:$0xf]
      %v1214 = vld [vmem:[%s1209 + $0x10] sm:$0xf]
      %v1215 = vld [vmem:[%s1209 + $0x14] sm:$0xf]
      %v1216 = vld [vmem:[%s1209 + $0x18] sm:$0xf]
      %v1217 = vld [vmem:[%s1209 + $0x1c] sm:$0xf]
      %v1218 = vld [vmem:[%s1209 + $0x20] sm:$0xf]
      %v1219 = vld [vmem:[%s1209 + $0x24] sm:$0xf]
      %v1220 = vld [vmem:[%s1209 + $0x28] sm:$0xf]
      %v1221 = vld [vmem:[%s1209 + $0x2c] sm:$0xf]
      %v1222 = vld [vmem:[%s1209 + $0x30] sm:$0xf]
      %v1223 = vld [vmem:[%s1209 + $0x34] sm:$0xf]
      %v1224 = vld [vmem:[%s1209 + $0x38] sm:$0xf]
      %v1225 = vld [vmem:[%s1209 + $0x3c] sm:$0xf]
      %v1242 = vunpack.c.l.b16 %v1210
      %v1243 = vunpack.c.l.b16 %v1211
      %v1244 = vunpack.c.l.b16 %v1212
      %v1245 = vunpack.c.l.b16 %v1213
      %v1246 = vunpack.c.l.b16 %v1214
      %v1247 = vunpack.c.l.b16 %v1215
      %v1248 = vunpack.c.l.b16 %v1216
      %v1249 = vunpack.c.l.b16 %v1217
      %v1250 = vunpack.c.l.b16 %v1218
      %v1251 = vunpack.c.l.b16 %v1219
      %v1252 = vunpack.c.l.b16 %v1220
      %v1253 = vunpack.c.l.b16 %v1221
      %v1254 = vunpack.c.l.b16 %v1222
      %v1255 = vunpack.c.l.b16 %v1223
      %v1256 = vunpack.c.l.b16 %v1224
      %v1257 = vunpack.c.l.b16 %v1225
      %v1258 = vpack.c.b16 %v1243, %v1242
      %v1259 = vpack.c.b16 %v1245, %v1244
      %v1260 = vpack.c.b16 %v1247, %v1246
      %v1261 = vpack.c.b16 %v1249, %v1248
      %v1262 = vpack.c.b16 %v1251, %v1250
      %v1263 = vpack.c.b16 %v1253, %v1252
      %v1264 = vpack.c.b16 %v1255, %v1254
      %v1265 = vpack.c.b16 %v1257, %v1256
      %1274 = vmatprep.subr.bf16.mxu0 0
      %1275 = vmatpush1.bf16.msra.mxu0 %v1258
      %1276 = vmatprep.subr.bf16.mxu0 0
      %1277 = vmatpush1.bf16.msra.mxu0 %v1259
      %1278 = vmatprep.subr.bf16.mxu0 0
      %1279 = vmatpush1.bf16.msra.mxu0 %v1260
      %1280 = vmatprep.subr.bf16.mxu0 0
      %1281 = vmatpush1.bf16.msra.mxu0 %v1261
      %1282 = vmatprep.subr.bf16.mxu0 0
      %1283 = vmatpush1.bf16.msra.mxu0 %v1262
      %1284 = vmatprep.subr.bf16.mxu0 0
      %1285 = vmatpush1.bf16.msra.mxu0 %v1263
      %1286 = vmatprep.subr.bf16.mxu0 0
      %1287 = vmatpush1.bf16.msra.mxu0 %v1264
      %1288 = vmatprep.subr.bf16.mxu0 0
      %1289 = vmatpush1.bf16.msra.mxu0 %v1265
      %1290 = vmatprep.subr.bf16.mxu0 0
      %1291 = vmatpush1.bf16.msra.mxu0 0
      %1292 = vmatprep.subr.bf16.mxu0 0
      %1293 = vmatpush1.bf16.msra.mxu0 0
      %1294 = vmatprep.subr.bf16.mxu0 0
      %1295 = vmatpush1.bf16.msra.mxu0 0
      %1296 = vmatprep.subr.bf16.mxu0 0
      %1297 = vmatpush1.bf16.msra.mxu0 0
      %1298 = vmatprep.subr.bf16.mxu0 0
      %1299 = vmatpush1.bf16.msra.mxu0 0
      %1300 = vmatprep.subr.bf16.mxu0 0
      %1301 = vmatpush1.bf16.msra.mxu0 0
      %1302 = vmatprep.subr.bf16.mxu0 0
      %1303 = vmatpush1.bf16.msra.mxu0 0
      %1304 = vmatprep.subr.bf16.mxu0 0
      %1305 = vmatpush1.bf16.msra.mxu0 0
      %1306 = vmatprep.mubr.bf16.mxu0 0
      %1307 = vmatmul.mubr.bf16.gmra.mrb[0].mxu0 %v1205
      %v1308 = vpop.f32.mrb[0].mxu0
      %v1309 = vadd.f32 0.0, %v1308
      %v1310 = vpop.f32.mrb[0].mxu0
      %v1311 = vpop.f32.mrb[0].mxu0
      %v1312 = vadd.f32 0.0, %v1311
      %v1313 = vpop.f32.mrb[0].mxu0
      %1314 = vmatprep.mubr.bf16.mxu0 0
      %1315 = vmatmul.mubr.bf16.gmra.mrb[0].mxu0 %v1206
      %v1316 = vpop.f32.mrb[0].mxu0
      %v1317 = vadd.f32 0.0, %v1316
      %v1318 = vpop.f32.mrb[0].mxu0
      %v1319 = vpop.f32.mrb[0].mxu0
      %v1320 = vadd.f32 0.0, %v1319
      %v1321 = vpop.f32.mrb[0].mxu0
      %1322 = vmatprep.mubr.bf16.mxu0 0
      %1323 = vmatmul.mubr.bf16.gmra.mrb[0].mxu0 %v1207
      %v1324 = vpop.f32.mrb[0].mxu0
      %v1325 = vadd.f32 0.0, %v1324
      %v1326 = vpop.f32.mrb[0].mxu0
      %v1327 = vpop.f32.mrb[0].mxu0
      %v1328 = vadd.f32 0.0, %v1327
      %v1329 = vpop.f32.mrb[0].mxu0
      %1330 = vmatprep.mubr.bf16.mxu0 0
      %1331 = vmatmul.mubr.bf16.gmra.mrb[0].mxu0 %v1208
      %v1332 = vpop.f32.mrb[0].mxu0
      %v1333 = vadd.f32 0.0, %v1332
      %v1334 = vpop.f32.mrb[0].mxu0
      %v1335 = vpop.f32.mrb[0].mxu0
      %v1336 = vadd.f32 0.0, %v1335
      %v1337 = vpop.f32.mrb[0].mxu0
      %1338 = vdwg.mxu0
      %v1339 = vadd.f32 %v1188, %v1309
      %v1340 = vadd.f32 %v1189, %v1312
      %v1341 = vadd.f32 %v1190, %v1317
      %v1342 = vadd.f32 %v1191, %v1320
      %v1343 = vadd.f32 %v1192, %v1325
      %v1344 = vadd.f32 %v1193, %v1328
      %v1345 = vadd.f32 %v1194, %v1333
      %v1346 = vadd.f32 %v1195, %v1336
      %s1347 = scalar_lea.vmem %s296, 16
      %v1348 = vld [vmem:[%s1347] sm:$0xff]
      %v1349 = vld [vmem:[%s1347 + $0x10] sm:$0xff]
      %v1350 = vld [vmem:[%s1347 + $0x20] sm:$0xff]
      %v1351 = vld [vmem:[%s1347 + $0x30] sm:$0xff]
      %v1352 = vld [vmem:[%s1347 + $0x40] sm:$0xff]
      %v1353 = vld [vmem:[%s1347 + $0x50] sm:$0xff]
      %v1354 = vld [vmem:[%s1347 + $0x60] sm:$0xff]
      %v1355 = vld [vmem:[%s1347 + $0x70] sm:$0xff]
      %v1356 = vpack.c.bf16 %v1349, %v1348
      %v1357 = vpack.c.bf16 %v1351, %v1350
      %v1358 = vpack.c.bf16 %v1353, %v1352
      %v1359 = vpack.c.bf16 %v1355, %v1354
      %s1360 = scalar_lea.vmem %s4, 448
      %v1361 = vld [vmem:[%s1360] sm:$0xf]
      %v1362 = vld [vmem:[%s1360 + $0x4] sm:$0xf]
      %v1363 = vld [vmem:[%s1360 + $0x8] sm:$0xf]
      %v1364 = vld [vmem:[%s1360 + $0xc] sm:$0xf]
      %v1365 = vld [vmem:[%s1360 + $0x10] sm:$0xf]
      %v1366 = vld [vmem:[%s1360 + $0x14] sm:$0xf]
      %v1367 = vld [vmem:[%s1360 + $0x18] sm:$0xf]
      %v1368 = vld [vmem:[%s1360 + $0x1c] sm:$0xf]
      %v1369 = vld [vmem:[%s1360 + $0x20] sm:$0xf]
      %v1370 = vld [vmem:[%s1360 + $0x24] sm:$0xf]
      %v1371 = vld [vmem:[%s1360 + $0x28] sm:$0xf]
      %v1372 = vld [vmem:[%s1360 + $0x2c] sm:$0xf]
      %v1373 = vld [vmem:[%s1360 + $0x30] sm:$0xf]
      %v1374 = vld [vmem:[%s1360 + $0x34] sm:$0xf]
      %v1375 = vld [vmem:[%s1360 + $0x38] sm:$0xf]
      %v1376 = vld [vmem:[%s1360 + $0x3c] sm:$0xf]
      %v1393 = vunpack.c.l.b16 %v1361
      %v1394 = vunpack.c.l.b16 %v1362
      %v1395 = vunpack.c.l.b16 %v1363
      %v1396 = vunpack.c.l.b16 %v1364
      %v1397 = vunpack.c.l.b16 %v1365
      %v1398 = vunpack.c.l.b16 %v1366
      %v1399 = vunpack.c.l.b16 %v1367
      %v1400 = vunpack.c.l.b16 %v1368
      %v1401 = vunpack.c.l.b16 %v1369
      %v1402 = vunpack.c.l.b16 %v1370
      %v1403 = vunpack.c.l.b16 %v1371
      %v1404 = vunpack.c.l.b16 %v1372
      %v1405 = vunpack.c.l.b16 %v1373
      %v1406 = vunpack.c.l.b16 %v1374
      %v1407 = vunpack.c.l.b16 %v1375
      %v1408 = vunpack.c.l.b16 %v1376
      %v1409 = vpack.c.b16 %v1394, %v1393
      %v1410 = vpack.c.b16 %v1396, %v1395
      %v1411 = vpack.c.b16 %v1398, %v1397
      %v1412 = vpack.c.b16 %v1400, %v1399
      %v1413 = vpack.c.b16 %v1402, %v1401
      %v1414 = vpack.c.b16 %v1404, %v1403
      %v1415 = vpack.c.b16 %v1406, %v1405
      %v1416 = vpack.c.b16 %v1408, %v1407
      %1425 = vmatprep.subr.bf16.mxu0 0
      %1426 = vmatpush1.bf16.msra.mxu0 %v1409
      %1427 = vmatprep.subr.bf16.mxu0 0
      %1428 = vmatpush1.bf16.msra.mxu0 %v1410
      %1429 = vmatprep.subr.bf16.mxu0 0
      %1430 = vmatpush1.bf16.msra.mxu0 %v1411
      %1431 = vmatprep.subr.bf16.mxu0 0
      %1432 = vmatpush1.bf16.msra.mxu0 %v1412
      %1433 = vmatprep.subr.bf16.mxu0 0
      %1434 = vmatpush1.bf16.msra.mxu0 %v1413
      %1435 = vmatprep.subr.bf16.mxu0 0
      %1436 = vmatpush1.bf16.msra.mxu0 %v1414
      %1437 = vmatprep.subr.bf16.mxu0 0
      %1438 = vmatpush1.bf16.msra.mxu0 %v1415
      %1439 = vmatprep.subr.bf16.mxu0 0
      %1440 = vmatpush1.bf16.msra.mxu0 %v1416
      %1441 = vmatprep.subr.bf16.mxu0 0
      %1442 = vmatpush1.bf16.msra.mxu0 0
      %1443 = vmatprep.subr.bf16.mxu0 0
      %1444 = vmatpush1.bf16.msra.mxu0 0
      %1445 = vmatprep.subr.bf16.mxu0 0
      %1446 = vmatpush1.bf16.msra.mxu0 0
      %1447 = vmatprep.subr.bf16.mxu0 0
      %1448 = vmatpush1.bf16.msra.mxu0 0
      %1449 = vmatprep.subr.bf16.mxu0 0
      %1450 = vmatpush1.bf16.msra.mxu0 0
      %1451 = vmatprep.subr.bf16.mxu0 0
      %1452 = vmatpush1.bf16.msra.mxu0 0
      %1453 = vmatprep.subr.bf16.mxu0 0
      %1454 = vmatpush1.bf16.msra.mxu0 0
      %1455 = vmatprep.subr.bf16.mxu0 0
      %1456 = vmatpush1.bf16.msra.mxu0 0
      %1457 = vmatprep.mubr.bf16.mxu0 0
      %1458 = vmatmul.mubr.bf16.gmra.mrb[0].mxu0 %v1356
      %v1459 = vpop.f32.mrb[0].mxu0
      %v1460 = vadd.f32 0.0, %v1459
      %v1461 = vpop.f32.mrb[0].mxu0
      %v1462 = vpop.f32.mrb[0].mxu0
      %v1463 = vadd.f32 0.0, %v1462
      %v1464 = vpop.f32.mrb[0].mxu0
      %1465 = vmatprep.mubr.bf16.mxu0 0
      %1466 = vmatmul.mubr.bf16.gmra.mrb[0].mxu0 %v1357
      %v1467 = vpop.f32.mrb[0].mxu0
      %v1468 = vadd.f32 0.0, %v1467
      %v1469 = vpop.f32.mrb[0].mxu0
      %v1470 = vpop.f32.mrb[0].mxu0
      %v1471 = vadd.f32 0.0, %v1470
      %v1472 = vpop.f32.mrb[0].mxu0
      %1473 = vmatprep.mubr.bf16.mxu0 0
      %1474 = vmatmul.mubr.bf16.gmra.mrb[0].mxu0 %v1358
      %v1475 = vpop.f32.mrb[0].mxu0
      %v1476 = vadd.f32 0.0, %v1475
      %v1477 = vpop.f32.mrb[0].mxu0
      %v1478 = vpop.f32.mrb[0].mxu0
      %v1479 = vadd.f32 0.0, %v1478
      %v1480 = vpop.f32.mrb[0].mxu0
      %1481 = vmatprep.mubr.bf16.mxu0 0
      %1482 = vmatmul.mubr.bf16.gmra.mrb[0].mxu0 %v1359
      %v1483 = vpop.f32.mrb[0].mxu0
      %v1484 = vadd.f32 0.0, %v1483
      %v1485 = vpop.f32.mrb[0].mxu0
      %v1486 = vpop.f32.mrb[0].mxu0
      %v1487 = vadd.f32 0.0, %v1486
      %v1488 = vpop.f32.mrb[0].mxu0
      %1489 = vdwg.mxu0
      %v1490 = vadd.f32 %v1339, %v1460
      %v1491 = vadd.f32 %v1340, %v1463
      %v1492 = vadd.f32 %v1341, %v1468
      %v1493 = vadd.f32 %v1342, %v1471
      %v1494 = vadd.f32 %v1343, %v1476
      %v1495 = vadd.f32 %v1344, %v1479
      %v1496 = vadd.f32 %v1345, %v1484
      %v1497 = vadd.f32 %v1346, %v1487
      %v1498 = vld [vmem:[%s1196 + $0x1] sm:$0xff]
      %v1499 = vld [vmem:[%s1196 + $0x11] sm:$0xff]
      %v1500 = vld [vmem:[%s1196 + $0x21] sm:$0xff]
      %v1501 = vld [vmem:[%s1196 + $0x31] sm:$0xff]
      %v1502 = vld [vmem:[%s1196 + $0x41] sm:$0xff]
      %v1503 = vld [vmem:[%s1196 + $0x51] sm:$0xff]
      %v1504 = vld [vmem:[%s1196 + $0x61] sm:$0xff]
      %v1505 = vld [vmem:[%s1196 + $0x71] sm:$0xff]
      %v1506 = vpack.c.bf16 %v1499, %v1498
      %v1507 = vpack.c.bf16 %v1501, %v1500
      %v1508 = vpack.c.bf16 %v1503, %v1502
      %v1509 = vpack.c.bf16 %v1505, %v1504
      %s1510 = scalar_lea.vmem %s4, 512
      %v1511 = vld [vmem:[%s1510] sm:$0xf]
      %v1512 = vld [vmem:[%s1510 + $0x4] sm:$0xf]
      %v1513 = vld [vmem:[%s1510 + $0x8] sm:$0xf]
      %v1514 = vld [vmem:[%s1510 + $0xc] sm:$0xf]
      %v1515 = vld [vmem:[%s1510 + $0x10] sm:$0xf]
      %v1516 = vld [vmem:[%s1510 + $0x14] sm:$0xf]
      %v1517 = vld [vmem:[%s1510 + $0x18] sm:$0xf]
      %v1518 = vld [vmem:[%s1510 + $0x1c] sm:$0xf]
      %v1519 = vld [vmem:[%s1510 + $0x20] sm:$0xf]
      %v1520 = vld [vmem:[%s1510 + $0x24] sm:$0xf]
      %v1521 = vld [vmem:[%s1510 + $0x28] sm:$0xf]
      %v1522 = vld [vmem:[%s1510 + $0x2c] sm:$0xf]
      %v1523 = vld [vmem:[%s1510 + $0x30] sm:$0xf]
      %v1524 = vld [vmem:[%s1510 + $0x34] sm:$0xf]
      %v1525 = vld [vmem:[%s1510 + $0x38] sm:$0xf]
      %v1526 = vld [vmem:[%s1510 + $0x3c] sm:$0xf]
      %v1543 = vunpack.c.l.b16 %v1511
      %v1544 = vunpack.c.l.b16 %v1512
      %v1545 = vunpack.c.l.b16 %v1513
      %v1546 = vunpack.c.l.b16 %v1514
      %v1547 = vunpack.c.l.b16 %v1515
      %v1548 = vunpack.c.l.b16 %v1516
      %v1549 = vunpack.c.l.b16 %v1517
      %v1550 = vunpack.c.l.b16 %v1518
      %v1551 = vunpack.c.l.b16 %v1519
      %v1552 = vunpack.c.l.b16 %v1520
      %v1553 = vunpack.c.l.b16 %v1521
      %v1554 = vunpack.c.l.b16 %v1522
      %v1555 = vunpack.c.l.b16 %v1523
      %v1556 = vunpack.c.l.b16 %v1524
      %v1557 = vunpack.c.l.b16 %v1525
      %v1558 = vunpack.c.l.b16 %v1526
      %v1559 = vpack.c.b16 %v1544, %v1543
      %v1560 = vpack.c.b16 %v1546, %v1545
      %v1561 = vpack.c.b16 %v1548, %v1547
      %v1562 = vpack.c.b16 %v1550, %v1549
      %v1563 = vpack.c.b16 %v1552, %v1551
      %v1564 = vpack.c.b16 %v1554, %v1553
      %v1565 = vpack.c.b16 %v1556, %v1555
      %v1566 = vpack.c.b16 %v1558, %v1557
      %1575 = vmatprep.subr.bf16.mxu0 0
      %1576 = vmatpush1.bf16.msra.mxu0 %v1559
      %1577 = vmatprep.subr.bf16.mxu0 0
      %1578 = vmatpush1.bf16.msra.mxu0 %v1560
      %1579 = vmatprep.subr.bf16.mxu0 0
      %1580 = vmatpush1.bf16.msra.mxu0 %v1561
      %1581 = vmatprep.subr.bf16.mxu0 0
      %1582 = vmatpush1.bf16.msra.mxu0 %v1562
      %1583 = vmatprep.subr.bf16.mxu0 0
      %1584 = vmatpush1.bf16.msra.mxu0 %v1563
      %1585 = vmatprep.subr.bf16.mxu0 0
      %1586 = vmatpush1.bf16.msra.mxu0 %v1564
      %1587 = vmatprep.subr.bf16.mxu0 0
      %1588 = vmatpush1.bf16.msra.mxu0 %v1565
      %1589 = vmatprep.subr.bf16.mxu0 0
      %1590 = vmatpush1.bf16.msra.mxu0 %v1566
      %1591 = vmatprep.subr.bf16.mxu0 0
      %1592 = vmatpush1.bf16.msra.mxu0 0
      %1593 = vmatprep.subr.bf16.mxu0 0
      %1594 = vmatpush1.bf16.msra.mxu0 0
      %1595 = vmatprep.subr.bf16.mxu0 0
      %1596 = vmatpush1.bf16.msra.mxu0 0
      %1597 = vmatprep.subr.bf16.mxu0 0
      %1598 = vmatpush1.bf16.msra.mxu0 0
      %1599 = vmatprep.subr.bf16.mxu0 0
      %1600 = vmatpush1.bf16.msra.mxu0 0
      %1601 = vmatprep.subr.bf16.mxu0 0
      %1602 = vmatpush1.bf16.msra.mxu0 0
      %1603 = vmatprep.subr.bf16.mxu0 0
      %1604 = vmatpush1.bf16.msra.mxu0 0
      %1605 = vmatprep.subr.bf16.mxu0 0
      %1606 = vmatpush1.bf16.msra.mxu0 0
      %1607 = vmatprep.mubr.bf16.mxu0 0
      %1608 = vmatmul.mubr.bf16.gmra.mrb[0].mxu0 %v1506
      %v1609 = vpop.f32.mrb[0].mxu0
      %v1610 = vadd.f32 0.0, %v1609
      %v1611 = vpop.f32.mrb[0].mxu0
      %v1612 = vpop.f32.mrb[0].mxu0
      %v1613 = vadd.f32 0.0, %v1612
      %v1614 = vpop.f32.mrb[0].mxu0
      %1615 = vmatprep.mubr.bf16.mxu0 0
      %1616 = vmatmul.mubr.bf16.gmra.mrb[0].mxu0 %v1507
      %v1617 = vpop.f32.mrb[0].mxu0
      %v1618 = vadd.f32 0.0, %v1617
      %v1619 = vpop.f32.mrb[0].mxu0
      %v1620 = vpop.f32.mrb[0].mxu0
      %v1621 = vadd.f32 0.0, %v1620
      %v1622 = vpop.f32.mrb[0].mxu0
      %1623 = vmatprep.mubr.bf16.mxu0 0
      %1624 = vmatmul.mubr.bf16.gmra.mrb[0].mxu0 %v1508
      %v1625 = vpop.f32.mrb[0].mxu0
      %v1626 = vadd.f32 0.0, %v1625
      %v1627 = vpop.f32.mrb[0].mxu0
      %v1628 = vpop.f32.mrb[0].mxu0
      %v1629 = vadd.f32 0.0, %v1628
      %v1630 = vpop.f32.mrb[0].mxu0
      %1631 = vmatprep.mubr.bf16.mxu0 0
      %1632 = vmatmul.mubr.bf16.gmra.mrb[0].mxu0 %v1509
      %v1633 = vpop.f32.mrb[0].mxu0
      %v1634 = vadd.f32 0.0, %v1633
      %v1635 = vpop.f32.mrb[0].mxu0
      %v1636 = vpop.f32.mrb[0].mxu0
      %v1637 = vadd.f32 0.0, %v1636
      %v1638 = vpop.f32.mrb[0].mxu0
      %1639 = vdwg.mxu0
      %v1640 = vadd.f32 %v1490, %v1610
      %v1641 = vadd.f32 %v1491, %v1613
      %v1642 = vadd.f32 %v1492, %v1618
      %v1643 = vadd.f32 %v1493, %v1621
      %v1644 = vadd.f32 %v1494, %v1626
      %v1645 = vadd.f32 %v1495, %v1629
      %v1646 = vadd.f32 %v1496, %v1634
      %v1647 = vadd.f32 %v1497, %v1637
      %v1648 = vld [vmem:[%s5] sm:$0x1]
      %v1650 = vlaneseq
      %v1651 = vshrl.u32 %v1650, 7
      %v1652 = vsub.s32 0, %v1651
      %v1653 = vrot.slane %v1648, %v1652
      %v1655 = vadd.f32 %v1640, %v1653
      %v1656 = vadd.f32 %v1641, %v1653
      %v1657 = vadd.f32 %v1642, %v1653
      %v1658 = vadd.f32 %v1643, %v1653
      %v1659 = vadd.f32 %v1644, %v1653
      %v1660 = vadd.f32 %v1645, %v1653
      %v1661 = vadd.f32 %v1646, %v1653
      %v1662 = vadd.f32 %v1647, %v1653
      %1663 = vst [vmem:[%s311] sm:$0xff] %v1655
      %1664 = vst [vmem:[%s311 + $0x8] sm:$0xff] %v1656
      %1665 = vst [vmem:[%s311 + $0x10] sm:$0xff] %v1657
      %1666 = vst [vmem:[%s311 + $0x18] sm:$0xff] %v1658
      %1667 = vst [vmem:[%s311 + $0x20] sm:$0xff] %v1659
      %1668 = vst [vmem:[%s311 + $0x28] sm:$0xff] %v1660
      %1669 = vst [vmem:[%s311 + $0x30] sm:$0xff] %v1661
      %1670 = vst [vmem:[%s311 + $0x38] sm:$0xff] %v1662
      %p1671 = scmp.lt.s32.totalorder %s17, 1
      %s1672 = scalar_select %p1671, %s17, 1
      %s1673 = smul.addr %s1672, 8
      %s1674 = smul.addr %s1673, 8
      %s1675 = scalar_lea.vmem %s6, %s1674
      // Predicated region
      $region45: #{_lambda_.12} parent=43 // pred_check
        %p1676 = pneg %p181
      $region46: #{_lambda_.12} parent=43 // pred_check_branch
        %1678 = sbr.rel (%p1676) target = $region48
      $region47: #{_lambda_.12} parent=43 // pred_region
        _
      $region48: #{_lambda_.12} parent=43 // pred_fallthru
        _
    $region44: #{_lambda_.12} parent=5 // pred_fallthru
      _
    %p1679 = scmp.le.s32.totalorder 2, %s12
    // Predicated region
    $region49: #{_lambda_.12} parent=5 // pred_check
      %p1680 = pneg %p1679
    $region50: #{_lambda_.12} parent=5 // pred_check_branch
      %1682 = sbr.rel (%p1680) target = $region52
    $region51: #{_lambda_.12} parent=5 // pred_region
      %s1683 = ssub.s32 %s12, 2
      // Predicated region
      $region53: #{_lambda_.12} parent=51 // pred_check
        %p1684 = pneg %p187
      $region54: #{_lambda_.12} parent=51 // pred_check_branch
        %1686 = sbr.rel (%p1684) target = $region56
      $region55: #{_lambda_.12} parent=51 // pred_region
        %p1687 = scmp.lt.s32.totalorder %s18, 1
        %s1688 = scalar_select %p1687, %s18, 1
        %s1689 = smul.addr %s1688, 8
        %s1690 = smul.addr %s1689, 8
        %s1691 = scalar_lea.vmem %s6, %s1690
      $region56: #{_lambda_.12} parent=51 // pred_fallthru
        _
    $region52: #{_lambda_.12} parent=5 // pred_fallthru
      _
  $region6: #{_lambda_.12} parent=0 // loop_footer
    %s16 = sadd.s32 1, %s12
  $region7: #{_lambda_.12} parent=0 // loop_footer_branch
    %11 = sbr.rel target = $region3
  $region8: #{_lambda_.12} parent=0 // loop_exit
    _

// kernel: _lambda_.15
$region0: #{_lambda_.15}
  #allocation0 [shape = 'u32[]', space=smem, size = 0x4, offset = 0x4, fixed_abs, tag = 'smem constant byte address 0x4 - core index']
  #allocation1 [shape = 'u32[144,128]{1,0:T(1,128)}', space=vmem, size = 0x12000, scoped, tag = 'internal scratch']
  #allocation2 [shape = 'f32[1,10,10,128]{3,2,1,0:T(8,128)}', space=vmem, size = 0x14000, scoped, tag = 'scratch operand']
  %s0 = inlined_call_operand.vmem [shape: f32[2,8,8,128], index: 0, kind: input, shape index: {}]
  %s1 = inlined_call_operand.vmem [shape: f32[1,128], index: 1, kind: input, shape index: {}]
  %s2 = inlined_call_operand.vmem [shape: f32[1,128], index: 2, kind: input, shape index: {}]
  %s3 = inlined_call_operand.vmem [shape: bf16[9,128,128], index: 3, kind: input, shape index: {}]
  %s4 = inlined_call_operand.vmem [shape: f32[1,128], index: 4, kind: input, shape index: {}]
  %s5 = inlined_call_operand.vmem [shape: f32[2,8,8,128], index: 5, kind: input, shape index: {}]
  %s6 = inlined_call_operand.vmem [shape: f32[2,8,8,128], index: 6, kind: output, shape index: {}]
  %s7 = sld [smem:[#allocation0]]
  $region57: #{_lambda_.15} parent=0
    _
  %s9 = ssub.s32 1, %s7
  %s10 = scalar_select 0, %s9, %s7
  loop: start=0, step=1, limit=4
  $region2: #{_lambda_.15} parent=0 // loop_pre_header
    _
  $region3: #{_lambda_.15} parent=0 // loop_header
    %s12 = sphi 0, %s16
    %p13 = scmp.ge.s32.totalorder %s12, 4
    %s22 = sphi 0, %s24
    %s25 = sphi 0, %s22
    %s26 = sphi 0, %s25
    %s42 = sphi 0, %s26
    %s46 = sphi 0, %s46
    %s48 = sphi 0, %s46
    %s49 = sphi 0, %s48
    %s63 = sphi 0, %s49
    %s67 = sphi 0, %s67
    %s69 = sphi 0, %s67
    %s70 = sphi 0, %s69
    %s84 = sphi 0, %s70
    %s88 = sphi 0, %s88
    %s90 = sphi 0, %s88
    %s91 = sphi 0, %s90
    %s105 = sphi 0, %s91
    %s109 = sphi 0, %s109
    %s111 = sphi 0, %s109
    %s112 = sphi 0, %s111
    %s126 = sphi 0, %s112
    %s132 = sphi 0, %s134
    %s135 = sphi 0, %s132
    %s136 = sphi 0, %s135
    %s152 = sphi 0, %s136
    %s158 = sphi 0, %s160
    %s161 = sphi 0, %s158
    %s162 = sphi 0, %s161
    %s178 = sphi 0, %s162
  $region4: #{_lambda_.15} parent=0 // loop_header_branch
    %15 = sbr.rel (%p13) target = $region8
  $region5: #{_lambda_.15} parent=0 // loop_body
    %s17 = ssub.s32 %s12, 1
    %s18 = ssub.s32 %s12, 2
    %s19 = sadd.s32 %s12, 1
    %s20 = ssub.s32 %s12, %s19
    %p21 = scmp.eq.s32.totalorder %s20, 0
    %s23 = sadd.s32 %s22, 1
    %s24 = scalar_select %p21, %s22, %s23
    %p27 = pneg %p21
    %p28 = scmp.eq.s32.totalorder %s12, 1
    %p29 = por %p27, %p28
    %p30 = scmp.ne.s32.totalorder %s22, %s25
    %p31 = scmp.eq.s32.totalorder %s12, 0
    %p32 = por %p30, %p31
    %p33 = scmp.ne.s32.totalorder %s22, %s25
    %p34 = scmp.eq.s32.totalorder %s17, 1
    %p35 = por %p33, %p34
    %p36 = scmp.ne.s32.totalorder %s25, %s26
    %p37 = scmp.eq.s32.totalorder %s17, 0
    %p38 = por %p36, %p37
    %p39 = scmp.ne.s32.totalorder %s25, %s26
    %p40 = scmp.eq.s32.totalorder %s18, 1
    %p41 = por %p39, %p40
    %p43 = scmp.ne.s32.totalorder %s26, %s42
    %p44 = scmp.eq.s32.totalorder %s18, 0
    %p45 = por %p43, %p44
    %s47 = sadd.s32 %s46, 1
    %p50 = scmp.eq.s32.totalorder %s12, 1
    %p51 = scmp.ne.s32.totalorder %s46, %s48
    %p52 = scmp.eq.s32.totalorder %s12, 0
    %p53 = por %p51, %p52
    %p54 = scmp.ne.s32.totalorder %s46, %s48
    %p55 = scmp.eq.s32.totalorder %s17, 1
    %p56 = por %p54, %p55
    %p57 = scmp.ne.s32.totalorder %s48, %s49
    %p58 = scmp.eq.s32.totalorder %s17, 0
    %p59 = por %p57, %p58
    %p60 = scmp.ne.s32.totalorder %s48, %s49
    %p61 = scmp.eq.s32.totalorder %s18, 1
    %p62 = por %p60, %p61
    %p64 = scmp.ne.s32.totalorder %s49, %s63
    %p65 = scmp.eq.s32.totalorder %s18, 0
    %p66 = por %p64, %p65
    %s68 = sadd.s32 %s67, 1
    %p71 = scmp.eq.s32.totalorder %s12, 1
    %p72 = scmp.ne.s32.totalorder %s67, %s69
    %p73 = scmp.eq.s32.totalorder %s12, 0
    %p74 = por %p72, %p73
    %p75 = scmp.ne.s32.totalorder %s67, %s69
    %p76 = scmp.eq.s32.totalorder %s17, 1
    %p77 = por %p75, %p76
    %p78 = scmp.ne.s32.totalorder %s69, %s70
    %p79 = scmp.eq.s32.totalorder %s17, 0
    %p80 = por %p78, %p79
    %p81 = scmp.ne.s32.totalorder %s69, %s70
    %p82 = scmp.eq.s32.totalorder %s18, 1
    %p83 = por %p81, %p82
    %p85 = scmp.ne.s32.totalorder %s70, %s84
    %p86 = scmp.eq.s32.totalorder %s18, 0
    %p87 = por %p85, %p86
    %s89 = sadd.s32 %s88, 1
    %p92 = scmp.eq.s32.totalorder %s12, 1
    %p93 = scmp.ne.s32.totalorder %s88, %s90
    %p94 = scmp.eq.s32.totalorder %s12, 0
    %p95 = por %p93, %p94
    %p96 = scmp.ne.s32.totalorder %s88, %s90
    %p97 = scmp.eq.s32.totalorder %s17, 1
    %p98 = por %p96, %p97
    %p99 = scmp.ne.s32.totalorder %s90, %s91
    %p100 = scmp.eq.s32.totalorder %s17, 0
    %p101 = por %p99, %p100
    %p102 = scmp.ne.s32.totalorder %s90, %s91
    %p103 = scmp.eq.s32.totalorder %s18, 1
    %p104 = por %p102, %p103
    %p106 = scmp.ne.s32.totalorder %s91, %s105
    %p107 = scmp.eq.s32.totalorder %s18, 0
    %p108 = por %p106, %p107
    %s110 = sadd.s32 %s109, 1
    %p113 = scmp.eq.s32.totalorder %s12, 1
    %p114 = scmp.ne.s32.totalorder %s109, %s111
    %p115 = scmp.eq.s32.totalorder %s12, 0
    %p116 = por %p114, %p115
    %p117 = scmp.ne.s32.totalorder %s109, %s111
    %p118 = scmp.eq.s32.totalorder %s17, 1
    %p119 = por %p117, %p118
    %p120 = scmp.ne.s32.totalorder %s111, %s112
    %p121 = scmp.eq.s32.totalorder %s17, 0
    %p122 = por %p120, %p121
    %p123 = scmp.ne.s32.totalorder %s111, %s112
    %p124 = scmp.eq.s32.totalorder %s18, 1
    %p125 = por %p123, %p124
    %p127 = scmp.ne.s32.totalorder %s112, %s126
    %p128 = scmp.eq.s32.totalorder %s18, 0
    %p129 = por %p127, %p128
    %s130 = ssub.s32 %s12, %s19
    %p131 = scmp.eq.s32.totalorder %s130, 0
    %s133 = sadd.s32 %s132, 1
    %s134 = scalar_select %p131, %s132, %s133
    %p137 = pneg %p131
    %p138 = scmp.eq.s32.totalorder %s12, 1
    %p139 = por %p137, %p138
    %p140 = scmp.ne.s32.totalorder %s132, %s135
    %p141 = scmp.eq.s32.totalorder %s12, 0
    %p142 = por %p140, %p141
    %p143 = scmp.ne.s32.totalorder %s132, %s135
    %p144 = scmp.eq.s32.totalorder %s17, 1
    %p145 = por %p143, %p144
    %p146 = scmp.ne.s32.totalorder %s135, %s136
    %p147 = scmp.eq.s32.totalorder %s17, 0
    %p148 = por %p146, %p147
    %p149 = scmp.ne.s32.totalorder %s135, %s136
    %p150 = scmp.eq.s32.totalorder %s18, 1
    %p151 = por %p149, %p150
    %p153 = scmp.ne.s32.totalorder %s136, %s152
    %p154 = scmp.eq.s32.totalorder %s18, 0
    %p155 = por %p153, %p154
    %s156 = ssub.s32 %s12, %s19
    %p157 = scmp.eq.s32.totalorder %s156, 0
    %s159 = sadd.s32 %s158, 1
    %s160 = scalar_select %p157, %s158, %s159
    %p163 = pneg %p157
    %p164 = scmp.eq.s32.totalorder %s12, 1
    %p165 = por %p163, %p164
    %p166 = scmp.ne.s32.totalorder %s158, %s161
    %p167 = scmp.eq.s32.totalorder %s12, 0
    %p168 = por %p166, %p167
    %p169 = scmp.ne.s32.totalorder %s158, %s161
    %p170 = scmp.eq.s32.totalorder %s17, 1
    %p171 = por %p169, %p170
    %p172 = scmp.ne.s32.totalorder %s161, %s162
    %p173 = scmp.eq.s32.totalorder %s17, 0
    %p174 = por %p172, %p173
    %p175 = scmp.ne.s32.totalorder %s161, %s162
    %p176 = scmp.eq.s32.totalorder %s18, 1
    %p177 = por %p175, %p176
    %p179 = scmp.ne.s32.totalorder %s162, %s178
    %p180 = scmp.eq.s32.totalorder %s18, 0
    %p181 = por %p179, %p180
    %p182 = scmp.le.s32.totalorder 1, %s12
    %p183 = scmp.lt.s32.totalorder %s12, 3
    %p184 = pnand %p182, %p183
    %p185 = pneg %p184
    // Predicated region
    $region9: #{_lambda_.15} parent=5 // pred_check
      _
    $region10: #{_lambda_.15} parent=5 // pred_check_branch
      %187 = sbr.rel (%p184) target = $region12
    $region11: #{_lambda_.15} parent=5 // pred_region
      %s188 = ssub.s32 %s12, 1
      // Predicated region
      $region13: #{_lambda_.15} parent=11 // pred_check
        %p189 = pneg %p59
      $region14: #{_lambda_.15} parent=11 // pred_check_branch
        %191 = sbr.rel (%p189) target = $region16
      $region15: #{_lambda_.15} parent=11 // pred_region
        _
      $region16: #{_lambda_.15} parent=11 // pred_fallthru
        _
      // Predicated region
      $region17: #{_lambda_.15} parent=11 // pred_check
        %p192 = pneg %p80
      $region18: #{_lambda_.15} parent=11 // pred_check_branch
        %194 = sbr.rel (%p192) target = $region20
      $region19: #{_lambda_.15} parent=11 // pred_region
        _
      $region20: #{_lambda_.15} parent=11 // pred_fallthru
        _
      // Predicated region
      $region21: #{_lambda_.15} parent=11 // pred_check
        %p195 = pneg %p101
      $region22: #{_lambda_.15} parent=11 // pred_check_branch
        %197 = sbr.rel (%p195) target = $region24
      $region23: #{_lambda_.15} parent=11 // pred_region
        _
      $region24: #{_lambda_.15} parent=11 // pred_fallthru
        _
      // Predicated region
      $region25: #{_lambda_.15} parent=11 // pred_check
        %p198 = pneg %p122
      $region26: #{_lambda_.15} parent=11 // pred_check_branch
        %200 = sbr.rel (%p198) target = $region28
      $region27: #{_lambda_.15} parent=11 // pred_region
        _
      $region28: #{_lambda_.15} parent=11 // pred_fallthru
        _
    $region12: #{_lambda_.15} parent=5 // pred_fallthru
      _
    %p201 = scmp.lt.s32.totalorder %s12, 2
    // Predicated region
    $region29: #{_lambda_.15} parent=5 // pred_check
      %p202 = pneg %p201
    $region30: #{_lambda_.15} parent=5 // pred_check_branch
      %204 = sbr.rel (%p202) target = $region32
    $region31: #{_lambda_.15} parent=5 // pred_region
      // Predicated region
      $region33: #{_lambda_.15} parent=31 // pred_check
        %p205 = pneg %p32
      $region34: #{_lambda_.15} parent=31 // pred_check_branch
        %207 = sbr.rel (%p205) target = $region36
      $region35: #{_lambda_.15} parent=31 // pred_region
        %p208 = scmp.lt.s32.totalorder %s12, 1
        %s209 = scalar_select %p208, %s12, 1
        %s210 = smul.addr %s209, 8
        %s211 = smul.addr %s210, 8
        %s212 = scalar_lea.vmem %s0, %s211
      $region36: #{_lambda_.15} parent=31 // pred_fallthru
        _
      // Predicated region
      $region37: #{_lambda_.15} parent=31 // pred_check
        %p213 = pneg %p142
      $region38: #{_lambda_.15} parent=31 // pred_check_branch
        %215 = sbr.rel (%p213) target = $region40
      $region39: #{_lambda_.15} parent=31 // pred_region
        %p216 = scmp.lt.s32.totalorder %s12, 1
        %s217 = scalar_select %p216, %s12, 1
        %s218 = smul.addr %s217, 8
        %s219 = smul.addr %s218, 8
        %s220 = scalar_lea.vmem %s5, %s219
      $region40: #{_lambda_.15} parent=31 // pred_fallthru
        _
    $region32: #{_lambda_.15} parent=5 // pred_fallthru
      _
    %p221 = scmp.le.s32.totalorder 1, %s12
    %p222 = scmp.lt.s32.totalorder %s12, 3
    %p223 = pnand %p221, %p222
    %p224 = pneg %p223
    // Predicated region
    $region41: #{_lambda_.15} parent=5 // pred_check
      _
    $region42: #{_lambda_.15} parent=5 // pred_check_branch
      %226 = sbr.rel (%p223) target = $region44
    $region43: #{_lambda_.15} parent=5 // pred_region
      %s227 = ssub.s32 %s12, 1
      %p228 = scmp.lt.s32.totalorder %s17, 1
      %s229 = scalar_select %p228, %s17, 1
      %s230 = smul.addr %s229, 8
      %s231 = smul.addr %s230, 8
      %s232 = scalar_lea.vmem %s0, %s231
      %p233 = pneg %p38
      %p234 = pneg %p35
      %p235 = pneg %p59
      %p236 = pneg %p56
      %p237 = pneg %p80
      %p238 = pneg %p77
      %p239 = pneg %p101
      %p240 = pneg %p98
      %p241 = pneg %p122
      %p242 = pneg %p119
      %p243 = scmp.lt.s32.totalorder %s17, 1
      %s244 = scalar_select %p243, %s17, 1
      %s245 = smul.addr %s244, 8
      %s246 = smul.addr %s245, 8
      %s247 = scalar_lea.vmem %s5, %s246
      %p248 = pneg %p148
      %p249 = pneg %p145
      %p250 = pneg %p174
      %p251 = pneg %p171
      %p252 = scmp.lt.s32.totalorder %s17, 1
      %s253 = scalar_select %p252, %s17, 1
      %s254 = smul.addr %s253, 8
      %s255 = smul.addr %s254, 8
      %s256 = scalar_lea.vmem %s6, %s255
      %p257 = scmp.lt.s32.totalorder %s17, 1
      %s258 = scalar_select %p257, %s17, 1
      %s259 = smul.addr %s258, 8
      %s260 = smul.addr %s259, 8
      %s261 = scalar_lea.vmem %s0, %s260
      %p262 = scmp.lt.s32.totalorder %s17, 1
      %s263 = scalar_select %p262, %s17, 1
      %s264 = smul.addr %s263, 8
      %s265 = smul.addr %s264, 8
      %s266 = scalar_lea.vmem %s5, %s265
      %p267 = scmp.lt.s32.totalorder %s17, 1
      %s268 = scalar_select %p267, %s17, 1
      %s269 = smul.addr %s268, 8
      %s270 = smul.addr %s269, 8
      %s271 = scalar_lea.vmem %s6, %s270
      %v273 = vld [vmem:[%s261] sm:$0xff]
      %v274 = vld [vmem:[%s261 + $0x8] sm:$0xff]
      %v275 = vld [vmem:[%s261 + $0x10] sm:$0xff]
      %v276 = vld [vmem:[%s261 + $0x18] sm:$0xff]
      %v277 = vld [vmem:[%s261 + $0x20] sm:$0xff]
      %v278 = vld [vmem:[%s261 + $0x28] sm:$0xff]
      %v279 = vld [vmem:[%s261 + $0x30] sm:$0xff]
      %v280 = vld [vmem:[%s261 + $0x38] sm:$0xff]
      %v281 = vld [vmem:[%s1] sm:$0x1]
      %v283 = vlaneseq
      %v284 = vshrl.u32 %v283, 7
      %v285 = vsub.s32 0, %v284
      %v286 = vrot.slane %v281, %v285
      %v288 = vmul.f32 %v273, %v286
      %v289 = vmul.f32 %v274, %v286
      %v290 = vmul.f32 %v275, %v286
      %v291 = vmul.f32 %v276, %v286
      %v292 = vmul.f32 %v277, %v286
      %v293 = vmul.f32 %v278, %v286
      %v294 = vmul.f32 %v279, %v286
      %v295 = vmul.f32 %v280, %v286
      %v296 = vld [vmem:[%s2] sm:$0x1]
      %v298 = vlaneseq
      %v299 = vshrl.u32 %v298, 7
      %v300 = vsub.s32 0, %v299
      %v301 = vrot.slane %v296, %v300
      %v303 = vadd.f32 %v288, %v301
      %v304 = vadd.f32 %v289, %v301
      %v305 = vadd.f32 %v290, %v301
      %v306 = vadd.f32 %v291, %v301
      %v307 = vadd.f32 %v292, %v301
      %v308 = vadd.f32 %v293, %v301
      %v309 = vadd.f32 %v294, %v301
      %v310 = vadd.f32 %v295, %v301
      %v311 = vmax.f32 %v303, 0.0
      %v312 = vmax.f32 %v304, 0.0
      %v313 = vmax.f32 %v305, 0.0
      %v314 = vmax.f32 %v306, 0.0
      %v315 = vmax.f32 %v307, 0.0
      %v316 = vmax.f32 %v308, 0.0
      %v317 = vmax.f32 %v309, 0.0
      %v318 = vmax.f32 %v310, 0.0
      %319 = vst [vmem:[#allocation2] sm:$0xff] 0.0
      %320 = vst [vmem:[#allocation2 + $0x8] sm:$0x3] 0.0
      %321 = vst [vmem:[#allocation2 + $0x10] sm:$0xff] 0.0
      %322 = vst [vmem:[#allocation2 + $0x18] sm:$0x3] 0.0
      %323 = vst [vmem:[#allocation2 + $0x20] sm:$0xff] 0.0
      %324 = vst [vmem:[#allocation2 + $0x28] sm:$0x3] 0.0
      %325 = vst [vmem:[#allocation2 + $0x30] sm:$0xff] 0.0
      %326 = vst [vmem:[#allocation2 + $0x38] sm:$0x3] 0.0
      %327 = vst [vmem:[#allocation2 + $0x40] sm:$0xff] 0.0
      %328 = vst [vmem:[#allocation2 + $0x48] sm:$0x3] 0.0
      %329 = vst [vmem:[#allocation2 + $0x50] sm:$0xff] 0.0
      %330 = vst [vmem:[#allocation2 + $0x58] sm:$0x3] 0.0
      %331 = vst [vmem:[#allocation2 + $0x60] sm:$0xff] 0.0
      %332 = vst [vmem:[#allocation2 + $0x68] sm:$0x3] 0.0
      %333 = vst [vmem:[#allocation2 + $0x70] sm:$0xff] 0.0
      %334 = vst [vmem:[#allocation2 + $0x78] sm:$0x3] 0.0
      %335 = vst [vmem:[#allocation2 + $0x80] sm:$0xff] 0.0
      %336 = vst [vmem:[#allocation2 + $0x88] sm:$0x3] 0.0
      %337 = vst [vmem:[#allocation2 + $0x90] sm:$0xff] 0.0
      %338 = vst [vmem:[#allocation2 + $0x98] sm:$0x3] 0.0
      %s339 = scalar_lea.vmem [#allocation2], 16
      %340 = vst [vmem:[%s339 + $0x1] sm:$0xff] %v311
      %341 = vst [vmem:[%s339 + $0x11] sm:$0xff] %v312
      %342 = vst [vmem:[%s339 + $0x21] sm:$0xff] %v313
      %343 = vst [vmem:[%s339 + $0x31] sm:$0xff] %v314
      %344 = vst [vmem:[%s339 + $0x41] sm:$0xff] %v315
      %345 = vst [vmem:[%s339 + $0x51] sm:$0xff] %v316
      %346 = vst [vmem:[%s339 + $0x61] sm:$0xff] %v317
      %347 = vst [vmem:[%s339 + $0x71] sm:$0xff] %v318
      %v348 = vld [vmem:[#allocation2] sm:$0xff]
      %v349 = vld [vmem:[#allocation2 + $0x10] sm:$0xff]
      %v350 = vld [vmem:[#allocation2 + $0x20] sm:$0xff]
      %v351 = vld [vmem:[#allocation2 + $0x30] sm:$0xff]
      %v352 = vld [vmem:[#allocation2 + $0x40] sm:$0xff]
      %v353 = vld [vmem:[#allocation2 + $0x50] sm:$0xff]
      %v354 = vld [vmem:[#allocation2 + $0x60] sm:$0xff]
      %v355 = vld [vmem:[#allocation2 + $0x70] sm:$0xff]
      %v356 = vpack.c.bf16 %v349, %v348
      %v357 = vpack.c.bf16 %v351, %v350
      %v358 = vpack.c.bf16 %v353, %v352
      %v359 = vpack.c.bf16 %v355, %v354
      %v360 = vld [vmem:[%s3] sm:$0xf]
      %v361 = vld [vmem:[%s3 + $0x4] sm:$0xf]
      %v362 = vld [vmem:[%s3 + $0x8] sm:$0xf]
      %v363 = vld [vmem:[%s3 + $0xc] sm:$0xf]
      %v364 = vld [vmem:[%s3 + $0x10] sm:$0xf]
      %v365 = vld [vmem:[%s3 + $0x14] sm:$0xf]
      %v366 = vld [vmem:[%s3 + $0x18] sm:$0xf]
      %v367 = vld [vmem:[%s3 + $0x1c] sm:$0xf]
      %v368 = vld [vmem:[%s3 + $0x20] sm:$0xf]
      %v369 = vld [vmem:[%s3 + $0x24] sm:$0xf]
      %v370 = vld [vmem:[%s3 + $0x28] sm:$0xf]
      %v371 = vld [vmem:[%s3 + $0x2c] sm:$0xf]
      %v372 = vld [vmem:[%s3 + $0x30] sm:$0xf]
      %v373 = vld [vmem:[%s3 + $0x34] sm:$0xf]
      %v374 = vld [vmem:[%s3 + $0x38] sm:$0xf]
      %v375 = vld [vmem:[%s3 + $0x3c] sm:$0xf]
      %v376 = vld [vmem:[#allocation2 + $0x1] sm:$0xff]
      %v377 = vld [vmem:[#allocation2 + $0x11] sm:$0xff]
      %v378 = vld [vmem:[#allocation2 + $0x21] sm:$0xff]
      %v379 = vld [vmem:[#allocation2 + $0x31] sm:$0xff]
      %v380 = vld [vmem:[#allocation2 + $0x41] sm:$0xff]
      %v381 = vld [vmem:[#allocation2 + $0x51] sm:$0xff]
      %v382 = vld [vmem:[#allocation2 + $0x61] sm:$0xff]
      %v383 = vld [vmem:[#allocation2 + $0x71] sm:$0xff]
      %v384 = vpack.c.bf16 %v377, %v376
      %v385 = vpack.c.bf16 %v379, %v378
      %v386 = vpack.c.bf16 %v381, %v380
      %v387 = vpack.c.bf16 %v383, %v382
      %s388 = scalar_lea.vmem %s3, 64
      %v389 = vld [vmem:[%s388] sm:$0xf]
      %v390 = vld [vmem:[%s388 + $0x4] sm:$0xf]
      %v391 = vld [vmem:[%s388 + $0x8] sm:$0xf]
      %v392 = vld [vmem:[%s388 + $0xc] sm:$0xf]
      %v393 = vld [vmem:[%s388 + $0x10] sm:$0xf]
      %v394 = vld [vmem:[%s388 + $0x14] sm:$0xf]
      %v395 = vld [vmem:[%s388 + $0x18] sm:$0xf]
      %v396 = vld [vmem:[%s388 + $0x1c] sm:$0xf]
      %v397 = vld [vmem:[%s388 + $0x20] sm:$0xf]
      %v398 = vld [vmem:[%s388 + $0x24] sm:$0xf]
      %v399 = vld [vmem:[%s388 + $0x28] sm:$0xf]
      %v400 = vld [vmem:[%s388 + $0x2c] sm:$0xf]
      %v401 = vld [vmem:[%s388 + $0x30] sm:$0xf]
      %v402 = vld [vmem:[%s388 + $0x34] sm:$0xf]
      %v403 = vld [vmem:[%s388 + $0x38] sm:$0xf]
      %v404 = vld [vmem:[%s388 + $0x3c] sm:$0xf]
      %v421 = vunpack.c.l.b16 %v389
      %v422 = vunpack.c.l.b16 %v390
      %v423 = vunpack.c.l.b16 %v391
      %v424 = vunpack.c.l.b16 %v392
      %v425 = vunpack.c.l.b16 %v393
      %v426 = vunpack.c.l.b16 %v394
      %v427 = vunpack.c.l.b16 %v395
      %v428 = vunpack.c.l.b16 %v396
      %v429 = vunpack.c.l.b16 %v397
      %v430 = vunpack.c.l.b16 %v398
      %v431 = vunpack.c.l.b16 %v399
      %v432 = vunpack.c.l.b16 %v400
      %v433 = vunpack.c.l.b16 %v401
      %v434 = vunpack.c.l.b16 %v402
      %v435 = vunpack.c.l.b16 %v403
      %v436 = vunpack.c.l.b16 %v404
      %v437 = vpack.c.b16 %v422, %v421
      %v438 = vpack.c.b16 %v424, %v423
      %v439 = vpack.c.b16 %v426, %v425
      %v440 = vpack.c.b16 %v428, %v427
      %v441 = vpack.c.b16 %v430, %v429
      %v442 = vpack.c.b16 %v432, %v431
      %v443 = vpack.c.b16 %v434, %v433
      %v444 = vpack.c.b16 %v436, %v435
      %453 = vmatprep.subr.bf16.mxu0 0
      %454 = vmatpush1.bf16.msra.mxu0 %v437
      %455 = vmatprep.subr.bf16.mxu0 0
      %456 = vmatpush1.bf16.msra.mxu0 %v438
      %457 = vmatprep.subr.bf16.mxu0 0
      %458 = vmatpush1.bf16.msra.mxu0 %v439
      %459 = vmatprep.subr.bf16.mxu0 0
      %460 = vmatpush1.bf16.msra.mxu0 %v440
      %461 = vmatprep.subr.bf16.mxu0 0
      %462 = vmatpush1.bf16.msra.mxu0 %v441
      %463 = vmatprep.subr.bf16.mxu0 0
      %464 = vmatpush1.bf16.msra.mxu0 %v442
      %465 = vmatprep.subr.bf16.mxu0 0
      %466 = vmatpush1.bf16.msra.mxu0 %v443
      %467 = vmatprep.subr.bf16.mxu0 0
      %468 = vmatpush1.bf16.msra.mxu0 %v444
      %469 = vmatprep.subr.bf16.mxu0 0
      %470 = vmatpush1.bf16.msra.mxu0 0
      %471 = vmatprep.subr.bf16.mxu0 0
      %472 = vmatpush1.bf16.msra.mxu0 0
      %473 = vmatprep.subr.bf16.mxu0 0
      %474 = vmatpush1.bf16.msra.mxu0 0
      %475 = vmatprep.subr.bf16.mxu0 0
      %476 = vmatpush1.bf16.msra.mxu0 0
      %477 = vmatprep.subr.bf16.mxu0 0
      %478 = vmatpush1.bf16.msra.mxu0 0
      %479 = vmatprep.subr.bf16.mxu0 0
      %480 = vmatpush1.bf16.msra.mxu0 0
      %481 = vmatprep.subr.bf16.mxu0 0
      %482 = vmatpush1.bf16.msra.mxu0 0
      %483 = vmatprep.subr.bf16.mxu0 0
      %484 = vmatpush1.bf16.msra.mxu0 0
      %485 = vmatprep.mubr.bf16.mxu0 0
      %486 = vmatmul.mubr.bf16.gmra.mrb[0].mxu0 %v384
      %v487 = vpop.f32.mrb[0].mxu0
      %v488 = vadd.f32 0.0, %v487
      %v489 = vpop.f32.mrb[0].mxu0
      %v490 = vpop.f32.mrb[0].mxu0
      %v491 = vadd.f32 0.0, %v490
      %v492 = vpop.f32.mrb[0].mxu0
      %493 = vmatprep.mubr.bf16.mxu0 0
      %494 = vmatmul.mubr.bf16.gmra.mrb[0].mxu0 %v385
      %v495 = vpop.f32.mrb[0].mxu0
      %v496 = vadd.f32 0.0, %v495
      %v497 = vpop.f32.mrb[0].mxu0
      %v498 = vpop.f32.mrb[0].mxu0
      %v499 = vadd.f32 0.0, %v498
      %v500 = vpop.f32.mrb[0].mxu0
      %501 = vmatprep.mubr.bf16.mxu0 0
      %502 = vmatmul.mubr.bf16.gmra.mrb[0].mxu0 %v386
      %v503 = vpop.f32.mrb[0].mxu0
      %v504 = vadd.f32 0.0, %v503
      %v505 = vpop.f32.mrb[0].mxu0
      %v506 = vpop.f32.mrb[0].mxu0
      %v507 = vadd.f32 0.0, %v506
      %v508 = vpop.f32.mrb[0].mxu0
      %509 = vmatprep.mubr.bf16.mxu0 0
      %510 = vmatmul.mubr.bf16.gmra.mrb[0].mxu0 %v387
      %v511 = vpop.f32.mrb[0].mxu0
      %v512 = vadd.f32 0.0, %v511
      %v513 = vpop.f32.mrb[0].mxu0
      %v514 = vpop.f32.mrb[0].mxu0
      %v515 = vadd.f32 0.0, %v514
      %v516 = vpop.f32.mrb[0].mxu0
      %517 = vdwg.mxu0
      %v534 = vunpack.c.l.b16 %v360
      %v535 = vunpack.c.l.b16 %v361
      %v536 = vunpack.c.l.b16 %v362
      %v537 = vunpack.c.l.b16 %v363
      %v538 = vunpack.c.l.b16 %v364
      %v539 = vunpack.c.l.b16 %v365
      %v540 = vunpack.c.l.b16 %v366
      %v541 = vunpack.c.l.b16 %v367
      %v542 = vunpack.c.l.b16 %v368
      %v543 = vunpack.c.l.b16 %v369
      %v544 = vunpack.c.l.b16 %v370
      %v545 = vunpack.c.l.b16 %v371
      %v546 = vunpack.c.l.b16 %v372
      %v547 = vunpack.c.l.b16 %v373
      %v548 = vunpack.c.l.b16 %v374
      %v549 = vunpack.c.l.b16 %v375
      %v550 = vpack.c.b16 %v535, %v534
      %v551 = vpack.c.b16 %v537, %v536
      %v552 = vpack.c.b16 %v539, %v538
      %v553 = vpack.c.b16 %v541, %v540
      %v554 = vpack.c.b16 %v543, %v542
      %v555 = vpack.c.b16 %v545, %v544
      %v556 = vpack.c.b16 %v547, %v546
      %v557 = vpack.c.b16 %v549, %v548
      %566 = vmatprep.subr.bf16.mxu0 0
      %567 = vmatpush1.bf16.msra.mxu0 %v550
      %568 = vmatprep.subr.bf16.mxu0 0
      %569 = vmatpush1.bf16.msra.mxu0 %v551
      %570 = vmatprep.subr.bf16.mxu0 0
      %571 = vmatpush1.bf16.msra.mxu0 %v552
      %572 = vmatprep.subr.bf16.mxu0 0
      %573 = vmatpush1.bf16.msra.mxu0 %v553
      %574 = vmatprep.subr.bf16.mxu0 0
      %575 = vmatpush1.bf16.msra.mxu0 %v554
      %576 = vmatprep.subr.bf16.mxu0 0
      %577 = vmatpush1.bf16.msra.mxu0 %v555
      %578 = vmatprep.subr.bf16.mxu0 0
      %579 = vmatpush1.bf16.msra.mxu0 %v556
      %580 = vmatprep.subr.bf16.mxu0 0
      %581 = vmatpush1.bf16.msra.mxu0 %v557
      %582 = vmatprep.subr.bf16.mxu0 0
      %583 = vmatpush1.bf16.msra.mxu0 0
      %584 = vmatprep.subr.bf16.mxu0 0
      %585 = vmatpush1.bf16.msra.mxu0 0
      %586 = vmatprep.subr.bf16.mxu0 0
      %587 = vmatpush1.bf16.msra.mxu0 0
      %588 = vmatprep.subr.bf16.mxu0 0
      %589 = vmatpush1.bf16.msra.mxu0 0
      %590 = vmatprep.subr.bf16.mxu0 0
      %591 = vmatpush1.bf16.msra.mxu0 0
      %592 = vmatprep.subr.bf16.mxu0 0
      %593 = vmatpush1.bf16.msra.mxu0 0
      %594 = vmatprep.subr.bf16.mxu0 0
      %595 = vmatpush1.bf16.msra.mxu0 0
      %596 = vmatprep.subr.bf16.mxu0 0
      %597 = vmatpush1.bf16.msra.mxu0 0
      %598 = vmatprep.mubr.bf16.mxu0 0
      %599 = vmatmul.mubr.bf16.gmra.mrb[0].mxu0 %v356
      %v600 = vpop.f32.mrb[0].mxu0
      %v601 = vadd.f32 %v488, %v600
      %v602 = vpop.f32.mrb[0].mxu0
      %v603 = vpop.f32.mrb[0].mxu0
      %v604 = vadd.f32 %v491, %v603
      %v605 = vpop.f32.mrb[0].mxu0
      %606 = vmatprep.mubr.bf16.mxu0 0
      %607 = vmatmul.mubr.bf16.gmra.mrb[0].mxu0 %v357
      %v608 = vpop.f32.mrb[0].mxu0
      %v609 = vadd.f32 %v496, %v608
      %v610 = vpop.f32.mrb[0].mxu0
      %v611 = vpop.f32.mrb[0].mxu0
      %v612 = vadd.f32 %v499, %v611
      %v613 = vpop.f32.mrb[0].mxu0
      %614 = vmatprep.mubr.bf16.mxu0 0
      %615 = vmatmul.mubr.bf16.gmra.mrb[0].mxu0 %v358
      %v616 = vpop.f32.mrb[0].mxu0
      %v617 = vadd.f32 %v504, %v616
      %v618 = vpop.f32.mrb[0].mxu0
      %v619 = vpop.f32.mrb[0].mxu0
      %v620 = vadd.f32 %v507, %v619
      %v621 = vpop.f32.mrb[0].mxu0
      %622 = vmatprep.mubr.bf16.mxu0 0
      %623 = vmatmul.mubr.bf16.gmra.mrb[0].mxu0 %v359
      %v624 = vpop.f32.mrb[0].mxu0
      %v625 = vadd.f32 %v512, %v624
      %v626 = vpop.f32.mrb[0].mxu0
      %v627 = vpop.f32.mrb[0].mxu0
      %v628 = vadd.f32 %v515, %v627
      %v629 = vpop.f32.mrb[0].mxu0
      %630 = vdwg.mxu0
      %v631 = vld [vmem:[#allocation2 + $0x2] sm:$0xff]
      %v632 = vld [vmem:[#allocation2 + $0x12] sm:$0xff]
      %v633 = vld [vmem:[#allocation2 + $0x22] sm:$0xff]
      %v634 = vld [vmem:[#allocation2 + $0x32] sm:$0xff]
      %v635 = vld [vmem:[#allocation2 + $0x42] sm:$0xff]
      %v636 = vld [vmem:[#allocation2 + $0x52] sm:$0xff]
      %v637 = vld [vmem:[#allocation2 + $0x62] sm:$0xff]
      %v638 = vld [vmem:[#allocation2 + $0x72] sm:$0xff]
      %v639 = vpack.c.bf16 %v632, %v631
      %v640 = vpack.c.bf16 %v634, %v633
      %v641 = vpack.c.bf16 %v636, %v635
      %v642 = vpack.c.bf16 %v638, %v637
      %s643 = scalar_lea.vmem %s3, 128
      %v644 = vld [vmem:[%s643] sm:$0xf]
      %v645 = vld [vmem:[%s643 + $0x4] sm:$0xf]
      %v646 = vld [vmem:[%s643 + $0x8] sm:$0xf]
      %v647 = vld [vmem:[%s643 + $0xc] sm:$0xf]
      %v648 = vld [vmem:[%s643 + $0x10] sm:$0xf]
      %v649 = vld [vmem:[%s643 + $0x14] sm:$0xf]
      %v650 = vld [vmem:[%s643 + $0x18] sm:$0xf]
      %v651 = vld [vmem:[%s643 + $0x1c] sm:$0xf]
      %v652 = vld [vmem:[%s643 + $0x20] sm:$0xf]
      %v653 = vld [vmem:[%s643 + $0x24] sm:$0xf]
      %v654 = vld [vmem:[%s643 + $0x28] sm:$0xf]
      %v655 = vld [vmem:[%s643 + $0x2c] sm:$0xf]
      %v656 = vld [vmem:[%s643 + $0x30] sm:$0xf]
      %v657 = vld [vmem:[%s643 + $0x34] sm:$0xf]
      %v658 = vld [vmem:[%s643 + $0x38] sm:$0xf]
      %v659 = vld [vmem:[%s643 + $0x3c] sm:$0xf]
      %v676 = vunpack.c.l.b16 %v644
      %v677 = vunpack.c.l.b16 %v645
      %v678 = vunpack.c.l.b16 %v646
      %v679 = vunpack.c.l.b16 %v647
      %v680 = vunpack.c.l.b16 %v648
      %v681 = vunpack.c.l.b16 %v649
      %v682 = vunpack.c.l.b16 %v650
      %v683 = vunpack.c.l.b16 %v651
      %v684 = vunpack.c.l.b16 %v652
      %v685 = vunpack.c.l.b16 %v653
      %v686 = vunpack.c.l.b16 %v654
      %v687 = vunpack.c.l.b16 %v655
      %v688 = vunpack.c.l.b16 %v656
      %v689 = vunpack.c.l.b16 %v657
      %v690 = vunpack.c.l.b16 %v658
      %v691 = vunpack.c.l.b16 %v659
      %v692 = vpack.c.b16 %v677, %v676
      %v693 = vpack.c.b16 %v679, %v678
      %v694 = vpack.c.b16 %v681, %v680
      %v695 = vpack.c.b16 %v683, %v682
      %v696 = vpack.c.b16 %v685, %v684
      %v697 = vpack.c.b16 %v687, %v686
      %v698 = vpack.c.b16 %v689, %v688
      %v699 = vpack.c.b16 %v691, %v690
      %708 = vmatprep.subr.bf16.mxu0 0
      %709 = vmatpush1.bf16.msra.mxu0 %v692
      %710 = vmatprep.subr.bf16.mxu0 0
      %711 = vmatpush1.bf16.msra.mxu0 %v693
      %712 = vmatprep.subr.bf16.mxu0 0
      %713 = vmatpush1.bf16.msra.mxu0 %v694
      %714 = vmatprep.subr.bf16.mxu0 0
      %715 = vmatpush1.bf16.msra.mxu0 %v695
      %716 = vmatprep.subr.bf16.mxu0 0
      %717 = vmatpush1.bf16.msra.mxu0 %v696
      %718 = vmatprep.subr.bf16.mxu0 0
      %719 = vmatpush1.bf16.msra.mxu0 %v697
      %720 = vmatprep.subr.bf16.mxu0 0
      %721 = vmatpush1.bf16.msra.mxu0 %v698
      %722 = vmatprep.subr.bf16.mxu0 0
      %723 = vmatpush1.bf16.msra.mxu0 %v699
      %724 = vmatprep.subr.bf16.mxu0 0
      %725 = vmatpush1.bf16.msra.mxu0 0
      %726 = vmatprep.subr.bf16.mxu0 0
      %727 = vmatpush1.bf16.msra.mxu0 0
      %728 = vmatprep.subr.bf16.mxu0 0
      %729 = vmatpush1.bf16.msra.mxu0 0
      %730 = vmatprep.subr.bf16.mxu0 0
      %731 = vmatpush1.bf16.msra.mxu0 0
      %732 = vmatprep.subr.bf16.mxu0 0
      %733 = vmatpush1.bf16.msra.mxu0 0
      %734 = vmatprep.subr.bf16.mxu0 0
      %735 = vmatpush1.bf16.msra.mxu0 0
      %736 = vmatprep.subr.bf16.mxu0 0
      %737 = vmatpush1.bf16.msra.mxu0 0
      %738 = vmatprep.subr.bf16.mxu0 0
      %739 = vmatpush1.bf16.msra.mxu0 0
      %740 = vmatprep.mubr.bf16.mxu0 0
      %741 = vmatmul.mubr.bf16.gmra.mrb[0].mxu0 %v639
      %v742 = vpop.f32.mrb[0].mxu0
      %v743 = vadd.f32 0.0, %v742
      %v744 = vpop.f32.mrb[0].mxu0
      %v745 = vpop.f32.mrb[0].mxu0
      %v746 = vadd.f32 0.0, %v745
      %v747 = vpop.f32.mrb[0].mxu0
      %748 = vmatprep.mubr.bf16.mxu0 0
      %749 = vmatmul.mubr.bf16.gmra.mrb[0].mxu0 %v640
      %v750 = vpop.f32.mrb[0].mxu0
      %v751 = vadd.f32 0.0, %v750
      %v752 = vpop.f32.mrb[0].mxu0
      %v753 = vpop.f32.mrb[0].mxu0
      %v754 = vadd.f32 0.0, %v753
      %v755 = vpop.f32.mrb[0].mxu0
      %756 = vmatprep.mubr.bf16.mxu0 0
      %757 = vmatmul.mubr.bf16.gmra.mrb[0].mxu0 %v641
      %v758 = vpop.f32.mrb[0].mxu0
      %v759 = vadd.f32 0.0, %v758
      %v760 = vpop.f32.mrb[0].mxu0
      %v761 = vpop.f32.mrb[0].mxu0
      %v762 = vadd.f32 0.0, %v761
      %v763 = vpop.f32.mrb[0].mxu0
      %764 = vmatprep.mubr.bf16.mxu0 0
      %765 = vmatmul.mubr.bf16.gmra.mrb[0].mxu0 %v642
      %v766 = vpop.f32.mrb[0].mxu0
      %v767 = vadd.f32 0.0, %v766
      %v768 = vpop.f32.mrb[0].mxu0
      %v769 = vpop.f32.mrb[0].mxu0
      %v770 = vadd.f32 0.0, %v769
      %v771 = vpop.f32.mrb[0].mxu0
      %772 = vdwg.mxu0
      %v773 = vadd.f32 %v601, %v743
      %v774 = vadd.f32 %v604, %v746
      %v775 = vadd.f32 %v609, %v751
      %v776 = vadd.f32 %v612, %v754
      %v777 = vadd.f32 %v617, %v759
      %v778 = vadd.f32 %v620, %v762
      %v779 = vadd.f32 %v625, %v767
      %v780 = vadd.f32 %v628, %v770
      %v781 = vld [vmem:[%s339] sm:$0xff]
      %v782 = vld [vmem:[%s339 + $0x10] sm:$0xff]
      %v783 = vld [vmem:[%s339 + $0x20] sm:$0xff]
      %v784 = vld [vmem:[%s339 + $0x30] sm:$0xff]
      %v785 = vld [vmem:[%s339 + $0x40] sm:$0xff]
      %v786 = vld [vmem:[%s339 + $0x50] sm:$0xff]
      %v787 = vld [vmem:[%s339 + $0x60] sm:$0xff]
      %v788 = vld [vmem:[%s339 + $0x70] sm:$0xff]
      %v789 = vpack.c.bf16 %v782, %v781
      %v790 = vpack.c.bf16 %v784, %v783
      %v791 = vpack.c.bf16 %v786, %v785
      %v792 = vpack.c.bf16 %v788, %v787
      %s793 = scalar_lea.vmem %s3, 192
      %v794 = vld [vmem:[%s793] sm:$0xf]
      %v795 = vld [vmem:[%s793 + $0x4] sm:$0xf]
      %v796 = vld [vmem:[%s793 + $0x8] sm:$0xf]
      %v797 = vld [vmem:[%s793 + $0xc] sm:$0xf]
      %v798 = vld [vmem:[%s793 + $0x10] sm:$0xf]
      %v799 = vld [vmem:[%s793 + $0x14] sm:$0xf]
      %v800 = vld [vmem:[%s793 + $0x18] sm:$0xf]
      %v801 = vld [vmem:[%s793 + $0x1c] sm:$0xf]
      %v802 = vld [vmem:[%s793 + $0x20] sm:$0xf]
      %v803 = vld [vmem:[%s793 + $0x24] sm:$0xf]
      %v804 = vld [vmem:[%s793 + $0x28] sm:$0xf]
      %v805 = vld [vmem:[%s793 + $0x2c] sm:$0xf]
      %v806 = vld [vmem:[%s793 + $0x30] sm:$0xf]
      %v807 = vld [vmem:[%s793 + $0x34] sm:$0xf]
      %v808 = vld [vmem:[%s793 + $0x38] sm:$0xf]
      %v809 = vld [vmem:[%s793 + $0x3c] sm:$0xf]
      %v826 = vunpack.c.l.b16 %v794
      %v827 = vunpack.c.l.b16 %v795
      %v828 = vunpack.c.l.b16 %v796
      %v829 = vunpack.c.l.b16 %v797
      %v830 = vunpack.c.l.b16 %v798
      %v831 = vunpack.c.l.b16 %v799
      %v832 = vunpack.c.l.b16 %v800
      %v833 = vunpack.c.l.b16 %v801
      %v834 = vunpack.c.l.b16 %v802
      %v835 = vunpack.c.l.b16 %v803
      %v836 = vunpack.c.l.b16 %v804
      %v837 = vunpack.c.l.b16 %v805
      %v838 = vunpack.c.l.b16 %v806
      %v839 = vunpack.c.l.b16 %v807
      %v840 = vunpack.c.l.b16 %v808
      %v841 = vunpack.c.l.b16 %v809
      %v842 = vpack.c.b16 %v827, %v826
      %v843 = vpack.c.b16 %v829, %v828
      %v844 = vpack.c.b16 %v831, %v830
      %v845 = vpack.c.b16 %v833, %v832
      %v846 = vpack.c.b16 %v835, %v834
      %v847 = vpack.c.b16 %v837, %v836
      %v848 = vpack.c.b16 %v839, %v838
      %v849 = vpack.c.b16 %v841, %v840
      %858 = vmatprep.subr.bf16.mxu0 0
      %859 = vmatpush1.bf16.msra.mxu0 %v842
      %860 = vmatprep.subr.bf16.mxu0 0
      %861 = vmatpush1.bf16.msra.mxu0 %v843
      %862 = vmatprep.subr.bf16.mxu0 0
      %863 = vmatpush1.bf16.msra.mxu0 %v844
      %864 = vmatprep.subr.bf16.mxu0 0
      %865 = vmatpush1.bf16.msra.mxu0 %v845
      %866 = vmatprep.subr.bf16.mxu0 0
      %867 = vmatpush1.bf16.msra.mxu0 %v846
      %868 = vmatprep.subr.bf16.mxu0 0
      %869 = vmatpush1.bf16.msra.mxu0 %v847
      %870 = vmatprep.subr.bf16.mxu0 0
      %871 = vmatpush1.bf16.msra.mxu0 %v848
      %872 = vmatprep.subr.bf16.mxu0 0
      %873 = vmatpush1.bf16.msra.mxu0 %v849
      %874 = vmatprep.subr.bf16.mxu0 0
      %875 = vmatpush1.bf16.msra.mxu0 0
      %876 = vmatprep.subr.bf16.mxu0 0
      %877 = vmatpush1.bf16.msra.mxu0 0
      %878 = vmatprep.subr.bf16.mxu0 0
      %879 = vmatpush1.bf16.msra.mxu0 0
      %880 = vmatprep.subr.bf16.mxu0 0
      %881 = vmatpush1.bf16.msra.mxu0 0
      %882 = vmatprep.subr.bf16.mxu0 0
      %883 = vmatpush1.bf16.msra.mxu0 0
      %884 = vmatprep.subr.bf16.mxu0 0
      %885 = vmatpush1.bf16.msra.mxu0 0
      %886 = vmatprep.subr.bf16.mxu0 0
      %887 = vmatpush1.bf16.msra.mxu0 0
      %888 = vmatprep.subr.bf16.mxu0 0
      %889 = vmatpush1.bf16.msra.mxu0 0
      %890 = vmatprep.mubr.bf16.mxu0 0
      %891 = vmatmul.mubr.bf16.gmra.mrb[0].mxu0 %v789
      %v892 = vpop.f32.mrb[0].mxu0
      %v893 = vadd.f32 0.0, %v892
      %v894 = vpop.f32.mrb[0].mxu0
      %v895 = vpop.f32.mrb[0].mxu0
      %v896 = vadd.f32 0.0, %v895
      %v897 = vpop.f32.mrb[0].mxu0
      %898 = vmatprep.mubr.bf16.mxu0 0
      %899 = vmatmul.mubr.bf16.gmra.mrb[0].mxu0 %v790
      %v900 = vpop.f32.mrb[0].mxu0
      %v901 = vadd.f32 0.0, %v900
      %v902 = vpop.f32.mrb[0].mxu0
      %v903 = vpop.f32.mrb[0].mxu0
      %v904 = vadd.f32 0.0, %v903
      %v905 = vpop.f32.mrb[0].mxu0
      %906 = vmatprep.mubr.bf16.mxu0 0
      %907 = vmatmul.mubr.bf16.gmra.mrb[0].mxu0 %v791
      %v908 = vpop.f32.mrb[0].mxu0
      %v909 = vadd.f32 0.0, %v908
      %v910 = vpop.f32.mrb[0].mxu0
      %v911 = vpop.f32.mrb[0].mxu0
      %v912 = vadd.f32 0.0, %v911
      %v913 = vpop.f32.mrb[0].mxu0
      %914 = vmatprep.mubr.bf16.mxu0 0
      %915 = vmatmul.mubr.bf16.gmra.mrb[0].mxu0 %v792
      %v916 = vpop.f32.mrb[0].mxu0
      %v917 = vadd.f32 0.0, %v916
      %v918 = vpop.f32.mrb[0].mxu0
      %v919 = vpop.f32.mrb[0].mxu0
      %v920 = vadd.f32 0.0, %v919
      %v921 = vpop.f32.mrb[0].mxu0
      %922 = vdwg.mxu0
      %v923 = vadd.f32 %v773, %v893
      %v924 = vadd.f32 %v774, %v896
      %v925 = vadd.f32 %v775, %v901
      %v926 = vadd.f32 %v776, %v904
      %v927 = vadd.f32 %v777, %v909
      %v928 = vadd.f32 %v778, %v912
      %v929 = vadd.f32 %v779, %v917
      %v930 = vadd.f32 %v780, %v920
      %v931 = vld [vmem:[%s339 + $0x1] sm:$0xff]
      %v932 = vld [vmem:[%s339 + $0x11] sm:$0xff]
      %v933 = vld [vmem:[%s339 + $0x21] sm:$0xff]
      %v934 = vld [vmem:[%s339 + $0x31] sm:$0xff]
      %v935 = vld [vmem:[%s339 + $0x41] sm:$0xff]
      %v936 = vld [vmem:[%s339 + $0x51] sm:$0xff]
      %v937 = vld [vmem:[%s339 + $0x61] sm:$0xff]
      %v938 = vld [vmem:[%s339 + $0x71] sm:$0xff]
      %v939 = vpack.c.bf16 %v932, %v931
      %v940 = vpack.c.bf16 %v934, %v933
      %v941 = vpack.c.bf16 %v936, %v935
      %v942 = vpack.c.bf16 %v938, %v937
      %s943 = scalar_lea.vmem %s3, 256
      %v944 = vld [vmem:[%s943] sm:$0xf]
      %v945 = vld [vmem:[%s943 + $0x4] sm:$0xf]
      %v946 = vld [vmem:[%s943 + $0x8] sm:$0xf]
      %v947 = vld [vmem:[%s943 + $0xc] sm:$0xf]
      %v948 = vld [vmem:[%s943 + $0x10] sm:$0xf]
      %v949 = vld [vmem:[%s943 + $0x14] sm:$0xf]
      %v950 = vld [vmem:[%s943 + $0x18] sm:$0xf]
      %v951 = vld [vmem:[%s943 + $0x1c] sm:$0xf]
      %v952 = vld [vmem:[%s943 + $0x20] sm:$0xf]
      %v953 = vld [vmem:[%s943 + $0x24] sm:$0xf]
      %v954 = vld [vmem:[%s943 + $0x28] sm:$0xf]
      %v955 = vld [vmem:[%s943 + $0x2c] sm:$0xf]
      %v956 = vld [vmem:[%s943 + $0x30] sm:$0xf]
      %v957 = vld [vmem:[%s943 + $0x34] sm:$0xf]
      %v958 = vld [vmem:[%s943 + $0x38] sm:$0xf]
      %v959 = vld [vmem:[%s943 + $0x3c] sm:$0xf]
      %v976 = vunpack.c.l.b16 %v944
      %v977 = vunpack.c.l.b16 %v945
      %v978 = vunpack.c.l.b16 %v946
      %v979 = vunpack.c.l.b16 %v947
      %v980 = vunpack.c.l.b16 %v948
      %v981 = vunpack.c.l.b16 %v949
      %v982 = vunpack.c.l.b16 %v950
      %v983 = vunpack.c.l.b16 %v951
      %v984 = vunpack.c.l.b16 %v952
      %v985 = vunpack.c.l.b16 %v953
      %v986 = vunpack.c.l.b16 %v954
      %v987 = vunpack.c.l.b16 %v955
      %v988 = vunpack.c.l.b16 %v956
      %v989 = vunpack.c.l.b16 %v957
      %v990 = vunpack.c.l.b16 %v958
      %v991 = vunpack.c.l.b16 %v959
      %v992 = vpack.c.b16 %v977, %v976
      %v993 = vpack.c.b16 %v979, %v978
      %v994 = vpack.c.b16 %v981, %v980
      %v995 = vpack.c.b16 %v983, %v982
      %v996 = vpack.c.b16 %v985, %v984
      %v997 = vpack.c.b16 %v987, %v986
      %v998 = vpack.c.b16 %v989, %v988
      %v999 = vpack.c.b16 %v991, %v990
      %1008 = vmatprep.subr.bf16.mxu0 0
      %1009 = vmatpush1.bf16.msra.mxu0 %v992
      %1010 = vmatprep.subr.bf16.mxu0 0
      %1011 = vmatpush1.bf16.msra.mxu0 %v993
      %1012 = vmatprep.subr.bf16.mxu0 0
      %1013 = vmatpush1.bf16.msra.mxu0 %v994
      %1014 = vmatprep.subr.bf16.mxu0 0
      %1015 = vmatpush1.bf16.msra.mxu0 %v995
      %1016 = vmatprep.subr.bf16.mxu0 0
      %1017 = vmatpush1.bf16.msra.mxu0 %v996
      %1018 = vmatprep.subr.bf16.mxu0 0
      %1019 = vmatpush1.bf16.msra.mxu0 %v997
      %1020 = vmatprep.subr.bf16.mxu0 0
      %1021 = vmatpush1.bf16.msra.mxu0 %v998
      %1022 = vmatprep.subr.bf16.mxu0 0
      %1023 = vmatpush1.bf16.msra.mxu0 %v999
      %1024 = vmatprep.subr.bf16.mxu0 0
      %1025 = vmatpush1.bf16.msra.mxu0 0
      %1026 = vmatprep.subr.bf16.mxu0 0
      %1027 = vmatpush1.bf16.msra.mxu0 0
      %1028 = vmatprep.subr.bf16.mxu0 0
      %1029 = vmatpush1.bf16.msra.mxu0 0
      %1030 = vmatprep.subr.bf16.mxu0 0
      %1031 = vmatpush1.bf16.msra.mxu0 0
      %1032 = vmatprep.subr.bf16.mxu0 0
      %1033 = vmatpush1.bf16.msra.mxu0 0
      %1034 = vmatprep.subr.bf16.mxu0 0
      %1035 = vmatpush1.bf16.msra.mxu0 0
      %1036 = vmatprep.subr.bf16.mxu0 0
      %1037 = vmatpush1.bf16.msra.mxu0 0
      %1038 = vmatprep.subr.bf16.mxu0 0
      %1039 = vmatpush1.bf16.msra.mxu0 0
      %1040 = vmatprep.mubr.bf16.mxu0 0
      %1041 = vmatmul.mubr.bf16.gmra.mrb[0].mxu0 %v939
      %v1042 = vpop.f32.mrb[0].mxu0
      %v1043 = vadd.f32 0.0, %v1042
      %v1044 = vpop.f32.mrb[0].mxu0
      %v1045 = vpop.f32.mrb[0].mxu0
      %v1046 = vadd.f32 0.0, %v1045
      %v1047 = vpop.f32.mrb[0].mxu0
      %1048 = vmatprep.mubr.bf16.mxu0 0
      %1049 = vmatmul.mubr.bf16.gmra.mrb[0].mxu0 %v940
      %v1050 = vpop.f32.mrb[0].mxu0
      %v1051 = vadd.f32 0.0, %v1050
      %v1052 = vpop.f32.mrb[0].mxu0
      %v1053 = vpop.f32.mrb[0].mxu0
      %v1054 = vadd.f32 0.0, %v1053
      %v1055 = vpop.f32.mrb[0].mxu0
      %1056 = vmatprep.mubr.bf16.mxu0 0
      %1057 = vmatmul.mubr.bf16.gmra.mrb[0].mxu0 %v941
      %v1058 = vpop.f32.mrb[0].mxu0
      %v1059 = vadd.f32 0.0, %v1058
      %v1060 = vpop.f32.mrb[0].mxu0
      %v1061 = vpop.f32.mrb[0].mxu0
      %v1062 = vadd.f32 0.0, %v1061
      %v1063 = vpop.f32.mrb[0].mxu0
      %1064 = vmatprep.mubr.bf16.mxu0 0
      %1065 = vmatmul.mubr.bf16.gmra.mrb[0].mxu0 %v942
      %v1066 = vpop.f32.mrb[0].mxu0
      %v1067 = vadd.f32 0.0, %v1066
      %v1068 = vpop.f32.mrb[0].mxu0
      %v1069 = vpop.f32.mrb[0].mxu0
      %v1070 = vadd.f32 0.0, %v1069
      %v1071 = vpop.f32.mrb[0].mxu0
      %1072 = vdwg.mxu0
      %v1073 = vadd.f32 %v923, %v1043
      %v1074 = vadd.f32 %v924, %v1046
      %v1075 = vadd.f32 %v925, %v1051
      %v1076 = vadd.f32 %v926, %v1054
      %v1077 = vadd.f32 %v927, %v1059
      %v1078 = vadd.f32 %v928, %v1062
      %v1079 = vadd.f32 %v929, %v1067
      %v1080 = vadd.f32 %v930, %v1070
      %v1081 = vld [vmem:[%s339 + $0x2] sm:$0xff]
      %v1082 = vld [vmem:[%s339 + $0x12] sm:$0xff]
      %v1083 = vld [vmem:[%s339 + $0x22] sm:$0xff]
      %v1084 = vld [vmem:[%s339 + $0x32] sm:$0xff]
      %v1085 = vld [vmem:[%s339 + $0x42] sm:$0xff]
      %v1086 = vld [vmem:[%s339 + $0x52] sm:$0xff]
      %v1087 = vld [vmem:[%s339 + $0x62] sm:$0xff]
      %v1088 = vld [vmem:[%s339 + $0x72] sm:$0xff]
      %v1089 = vpack.c.bf16 %v1082, %v1081
      %v1090 = vpack.c.bf16 %v1084, %v1083
      %v1091 = vpack.c.bf16 %v1086, %v1085
      %v1092 = vpack.c.bf16 %v1088, %v1087
      %s1093 = scalar_lea.vmem %s3, 320
      %v1094 = vld [vmem:[%s1093] sm:$0xf]
      %v1095 = vld [vmem:[%s1093 + $0x4] sm:$0xf]
      %v1096 = vld [vmem:[%s1093 + $0x8] sm:$0xf]
      %v1097 = vld [vmem:[%s1093 + $0xc] sm:$0xf]
      %v1098 = vld [vmem:[%s1093 + $0x10] sm:$0xf]
      %v1099 = vld [vmem:[%s1093 + $0x14] sm:$0xf]
      %v1100 = vld [vmem:[%s1093 + $0x18] sm:$0xf]
      %v1101 = vld [vmem:[%s1093 + $0x1c] sm:$0xf]
      %v1102 = vld [vmem:[%s1093 + $0x20] sm:$0xf]
      %v1103 = vld [vmem:[%s1093 + $0x24] sm:$0xf]
      %v1104 = vld [vmem:[%s1093 + $0x28] sm:$0xf]
      %v1105 = vld [vmem:[%s1093 + $0x2c] sm:$0xf]
      %v1106 = vld [vmem:[%s1093 + $0x30] sm:$0xf]
      %v1107 = vld [vmem:[%s1093 + $0x34] sm:$0xf]
      %v1108 = vld [vmem:[%s1093 + $0x38] sm:$0xf]
      %v1109 = vld [vmem:[%s1093 + $0x3c] sm:$0xf]
      %v1126 = vunpack.c.l.b16 %v1094
      %v1127 = vunpack.c.l.b16 %v1095
      %v1128 = vunpack.c.l.b16 %v1096
      %v1129 = vunpack.c.l.b16 %v1097
      %v1130 = vunpack.c.l.b16 %v1098
      %v1131 = vunpack.c.l.b16 %v1099
      %v1132 = vunpack.c.l.b16 %v1100
      %v1133 = vunpack.c.l.b16 %v1101
      %v1134 = vunpack.c.l.b16 %v1102
      %v1135 = vunpack.c.l.b16 %v1103
      %v1136 = vunpack.c.l.b16 %v1104
      %v1137 = vunpack.c.l.b16 %v1105
      %v1138 = vunpack.c.l.b16 %v1106
      %v1139 = vunpack.c.l.b16 %v1107
      %v1140 = vunpack.c.l.b16 %v1108
      %v1141 = vunpack.c.l.b16 %v1109
      %v1142 = vpack.c.b16 %v1127, %v1126
      %v1143 = vpack.c.b16 %v1129, %v1128
      %v1144 = vpack.c.b16 %v1131, %v1130
      %v1145 = vpack.c.b16 %v1133, %v1132
      %v1146 = vpack.c.b16 %v1135, %v1134
      %v1147 = vpack.c.b16 %v1137, %v1136
      %v1148 = vpack.c.b16 %v1139, %v1138
      %v1149 = vpack.c.b16 %v1141, %v1140
      %1158 = vmatprep.subr.bf16.mxu0 0
      %1159 = vmatpush1.bf16.msra.mxu0 %v1142
      %1160 = vmatprep.subr.bf16.mxu0 0
      %1161 = vmatpush1.bf16.msra.mxu0 %v1143
      %1162 = vmatprep.subr.bf16.mxu0 0
      %1163 = vmatpush1.bf16.msra.mxu0 %v1144
      %1164 = vmatprep.subr.bf16.mxu0 0
      %1165 = vmatpush1.bf16.msra.mxu0 %v1145
      %1166 = vmatprep.subr.bf16.mxu0 0
      %1167 = vmatpush1.bf16.msra.mxu0 %v1146
      %1168 = vmatprep.subr.bf16.mxu0 0
      %1169 = vmatpush1.bf16.msra.mxu0 %v1147
      %1170 = vmatprep.subr.bf16.mxu0 0
      %1171 = vmatpush1.bf16.msra.mxu0 %v1148
      %1172 = vmatprep.subr.bf16.mxu0 0
      %1173 = vmatpush1.bf16.msra.mxu0 %v1149
      %1174 = vmatprep.subr.bf16.mxu0 0
      %1175 = vmatpush1.bf16.msra.mxu0 0
      %1176 = vmatprep.subr.bf16.mxu0 0
      %1177 = vmatpush1.bf16.msra.mxu0 0
      %1178 = vmatprep.subr.bf16.mxu0 0
      %1179 = vmatpush1.bf16.msra.mxu0 0
      %1180 = vmatprep.subr.bf16.mxu0 0
      %1181 = vmatpush1.bf16.msra.mxu0 0
      %1182 = vmatprep.subr.bf16.mxu0 0
      %1183 = vmatpush1.bf16.msra.mxu0 0
      %1184 = vmatprep.subr.bf16.mxu0 0
      %1185 = vmatpush1.bf16.msra.mxu0 0
      %1186 = vmatprep.subr.bf16.mxu0 0
      %1187 = vmatpush1.bf16.msra.mxu0 0
      %1188 = vmatprep.subr.bf16.mxu0 0
      %1189 = vmatpush1.bf16.msra.mxu0 0
      %1190 = vmatprep.mubr.bf16.mxu0 0
      %1191 = vmatmul.mubr.bf16.gmra.mrb[0].mxu0 %v1089
      %v1192 = vpop.f32.mrb[0].mxu0
      %v1193 = vadd.f32 0.0, %v1192
      %v1194 = vpop.f32.mrb[0].mxu0
      %v1195 = vpop.f32.mrb[0].mxu0
      %v1196 = vadd.f32 0.0, %v1195
      %v1197 = vpop.f32.mrb[0].mxu0
      %1198 = vmatprep.mubr.bf16.mxu0 0
      %1199 = vmatmul.mubr.bf16.gmra.mrb[0].mxu0 %v1090
      %v1200 = vpop.f32.mrb[0].mxu0
      %v1201 = vadd.f32 0.0, %v1200
      %v1202 = vpop.f32.mrb[0].mxu0
      %v1203 = vpop.f32.mrb[0].mxu0
      %v1204 = vadd.f32 0.0, %v1203
      %v1205 = vpop.f32.mrb[0].mxu0
      %1206 = vmatprep.mubr.bf16.mxu0 0
      %1207 = vmatmul.mubr.bf16.gmra.mrb[0].mxu0 %v1091
      %v1208 = vpop.f32.mrb[0].mxu0
      %v1209 = vadd.f32 0.0, %v1208
      %v1210 = vpop.f32.mrb[0].mxu0
      %v1211 = vpop.f32.mrb[0].mxu0
      %v1212 = vadd.f32 0.0, %v1211
      %v1213 = vpop.f32.mrb[0].mxu0
      %1214 = vmatprep.mubr.bf16.mxu0 0
      %1215 = vmatmul.mubr.bf16.gmra.mrb[0].mxu0 %v1092
      %v1216 = vpop.f32.mrb[0].mxu0
      %v1217 = vadd.f32 0.0, %v1216
      %v1218 = vpop.f32.mrb[0].mxu0
      %v1219 = vpop.f32.mrb[0].mxu0
      %v1220 = vadd.f32 0.0, %v1219
      %v1221 = vpop.f32.mrb[0].mxu0
      %1222 = vdwg.mxu0
      %v1223 = vadd.f32 %v1073, %v1193
      %v1224 = vadd.f32 %v1074, %v1196
      %v1225 = vadd.f32 %v1075, %v1201
      %v1226 = vadd.f32 %v1076, %v1204
      %v1227 = vadd.f32 %v1077, %v1209
      %v1228 = vadd.f32 %v1078, %v1212
      %v1229 = vadd.f32 %v1079, %v1217
      %v1230 = vadd.f32 %v1080, %v1220
      %s1231 = scalar_lea.vmem [#allocation2], 32
      %v1232 = vld [vmem:[%s1231] sm:$0xff]
      %v1233 = vld [vmem:[%s1231 + $0x10] sm:$0xff]
      %v1234 = vld [vmem:[%s1231 + $0x20] sm:$0xff]
      %v1235 = vld [vmem:[%s1231 + $0x30] sm:$0xff]
      %v1236 = vld [vmem:[%s1231 + $0x40] sm:$0xff]
      %v1237 = vld [vmem:[%s1231 + $0x50] sm:$0xff]
      %v1238 = vld [vmem:[%s1231 + $0x60] sm:$0xff]
      %v1239 = vld [vmem:[%s1231 + $0x70] sm:$0xff]
      %v1240 = vpack.c.bf16 %v1233, %v1232
      %v1241 = vpack.c.bf16 %v1235, %v1234
      %v1242 = vpack.c.bf16 %v1237, %v1236
      %v1243 = vpack.c.bf16 %v1239, %v1238
      %s1244 = scalar_lea.vmem %s3, 384
      %v1245 = vld [vmem:[%s1244] sm:$0xf]
      %v1246 = vld [vmem:[%s1244 + $0x4] sm:$0xf]
      %v1247 = vld [vmem:[%s1244 + $0x8] sm:$0xf]
      %v1248 = vld [vmem:[%s1244 + $0xc] sm:$0xf]
      %v1249 = vld [vmem:[%s1244 + $0x10] sm:$0xf]
      %v1250 = vld [vmem:[%s1244 + $0x14] sm:$0xf]
      %v1251 = vld [vmem:[%s1244 + $0x18] sm:$0xf]
      %v1252 = vld [vmem:[%s1244 + $0x1c] sm:$0xf]
      %v1253 = vld [vmem:[%s1244 + $0x20] sm:$0xf]
      %v1254 = vld [vmem:[%s1244 + $0x24] sm:$0xf]
      %v1255 = vld [vmem:[%s1244 + $0x28] sm:$0xf]
      %v1256 = vld [vmem:[%s1244 + $0x2c] sm:$0xf]
      %v1257 = vld [vmem:[%s1244 + $0x30] sm:$0xf]
      %v1258 = vld [vmem:[%s1244 + $0x34] sm:$0xf]
      %v1259 = vld [vmem:[%s1244 + $0x38] sm:$0xf]
      %v1260 = vld [vmem:[%s1244 + $0x3c] sm:$0xf]
      %v1277 = vunpack.c.l.b16 %v1245
      %v1278 = vunpack.c.l.b16 %v1246
      %v1279 = vunpack.c.l.b16 %v1247
      %v1280 = vunpack.c.l.b16 %v1248
      %v1281 = vunpack.c.l.b16 %v1249
      %v1282 = vunpack.c.l.b16 %v1250
      %v1283 = vunpack.c.l.b16 %v1251
      %v1284 = vunpack.c.l.b16 %v1252
      %v1285 = vunpack.c.l.b16 %v1253
      %v1286 = vunpack.c.l.b16 %v1254
      %v1287 = vunpack.c.l.b16 %v1255
      %v1288 = vunpack.c.l.b16 %v1256
      %v1289 = vunpack.c.l.b16 %v1257
      %v1290 = vunpack.c.l.b16 %v1258
      %v1291 = vunpack.c.l.b16 %v1259
      %v1292 = vunpack.c.l.b16 %v1260
      %v1293 = vpack.c.b16 %v1278, %v1277
      %v1294 = vpack.c.b16 %v1280, %v1279
      %v1295 = vpack.c.b16 %v1282, %v1281
      %v1296 = vpack.c.b16 %v1284, %v1283
      %v1297 = vpack.c.b16 %v1286, %v1285
      %v1298 = vpack.c.b16 %v1288, %v1287
      %v1299 = vpack.c.b16 %v1290, %v1289
      %v1300 = vpack.c.b16 %v1292, %v1291
      %1309 = vmatprep.subr.bf16.mxu0 0
      %1310 = vmatpush1.bf16.msra.mxu0 %v1293
      %1311 = vmatprep.subr.bf16.mxu0 0
      %1312 = vmatpush1.bf16.msra.mxu0 %v1294
      %1313 = vmatprep.subr.bf16.mxu0 0
      %1314 = vmatpush1.bf16.msra.mxu0 %v1295
      %1315 = vmatprep.subr.bf16.mxu0 0
      %1316 = vmatpush1.bf16.msra.mxu0 %v1296
      %1317 = vmatprep.subr.bf16.mxu0 0
      %1318 = vmatpush1.bf16.msra.mxu0 %v1297
      %1319 = vmatprep.subr.bf16.mxu0 0
      %1320 = vmatpush1.bf16.msra.mxu0 %v1298
      %1321 = vmatprep.subr.bf16.mxu0 0
      %1322 = vmatpush1.bf16.msra.mxu0 %v1299
      %1323 = vmatprep.subr.bf16.mxu0 0
      %1324 = vmatpush1.bf16.msra.mxu0 %v1300
      %1325 = vmatprep.subr.bf16.mxu0 0
      %1326 = vmatpush1.bf16.msra.mxu0 0
      %1327 = vmatprep.subr.bf16.mxu0 0
      %1328 = vmatpush1.bf16.msra.mxu0 0
      %1329 = vmatprep.subr.bf16.mxu0 0
      %1330 = vmatpush1.bf16.msra.mxu0 0
      %1331 = vmatprep.subr.bf16.mxu0 0
      %1332 = vmatpush1.bf16.msra.mxu0 0
      %1333 = vmatprep.subr.bf16.mxu0 0
      %1334 = vmatpush1.bf16.msra.mxu0 0
      %1335 = vmatprep.subr.bf16.mxu0 0
      %1336 = vmatpush1.bf16.msra.mxu0 0
      %1337 = vmatprep.subr.bf16.mxu0 0
      %1338 = vmatpush1.bf16.msra.mxu0 0
      %1339 = vmatprep.subr.bf16.mxu0 0
      %1340 = vmatpush1.bf16.msra.mxu0 0
      %1341 = vmatprep.mubr.bf16.mxu0 0
      %1342 = vmatmul.mubr.bf16.gmra.mrb[0].mxu0 %v1240
      %v1343 = vpop.f32.mrb[0].mxu0
      %v1344 = vadd.f32 0.0, %v1343
      %v1345 = vpop.f32.mrb[0].mxu0
      %v1346 = vpop.f32.mrb[0].mxu0
      %v1347 = vadd.f32 0.0, %v1346
      %v1348 = vpop.f32.mrb[0].mxu0
      %1349 = vmatprep.mubr.bf16.mxu0 0
      %1350 = vmatmul.mubr.bf16.gmra.mrb[0].mxu0 %v1241
      %v1351 = vpop.f32.mrb[0].mxu0
      %v1352 = vadd.f32 0.0, %v1351
      %v1353 = vpop.f32.mrb[0].mxu0
      %v1354 = vpop.f32.mrb[0].mxu0
      %v1355 = vadd.f32 0.0, %v1354
      %v1356 = vpop.f32.mrb[0].mxu0
      %1357 = vmatprep.mubr.bf16.mxu0 0
      %1358 = vmatmul.mubr.bf16.gmra.mrb[0].mxu0 %v1242
      %v1359 = vpop.f32.mrb[0].mxu0
      %v1360 = vadd.f32 0.0, %v1359
      %v1361 = vpop.f32.mrb[0].mxu0
      %v1362 = vpop.f32.mrb[0].mxu0
      %v1363 = vadd.f32 0.0, %v1362
      %v1364 = vpop.f32.mrb[0].mxu0
      %1365 = vmatprep.mubr.bf16.mxu0 0
      %1366 = vmatmul.mubr.bf16.gmra.mrb[0].mxu0 %v1243
      %v1367 = vpop.f32.mrb[0].mxu0
      %v1368 = vadd.f32 0.0, %v1367
      %v1369 = vpop.f32.mrb[0].mxu0
      %v1370 = vpop.f32.mrb[0].mxu0
      %v1371 = vadd.f32 0.0, %v1370
      %v1372 = vpop.f32.mrb[0].mxu0
      %1373 = vdwg.mxu0
      %v1374 = vadd.f32 %v1223, %v1344
      %v1375 = vadd.f32 %v1224, %v1347
      %v1376 = vadd.f32 %v1225, %v1352
      %v1377 = vadd.f32 %v1226, %v1355
      %v1378 = vadd.f32 %v1227, %v1360
      %v1379 = vadd.f32 %v1228, %v1363
      %v1380 = vadd.f32 %v1229, %v1368
      %v1381 = vadd.f32 %v1230, %v1371
      %v1382 = vld [vmem:[%s1231 + $0x1] sm:$0xff]
      %v1383 = vld [vmem:[%s1231 + $0x11] sm:$0xff]
      %v1384 = vld [vmem:[%s1231 + $0x21] sm:$0xff]
      %v1385 = vld [vmem:[%s1231 + $0x31] sm:$0xff]
      %v1386 = vld [vmem:[%s1231 + $0x41] sm:$0xff]
      %v1387 = vld [vmem:[%s1231 + $0x51] sm:$0xff]
      %v1388 = vld [vmem:[%s1231 + $0x61] sm:$0xff]
      %v1389 = vld [vmem:[%s1231 + $0x71] sm:$0xff]
      %v1390 = vpack.c.bf16 %v1383, %v1382
      %v1391 = vpack.c.bf16 %v1385, %v1384
      %v1392 = vpack.c.bf16 %v1387, %v1386
      %v1393 = vpack.c.bf16 %v1389, %v1388
      %s1394 = scalar_lea.vmem %s3, 448
      %v1395 = vld [vmem:[%s1394] sm:$0xf]
      %v1396 = vld [vmem:[%s1394 + $0x4] sm:$0xf]
      %v1397 = vld [vmem:[%s1394 + $0x8] sm:$0xf]
      %v1398 = vld [vmem:[%s1394 + $0xc] sm:$0xf]
      %v1399 = vld [vmem:[%s1394 + $0x10] sm:$0xf]
      %v1400 = vld [vmem:[%s1394 + $0x14] sm:$0xf]
      %v1401 = vld [vmem:[%s1394 + $0x18] sm:$0xf]
      %v1402 = vld [vmem:[%s1394 + $0x1c] sm:$0xf]
      %v1403 = vld [vmem:[%s1394 + $0x20] sm:$0xf]
      %v1404 = vld [vmem:[%s1394 + $0x24] sm:$0xf]
      %v1405 = vld [vmem:[%s1394 + $0x28] sm:$0xf]
      %v1406 = vld [vmem:[%s1394 + $0x2c] sm:$0xf]
      %v1407 = vld [vmem:[%s1394 + $0x30] sm:$0xf]
      %v1408 = vld [vmem:[%s1394 + $0x34] sm:$0xf]
      %v1409 = vld [vmem:[%s1394 + $0x38] sm:$0xf]
      %v1410 = vld [vmem:[%s1394 + $0x3c] sm:$0xf]
      %v1427 = vunpack.c.l.b16 %v1395
      %v1428 = vunpack.c.l.b16 %v1396
      %v1429 = vunpack.c.l.b16 %v1397
      %v1430 = vunpack.c.l.b16 %v1398
      %v1431 = vunpack.c.l.b16 %v1399
      %v1432 = vunpack.c.l.b16 %v1400
      %v1433 = vunpack.c.l.b16 %v1401
      %v1434 = vunpack.c.l.b16 %v1402
      %v1435 = vunpack.c.l.b16 %v1403
      %v1436 = vunpack.c.l.b16 %v1404
      %v1437 = vunpack.c.l.b16 %v1405
      %v1438 = vunpack.c.l.b16 %v1406
      %v1439 = vunpack.c.l.b16 %v1407
      %v1440 = vunpack.c.l.b16 %v1408
      %v1441 = vunpack.c.l.b16 %v1409
      %v1442 = vunpack.c.l.b16 %v1410
      %v1443 = vpack.c.b16 %v1428, %v1427
      %v1444 = vpack.c.b16 %v1430, %v1429
      %v1445 = vpack.c.b16 %v1432, %v1431
      %v1446 = vpack.c.b16 %v1434, %v1433
      %v1447 = vpack.c.b16 %v1436, %v1435
      %v1448 = vpack.c.b16 %v1438, %v1437
      %v1449 = vpack.c.b16 %v1440, %v1439
      %v1450 = vpack.c.b16 %v1442, %v1441
      %1459 = vmatprep.subr.bf16.mxu0 0
      %1460 = vmatpush1.bf16.msra.mxu0 %v1443
      %1461 = vmatprep.subr.bf16.mxu0 0
      %1462 = vmatpush1.bf16.msra.mxu0 %v1444
      %1463 = vmatprep.subr.bf16.mxu0 0
      %1464 = vmatpush1.bf16.msra.mxu0 %v1445
      %1465 = vmatprep.subr.bf16.mxu0 0
      %1466 = vmatpush1.bf16.msra.mxu0 %v1446
      %1467 = vmatprep.subr.bf16.mxu0 0
      %1468 = vmatpush1.bf16.msra.mxu0 %v1447
      %1469 = vmatprep.subr.bf16.mxu0 0
      %1470 = vmatpush1.bf16.msra.mxu0 %v1448
      %1471 = vmatprep.subr.bf16.mxu0 0
      %1472 = vmatpush1.bf16.msra.mxu0 %v1449
      %1473 = vmatprep.subr.bf16.mxu0 0
      %1474 = vmatpush1.bf16.msra.mxu0 %v1450
      %1475 = vmatprep.subr.bf16.mxu0 0
      %1476 = vmatpush1.bf16.msra.mxu0 0
      %1477 = vmatprep.subr.bf16.mxu0 0
      %1478 = vmatpush1.bf16.msra.mxu0 0
      %1479 = vmatprep.subr.bf16.mxu0 0
      %1480 = vmatpush1.bf16.msra.mxu0 0
      %1481 = vmatprep.subr.bf16.mxu0 0
      %1482 = vmatpush1.bf16.msra.mxu0 0
      %1483 = vmatprep.subr.bf16.mxu0 0
      %1484 = vmatpush1.bf16.msra.mxu0 0
      %1485 = vmatprep.subr.bf16.mxu0 0
      %1486 = vmatpush1.bf16.msra.mxu0 0
      %1487 = vmatprep.subr.bf16.mxu0 0
      %1488 = vmatpush1.bf16.msra.mxu0 0
      %1489 = vmatprep.subr.bf16.mxu0 0
      %1490 = vmatpush1.bf16.msra.mxu0 0
      %1491 = vmatprep.mubr.bf16.mxu0 0
      %1492 = vmatmul.mubr.bf16.gmra.mrb[0].mxu0 %v1390
      %v1493 = vpop.f32.mrb[0].mxu0
      %v1494 = vadd.f32 0.0, %v1493
      %v1495 = vpop.f32.mrb[0].mxu0
      %v1496 = vpop.f32.mrb[0].mxu0
      %v1497 = vadd.f32 0.0, %v1496
      %v1498 = vpop.f32.mrb[0].mxu0
      %1499 = vmatprep.mubr.bf16.mxu0 0
      %1500 = vmatmul.mubr.bf16.gmra.mrb[0].mxu0 %v1391
      %v1501 = vpop.f32.mrb[0].mxu0
      %v1502 = vadd.f32 0.0, %v1501
      %v1503 = vpop.f32.mrb[0].mxu0
      %v1504 = vpop.f32.mrb[0].mxu0
      %v1505 = vadd.f32 0.0, %v1504
      %v1506 = vpop.f32.mrb[0].mxu0
      %1507 = vmatprep.mubr.bf16.mxu0 0
      %1508 = vmatmul.mubr.bf16.gmra.mrb[0].mxu0 %v1392
      %v1509 = vpop.f32.mrb[0].mxu0
      %v1510 = vadd.f32 0.0, %v1509
      %v1511 = vpop.f32.mrb[0].mxu0
      %v1512 = vpop.f32.mrb[0].mxu0
      %v1513 = vadd.f32 0.0, %v1512
      %v1514 = vpop.f32.mrb[0].mxu0
      %1515 = vmatprep.mubr.bf16.mxu0 0
      %1516 = vmatmul.mubr.bf16.gmra.mrb[0].mxu0 %v1393
      %v1517 = vpop.f32.mrb[0].mxu0
      %v1518 = vadd.f32 0.0, %v1517
      %v1519 = vpop.f32.mrb[0].mxu0
      %v1520 = vpop.f32.mrb[0].mxu0
      %v1521 = vadd.f32 0.0, %v1520
      %v1522 = vpop.f32.mrb[0].mxu0
      %1523 = vdwg.mxu0
      %v1524 = vadd.f32 %v1374, %v1494
      %v1525 = vadd.f32 %v1375, %v1497
      %v1526 = vadd.f32 %v1376, %v1502
      %v1527 = vadd.f32 %v1377, %v1505
      %v1528 = vadd.f32 %v1378, %v1510
      %v1529 = vadd.f32 %v1379, %v1513
      %v1530 = vadd.f32 %v1380, %v1518
      %v1531 = vadd.f32 %v1381, %v1521
      %v1532 = vld [vmem:[%s1231 + $0x2] sm:$0xff]
      %v1533 = vld [vmem:[%s1231 + $0x12] sm:$0xff]
      %v1534 = vld [vmem:[%s1231 + $0x22] sm:$0xff]
      %v1535 = vld [vmem:[%s1231 + $0x32] sm:$0xff]
      %v1536 = vld [vmem:[%s1231 + $0x42] sm:$0xff]
      %v1537 = vld [vmem:[%s1231 + $0x52] sm:$0xff]
      %v1538 = vld [vmem:[%s1231 + $0x62] sm:$0xff]
      %v1539 = vld [vmem:[%s1231 + $0x72] sm:$0xff]
      %v1540 = vpack.c.bf16 %v1533, %v1532
      %v1541 = vpack.c.bf16 %v1535, %v1534
      %v1542 = vpack.c.bf16 %v1537, %v1536
      %v1543 = vpack.c.bf16 %v1539, %v1538
      %s1544 = scalar_lea.vmem %s3, 512
      %v1545 = vld [vmem:[%s1544] sm:$0xf]
      %v1546 = vld [vmem:[%s1544 + $0x4] sm:$0xf]
      %v1547 = vld [vmem:[%s1544 + $0x8] sm:$0xf]
      %v1548 = vld [vmem:[%s1544 + $0xc] sm:$0xf]
      %v1549 = vld [vmem:[%s1544 + $0x10] sm:$0xf]
      %v1550 = vld [vmem:[%s1544 + $0x14] sm:$0xf]
      %v1551 = vld [vmem:[%s1544 + $0x18] sm:$0xf]
      %v1552 = vld [vmem:[%s1544 + $0x1c] sm:$0xf]
      %v1553 = vld [vmem:[%s1544 + $0x20] sm:$0xf]
      %v1554 = vld [vmem:[%s1544 + $0x24] sm:$0xf]
      %v1555 = vld [vmem:[%s1544 + $0x28] sm:$0xf]
      %v1556 = vld [vmem:[%s1544 + $0x2c] sm:$0xf]
      %v1557 = vld [vmem:[%s1544 + $0x30] sm:$0xf]
      %v1558 = vld [vmem:[%s1544 + $0x34] sm:$0xf]
      %v1559 = vld [vmem:[%s1544 + $0x38] sm:$0xf]
      %v1560 = vld [vmem:[%s1544 + $0x3c] sm:$0xf]
      %v1577 = vunpack.c.l.b16 %v1545
      %v1578 = vunpack.c.l.b16 %v1546
      %v1579 = vunpack.c.l.b16 %v1547
      %v1580 = vunpack.c.l.b16 %v1548
      %v1581 = vunpack.c.l.b16 %v1549
      %v1582 = vunpack.c.l.b16 %v1550
      %v1583 = vunpack.c.l.b16 %v1551
      %v1584 = vunpack.c.l.b16 %v1552
      %v1585 = vunpack.c.l.b16 %v1553
      %v1586 = vunpack.c.l.b16 %v1554
      %v1587 = vunpack.c.l.b16 %v1555
      %v1588 = vunpack.c.l.b16 %v1556
      %v1589 = vunpack.c.l.b16 %v1557
      %v1590 = vunpack.c.l.b16 %v1558
      %v1591 = vunpack.c.l.b16 %v1559
      %v1592 = vunpack.c.l.b16 %v1560
      %v1593 = vpack.c.b16 %v1578, %v1577
      %v1594 = vpack.c.b16 %v1580, %v1579
      %v1595 = vpack.c.b16 %v1582, %v1581
      %v1596 = vpack.c.b16 %v1584, %v1583
      %v1597 = vpack.c.b16 %v1586, %v1585
      %v1598 = vpack.c.b16 %v1588, %v1587
      %v1599 = vpack.c.b16 %v1590, %v1589
      %v1600 = vpack.c.b16 %v1592, %v1591
      %1609 = vmatprep.subr.bf16.mxu0 0
      %1610 = vmatpush1.bf16.msra.mxu0 %v1593
      %1611 = vmatprep.subr.bf16.mxu0 0
      %1612 = vmatpush1.bf16.msra.mxu0 %v1594
      %1613 = vmatprep.subr.bf16.mxu0 0
      %1614 = vmatpush1.bf16.msra.mxu0 %v1595
      %1615 = vmatprep.subr.bf16.mxu0 0
      %1616 = vmatpush1.bf16.msra.mxu0 %v1596
      %1617 = vmatprep.subr.bf16.mxu0 0
      %1618 = vmatpush1.bf16.msra.mxu0 %v1597
      %1619 = vmatprep.subr.bf16.mxu0 0
      %1620 = vmatpush1.bf16.msra.mxu0 %v1598
      %1621 = vmatprep.subr.bf16.mxu0 0
      %1622 = vmatpush1.bf16.msra.mxu0 %v1599
      %1623 = vmatprep.subr.bf16.mxu0 0
      %1624 = vmatpush1.bf16.msra.mxu0 %v1600
      %1625 = vmatprep.subr.bf16.mxu0 0
      %1626 = vmatpush1.bf16.msra.mxu0 0
      %1627 = vmatprep.subr.bf16.mxu0 0
      %1628 = vmatpush1.bf16.msra.mxu0 0
      %1629 = vmatprep.subr.bf16.mxu0 0
      %1630 = vmatpush1.bf16.msra.mxu0 0
      %1631 = vmatprep.subr.bf16.mxu0 0
      %1632 = vmatpush1.bf16.msra.mxu0 0
      %1633 = vmatprep.subr.bf16.mxu0 0
      %1634 = vmatpush1.bf16.msra.mxu0 0
      %1635 = vmatprep.subr.bf16.mxu0 0
      %1636 = vmatpush1.bf16.msra.mxu0 0
      %1637 = vmatprep.subr.bf16.mxu0 0
      %1638 = vmatpush1.bf16.msra.mxu0 0
      %1639 = vmatprep.subr.bf16.mxu0 0
      %1640 = vmatpush1.bf16.msra.mxu0 0
      %1641 = vmatprep.mubr.bf16.mxu0 0
      %1642 = vmatmul.mubr.bf16.gmra.mrb[0].mxu0 %v1540
      %v1643 = vpop.f32.mrb[0].mxu0
      %v1644 = vadd.f32 0.0, %v1643
      %v1645 = vpop.f32.mrb[0].mxu0
      %v1646 = vpop.f32.mrb[0].mxu0
      %v1647 = vadd.f32 0.0, %v1646
      %v1648 = vpop.f32.mrb[0].mxu0
      %1649 = vmatprep.mubr.bf16.mxu0 0
      %1650 = vmatmul.mubr.bf16.gmra.mrb[0].mxu0 %v1541
      %v1651 = vpop.f32.mrb[0].mxu0
      %v1652 = vadd.f32 0.0, %v1651
      %v1653 = vpop.f32.mrb[0].mxu0
      %v1654 = vpop.f32.mrb[0].mxu0
      %v1655 = vadd.f32 0.0, %v1654
      %v1656 = vpop.f32.mrb[0].mxu0
      %1657 = vmatprep.mubr.bf16.mxu0 0
      %1658 = vmatmul.mubr.bf16.gmra.mrb[0].mxu0 %v1542
      %v1659 = vpop.f32.mrb[0].mxu0
      %v1660 = vadd.f32 0.0, %v1659
      %v1661 = vpop.f32.mrb[0].mxu0
      %v1662 = vpop.f32.mrb[0].mxu0
      %v1663 = vadd.f32 0.0, %v1662
      %v1664 = vpop.f32.mrb[0].mxu0
      %1665 = vmatprep.mubr.bf16.mxu0 0
      %1666 = vmatmul.mubr.bf16.gmra.mrb[0].mxu0 %v1543
      %v1667 = vpop.f32.mrb[0].mxu0
      %v1668 = vadd.f32 0.0, %v1667
      %v1669 = vpop.f32.mrb[0].mxu0
      %v1670 = vpop.f32.mrb[0].mxu0
      %v1671 = vadd.f32 0.0, %v1670
      %v1672 = vpop.f32.mrb[0].mxu0
      %1673 = vdwg.mxu0
      %v1674 = vadd.f32 %v1524, %v1644
      %v1675 = vadd.f32 %v1525, %v1647
      %v1676 = vadd.f32 %v1526, %v1652
      %v1677 = vadd.f32 %v1527, %v1655
      %v1678 = vadd.f32 %v1528, %v1660
      %v1679 = vadd.f32 %v1529, %v1663
      %v1680 = vadd.f32 %v1530, %v1668
      %v1681 = vadd.f32 %v1531, %v1671
      %v1682 = vld [vmem:[%s4] sm:$0x1]
      %v1684 = vlaneseq
      %v1685 = vshrl.u32 %v1684, 7
      %v1686 = vsub.s32 0, %v1685
      %v1687 = vrot.slane %v1682, %v1686
      %v1689 = vadd.f32 %v1674, %v1687
      %v1690 = vadd.f32 %v1675, %v1687
      %v1691 = vadd.f32 %v1676, %v1687
      %v1692 = vadd.f32 %v1677, %v1687
      %v1693 = vadd.f32 %v1678, %v1687
      %v1694 = vadd.f32 %v1679, %v1687
      %v1695 = vadd.f32 %v1680, %v1687
      %v1696 = vadd.f32 %v1681, %v1687
      %v1697 = vld [vmem:[%s266] sm:$0xff]
      %v1698 = vld [vmem:[%s266 + $0x8] sm:$0xff]
      %v1699 = vld [vmem:[%s266 + $0x10] sm:$0xff]
      %v1700 = vld [vmem:[%s266 + $0x18] sm:$0xff]
      %v1701 = vld [vmem:[%s266 + $0x20] sm:$0xff]
      %v1702 = vld [vmem:[%s266 + $0x28] sm:$0xff]
      %v1703 = vld [vmem:[%s266 + $0x30] sm:$0xff]
      %v1704 = vld [vmem:[%s266 + $0x38] sm:$0xff]
      %v1705 = vadd.f32 %v1689, %v1697
      %v1706 = vadd.f32 %v1690, %v1698
      %v1707 = vadd.f32 %v1691, %v1699
      %v1708 = vadd.f32 %v1692, %v1700
      %v1709 = vadd.f32 %v1693, %v1701
      %v1710 = vadd.f32 %v1694, %v1702
      %v1711 = vadd.f32 %v1695, %v1703
      %v1712 = vadd.f32 %v1696, %v1704
      %1713 = vst [vmem:[%s271] sm:$0xff] %v1705
      %1714 = vst [vmem:[%s271 + $0x8] sm:$0xff] %v1706
      %1715 = vst [vmem:[%s271 + $0x10] sm:$0xff] %v1707
      %1716 = vst [vmem:[%s271 + $0x18] sm:$0xff] %v1708
      %1717 = vst [vmem:[%s271 + $0x20] sm:$0xff] %v1709
      %1718 = vst [vmem:[%s271 + $0x28] sm:$0xff] %v1710
      %1719 = vst [vmem:[%s271 + $0x30] sm:$0xff] %v1711
      %1720 = vst [vmem:[%s271 + $0x38] sm:$0xff] %v1712
      %p1721 = scmp.lt.s32.totalorder %s17, 1
      %s1722 = scalar_select %p1721, %s17, 1
      %s1723 = smul.addr %s1722, 8
      %s1724 = smul.addr %s1723, 8
      %s1725 = scalar_lea.vmem %s6, %s1724
      // Predicated region
      $region45: #{_lambda_.15} parent=43 // pred_check
        %p1726 = pneg %p171
      $region46: #{_lambda_.15} parent=43 // pred_check_branch
        %1728 = sbr.rel (%p1726) target = $region48
      $region47: #{_lambda_.15} parent=43 // pred_region
        _
      $region48: #{_lambda_.15} parent=43 // pred_fallthru
        _
    $region44: #{_lambda_.15} parent=5 // pred_fallthru
      _
    %p1729 = scmp.le.s32.totalorder 2, %s12
    // Predicated region
    $region49: #{_lambda_.15} parent=5 // pred_check
      %p1730 = pneg %p1729
    $region50: #{_lambda_.15} parent=5 // pred_check_branch
      %1732 = sbr.rel (%p1730) target = $region52
    $region51: #{_lambda_.15} parent=5 // pred_region
      %s1733 = ssub.s32 %s12, 2
      // Predicated region
      $region53: #{_lambda_.15} parent=51 // pred_check
        %p1734 = pneg %p177
      $region54: #{_lambda_.15} parent=51 // pred_check_branch
        %1736 = sbr.rel (%p1734) target = $region56
      $region55: #{_lambda_.15} parent=51 // pred_region
        %p1737 = scmp.lt.s32.totalorder %s18, 1
        %s1738 = scalar_select %p1737, %s18, 1
        %s1739 = smul.addr %s1738, 8
        %s1740 = smul.addr %s1739, 8
        %s1741 = scalar_lea.vmem %s6, %s1740
      $region56: #{_lambda_.15} parent=51 // pred_fallthru
        _
    $region52: #{_lambda_.15} parent=5 // pred_fallthru
      _
  $region6: #{_lambda_.15} parent=0 // loop_footer
    %s16 = sadd.s32 1, %s12
  $region7: #{_lambda_.15} parent=0 // loop_footer_branch
    %11 = sbr.rel target = $region3
  $region8: #{_lambda_.15} parent=0 // loop_exit
    _

// kernel: _lambda_.17
$region0: #{_lambda_.17}
  #allocation0 [shape = 'u32[]', space=smem, size = 0x4, offset = 0x4, fixed_abs, tag = 'smem constant byte address 0x4 - core index']
  #allocation1 [shape = 'u32[144,128]{1,0:T(1,128)}', space=vmem, size = 0x12000, scoped, tag = 'internal scratch']
  #allocation2 [shape = 'f32[1,10,10,128]{3,2,1,0:T(8,128)}', space=vmem, size = 0x14000, scoped, tag = 'scratch operand']
  %s0 = inlined_call_operand.vmem [shape: f32[2,8,8,128], index: 0, kind: input, shape index: {}]
  %s1 = inlined_call_operand.vmem [shape: f32[1,128], index: 1, kind: input, shape index: {}]
  %s2 = inlined_call_operand.vmem [shape: f32[1,128], index: 2, kind: input, shape index: {}]
  %s3 = inlined_call_operand.vmem [shape: bf16[9,128,128], index: 3, kind: input, shape index: {}]
  %s4 = inlined_call_operand.vmem [shape: f32[1,128], index: 4, kind: input, shape index: {}]
  %s5 = inlined_call_operand.vmem [shape: f32[2,8,8,128], index: 5, kind: output, shape index: {}]
  %s6 = sld [smem:[#allocation0]]
  $region53: #{_lambda_.17} parent=0
    _
  %s8 = ssub.s32 1, %s6
  %s9 = scalar_select 0, %s8, %s6
  loop: start=0, step=1, limit=4
  $region2: #{_lambda_.17} parent=0 // loop_pre_header
    _
  $region3: #{_lambda_.17} parent=0 // loop_header
    %s11 = sphi 0, %s15
    %p12 = scmp.ge.s32.totalorder %s11, 4
    %s21 = sphi 0, %s23
    %s24 = sphi 0, %s21
    %s25 = sphi 0, %s24
    %s41 = sphi 0, %s25
    %s45 = sphi 0, %s45
    %s47 = sphi 0, %s45
    %s48 = sphi 0, %s47
    %s62 = sphi 0, %s48
    %s66 = sphi 0, %s66
    %s68 = sphi 0, %s66
    %s69 = sphi 0, %s68
    %s83 = sphi 0, %s69
    %s87 = sphi 0, %s87
    %s89 = sphi 0, %s87
    %s90 = sphi 0, %s89
    %s104 = sphi 0, %s90
    %s108 = sphi 0, %s108
    %s110 = sphi 0, %s108
    %s111 = sphi 0, %s110
    %s125 = sphi 0, %s111
    %s131 = sphi 0, %s133
    %s134 = sphi 0, %s131
    %s135 = sphi 0, %s134
    %s151 = sphi 0, %s135
  $region4: #{_lambda_.17} parent=0 // loop_header_branch
    %14 = sbr.rel (%p12) target = $region8
  $region5: #{_lambda_.17} parent=0 // loop_body
    %s16 = ssub.s32 %s11, 1
    %s17 = ssub.s32 %s11, 2
    %s18 = sadd.s32 %s11, 1
    %s19 = ssub.s32 %s11, %s18
    %p20 = scmp.eq.s32.totalorder %s19, 0
    %s22 = sadd.s32 %s21, 1
    %s23 = scalar_select %p20, %s21, %s22
    %p26 = pneg %p20
    %p27 = scmp.eq.s32.totalorder %s11, 1
    %p28 = por %p26, %p27
    %p29 = scmp.ne.s32.totalorder %s21, %s24
    %p30 = scmp.eq.s32.totalorder %s11, 0
    %p31 = por %p29, %p30
    %p32 = scmp.ne.s32.totalorder %s21, %s24
    %p33 = scmp.eq.s32.totalorder %s16, 1
    %p34 = por %p32, %p33
    %p35 = scmp.ne.s32.totalorder %s24, %s25
    %p36 = scmp.eq.s32.totalorder %s16, 0
    %p37 = por %p35, %p36
    %p38 = scmp.ne.s32.totalorder %s24, %s25
    %p39 = scmp.eq.s32.totalorder %s17, 1
    %p40 = por %p38, %p39
    %p42 = scmp.ne.s32.totalorder %s25, %s41
    %p43 = scmp.eq.s32.totalorder %s17, 0
    %p44 = por %p42, %p43
    %s46 = sadd.s32 %s45, 1
    %p49 = scmp.eq.s32.totalorder %s11, 1
    %p50 = scmp.ne.s32.totalorder %s45, %s47
    %p51 = scmp.eq.s32.totalorder %s11, 0
    %p52 = por %p50, %p51
    %p53 = scmp.ne.s32.totalorder %s45, %s47
    %p54 = scmp.eq.s32.totalorder %s16, 1
    %p55 = por %p53, %p54
    %p56 = scmp.ne.s32.totalorder %s47, %s48
    %p57 = scmp.eq.s32.totalorder %s16, 0
    %p58 = por %p56, %p57
    %p59 = scmp.ne.s32.totalorder %s47, %s48
    %p60 = scmp.eq.s32.totalorder %s17, 1
    %p61 = por %p59, %p60
    %p63 = scmp.ne.s32.totalorder %s48, %s62
    %p64 = scmp.eq.s32.totalorder %s17, 0
    %p65 = por %p63, %p64
    %s67 = sadd.s32 %s66, 1
    %p70 = scmp.eq.s32.totalorder %s11, 1
    %p71 = scmp.ne.s32.totalorder %s66, %s68
    %p72 = scmp.eq.s32.totalorder %s11, 0
    %p73 = por %p71, %p72
    %p74 = scmp.ne.s32.totalorder %s66, %s68
    %p75 = scmp.eq.s32.totalorder %s16, 1
    %p76 = por %p74, %p75
    %p77 = scmp.ne.s32.totalorder %s68, %s69
    %p78 = scmp.eq.s32.totalorder %s16, 0
    %p79 = por %p77, %p78
    %p80 = scmp.ne.s32.totalorder %s68, %s69
    %p81 = scmp.eq.s32.totalorder %s17, 1
    %p82 = por %p80, %p81
    %p84 = scmp.ne.s32.totalorder %s69, %s83
    %p85 = scmp.eq.s32.totalorder %s17, 0
    %p86 = por %p84, %p85
    %s88 = sadd.s32 %s87, 1
    %p91 = scmp.eq.s32.totalorder %s11, 1
    %p92 = scmp.ne.s32.totalorder %s87, %s89
    %p93 = scmp.eq.s32.totalorder %s11, 0
    %p94 = por %p92, %p93
    %p95 = scmp.ne.s32.totalorder %s87, %s89
    %p96 = scmp.eq.s32.totalorder %s16, 1
    %p97 = por %p95, %p96
    %p98 = scmp.ne.s32.totalorder %s89, %s90
    %p99 = scmp.eq.s32.totalorder %s16, 0
    %p100 = por %p98, %p99
    %p101 = scmp.ne.s32.totalorder %s89, %s90
    %p102 = scmp.eq.s32.totalorder %s17, 1
    %p103 = por %p101, %p102
    %p105 = scmp.ne.s32.totalorder %s90, %s104
    %p106 = scmp.eq.s32.totalorder %s17, 0
    %p107 = por %p105, %p106
    %s109 = sadd.s32 %s108, 1
    %p112 = scmp.eq.s32.totalorder %s11, 1
    %p113 = scmp.ne.s32.totalorder %s108, %s110
    %p114 = scmp.eq.s32.totalorder %s11, 0
    %p115 = por %p113, %p114
    %p116 = scmp.ne.s32.totalorder %s108, %s110
    %p117 = scmp.eq.s32.totalorder %s16, 1
    %p118 = por %p116, %p117
    %p119 = scmp.ne.s32.totalorder %s110, %s111
    %p120 = scmp.eq.s32.totalorder %s16, 0
    %p121 = por %p119, %p120
    %p122 = scmp.ne.s32.totalorder %s110, %s111
    %p123 = scmp.eq.s32.totalorder %s17, 1
    %p124 = por %p122, %p123
    %p126 = scmp.ne.s32.totalorder %s111, %s125
    %p127 = scmp.eq.s32.totalorder %s17, 0
    %p128 = por %p126, %p127
    %s129 = ssub.s32 %s11, %s18
    %p130 = scmp.eq.s32.totalorder %s129, 0
    %s132 = sadd.s32 %s131, 1
    %s133 = scalar_select %p130, %s131, %s132
    %p136 = pneg %p130
    %p137 = scmp.eq.s32.totalorder %s11, 1
    %p138 = por %p136, %p137
    %p139 = scmp.ne.s32.totalorder %s131, %s134
    %p140 = scmp.eq.s32.totalorder %s11, 0
    %p141 = por %p139, %p140
    %p142 = scmp.ne.s32.totalorder %s131, %s134
    %p143 = scmp.eq.s32.totalorder %s16, 1
    %p144 = por %p142, %p143
    %p145 = scmp.ne.s32.totalorder %s134, %s135
    %p146 = scmp.eq.s32.totalorder %s16, 0
    %p147 = por %p145, %p146
    %p148 = scmp.ne.s32.totalorder %s134, %s135
    %p149 = scmp.eq.s32.totalorder %s17, 1
    %p150 = por %p148, %p149
    %p152 = scmp.ne.s32.totalorder %s135, %s151
    %p153 = scmp.eq.s32.totalorder %s17, 0
    %p154 = por %p152, %p153
    %p155 = scmp.le.s32.totalorder 1, %s11
    %p156 = scmp.lt.s32.totalorder %s11, 3
    %p157 = pnand %p155, %p156
    %p158 = pneg %p157
    // Predicated region
    $region9: #{_lambda_.17} parent=5 // pred_check
      _
    $region10: #{_lambda_.17} parent=5 // pred_check_branch
      %160 = sbr.rel (%p157) target = $region12
    $region11: #{_lambda_.17} parent=5 // pred_region
      %s161 = ssub.s32 %s11, 1
      // Predicated region
      $region13: #{_lambda_.17} parent=11 // pred_check
        %p162 = pneg %p58
      $region14: #{_lambda_.17} parent=11 // pred_check_branch
        %164 = sbr.rel (%p162) target = $region16
      $region15: #{_lambda_.17} parent=11 // pred_region
        _
      $region16: #{_lambda_.17} parent=11 // pred_fallthru
        _
      // Predicated region
      $region17: #{_lambda_.17} parent=11 // pred_check
        %p165 = pneg %p79
      $region18: #{_lambda_.17} parent=11 // pred_check_branch
        %167 = sbr.rel (%p165) target = $region20
      $region19: #{_lambda_.17} parent=11 // pred_region
        _
      $region20: #{_lambda_.17} parent=11 // pred_fallthru
        _
      // Predicated region
      $region21: #{_lambda_.17} parent=11 // pred_check
        %p168 = pneg %p100
      $region22: #{_lambda_.17} parent=11 // pred_check_branch
        %170 = sbr.rel (%p168) target = $region24
      $region23: #{_lambda_.17} parent=11 // pred_region
        _
      $region24: #{_lambda_.17} parent=11 // pred_fallthru
        _
      // Predicated region
      $region25: #{_lambda_.17} parent=11 // pred_check
        %p171 = pneg %p121
      $region26: #{_lambda_.17} parent=11 // pred_check_branch
        %173 = sbr.rel (%p171) target = $region28
      $region27: #{_lambda_.17} parent=11 // pred_region
        _
      $region28: #{_lambda_.17} parent=11 // pred_fallthru
        _
    $region12: #{_lambda_.17} parent=5 // pred_fallthru
      _
    %p174 = scmp.lt.s32.totalorder %s11, 2
    // Predicated region
    $region29: #{_lambda_.17} parent=5 // pred_check
      %p175 = pneg %p174
    $region30: #{_lambda_.17} parent=5 // pred_check_branch
      %177 = sbr.rel (%p175) target = $region32
    $region31: #{_lambda_.17} parent=5 // pred_region
      // Predicated region
      $region33: #{_lambda_.17} parent=31 // pred_check
        %p178 = pneg %p31
      $region34: #{_lambda_.17} parent=31 // pred_check_branch
        %180 = sbr.rel (%p178) target = $region36
      $region35: #{_lambda_.17} parent=31 // pred_region
        %p181 = scmp.lt.s32.totalorder %s11, 1
        %s182 = scalar_select %p181, %s11, 1
        %s183 = smul.addr %s182, 8
        %s184 = smul.addr %s183, 8
        %s185 = scalar_lea.vmem %s0, %s184
      $region36: #{_lambda_.17} parent=31 // pred_fallthru
        _
    $region32: #{_lambda_.17} parent=5 // pred_fallthru
      _
    %p186 = scmp.le.s32.totalorder 1, %s11
    %p187 = scmp.lt.s32.totalorder %s11, 3
    %p188 = pnand %p186, %p187
    %p189 = pneg %p188
    // Predicated region
    $region37: #{_lambda_.17} parent=5 // pred_check
      _
    $region38: #{_lambda_.17} parent=5 // pred_check_branch
      %191 = sbr.rel (%p188) target = $region40
    $region39: #{_lambda_.17} parent=5 // pred_region
      %s192 = ssub.s32 %s11, 1
      %p193 = scmp.lt.s32.totalorder %s16, 1
      %s194 = scalar_select %p193, %s16, 1
      %s195 = smul.addr %s194, 8
      %s196 = smul.addr %s195, 8
      %s197 = scalar_lea.vmem %s0, %s196
      %p198 = pneg %p37
      %p199 = pneg %p34
      %p200 = pneg %p58
      %p201 = pneg %p55
      %p202 = pneg %p79
      %p203 = pneg %p76
      %p204 = pneg %p100
      %p205 = pneg %p97
      %p206 = pneg %p121
      %p207 = pneg %p118
      %p208 = pneg %p147
      %p209 = pneg %p144
      %p210 = scmp.lt.s32.totalorder %s16, 1
      %s211 = scalar_select %p210, %s16, 1
      %s212 = smul.addr %s211, 8
      %s213 = smul.addr %s212, 8
      %s214 = scalar_lea.vmem %s5, %s213
      %p215 = scmp.lt.s32.totalorder %s16, 1
      %s216 = scalar_select %p215, %s16, 1
      %s217 = smul.addr %s216, 8
      %s218 = smul.addr %s217, 8
      %s219 = scalar_lea.vmem %s0, %s218
      %p220 = scmp.lt.s32.totalorder %s16, 1
      %s221 = scalar_select %p220, %s16, 1
      %s222 = smul.addr %s221, 8
      %s223 = smul.addr %s222, 8
      %s224 = scalar_lea.vmem %s5, %s223
      %v226 = vld [vmem:[%s219] sm:$0xff]
      %v227 = vld [vmem:[%s219 + $0x8] sm:$0xff]
      %v228 = vld [vmem:[%s219 + $0x10] sm:$0xff]
      %v229 = vld [vmem:[%s219 + $0x18] sm:$0xff]
      %v230 = vld [vmem:[%s219 + $0x20] sm:$0xff]
      %v231 = vld [vmem:[%s219 + $0x28] sm:$0xff]
      %v232 = vld [vmem:[%s219 + $0x30] sm:$0xff]
      %v233 = vld [vmem:[%s219 + $0x38] sm:$0xff]
      %v234 = vld [vmem:[%s1] sm:$0x1]
      %v236 = vlaneseq
      %v237 = vshrl.u32 %v236, 7
      %v238 = vsub.s32 0, %v237
      %v239 = vrot.slane %v234, %v238
      %v241 = vmul.f32 %v226, %v239
      %v242 = vmul.f32 %v227, %v239
      %v243 = vmul.f32 %v228, %v239
      %v244 = vmul.f32 %v229, %v239
      %v245 = vmul.f32 %v230, %v239
      %v246 = vmul.f32 %v231, %v239
      %v247 = vmul.f32 %v232, %v239
      %v248 = vmul.f32 %v233, %v239
      %v249 = vld [vmem:[%s2] sm:$0x1]
      %v251 = vlaneseq
      %v252 = vshrl.u32 %v251, 7
      %v253 = vsub.s32 0, %v252
      %v254 = vrot.slane %v249, %v253
      %v256 = vadd.f32 %v241, %v254
      %v257 = vadd.f32 %v242, %v254
      %v258 = vadd.f32 %v243, %v254
      %v259 = vadd.f32 %v244, %v254
      %v260 = vadd.f32 %v245, %v254
      %v261 = vadd.f32 %v246, %v254
      %v262 = vadd.f32 %v247, %v254
      %v263 = vadd.f32 %v248, %v254
      %v264 = vmax.f32 %v256, 0.0
      %v265 = vmax.f32 %v257, 0.0
      %v266 = vmax.f32 %v258, 0.0
      %v267 = vmax.f32 %v259, 0.0
      %v268 = vmax.f32 %v260, 0.0
      %v269 = vmax.f32 %v261, 0.0
      %v270 = vmax.f32 %v262, 0.0
      %v271 = vmax.f32 %v263, 0.0
      %272 = vst [vmem:[#allocation2] sm:$0xff] 0.0
      %273 = vst [vmem:[#allocation2 + $0x8] sm:$0x3] 0.0
      %274 = vst [vmem:[#allocation2 + $0x10] sm:$0xff] 0.0
      %275 = vst [vmem:[#allocation2 + $0x18] sm:$0x3] 0.0
      %276 = vst [vmem:[#allocation2 + $0x20] sm:$0xff] 0.0
      %277 = vst [vmem:[#allocation2 + $0x28] sm:$0x3] 0.0
      %278 = vst [vmem:[#allocation2 + $0x30] sm:$0xff] 0.0
      %279 = vst [vmem:[#allocation2 + $0x38] sm:$0x3] 0.0
      %280 = vst [vmem:[#allocation2 + $0x40] sm:$0xff] 0.0
      %281 = vst [vmem:[#allocation2 + $0x48] sm:$0x3] 0.0
      %282 = vst [vmem:[#allocation2 + $0x50] sm:$0xff] 0.0
      %283 = vst [vmem:[#allocation2 + $0x58] sm:$0x3] 0.0
      %284 = vst [vmem:[#allocation2 + $0x60] sm:$0xff] 0.0
      %285 = vst [vmem:[#allocation2 + $0x68] sm:$0x3] 0.0
      %286 = vst [vmem:[#allocation2 + $0x70] sm:$0xff] 0.0
      %287 = vst [vmem:[#allocation2 + $0x78] sm:$0x3] 0.0
      %288 = vst [vmem:[#allocation2 + $0x80] sm:$0xff] 0.0
      %289 = vst [vmem:[#allocation2 + $0x88] sm:$0x3] 0.0
      %290 = vst [vmem:[#allocation2 + $0x90] sm:$0xff] 0.0
      %291 = vst [vmem:[#allocation2 + $0x98] sm:$0x3] 0.0
      %s292 = scalar_lea.vmem [#allocation2], 16
      %293 = vst [vmem:[%s292 + $0x1] sm:$0xff] %v264
      %294 = vst [vmem:[%s292 + $0x11] sm:$0xff] %v265
      %295 = vst [vmem:[%s292 + $0x21] sm:$0xff] %v266
      %296 = vst [vmem:[%s292 + $0x31] sm:$0xff] %v267
      %297 = vst [vmem:[%s292 + $0x41] sm:$0xff] %v268
      %298 = vst [vmem:[%s292 + $0x51] sm:$0xff] %v269
      %299 = vst [vmem:[%s292 + $0x61] sm:$0xff] %v270
      %300 = vst [vmem:[%s292 + $0x71] sm:$0xff] %v271
      %v301 = vld [vmem:[#allocation2] sm:$0xff]
      %v302 = vld [vmem:[#allocation2 + $0x10] sm:$0xff]
      %v303 = vld [vmem:[#allocation2 + $0x20] sm:$0xff]
      %v304 = vld [vmem:[#allocation2 + $0x30] sm:$0xff]
      %v305 = vld [vmem:[#allocation2 + $0x40] sm:$0xff]
      %v306 = vld [vmem:[#allocation2 + $0x50] sm:$0xff]
      %v307 = vld [vmem:[#allocation2 + $0x60] sm:$0xff]
      %v308 = vld [vmem:[#allocation2 + $0x70] sm:$0xff]
      %v309 = vpack.c.bf16 %v302, %v301
      %v310 = vpack.c.bf16 %v304, %v303
      %v311 = vpack.c.bf16 %v306, %v305
      %v312 = vpack.c.bf16 %v308, %v307
      %v313 = vld [vmem:[%s3] sm:$0xf]
      %v314 = vld [vmem:[%s3 + $0x4] sm:$0xf]
      %v315 = vld [vmem:[%s3 + $0x8] sm:$0xf]
      %v316 = vld [vmem:[%s3 + $0xc] sm:$0xf]
      %v317 = vld [vmem:[%s3 + $0x10] sm:$0xf]
      %v318 = vld [vmem:[%s3 + $0x14] sm:$0xf]
      %v319 = vld [vmem:[%s3 + $0x18] sm:$0xf]
      %v320 = vld [vmem:[%s3 + $0x1c] sm:$0xf]
      %v321 = vld [vmem:[%s3 + $0x20] sm:$0xf]
      %v322 = vld [vmem:[%s3 + $0x24] sm:$0xf]
      %v323 = vld [vmem:[%s3 + $0x28] sm:$0xf]
      %v324 = vld [vmem:[%s3 + $0x2c] sm:$0xf]
      %v325 = vld [vmem:[%s3 + $0x30] sm:$0xf]
      %v326 = vld [vmem:[%s3 + $0x34] sm:$0xf]
      %v327 = vld [vmem:[%s3 + $0x38] sm:$0xf]
      %v328 = vld [vmem:[%s3 + $0x3c] sm:$0xf]
      %v329 = vld [vmem:[#allocation2 + $0x1] sm:$0xff]
      %v330 = vld [vmem:[#allocation2 + $0x11] sm:$0xff]
      %v331 = vld [vmem:[#allocation2 + $0x21] sm:$0xff]
      %v332 = vld [vmem:[#allocation2 + $0x31] sm:$0xff]
      %v333 = vld [vmem:[#allocation2 + $0x41] sm:$0xff]
      %v334 = vld [vmem:[#allocation2 + $0x51] sm:$0xff]
      %v335 = vld [vmem:[#allocation2 + $0x61] sm:$0xff]
      %v336 = vld [vmem:[#allocation2 + $0x71] sm:$0xff]
      %v337 = vpack.c.bf16 %v330, %v329
      %v338 = vpack.c.bf16 %v332, %v331
      %v339 = vpack.c.bf16 %v334, %v333
      %v340 = vpack.c.bf16 %v336, %v335
      %s341 = scalar_lea.vmem %s3, 64
      %v342 = vld [vmem:[%s341] sm:$0xf]
      %v343 = vld [vmem:[%s341 + $0x4] sm:$0xf]
      %v344 = vld [vmem:[%s341 + $0x8] sm:$0xf]
      %v345 = vld [vmem:[%s341 + $0xc] sm:$0xf]
      %v346 = vld [vmem:[%s341 + $0x10] sm:$0xf]
      %v347 = vld [vmem:[%s341 + $0x14] sm:$0xf]
      %v348 = vld [vmem:[%s341 + $0x18] sm:$0xf]
      %v349 = vld [vmem:[%s341 + $0x1c] sm:$0xf]
      %v350 = vld [vmem:[%s341 + $0x20] sm:$0xf]
      %v351 = vld [vmem:[%s341 + $0x24] sm:$0xf]
      %v352 = vld [vmem:[%s341 + $0x28] sm:$0xf]
      %v353 = vld [vmem:[%s341 + $0x2c] sm:$0xf]
      %v354 = vld [vmem:[%s341 + $0x30] sm:$0xf]
      %v355 = vld [vmem:[%s341 + $0x34] sm:$0xf]
      %v356 = vld [vmem:[%s341 + $0x38] sm:$0xf]
      %v357 = vld [vmem:[%s341 + $0x3c] sm:$0xf]
      %v374 = vunpack.c.l.b16 %v342
      %v375 = vunpack.c.l.b16 %v343
      %v376 = vunpack.c.l.b16 %v344
      %v377 = vunpack.c.l.b16 %v345
      %v378 = vunpack.c.l.b16 %v346
      %v379 = vunpack.c.l.b16 %v347
      %v380 = vunpack.c.l.b16 %v348
      %v381 = vunpack.c.l.b16 %v349
      %v382 = vunpack.c.l.b16 %v350
      %v383 = vunpack.c.l.b16 %v351
      %v384 = vunpack.c.l.b16 %v352
      %v385 = vunpack.c.l.b16 %v353
      %v386 = vunpack.c.l.b16 %v354
      %v387 = vunpack.c.l.b16 %v355
      %v388 = vunpack.c.l.b16 %v356
      %v389 = vunpack.c.l.b16 %v357
      %v390 = vpack.c.b16 %v375, %v374
      %v391 = vpack.c.b16 %v377, %v376
      %v392 = vpack.c.b16 %v379, %v378
      %v393 = vpack.c.b16 %v381, %v380
      %v394 = vpack.c.b16 %v383, %v382
      %v395 = vpack.c.b16 %v385, %v384
      %v396 = vpack.c.b16 %v387, %v386
      %v397 = vpack.c.b16 %v389, %v388
      %406 = vmatprep.subr.bf16.mxu0 0
      %407 = vmatpush1.bf16.msra.mxu0 %v390
      %408 = vmatprep.subr.bf16.mxu0 0
      %409 = vmatpush1.bf16.msra.mxu0 %v391
      %410 = vmatprep.subr.bf16.mxu0 0
      %411 = vmatpush1.bf16.msra.mxu0 %v392
      %412 = vmatprep.subr.bf16.mxu0 0
      %413 = vmatpush1.bf16.msra.mxu0 %v393
      %414 = vmatprep.subr.bf16.mxu0 0
      %415 = vmatpush1.bf16.msra.mxu0 %v394
      %416 = vmatprep.subr.bf16.mxu0 0
      %417 = vmatpush1.bf16.msra.mxu0 %v395
      %418 = vmatprep.subr.bf16.mxu0 0
      %419 = vmatpush1.bf16.msra.mxu0 %v396
      %420 = vmatprep.subr.bf16.mxu0 0
      %421 = vmatpush1.bf16.msra.mxu0 %v397
      %422 = vmatprep.subr.bf16.mxu0 0
      %423 = vmatpush1.bf16.msra.mxu0 0
      %424 = vmatprep.subr.bf16.mxu0 0
      %425 = vmatpush1.bf16.msra.mxu0 0
      %426 = vmatprep.subr.bf16.mxu0 0
      %427 = vmatpush1.bf16.msra.mxu0 0
      %428 = vmatprep.subr.bf16.mxu0 0
      %429 = vmatpush1.bf16.msra.mxu0 0
      %430 = vmatprep.subr.bf16.mxu0 0
      %431 = vmatpush1.bf16.msra.mxu0 0
      %432 = vmatprep.subr.bf16.mxu0 0
      %433 = vmatpush1.bf16.msra.mxu0 0
      %434 = vmatprep.subr.bf16.mxu0 0
      %435 = vmatpush1.bf16.msra.mxu0 0
      %436 = vmatprep.subr.bf16.mxu0 0
      %437 = vmatpush1.bf16.msra.mxu0 0
      %438 = vmatprep.mubr.bf16.mxu0 0
      %439 = vmatmul.mubr.bf16.gmra.mrb[0].mxu0 %v337
      %v440 = vpop.f32.mrb[0].mxu0
      %v441 = vadd.f32 0.0, %v440
      %v442 = vpop.f32.mrb[0].mxu0
      %v443 = vpop.f32.mrb[0].mxu0
      %v444 = vadd.f32 0.0, %v443
      %v445 = vpop.f32.mrb[0].mxu0
      %446 = vmatprep.mubr.bf16.mxu0 0
      %447 = vmatmul.mubr.bf16.gmra.mrb[0].mxu0 %v338
      %v448 = vpop.f32.mrb[0].mxu0
      %v449 = vadd.f32 0.0, %v448
      %v450 = vpop.f32.mrb[0].mxu0
      %v451 = vpop.f32.mrb[0].mxu0
      %v452 = vadd.f32 0.0, %v451
      %v453 = vpop.f32.mrb[0].mxu0
      %454 = vmatprep.mubr.bf16.mxu0 0
      %455 = vmatmul.mubr.bf16.gmra.mrb[0].mxu0 %v339
      %v456 = vpop.f32.mrb[0].mxu0
      %v457 = vadd.f32 0.0, %v456
      %v458 = vpop.f32.mrb[0].mxu0
      %v459 = vpop.f32.mrb[0].mxu0
      %v460 = vadd.f32 0.0, %v459
      %v461 = vpop.f32.mrb[0].mxu0
      %462 = vmatprep.mubr.bf16.mxu0 0
      %463 = vmatmul.mubr.bf16.gmra.mrb[0].mxu0 %v340
      %v464 = vpop.f32.mrb[0].mxu0
      %v465 = vadd.f32 0.0, %v464
      %v466 = vpop.f32.mrb[0].mxu0
      %v467 = vpop.f32.mrb[0].mxu0
      %v468 = vadd.f32 0.0, %v467
      %v469 = vpop.f32.mrb[0].mxu0
      %470 = vdwg.mxu0
      %v487 = vunpack.c.l.b16 %v313
      %v488 = vunpack.c.l.b16 %v314
      %v489 = vunpack.c.l.b16 %v315
      %v490 = vunpack.c.l.b16 %v316
      %v491 = vunpack.c.l.b16 %v317
      %v492 = vunpack.c.l.b16 %v318
      %v493 = vunpack.c.l.b16 %v319
      %v494 = vunpack.c.l.b16 %v320
      %v495 = vunpack.c.l.b16 %v321
      %v496 = vunpack.c.l.b16 %v322
      %v497 = vunpack.c.l.b16 %v323
      %v498 = vunpack.c.l.b16 %v324
      %v499 = vunpack.c.l.b16 %v325
      %v500 = vunpack.c.l.b16 %v326
      %v501 = vunpack.c.l.b16 %v327
      %v502 = vunpack.c.l.b16 %v328
      %v503 = vpack.c.b16 %v488, %v487
      %v504 = vpack.c.b16 %v490, %v489
      %v505 = vpack.c.b16 %v492, %v491
      %v506 = vpack.c.b16 %v494, %v493
      %v507 = vpack.c.b16 %v496, %v495
      %v508 = vpack.c.b16 %v498, %v497
      %v509 = vpack.c.b16 %v500, %v499
      %v510 = vpack.c.b16 %v502, %v501
      %519 = vmatprep.subr.bf16.mxu0 0
      %520 = vmatpush1.bf16.msra.mxu0 %v503
      %521 = vmatprep.subr.bf16.mxu0 0
      %522 = vmatpush1.bf16.msra.mxu0 %v504
      %523 = vmatprep.subr.bf16.mxu0 0
      %524 = vmatpush1.bf16.msra.mxu0 %v505
      %525 = vmatprep.subr.bf16.mxu0 0
      %526 = vmatpush1.bf16.msra.mxu0 %v506
      %527 = vmatprep.subr.bf16.mxu0 0
      %528 = vmatpush1.bf16.msra.mxu0 %v507
      %529 = vmatprep.subr.bf16.mxu0 0
      %530 = vmatpush1.bf16.msra.mxu0 %v508
      %531 = vmatprep.subr.bf16.mxu0 0
      %532 = vmatpush1.bf16.msra.mxu0 %v509
      %533 = vmatprep.subr.bf16.mxu0 0
      %534 = vmatpush1.bf16.msra.mxu0 %v510
      %535 = vmatprep.subr.bf16.mxu0 0
      %536 = vmatpush1.bf16.msra.mxu0 0
      %537 = vmatprep.subr.bf16.mxu0 0
      %538 = vmatpush1.bf16.msra.mxu0 0
      %539 = vmatprep.subr.bf16.mxu0 0
      %540 = vmatpush1.bf16.msra.mxu0 0
      %541 = vmatprep.subr.bf16.mxu0 0
      %542 = vmatpush1.bf16.msra.mxu0 0
      %543 = vmatprep.subr.bf16.mxu0 0
      %544 = vmatpush1.bf16.msra.mxu0 0
      %545 = vmatprep.subr.bf16.mxu0 0
      %546 = vmatpush1.bf16.msra.mxu0 0
      %547 = vmatprep.subr.bf16.mxu0 0
      %548 = vmatpush1.bf16.msra.mxu0 0
      %549 = vmatprep.subr.bf16.mxu0 0
      %550 = vmatpush1.bf16.msra.mxu0 0
      %551 = vmatprep.mubr.bf16.mxu0 0
      %552 = vmatmul.mubr.bf16.gmra.mrb[0].mxu0 %v309
      %v553 = vpop.f32.mrb[0].mxu0
      %v554 = vadd.f32 %v441, %v553
      %v555 = vpop.f32.mrb[0].mxu0
      %v556 = vpop.f32.mrb[0].mxu0
      %v557 = vadd.f32 %v444, %v556
      %v558 = vpop.f32.mrb[0].mxu0
      %559 = vmatprep.mubr.bf16.mxu0 0
      %560 = vmatmul.mubr.bf16.gmra.mrb[0].mxu0 %v310
      %v561 = vpop.f32.mrb[0].mxu0
      %v562 = vadd.f32 %v449, %v561
      %v563 = vpop.f32.mrb[0].mxu0
      %v564 = vpop.f32.mrb[0].mxu0
      %v565 = vadd.f32 %v452, %v564
      %v566 = vpop.f32.mrb[0].mxu0
      %567 = vmatprep.mubr.bf16.mxu0 0
      %568 = vmatmul.mubr.bf16.gmra.mrb[0].mxu0 %v311
      %v569 = vpop.f32.mrb[0].mxu0
      %v570 = vadd.f32 %v457, %v569
      %v571 = vpop.f32.mrb[0].mxu0
      %v572 = vpop.f32.mrb[0].mxu0
      %v573 = vadd.f32 %v460, %v572
      %v574 = vpop.f32.mrb[0].mxu0
      %575 = vmatprep.mubr.bf16.mxu0 0
      %576 = vmatmul.mubr.bf16.gmra.mrb[0].mxu0 %v312
      %v577 = vpop.f32.mrb[0].mxu0
      %v578 = vadd.f32 %v465, %v577
      %v579 = vpop.f32.mrb[0].mxu0
      %v580 = vpop.f32.mrb[0].mxu0
      %v581 = vadd.f32 %v468, %v580
      %v582 = vpop.f32.mrb[0].mxu0
      %583 = vdwg.mxu0
      %v584 = vld [vmem:[#allocation2 + $0x2] sm:$0xff]
      %v585 = vld [vmem:[#allocation2 + $0x12] sm:$0xff]
      %v586 = vld [vmem:[#allocation2 + $0x22] sm:$0xff]
      %v587 = vld [vmem:[#allocation2 + $0x32] sm:$0xff]
      %v588 = vld [vmem:[#allocation2 + $0x42] sm:$0xff]
      %v589 = vld [vmem:[#allocation2 + $0x52] sm:$0xff]
      %v590 = vld [vmem:[#allocation2 + $0x62] sm:$0xff]
      %v591 = vld [vmem:[#allocation2 + $0x72] sm:$0xff]
      %v592 = vpack.c.bf16 %v585, %v584
      %v593 = vpack.c.bf16 %v587, %v586
      %v594 = vpack.c.bf16 %v589, %v588
      %v595 = vpack.c.bf16 %v591, %v590
      %s596 = scalar_lea.vmem %s3, 128
      %v597 = vld [vmem:[%s596] sm:$0xf]
      %v598 = vld [vmem:[%s596 + $0x4] sm:$0xf]
      %v599 = vld [vmem:[%s596 + $0x8] sm:$0xf]
      %v600 = vld [vmem:[%s596 + $0xc] sm:$0xf]
      %v601 = vld [vmem:[%s596 + $0x10] sm:$0xf]
      %v602 = vld [vmem:[%s596 + $0x14] sm:$0xf]
      %v603 = vld [vmem:[%s596 + $0x18] sm:$0xf]
      %v604 = vld [vmem:[%s596 + $0x1c] sm:$0xf]
      %v605 = vld [vmem:[%s596 + $0x20] sm:$0xf]
      %v606 = vld [vmem:[%s596 + $0x24] sm:$0xf]
      %v607 = vld [vmem:[%s596 + $0x28] sm:$0xf]
      %v608 = vld [vmem:[%s596 + $0x2c] sm:$0xf]
      %v609 = vld [vmem:[%s596 + $0x30] sm:$0xf]
      %v610 = vld [vmem:[%s596 + $0x34] sm:$0xf]
      %v611 = vld [vmem:[%s596 + $0x38] sm:$0xf]
      %v612 = vld [vmem:[%s596 + $0x3c] sm:$0xf]
      %v629 = vunpack.c.l.b16 %v597
      %v630 = vunpack.c.l.b16 %v598
      %v631 = vunpack.c.l.b16 %v599
      %v632 = vunpack.c.l.b16 %v600
      %v633 = vunpack.c.l.b16 %v601
      %v634 = vunpack.c.l.b16 %v602
      %v635 = vunpack.c.l.b16 %v603
      %v636 = vunpack.c.l.b16 %v604
      %v637 = vunpack.c.l.b16 %v605
      %v638 = vunpack.c.l.b16 %v606
      %v639 = vunpack.c.l.b16 %v607
      %v640 = vunpack.c.l.b16 %v608
      %v641 = vunpack.c.l.b16 %v609
      %v642 = vunpack.c.l.b16 %v610
      %v643 = vunpack.c.l.b16 %v611
      %v644 = vunpack.c.l.b16 %v612
      %v645 = vpack.c.b16 %v630, %v629
      %v646 = vpack.c.b16 %v632, %v631
      %v647 = vpack.c.b16 %v634, %v633
      %v648 = vpack.c.b16 %v636, %v635
      %v649 = vpack.c.b16 %v638, %v637
      %v650 = vpack.c.b16 %v640, %v639
      %v651 = vpack.c.b16 %v642, %v641
      %v652 = vpack.c.b16 %v644, %v643
      %661 = vmatprep.subr.bf16.mxu0 0
      %662 = vmatpush1.bf16.msra.mxu0 %v645
      %663 = vmatprep.subr.bf16.mxu0 0
      %664 = vmatpush1.bf16.msra.mxu0 %v646
      %665 = vmatprep.subr.bf16.mxu0 0
      %666 = vmatpush1.bf16.msra.mxu0 %v647
      %667 = vmatprep.subr.bf16.mxu0 0
      %668 = vmatpush1.bf16.msra.mxu0 %v648
      %669 = vmatprep.subr.bf16.mxu0 0
      %670 = vmatpush1.bf16.msra.mxu0 %v649
      %671 = vmatprep.subr.bf16.mxu0 0
      %672 = vmatpush1.bf16.msra.mxu0 %v650
      %673 = vmatprep.subr.bf16.mxu0 0
      %674 = vmatpush1.bf16.msra.mxu0 %v651
      %675 = vmatprep.subr.bf16.mxu0 0
      %676 = vmatpush1.bf16.msra.mxu0 %v652
      %677 = vmatprep.subr.bf16.mxu0 0
      %678 = vmatpush1.bf16.msra.mxu0 0
      %679 = vmatprep.subr.bf16.mxu0 0
      %680 = vmatpush1.bf16.msra.mxu0 0
      %681 = vmatprep.subr.bf16.mxu0 0
      %682 = vmatpush1.bf16.msra.mxu0 0
      %683 = vmatprep.subr.bf16.mxu0 0
      %684 = vmatpush1.bf16.msra.mxu0 0
      %685 = vmatprep.subr.bf16.mxu0 0
      %686 = vmatpush1.bf16.msra.mxu0 0
      %687 = vmatprep.subr.bf16.mxu0 0
      %688 = vmatpush1.bf16.msra.mxu0 0
      %689 = vmatprep.subr.bf16.mxu0 0
      %690 = vmatpush1.bf16.msra.mxu0 0
      %691 = vmatprep.subr.bf16.mxu0 0
      %692 = vmatpush1.bf16.msra.mxu0 0
      %693 = vmatprep.mubr.bf16.mxu0 0
      %694 = vmatmul.mubr.bf16.gmra.mrb[0].mxu0 %v592
      %v695 = vpop.f32.mrb[0].mxu0
      %v696 = vadd.f32 0.0, %v695
      %v697 = vpop.f32.mrb[0].mxu0
      %v698 = vpop.f32.mrb[0].mxu0
      %v699 = vadd.f32 0.0, %v698
      %v700 = vpop.f32.mrb[0].mxu0
      %701 = vmatprep.mubr.bf16.mxu0 0
      %702 = vmatmul.mubr.bf16.gmra.mrb[0].mxu0 %v593
      %v703 = vpop.f32.mrb[0].mxu0
      %v704 = vadd.f32 0.0, %v703
      %v705 = vpop.f32.mrb[0].mxu0
      %v706 = vpop.f32.mrb[0].mxu0
      %v707 = vadd.f32 0.0, %v706
      %v708 = vpop.f32.mrb[0].mxu0
      %709 = vmatprep.mubr.bf16.mxu0 0
      %710 = vmatmul.mubr.bf16.gmra.mrb[0].mxu0 %v594
      %v711 = vpop.f32.mrb[0].mxu0
      %v712 = vadd.f32 0.0, %v711
      %v713 = vpop.f32.mrb[0].mxu0
      %v714 = vpop.f32.mrb[0].mxu0
      %v715 = vadd.f32 0.0, %v714
      %v716 = vpop.f32.mrb[0].mxu0
      %717 = vmatprep.mubr.bf16.mxu0 0
      %718 = vmatmul.mubr.bf16.gmra.mrb[0].mxu0 %v595
      %v719 = vpop.f32.mrb[0].mxu0
      %v720 = vadd.f32 0.0, %v719
      %v721 = vpop.f32.mrb[0].mxu0
      %v722 = vpop.f32.mrb[0].mxu0
      %v723 = vadd.f32 0.0, %v722
      %v724 = vpop.f32.mrb[0].mxu0
      %725 = vdwg.mxu0
      %v726 = vadd.f32 %v554, %v696
      %v727 = vadd.f32 %v557, %v699
      %v728 = vadd.f32 %v562, %v704
      %v729 = vadd.f32 %v565, %v707
      %v730 = vadd.f32 %v570, %v712
      %v731 = vadd.f32 %v573, %v715
      %v732 = vadd.f32 %v578, %v720
      %v733 = vadd.f32 %v581, %v723
      %v734 = vld [vmem:[%s292] sm:$0xff]
      %v735 = vld [vmem:[%s292 + $0x10] sm:$0xff]
      %v736 = vld [vmem:[%s292 + $0x20] sm:$0xff]
      %v737 = vld [vmem:[%s292 + $0x30] sm:$0xff]
      %v738 = vld [vmem:[%s292 + $0x40] sm:$0xff]
      %v739 = vld [vmem:[%s292 + $0x50] sm:$0xff]
      %v740 = vld [vmem:[%s292 + $0x60] sm:$0xff]
      %v741 = vld [vmem:[%s292 + $0x70] sm:$0xff]
      %v742 = vpack.c.bf16 %v735, %v734
      %v743 = vpack.c.bf16 %v737, %v736
      %v744 = vpack.c.bf16 %v739, %v738
      %v745 = vpack.c.bf16 %v741, %v740
      %s746 = scalar_lea.vmem %s3, 192
      %v747 = vld [vmem:[%s746] sm:$0xf]
      %v748 = vld [vmem:[%s746 + $0x4] sm:$0xf]
      %v749 = vld [vmem:[%s746 + $0x8] sm:$0xf]
      %v750 = vld [vmem:[%s746 + $0xc] sm:$0xf]
      %v751 = vld [vmem:[%s746 + $0x10] sm:$0xf]
      %v752 = vld [vmem:[%s746 + $0x14] sm:$0xf]
      %v753 = vld [vmem:[%s746 + $0x18] sm:$0xf]
      %v754 = vld [vmem:[%s746 + $0x1c] sm:$0xf]
      %v755 = vld [vmem:[%s746 + $0x20] sm:$0xf]
      %v756 = vld [vmem:[%s746 + $0x24] sm:$0xf]
      %v757 = vld [vmem:[%s746 + $0x28] sm:$0xf]
      %v758 = vld [vmem:[%s746 + $0x2c] sm:$0xf]
      %v759 = vld [vmem:[%s746 + $0x30] sm:$0xf]
      %v760 = vld [vmem:[%s746 + $0x34] sm:$0xf]
      %v761 = vld [vmem:[%s746 + $0x38] sm:$0xf]
      %v762 = vld [vmem:[%s746 + $0x3c] sm:$0xf]
      %v779 = vunpack.c.l.b16 %v747
      %v780 = vunpack.c.l.b16 %v748
      %v781 = vunpack.c.l.b16 %v749
      %v782 = vunpack.c.l.b16 %v750
      %v783 = vunpack.c.l.b16 %v751
      %v784 = vunpack.c.l.b16 %v752
      %v785 = vunpack.c.l.b16 %v753
      %v786 = vunpack.c.l.b16 %v754
      %v787 = vunpack.c.l.b16 %v755
      %v788 = vunpack.c.l.b16 %v756
      %v789 = vunpack.c.l.b16 %v757
      %v790 = vunpack.c.l.b16 %v758
      %v791 = vunpack.c.l.b16 %v759
      %v792 = vunpack.c.l.b16 %v760
      %v793 = vunpack.c.l.b16 %v761
      %v794 = vunpack.c.l.b16 %v762
      %v795 = vpack.c.b16 %v780, %v779
      %v796 = vpack.c.b16 %v782, %v781
      %v797 = vpack.c.b16 %v784, %v783
      %v798 = vpack.c.b16 %v786, %v785
      %v799 = vpack.c.b16 %v788, %v787
      %v800 = vpack.c.b16 %v790, %v789
      %v801 = vpack.c.b16 %v792, %v791
      %v802 = vpack.c.b16 %v794, %v793
      %811 = vmatprep.subr.bf16.mxu0 0
      %812 = vmatpush1.bf16.msra.mxu0 %v795
      %813 = vmatprep.subr.bf16.mxu0 0
      %814 = vmatpush1.bf16.msra.mxu0 %v796
      %815 = vmatprep.subr.bf16.mxu0 0
      %816 = vmatpush1.bf16.msra.mxu0 %v797
      %817 = vmatprep.subr.bf16.mxu0 0
      %818 = vmatpush1.bf16.msra.mxu0 %v798
      %819 = vmatprep.subr.bf16.mxu0 0
      %820 = vmatpush1.bf16.msra.mxu0 %v799
      %821 = vmatprep.subr.bf16.mxu0 0
      %822 = vmatpush1.bf16.msra.mxu0 %v800
      %823 = vmatprep.subr.bf16.mxu0 0
      %824 = vmatpush1.bf16.msra.mxu0 %v801
      %825 = vmatprep.subr.bf16.mxu0 0
      %826 = vmatpush1.bf16.msra.mxu0 %v802
      %827 = vmatprep.subr.bf16.mxu0 0
      %828 = vmatpush1.bf16.msra.mxu0 0
      %829 = vmatprep.subr.bf16.mxu0 0
      %830 = vmatpush1.bf16.msra.mxu0 0
      %831 = vmatprep.subr.bf16.mxu0 0
      %832 = vmatpush1.bf16.msra.mxu0 0
      %833 = vmatprep.subr.bf16.mxu0 0
      %834 = vmatpush1.bf16.msra.mxu0 0
      %835 = vmatprep.subr.bf16.mxu0 0
      %836 = vmatpush1.bf16.msra.mxu0 0
      %837 = vmatprep.subr.bf16.mxu0 0
      %838 = vmatpush1.bf16.msra.mxu0 0
      %839 = vmatprep.subr.bf16.mxu0 0
      %840 = vmatpush1.bf16.msra.mxu0 0
      %841 = vmatprep.subr.bf16.mxu0 0
      %842 = vmatpush1.bf16.msra.mxu0 0
      %843 = vmatprep.mubr.bf16.mxu0 0
      %844 = vmatmul.mubr.bf16.gmra.mrb[0].mxu0 %v742
      %v845 = vpop.f32.mrb[0].mxu0
      %v846 = vadd.f32 0.0, %v845
      %v847 = vpop.f32.mrb[0].mxu0
      %v848 = vpop.f32.mrb[0].mxu0
      %v849 = vadd.f32 0.0, %v848
      %v850 = vpop.f32.mrb[0].mxu0
      %851 = vmatprep.mubr.bf16.mxu0 0
      %852 = vmatmul.mubr.bf16.gmra.mrb[0].mxu0 %v743
      %v853 = vpop.f32.mrb[0].mxu0
      %v854 = vadd.f32 0.0, %v853
      %v855 = vpop.f32.mrb[0].mxu0
      %v856 = vpop.f32.mrb[0].mxu0
      %v857 = vadd.f32 0.0, %v856
      %v858 = vpop.f32.mrb[0].mxu0
      %859 = vmatprep.mubr.bf16.mxu0 0
      %860 = vmatmul.mubr.bf16.gmra.mrb[0].mxu0 %v744
      %v861 = vpop.f32.mrb[0].mxu0
      %v862 = vadd.f32 0.0, %v861
      %v863 = vpop.f32.mrb[0].mxu0
      %v864 = vpop.f32.mrb[0].mxu0
      %v865 = vadd.f32 0.0, %v864
      %v866 = vpop.f32.mrb[0].mxu0
      %867 = vmatprep.mubr.bf16.mxu0 0
      %868 = vmatmul.mubr.bf16.gmra.mrb[0].mxu0 %v745
      %v869 = vpop.f32.mrb[0].mxu0
      %v870 = vadd.f32 0.0, %v869
      %v871 = vpop.f32.mrb[0].mxu0
      %v872 = vpop.f32.mrb[0].mxu0
      %v873 = vadd.f32 0.0, %v872
      %v874 = vpop.f32.mrb[0].mxu0
      %875 = vdwg.mxu0
      %v876 = vadd.f32 %v726, %v846
      %v877 = vadd.f32 %v727, %v849
      %v878 = vadd.f32 %v728, %v854
      %v879 = vadd.f32 %v729, %v857
      %v880 = vadd.f32 %v730, %v862
      %v881 = vadd.f32 %v731, %v865
      %v882 = vadd.f32 %v732, %v870
      %v883 = vadd.f32 %v733, %v873
      %v884 = vld [vmem:[%s292 + $0x1] sm:$0xff]
      %v885 = vld [vmem:[%s292 + $0x11] sm:$0xff]
      %v886 = vld [vmem:[%s292 + $0x21] sm:$0xff]
      %v887 = vld [vmem:[%s292 + $0x31] sm:$0xff]
      %v888 = vld [vmem:[%s292 + $0x41] sm:$0xff]
      %v889 = vld [vmem:[%s292 + $0x51] sm:$0xff]
      %v890 = vld [vmem:[%s292 + $0x61] sm:$0xff]
      %v891 = vld [vmem:[%s292 + $0x71] sm:$0xff]
      %v892 = vpack.c.bf16 %v885, %v884
      %v893 = vpack.c.bf16 %v887, %v886
      %v894 = vpack.c.bf16 %v889, %v888
      %v895 = vpack.c.bf16 %v891, %v890
      %s896 = scalar_lea.vmem %s3, 256
      %v897 = vld [vmem:[%s896] sm:$0xf]
      %v898 = vld [vmem:[%s896 + $0x4] sm:$0xf]
      %v899 = vld [vmem:[%s896 + $0x8] sm:$0xf]
      %v900 = vld [vmem:[%s896 + $0xc] sm:$0xf]
      %v901 = vld [vmem:[%s896 + $0x10] sm:$0xf]
      %v902 = vld [vmem:[%s896 + $0x14] sm:$0xf]
      %v903 = vld [vmem:[%s896 + $0x18] sm:$0xf]
      %v904 = vld [vmem:[%s896 + $0x1c] sm:$0xf]
      %v905 = vld [vmem:[%s896 + $0x20] sm:$0xf]
      %v906 = vld [vmem:[%s896 + $0x24] sm:$0xf]
      %v907 = vld [vmem:[%s896 + $0x28] sm:$0xf]
      %v908 = vld [vmem:[%s896 + $0x2c] sm:$0xf]
      %v909 = vld [vmem:[%s896 + $0x30] sm:$0xf]
      %v910 = vld [vmem:[%s896 + $0x34] sm:$0xf]
      %v911 = vld [vmem:[%s896 + $0x38] sm:$0xf]
      %v912 = vld [vmem:[%s896 + $0x3c] sm:$0xf]
      %v929 = vunpack.c.l.b16 %v897
      %v930 = vunpack.c.l.b16 %v898
      %v931 = vunpack.c.l.b16 %v899
      %v932 = vunpack.c.l.b16 %v900
      %v933 = vunpack.c.l.b16 %v901
      %v934 = vunpack.c.l.b16 %v902
      %v935 = vunpack.c.l.b16 %v903
      %v936 = vunpack.c.l.b16 %v904
      %v937 = vunpack.c.l.b16 %v905
      %v938 = vunpack.c.l.b16 %v906
      %v939 = vunpack.c.l.b16 %v907
      %v940 = vunpack.c.l.b16 %v908
      %v941 = vunpack.c.l.b16 %v909
      %v942 = vunpack.c.l.b16 %v910
      %v943 = vunpack.c.l.b16 %v911
      %v944 = vunpack.c.l.b16 %v912
      %v945 = vpack.c.b16 %v930, %v929
      %v946 = vpack.c.b16 %v932, %v931
      %v947 = vpack.c.b16 %v934, %v933
      %v948 = vpack.c.b16 %v936, %v935
      %v949 = vpack.c.b16 %v938, %v937
      %v950 = vpack.c.b16 %v940, %v939
      %v951 = vpack.c.b16 %v942, %v941
      %v952 = vpack.c.b16 %v944, %v943
      %961 = vmatprep.subr.bf16.mxu0 0
      %962 = vmatpush1.bf16.msra.mxu0 %v945
      %963 = vmatprep.subr.bf16.mxu0 0
      %964 = vmatpush1.bf16.msra.mxu0 %v946
      %965 = vmatprep.subr.bf16.mxu0 0
      %966 = vmatpush1.bf16.msra.mxu0 %v947
      %967 = vmatprep.subr.bf16.mxu0 0
      %968 = vmatpush1.bf16.msra.mxu0 %v948
      %969 = vmatprep.subr.bf16.mxu0 0
      %970 = vmatpush1.bf16.msra.mxu0 %v949
      %971 = vmatprep.subr.bf16.mxu0 0
      %972 = vmatpush1.bf16.msra.mxu0 %v950
      %973 = vmatprep.subr.bf16.mxu0 0
      %974 = vmatpush1.bf16.msra.mxu0 %v951
      %975 = vmatprep.subr.bf16.mxu0 0
      %976 = vmatpush1.bf16.msra.mxu0 %v952
      %977 = vmatprep.subr.bf16.mxu0 0
      %978 = vmatpush1.bf16.msra.mxu0 0
      %979 = vmatprep.subr.bf16.mxu0 0
      %980 = vmatpush1.bf16.msra.mxu0 0
      %981 = vmatprep.subr.bf16.mxu0 0
      %982 = vmatpush1.bf16.msra.mxu0 0
      %983 = vmatprep.subr.bf16.mxu0 0
      %984 = vmatpush1.bf16.msra.mxu0 0
      %985 = vmatprep.subr.bf16.mxu0 0
      %986 = vmatpush1.bf16.msra.mxu0 0
      %987 = vmatprep.subr.bf16.mxu0 0
      %988 = vmatpush1.bf16.msra.mxu0 0
      %989 = vmatprep.subr.bf16.mxu0 0
      %990 = vmatpush1.bf16.msra.mxu0 0
      %991 = vmatprep.subr.bf16.mxu0 0
      %992 = vmatpush1.bf16.msra.mxu0 0
      %993 = vmatprep.mubr.bf16.mxu0 0
      %994 = vmatmul.mubr.bf16.gmra.mrb[0].mxu0 %v892
      %v995 = vpop.f32.mrb[0].mxu0
      %v996 = vadd.f32 0.0, %v995
      %v997 = vpop.f32.mrb[0].mxu0
      %v998 = vpop.f32.mrb[0].mxu0
      %v999 = vadd.f32 0.0, %v998
      %v1000 = vpop.f32.mrb[0].mxu0
      %1001 = vmatprep.mubr.bf16.mxu0 0
      %1002 = vmatmul.mubr.bf16.gmra.mrb[0].mxu0 %v893
      %v1003 = vpop.f32.mrb[0].mxu0
      %v1004 = vadd.f32 0.0, %v1003
      %v1005 = vpop.f32.mrb[0].mxu0
      %v1006 = vpop.f32.mrb[0].mxu0
      %v1007 = vadd.f32 0.0, %v1006
      %v1008 = vpop.f32.mrb[0].mxu0
      %1009 = vmatprep.mubr.bf16.mxu0 0
      %1010 = vmatmul.mubr.bf16.gmra.mrb[0].mxu0 %v894
      %v1011 = vpop.f32.mrb[0].mxu0
      %v1012 = vadd.f32 0.0, %v1011
      %v1013 = vpop.f32.mrb[0].mxu0
      %v1014 = vpop.f32.mrb[0].mxu0
      %v1015 = vadd.f32 0.0, %v1014
      %v1016 = vpop.f32.mrb[0].mxu0
      %1017 = vmatprep.mubr.bf16.mxu0 0
      %1018 = vmatmul.mubr.bf16.gmra.mrb[0].mxu0 %v895
      %v1019 = vpop.f32.mrb[0].mxu0
      %v1020 = vadd.f32 0.0, %v1019
      %v1021 = vpop.f32.mrb[0].mxu0
      %v1022 = vpop.f32.mrb[0].mxu0
      %v1023 = vadd.f32 0.0, %v1022
      %v1024 = vpop.f32.mrb[0].mxu0
      %1025 = vdwg.mxu0
      %v1026 = vadd.f32 %v876, %v996
      %v1027 = vadd.f32 %v877, %v999
      %v1028 = vadd.f32 %v878, %v1004
      %v1029 = vadd.f32 %v879, %v1007
      %v1030 = vadd.f32 %v880, %v1012
      %v1031 = vadd.f32 %v881, %v1015
      %v1032 = vadd.f32 %v882, %v1020
      %v1033 = vadd.f32 %v883, %v1023
      %v1034 = vld [vmem:[%s292 + $0x2] sm:$0xff]
      %v1035 = vld [vmem:[%s292 + $0x12] sm:$0xff]
      %v1036 = vld [vmem:[%s292 + $0x22] sm:$0xff]
      %v1037 = vld [vmem:[%s292 + $0x32] sm:$0xff]
      %v1038 = vld [vmem:[%s292 + $0x42] sm:$0xff]
      %v1039 = vld [vmem:[%s292 + $0x52] sm:$0xff]
      %v1040 = vld [vmem:[%s292 + $0x62] sm:$0xff]
      %v1041 = vld [vmem:[%s292 + $0x72] sm:$0xff]
      %v1042 = vpack.c.bf16 %v1035, %v1034
      %v1043 = vpack.c.bf16 %v1037, %v1036
      %v1044 = vpack.c.bf16 %v1039, %v1038
      %v1045 = vpack.c.bf16 %v1041, %v1040
      %s1046 = scalar_lea.vmem %s3, 320
      %v1047 = vld [vmem:[%s1046] sm:$0xf]
      %v1048 = vld [vmem:[%s1046 + $0x4] sm:$0xf]
      %v1049 = vld [vmem:[%s1046 + $0x8] sm:$0xf]
      %v1050 = vld [vmem:[%s1046 + $0xc] sm:$0xf]
      %v1051 = vld [vmem:[%s1046 + $0x10] sm:$0xf]
      %v1052 = vld [vmem:[%s1046 + $0x14] sm:$0xf]
      %v1053 = vld [vmem:[%s1046 + $0x18] sm:$0xf]
      %v1054 = vld [vmem:[%s1046 + $0x1c] sm:$0xf]
      %v1055 = vld [vmem:[%s1046 + $0x20] sm:$0xf]
      %v1056 = vld [vmem:[%s1046 + $0x24] sm:$0xf]
      %v1057 = vld [vmem:[%s1046 + $0x28] sm:$0xf]
      %v1058 = vld [vmem:[%s1046 + $0x2c] sm:$0xf]
      %v1059 = vld [vmem:[%s1046 + $0x30] sm:$0xf]
      %v1060 = vld [vmem:[%s1046 + $0x34] sm:$0xf]
      %v1061 = vld [vmem:[%s1046 + $0x38] sm:$0xf]
      %v1062 = vld [vmem:[%s1046 + $0x3c] sm:$0xf]
      %v1079 = vunpack.c.l.b16 %v1047
      %v1080 = vunpack.c.l.b16 %v1048
      %v1081 = vunpack.c.l.b16 %v1049
      %v1082 = vunpack.c.l.b16 %v1050
      %v1083 = vunpack.c.l.b16 %v1051
      %v1084 = vunpack.c.l.b16 %v1052
      %v1085 = vunpack.c.l.b16 %v1053
      %v1086 = vunpack.c.l.b16 %v1054
      %v1087 = vunpack.c.l.b16 %v1055
      %v1088 = vunpack.c.l.b16 %v1056
      %v1089 = vunpack.c.l.b16 %v1057
      %v1090 = vunpack.c.l.b16 %v1058
      %v1091 = vunpack.c.l.b16 %v1059
      %v1092 = vunpack.c.l.b16 %v1060
      %v1093 = vunpack.c.l.b16 %v1061
      %v1094 = vunpack.c.l.b16 %v1062
      %v1095 = vpack.c.b16 %v1080, %v1079
      %v1096 = vpack.c.b16 %v1082, %v1081
      %v1097 = vpack.c.b16 %v1084, %v1083
      %v1098 = vpack.c.b16 %v1086, %v1085
      %v1099 = vpack.c.b16 %v1088, %v1087
      %v1100 = vpack.c.b16 %v1090, %v1089
      %v1101 = vpack.c.b16 %v1092, %v1091
      %v1102 = vpack.c.b16 %v1094, %v1093
      %1111 = vmatprep.subr.bf16.mxu0 0
      %1112 = vmatpush1.bf16.msra.mxu0 %v1095
      %1113 = vmatprep.subr.bf16.mxu0 0
      %1114 = vmatpush1.bf16.msra.mxu0 %v1096
      %1115 = vmatprep.subr.bf16.mxu0 0
      %1116 = vmatpush1.bf16.msra.mxu0 %v1097
      %1117 = vmatprep.subr.bf16.mxu0 0
      %1118 = vmatpush1.bf16.msra.mxu0 %v1098
      %1119 = vmatprep.subr.bf16.mxu0 0
      %1120 = vmatpush1.bf16.msra.mxu0 %v1099
      %1121 = vmatprep.subr.bf16.mxu0 0
      %1122 = vmatpush1.bf16.msra.mxu0 %v1100
      %1123 = vmatprep.subr.bf16.mxu0 0
      %1124 = vmatpush1.bf16.msra.mxu0 %v1101
      %1125 = vmatprep.subr.bf16.mxu0 0
      %1126 = vmatpush1.bf16.msra.mxu0 %v1102
      %1127 = vmatprep.subr.bf16.mxu0 0
      %1128 = vmatpush1.bf16.msra.mxu0 0
      %1129 = vmatprep.subr.bf16.mxu0 0
      %1130 = vmatpush1.bf16.msra.mxu0 0
      %1131 = vmatprep.subr.bf16.mxu0 0
      %1132 = vmatpush1.bf16.msra.mxu0 0
      %1133 = vmatprep.subr.bf16.mxu0 0
      %1134 = vmatpush1.bf16.msra.mxu0 0
      %1135 = vmatprep.subr.bf16.mxu0 0
      %1136 = vmatpush1.bf16.msra.mxu0 0
      %1137 = vmatprep.subr.bf16.mxu0 0
      %1138 = vmatpush1.bf16.msra.mxu0 0
      %1139 = vmatprep.subr.bf16.mxu0 0
      %1140 = vmatpush1.bf16.msra.mxu0 0
      %1141 = vmatprep.subr.bf16.mxu0 0
      %1142 = vmatpush1.bf16.msra.mxu0 0
      %1143 = vmatprep.mubr.bf16.mxu0 0
      %1144 = vmatmul.mubr.bf16.gmra.mrb[0].mxu0 %v1042
      %v1145 = vpop.f32.mrb[0].mxu0
      %v1146 = vadd.f32 0.0, %v1145
      %v1147 = vpop.f32.mrb[0].mxu0
      %v1148 = vpop.f32.mrb[0].mxu0
      %v1149 = vadd.f32 0.0, %v1148
      %v1150 = vpop.f32.mrb[0].mxu0
      %1151 = vmatprep.mubr.bf16.mxu0 0
      %1152 = vmatmul.mubr.bf16.gmra.mrb[0].mxu0 %v1043
      %v1153 = vpop.f32.mrb[0].mxu0
      %v1154 = vadd.f32 0.0, %v1153
      %v1155 = vpop.f32.mrb[0].mxu0
      %v1156 = vpop.f32.mrb[0].mxu0
      %v1157 = vadd.f32 0.0, %v1156
      %v1158 = vpop.f32.mrb[0].mxu0
      %1159 = vmatprep.mubr.bf16.mxu0 0
      %1160 = vmatmul.mubr.bf16.gmra.mrb[0].mxu0 %v1044
      %v1161 = vpop.f32.mrb[0].mxu0
      %v1162 = vadd.f32 0.0, %v1161
      %v1163 = vpop.f32.mrb[0].mxu0
      %v1164 = vpop.f32.mrb[0].mxu0
      %v1165 = vadd.f32 0.0, %v1164
      %v1166 = vpop.f32.mrb[0].mxu0
      %1167 = vmatprep.mubr.bf16.mxu0 0
      %1168 = vmatmul.mubr.bf16.gmra.mrb[0].mxu0 %v1045
      %v1169 = vpop.f32.mrb[0].mxu0
      %v1170 = vadd.f32 0.0, %v1169
      %v1171 = vpop.f32.mrb[0].mxu0
      %v1172 = vpop.f32.mrb[0].mxu0
      %v1173 = vadd.f32 0.0, %v1172
      %v1174 = vpop.f32.mrb[0].mxu0
      %1175 = vdwg.mxu0
      %v1176 = vadd.f32 %v1026, %v1146
      %v1177 = vadd.f32 %v1027, %v1149
      %v1178 = vadd.f32 %v1028, %v1154
      %v1179 = vadd.f32 %v1029, %v1157
      %v1180 = vadd.f32 %v1030, %v1162
      %v1181 = vadd.f32 %v1031, %v1165
      %v1182 = vadd.f32 %v1032, %v1170
      %v1183 = vadd.f32 %v1033, %v1173
      %s1184 = scalar_lea.vmem [#allocation2], 32
      %v1185 = vld [vmem:[%s1184] sm:$0xff]
      %v1186 = vld [vmem:[%s1184 + $0x10] sm:$0xff]
      %v1187 = vld [vmem:[%s1184 + $0x20] sm:$0xff]
      %v1188 = vld [vmem:[%s1184 + $0x30] sm:$0xff]
      %v1189 = vld [vmem:[%s1184 + $0x40] sm:$0xff]
      %v1190 = vld [vmem:[%s1184 + $0x50] sm:$0xff]
      %v1191 = vld [vmem:[%s1184 + $0x60] sm:$0xff]
      %v1192 = vld [vmem:[%s1184 + $0x70] sm:$0xff]
      %v1193 = vpack.c.bf16 %v1186, %v1185
      %v1194 = vpack.c.bf16 %v1188, %v1187
      %v1195 = vpack.c.bf16 %v1190, %v1189
      %v1196 = vpack.c.bf16 %v1192, %v1191
      %s1197 = scalar_lea.vmem %s3, 384
      %v1198 = vld [vmem:[%s1197] sm:$0xf]
      %v1199 = vld [vmem:[%s1197 + $0x4] sm:$0xf]
      %v1200 = vld [vmem:[%s1197 + $0x8] sm:$0xf]
      %v1201 = vld [vmem:[%s1197 + $0xc] sm:$0xf]
      %v1202 = vld [vmem:[%s1197 + $0x10] sm:$0xf]
      %v1203 = vld [vmem:[%s1197 + $0x14] sm:$0xf]
      %v1204 = vld [vmem:[%s1197 + $0x18] sm:$0xf]
      %v1205 = vld [vmem:[%s1197 + $0x1c] sm:$0xf]
      %v1206 = vld [vmem:[%s1197 + $0x20] sm:$0xf]
      %v1207 = vld [vmem:[%s1197 + $0x24] sm:$0xf]
      %v1208 = vld [vmem:[%s1197 + $0x28] sm:$0xf]
      %v1209 = vld [vmem:[%s1197 + $0x2c] sm:$0xf]
      %v1210 = vld [vmem:[%s1197 + $0x30] sm:$0xf]
      %v1211 = vld [vmem:[%s1197 + $0x34] sm:$0xf]
      %v1212 = vld [vmem:[%s1197 + $0x38] sm:$0xf]
      %v1213 = vld [vmem:[%s1197 + $0x3c] sm:$0xf]
      %v1230 = vunpack.c.l.b16 %v1198
      %v1231 = vunpack.c.l.b16 %v1199
      %v1232 = vunpack.c.l.b16 %v1200
      %v1233 = vunpack.c.l.b16 %v1201
      %v1234 = vunpack.c.l.b16 %v1202
      %v1235 = vunpack.c.l.b16 %v1203
      %v1236 = vunpack.c.l.b16 %v1204
      %v1237 = vunpack.c.l.b16 %v1205
      %v1238 = vunpack.c.l.b16 %v1206
      %v1239 = vunpack.c.l.b16 %v1207
      %v1240 = vunpack.c.l.b16 %v1208
      %v1241 = vunpack.c.l.b16 %v1209
      %v1242 = vunpack.c.l.b16 %v1210
      %v1243 = vunpack.c.l.b16 %v1211
      %v1244 = vunpack.c.l.b16 %v1212
      %v1245 = vunpack.c.l.b16 %v1213
      %v1246 = vpack.c.b16 %v1231, %v1230
      %v1247 = vpack.c.b16 %v1233, %v1232
      %v1248 = vpack.c.b16 %v1235, %v1234
      %v1249 = vpack.c.b16 %v1237, %v1236
      %v1250 = vpack.c.b16 %v1239, %v1238
      %v1251 = vpack.c.b16 %v1241, %v1240
      %v1252 = vpack.c.b16 %v1243, %v1242
      %v1253 = vpack.c.b16 %v1245, %v1244
      %1262 = vmatprep.subr.bf16.mxu0 0
      %1263 = vmatpush1.bf16.msra.mxu0 %v1246
      %1264 = vmatprep.subr.bf16.mxu0 0
      %1265 = vmatpush1.bf16.msra.mxu0 %v1247
      %1266 = vmatprep.subr.bf16.mxu0 0
      %1267 = vmatpush1.bf16.msra.mxu0 %v1248
      %1268 = vmatprep.subr.bf16.mxu0 0
      %1269 = vmatpush1.bf16.msra.mxu0 %v1249
      %1270 = vmatprep.subr.bf16.mxu0 0
      %1271 = vmatpush1.bf16.msra.mxu0 %v1250
      %1272 = vmatprep.subr.bf16.mxu0 0
      %1273 = vmatpush1.bf16.msra.mxu0 %v1251
      %1274 = vmatprep.subr.bf16.mxu0 0
      %1275 = vmatpush1.bf16.msra.mxu0 %v1252
      %1276 = vmatprep.subr.bf16.mxu0 0
      %1277 = vmatpush1.bf16.msra.mxu0 %v1253
      %1278 = vmatprep.subr.bf16.mxu0 0
      %1279 = vmatpush1.bf16.msra.mxu0 0
      %1280 = vmatprep.subr.bf16.mxu0 0
      %1281 = vmatpush1.bf16.msra.mxu0 0
      %1282 = vmatprep.subr.bf16.mxu0 0
      %1283 = vmatpush1.bf16.msra.mxu0 0
      %1284 = vmatprep.subr.bf16.mxu0 0
      %1285 = vmatpush1.bf16.msra.mxu0 0
      %1286 = vmatprep.subr.bf16.mxu0 0
      %1287 = vmatpush1.bf16.msra.mxu0 0
      %1288 = vmatprep.subr.bf16.mxu0 0
      %1289 = vmatpush1.bf16.msra.mxu0 0
      %1290 = vmatprep.subr.bf16.mxu0 0
      %1291 = vmatpush1.bf16.msra.mxu0 0
      %1292 = vmatprep.subr.bf16.mxu0 0
      %1293 = vmatpush1.bf16.msra.mxu0 0
      %1294 = vmatprep.mubr.bf16.mxu0 0
      %1295 = vmatmul.mubr.bf16.gmra.mrb[0].mxu0 %v1193
      %v1296 = vpop.f32.mrb[0].mxu0
      %v1297 = vadd.f32 0.0, %v1296
      %v1298 = vpop.f32.mrb[0].mxu0
      %v1299 = vpop.f32.mrb[0].mxu0
      %v1300 = vadd.f32 0.0, %v1299
      %v1301 = vpop.f32.mrb[0].mxu0
      %1302 = vmatprep.mubr.bf16.mxu0 0
      %1303 = vmatmul.mubr.bf16.gmra.mrb[0].mxu0 %v1194
      %v1304 = vpop.f32.mrb[0].mxu0
      %v1305 = vadd.f32 0.0, %v1304
      %v1306 = vpop.f32.mrb[0].mxu0
      %v1307 = vpop.f32.mrb[0].mxu0
      %v1308 = vadd.f32 0.0, %v1307
      %v1309 = vpop.f32.mrb[0].mxu0
      %1310 = vmatprep.mubr.bf16.mxu0 0
      %1311 = vmatmul.mubr.bf16.gmra.mrb[0].mxu0 %v1195
      %v1312 = vpop.f32.mrb[0].mxu0
      %v1313 = vadd.f32 0.0, %v1312
      %v1314 = vpop.f32.mrb[0].mxu0
      %v1315 = vpop.f32.mrb[0].mxu0
      %v1316 = vadd.f32 0.0, %v1315
      %v1317 = vpop.f32.mrb[0].mxu0
      %1318 = vmatprep.mubr.bf16.mxu0 0
      %1319 = vmatmul.mubr.bf16.gmra.mrb[0].mxu0 %v1196
      %v1320 = vpop.f32.mrb[0].mxu0
      %v1321 = vadd.f32 0.0, %v1320
      %v1322 = vpop.f32.mrb[0].mxu0
      %v1323 = vpop.f32.mrb[0].mxu0
      %v1324 = vadd.f32 0.0, %v1323
      %v1325 = vpop.f32.mrb[0].mxu0
      %1326 = vdwg.mxu0
      %v1327 = vadd.f32 %v1176, %v1297
      %v1328 = vadd.f32 %v1177, %v1300
      %v1329 = vadd.f32 %v1178, %v1305
      %v1330 = vadd.f32 %v1179, %v1308
      %v1331 = vadd.f32 %v1180, %v1313
      %v1332 = vadd.f32 %v1181, %v1316
      %v1333 = vadd.f32 %v1182, %v1321
      %v1334 = vadd.f32 %v1183, %v1324
      %v1335 = vld [vmem:[%s1184 + $0x1] sm:$0xff]
      %v1336 = vld [vmem:[%s1184 + $0x11] sm:$0xff]
      %v1337 = vld [vmem:[%s1184 + $0x21] sm:$0xff]
      %v1338 = vld [vmem:[%s1184 + $0x31] sm:$0xff]
      %v1339 = vld [vmem:[%s1184 + $0x41] sm:$0xff]
      %v1340 = vld [vmem:[%s1184 + $0x51] sm:$0xff]
      %v1341 = vld [vmem:[%s1184 + $0x61] sm:$0xff]
      %v1342 = vld [vmem:[%s1184 + $0x71] sm:$0xff]
      %v1343 = vpack.c.bf16 %v1336, %v1335
      %v1344 = vpack.c.bf16 %v1338, %v1337
      %v1345 = vpack.c.bf16 %v1340, %v1339
      %v1346 = vpack.c.bf16 %v1342, %v1341
      %s1347 = scalar_lea.vmem %s3, 448
      %v1348 = vld [vmem:[%s1347] sm:$0xf]
      %v1349 = vld [vmem:[%s1347 + $0x4] sm:$0xf]
      %v1350 = vld [vmem:[%s1347 + $0x8] sm:$0xf]
      %v1351 = vld [vmem:[%s1347 + $0xc] sm:$0xf]
      %v1352 = vld [vmem:[%s1347 + $0x10] sm:$0xf]
      %v1353 = vld [vmem:[%s1347 + $0x14] sm:$0xf]
      %v1354 = vld [vmem:[%s1347 + $0x18] sm:$0xf]
      %v1355 = vld [vmem:[%s1347 + $0x1c] sm:$0xf]
      %v1356 = vld [vmem:[%s1347 + $0x20] sm:$0xf]
      %v1357 = vld [vmem:[%s1347 + $0x24] sm:$0xf]
      %v1358 = vld [vmem:[%s1347 + $0x28] sm:$0xf]
      %v1359 = vld [vmem:[%s1347 + $0x2c] sm:$0xf]
      %v1360 = vld [vmem:[%s1347 + $0x30] sm:$0xf]
      %v1361 = vld [vmem:[%s1347 + $0x34] sm:$0xf]
      %v1362 = vld [vmem:[%s1347 + $0x38] sm:$0xf]
      %v1363 = vld [vmem:[%s1347 + $0x3c] sm:$0xf]
      %v1380 = vunpack.c.l.b16 %v1348
      %v1381 = vunpack.c.l.b16 %v1349
      %v1382 = vunpack.c.l.b16 %v1350
      %v1383 = vunpack.c.l.b16 %v1351
      %v1384 = vunpack.c.l.b16 %v1352
      %v1385 = vunpack.c.l.b16 %v1353
      %v1386 = vunpack.c.l.b16 %v1354
      %v1387 = vunpack.c.l.b16 %v1355
      %v1388 = vunpack.c.l.b16 %v1356
      %v1389 = vunpack.c.l.b16 %v1357
      %v1390 = vunpack.c.l.b16 %v1358
      %v1391 = vunpack.c.l.b16 %v1359
      %v1392 = vunpack.c.l.b16 %v1360
      %v1393 = vunpack.c.l.b16 %v1361
      %v1394 = vunpack.c.l.b16 %v1362
      %v1395 = vunpack.c.l.b16 %v1363
      %v1396 = vpack.c.b16 %v1381, %v1380
      %v1397 = vpack.c.b16 %v1383, %v1382
      %v1398 = vpack.c.b16 %v1385, %v1384
      %v1399 = vpack.c.b16 %v1387, %v1386
      %v1400 = vpack.c.b16 %v1389, %v1388
      %v1401 = vpack.c.b16 %v1391, %v1390
      %v1402 = vpack.c.b16 %v1393, %v1392
      %v1403 = vpack.c.b16 %v1395, %v1394
      %1412 = vmatprep.subr.bf16.mxu0 0
      %1413 = vmatpush1.bf16.msra.mxu0 %v1396
      %1414 = vmatprep.subr.bf16.mxu0 0
      %1415 = vmatpush1.bf16.msra.mxu0 %v1397
      %1416 = vmatprep.subr.bf16.mxu0 0
      %1417 = vmatpush1.bf16.msra.mxu0 %v1398
      %1418 = vmatprep.subr.bf16.mxu0 0
      %1419 = vmatpush1.bf16.msra.mxu0 %v1399
      %1420 = vmatprep.subr.bf16.mxu0 0
      %1421 = vmatpush1.bf16.msra.mxu0 %v1400
      %1422 = vmatprep.subr.bf16.mxu0 0
      %1423 = vmatpush1.bf16.msra.mxu0 %v1401
      %1424 = vmatprep.subr.bf16.mxu0 0
      %1425 = vmatpush1.bf16.msra.mxu0 %v1402
      %1426 = vmatprep.subr.bf16.mxu0 0
      %1427 = vmatpush1.bf16.msra.mxu0 %v1403
      %1428 = vmatprep.subr.bf16.mxu0 0
      %1429 = vmatpush1.bf16.msra.mxu0 0
      %1430 = vmatprep.subr.bf16.mxu0 0
      %1431 = vmatpush1.bf16.msra.mxu0 0
      %1432 = vmatprep.subr.bf16.mxu0 0
      %1433 = vmatpush1.bf16.msra.mxu0 0
      %1434 = vmatprep.subr.bf16.mxu0 0
      %1435 = vmatpush1.bf16.msra.mxu0 0
      %1436 = vmatprep.subr.bf16.mxu0 0
      %1437 = vmatpush1.bf16.msra.mxu0 0
      %1438 = vmatprep.subr.bf16.mxu0 0
      %1439 = vmatpush1.bf16.msra.mxu0 0
      %1440 = vmatprep.subr.bf16.mxu0 0
      %1441 = vmatpush1.bf16.msra.mxu0 0
      %1442 = vmatprep.subr.bf16.mxu0 0
      %1443 = vmatpush1.bf16.msra.mxu0 0
      %1444 = vmatprep.mubr.bf16.mxu0 0
      %1445 = vmatmul.mubr.bf16.gmra.mrb[0].mxu0 %v1343
      %v1446 = vpop.f32.mrb[0].mxu0
      %v1447 = vadd.f32 0.0, %v1446
      %v1448 = vpop.f32.mrb[0].mxu0
      %v1449 = vpop.f32.mrb[0].mxu0
      %v1450 = vadd.f32 0.0, %v1449
      %v1451 = vpop.f32.mrb[0].mxu0
      %1452 = vmatprep.mubr.bf16.mxu0 0
      %1453 = vmatmul.mubr.bf16.gmra.mrb[0].mxu0 %v1344
      %v1454 = vpop.f32.mrb[0].mxu0
      %v1455 = vadd.f32 0.0, %v1454
      %v1456 = vpop.f32.mrb[0].mxu0
      %v1457 = vpop.f32.mrb[0].mxu0
      %v1458 = vadd.f32 0.0, %v1457
      %v1459 = vpop.f32.mrb[0].mxu0
      %1460 = vmatprep.mubr.bf16.mxu0 0
      %1461 = vmatmul.mubr.bf16.gmra.mrb[0].mxu0 %v1345
      %v1462 = vpop.f32.mrb[0].mxu0
      %v1463 = vadd.f32 0.0, %v1462
      %v1464 = vpop.f32.mrb[0].mxu0
      %v1465 = vpop.f32.mrb[0].mxu0
      %v1466 = vadd.f32 0.0, %v1465
      %v1467 = vpop.f32.mrb[0].mxu0
      %1468 = vmatprep.mubr.bf16.mxu0 0
      %1469 = vmatmul.mubr.bf16.gmra.mrb[0].mxu0 %v1346
      %v1470 = vpop.f32.mrb[0].mxu0
      %v1471 = vadd.f32 0.0, %v1470
      %v1472 = vpop.f32.mrb[0].mxu0
      %v1473 = vpop.f32.mrb[0].mxu0
      %v1474 = vadd.f32 0.0, %v1473
      %v1475 = vpop.f32.mrb[0].mxu0
      %1476 = vdwg.mxu0
      %v1477 = vadd.f32 %v1327, %v1447
      %v1478 = vadd.f32 %v1328, %v1450
      %v1479 = vadd.f32 %v1329, %v1455
      %v1480 = vadd.f32 %v1330, %v1458
      %v1481 = vadd.f32 %v1331, %v1463
      %v1482 = vadd.f32 %v1332, %v1466
      %v1483 = vadd.f32 %v1333, %v1471
      %v1484 = vadd.f32 %v1334, %v1474
      %v1485 = vld [vmem:[%s1184 + $0x2] sm:$0xff]
      %v1486 = vld [vmem:[%s1184 + $0x12] sm:$0xff]
      %v1487 = vld [vmem:[%s1184 + $0x22] sm:$0xff]
      %v1488 = vld [vmem:[%s1184 + $0x32] sm:$0xff]
      %v1489 = vld [vmem:[%s1184 + $0x42] sm:$0xff]
      %v1490 = vld [vmem:[%s1184 + $0x52] sm:$0xff]
      %v1491 = vld [vmem:[%s1184 + $0x62] sm:$0xff]
      %v1492 = vld [vmem:[%s1184 + $0x72] sm:$0xff]
      %v1493 = vpack.c.bf16 %v1486, %v1485
      %v1494 = vpack.c.bf16 %v1488, %v1487
      %v1495 = vpack.c.bf16 %v1490, %v1489
      %v1496 = vpack.c.bf16 %v1492, %v1491
      %s1497 = scalar_lea.vmem %s3, 512
      %v1498 = vld [vmem:[%s1497] sm:$0xf]
      %v1499 = vld [vmem:[%s1497 + $0x4] sm:$0xf]
      %v1500 = vld [vmem:[%s1497 + $0x8] sm:$0xf]
      %v1501 = vld [vmem:[%s1497 + $0xc] sm:$0xf]
      %v1502 = vld [vmem:[%s1497 + $0x10] sm:$0xf]
      %v1503 = vld [vmem:[%s1497 + $0x14] sm:$0xf]
      %v1504 = vld [vmem:[%s1497 + $0x18] sm:$0xf]
      %v1505 = vld [vmem:[%s1497 + $0x1c] sm:$0xf]
      %v1506 = vld [vmem:[%s1497 + $0x20] sm:$0xf]
      %v1507 = vld [vmem:[%s1497 + $0x24] sm:$0xf]
      %v1508 = vld [vmem:[%s1497 + $0x28] sm:$0xf]
      %v1509 = vld [vmem:[%s1497 + $0x2c] sm:$0xf]
      %v1510 = vld [vmem:[%s1497 + $0x30] sm:$0xf]
      %v1511 = vld [vmem:[%s1497 + $0x34] sm:$0xf]
      %v1512 = vld [vmem:[%s1497 + $0x38] sm:$0xf]
      %v1513 = vld [vmem:[%s1497 + $0x3c] sm:$0xf]
      %v1530 = vunpack.c.l.b16 %v1498
      %v1531 = vunpack.c.l.b16 %v1499
      %v1532 = vunpack.c.l.b16 %v1500
      %v1533 = vunpack.c.l.b16 %v1501
      %v1534 = vunpack.c.l.b16 %v1502
      %v1535 = vunpack.c.l.b16 %v1503
      %v1536 = vunpack.c.l.b16 %v1504
      %v1537 = vunpack.c.l.b16 %v1505
      %v1538 = vunpack.c.l.b16 %v1506
      %v1539 = vunpack.c.l.b16 %v1507
      %v1540 = vunpack.c.l.b16 %v1508
      %v1541 = vunpack.c.l.b16 %v1509
      %v1542 = vunpack.c.l.b16 %v1510
      %v1543 = vunpack.c.l.b16 %v1511
      %v1544 = vunpack.c.l.b16 %v1512
      %v1545 = vunpack.c.l.b16 %v1513
      %v1546 = vpack.c.b16 %v1531, %v1530
      %v1547 = vpack.c.b16 %v1533, %v1532
      %v1548 = vpack.c.b16 %v1535, %v1534
      %v1549 = vpack.c.b16 %v1537, %v1536
      %v1550 = vpack.c.b16 %v1539, %v1538
      %v1551 = vpack.c.b16 %v1541, %v1540
      %v1552 = vpack.c.b16 %v1543, %v1542
      %v1553 = vpack.c.b16 %v1545, %v1544
      %1562 = vmatprep.subr.bf16.mxu0 0
      %1563 = vmatpush1.bf16.msra.mxu0 %v1546
      %1564 = vmatprep.subr.bf16.mxu0 0
      %1565 = vmatpush1.bf16.msra.mxu0 %v1547
      %1566 = vmatprep.subr.bf16.mxu0 0
      %1567 = vmatpush1.bf16.msra.mxu0 %v1548
      %1568 = vmatprep.subr.bf16.mxu0 0
      %1569 = vmatpush1.bf16.msra.mxu0 %v1549
      %1570 = vmatprep.subr.bf16.mxu0 0
      %1571 = vmatpush1.bf16.msra.mxu0 %v1550
      %1572 = vmatprep.subr.bf16.mxu0 0
      %1573 = vmatpush1.bf16.msra.mxu0 %v1551
      %1574 = vmatprep.subr.bf16.mxu0 0
      %1575 = vmatpush1.bf16.msra.mxu0 %v1552
      %1576 = vmatprep.subr.bf16.mxu0 0
      %1577 = vmatpush1.bf16.msra.mxu0 %v1553
      %1578 = vmatprep.subr.bf16.mxu0 0
      %1579 = vmatpush1.bf16.msra.mxu0 0
      %1580 = vmatprep.subr.bf16.mxu0 0
      %1581 = vmatpush1.bf16.msra.mxu0 0
      %1582 = vmatprep.subr.bf16.mxu0 0
      %1583 = vmatpush1.bf16.msra.mxu0 0
      %1584 = vmatprep.subr.bf16.mxu0 0
      %1585 = vmatpush1.bf16.msra.mxu0 0
      %1586 = vmatprep.subr.bf16.mxu0 0
      %1587 = vmatpush1.bf16.msra.mxu0 0
      %1588 = vmatprep.subr.bf16.mxu0 0
      %1589 = vmatpush1.bf16.msra.mxu0 0
      %1590 = vmatprep.subr.bf16.mxu0 0
      %1591 = vmatpush1.bf16.msra.mxu0 0
      %1592 = vmatprep.subr.bf16.mxu0 0
      %1593 = vmatpush1.bf16.msra.mxu0 0
      %1594 = vmatprep.mubr.bf16.mxu0 0
      %1595 = vmatmul.mubr.bf16.gmra.mrb[0].mxu0 %v1493
      %v1596 = vpop.f32.mrb[0].mxu0
      %v1597 = vadd.f32 0.0, %v1596
      %v1598 = vpop.f32.mrb[0].mxu0
      %v1599 = vpop.f32.mrb[0].mxu0
      %v1600 = vadd.f32 0.0, %v1599
      %v1601 = vpop.f32.mrb[0].mxu0
      %1602 = vmatprep.mubr.bf16.mxu0 0
      %1603 = vmatmul.mubr.bf16.gmra.mrb[0].mxu0 %v1494
      %v1604 = vpop.f32.mrb[0].mxu0
      %v1605 = vadd.f32 0.0, %v1604
      %v1606 = vpop.f32.mrb[0].mxu0
      %v1607 = vpop.f32.mrb[0].mxu0
      %v1608 = vadd.f32 0.0, %v1607
      %v1609 = vpop.f32.mrb[0].mxu0
      %1610 = vmatprep.mubr.bf16.mxu0 0
      %1611 = vmatmul.mubr.bf16.gmra.mrb[0].mxu0 %v1495
      %v1612 = vpop.f32.mrb[0].mxu0
      %v1613 = vadd.f32 0.0, %v1612
      %v1614 = vpop.f32.mrb[0].mxu0
      %v1615 = vpop.f32.mrb[0].mxu0
      %v1616 = vadd.f32 0.0, %v1615
      %v1617 = vpop.f32.mrb[0].mxu0
      %1618 = vmatprep.mubr.bf16.mxu0 0
      %1619 = vmatmul.mubr.bf16.gmra.mrb[0].mxu0 %v1496
      %v1620 = vpop.f32.mrb[0].mxu0
      %v1621 = vadd.f32 0.0, %v1620
      %v1622 = vpop.f32.mrb[0].mxu0
      %v1623 = vpop.f32.mrb[0].mxu0
      %v1624 = vadd.f32 0.0, %v1623
      %v1625 = vpop.f32.mrb[0].mxu0
      %1626 = vdwg.mxu0
      %v1627 = vadd.f32 %v1477, %v1597
      %v1628 = vadd.f32 %v1478, %v1600
      %v1629 = vadd.f32 %v1479, %v1605
      %v1630 = vadd.f32 %v1480, %v1608
      %v1631 = vadd.f32 %v1481, %v1613
      %v1632 = vadd.f32 %v1482, %v1616
      %v1633 = vadd.f32 %v1483, %v1621
      %v1634 = vadd.f32 %v1484, %v1624
      %v1635 = vld [vmem:[%s4] sm:$0x1]
      %v1637 = vlaneseq
      %v1638 = vshrl.u32 %v1637, 7
      %v1639 = vsub.s32 0, %v1638
      %v1640 = vrot.slane %v1635, %v1639
      %v1642 = vadd.f32 %v1627, %v1640
      %v1643 = vadd.f32 %v1628, %v1640
      %v1644 = vadd.f32 %v1629, %v1640
      %v1645 = vadd.f32 %v1630, %v1640
      %v1646 = vadd.f32 %v1631, %v1640
      %v1647 = vadd.f32 %v1632, %v1640
      %v1648 = vadd.f32 %v1633, %v1640
      %v1649 = vadd.f32 %v1634, %v1640
      %1650 = vst [vmem:[%s224] sm:$0xff] %v1642
      %1651 = vst [vmem:[%s224 + $0x8] sm:$0xff] %v1643
      %1652 = vst [vmem:[%s224 + $0x10] sm:$0xff] %v1644
      %1653 = vst [vmem:[%s224 + $0x18] sm:$0xff] %v1645
      %1654 = vst [vmem:[%s224 + $0x20] sm:$0xff] %v1646
      %1655 = vst [vmem:[%s224 + $0x28] sm:$0xff] %v1647
      %1656 = vst [vmem:[%s224 + $0x30] sm:$0xff] %v1648
      %1657 = vst [vmem:[%s224 + $0x38] sm:$0xff] %v1649
      %p1658 = scmp.lt.s32.totalorder %s16, 1
      %s1659 = scalar_select %p1658, %s16, 1
      %s1660 = smul.addr %s1659, 8
      %s1661 = smul.addr %s1660, 8
      %s1662 = scalar_lea.vmem %s5, %s1661
      // Predicated region
      $region41: #{_lambda_.17} parent=39 // pred_check
        %p1663 = pneg %p144
      $region42: #{_lambda_.17} parent=39 // pred_check_branch
        %1665 = sbr.rel (%p1663) target = $region44
      $region43: #{_lambda_.17} parent=39 // pred_region
        _
      $region44: #{_lambda_.17} parent=39 // pred_fallthru
        _
    $region40: #{_lambda_.17} parent=5 // pred_fallthru
      _
    %p1666 = scmp.le.s32.totalorder 2, %s11
    // Predicated region
    $region45: #{_lambda_.17} parent=5 // pred_check
      %p1667 = pneg %p1666
    $region46: #{_lambda_.17} parent=5 // pred_check_branch
      %1669 = sbr.rel (%p1667) target = $region48
    $region47: #{_lambda_.17} parent=5 // pred_region
      %s1670 = ssub.s32 %s11, 2
      // Predicated region
      $region49: #{_lambda_.17} parent=47 // pred_check
        %p1671 = pneg %p150
      $region50: #{_lambda_.17} parent=47 // pred_check_branch
        %1673 = sbr.rel (%p1671) target = $region52
      $region51: #{_lambda_.17} parent=47 // pred_region
        %p1674 = scmp.lt.s32.totalorder %s17, 1
        %s1675 = scalar_select %p1674, %s17, 1
        %s1676 = smul.addr %s1675, 8
        %s1677 = smul.addr %s1676, 8
        %s1678 = scalar_lea.vmem %s5, %s1677
      $region52: #{_lambda_.17} parent=47 // pred_fallthru
        _
    $region48: #{_lambda_.17} parent=5 // pred_fallthru
      _
  $region6: #{_lambda_.17} parent=0 // loop_footer
    %s15 = sadd.s32 1, %s11
  $region7: #{_lambda_.17} parent=0 // loop_footer_branch
    %10 = sbr.rel target = $region3
  $region8: #{_lambda_.17} parent=0 // loop_exit
    _

</llo_original>
